<compile_context>
chip_gen: v5e
topology: v5e:2x2
jax: 0.10.0
libtpu: 0.0.40
codegen_flags: <defaults>
</compile_context>

<pallas_src>
import jax
import jax.numpy as jnp
from jax import lax
from jax.experimental import pallas as pl
from jax.experimental.pallas import tpu as pltpu


def _round_up(x, m):
    return (x + m - 1) // m * m


# ---------------------------------------------------------------------------
# Fused conv3x3 (+ folded BN/ReLU on the input path) + per-tile channel stats
# ---------------------------------------------------------------------------
def _make_conv_kernel(H, W, th, cin, cpad, apply_act, nh):
    Wp = W + 2          # padded slab width
    ths = th + 2        # haloed slab height
    K = 9 * cin         # im2col contraction depth

    def kernel(*refs):
        if apply_act:
            (xm_ref, xu_ref, xd_ref, w_ref, sc_ref, sh_ref,
             y_ref, s_ref, q_ref, slab_ref, col_ref) = refs
        else:
            (xm_ref, xu_ref, xd_ref, w_ref,
             y_ref, s_ref, q_ref, slab_ref, col_ref) = refs

        h = pl.program_id(1)
        sdtype = slab_ref.dtype

        def act(v):
            # Folded BN of the previous layer + ReLU, computed in f32 (v5e has
            # no bf16 VALU), stored back in bf16.
            if apply_act:
                z = v.astype(jnp.float32) * sc_ref[...] + sh_ref[...]
                return jnp.maximum(z, 0.0).astype(sdtype)
            return v.astype(sdtype)

        # ---- assemble the zero-ring, haloed slab in VMEM (single pass) ------
        zero_col = jnp.zeros((ths, 1, cin), sdtype)
        slab_ref[:, 0:1, :] = zero_col            # left ring column
        slab_ref[:, W + 1:Wp, :] = zero_col       # right ring column
        slab_ref[1:th + 1, 1:W + 1, :] = act(xm_ref[0])   # main tile rows

        zero_row = jnp.zeros((1, W, cin), sdtype)

        @pl.when(h == 0)
        def _():
            slab_ref[0:1, 1:W + 1, :] = zero_row   # top spatial padding

        @pl.when(h > 0)
        def _():
            slab_ref[0:1, 1:W + 1, :] = act(xu_ref[0])     # row above the tile

        @pl.when(h == nh - 1)
        def _():
            slab_ref[th + 1:ths, 1:W + 1, :] = zero_row    # bottom padding

        @pl.when(h < nh - 1)
        def _():
            slab_ref[th + 1:ths, 1:W + 1, :] = act(xd_ref[0])  # row below

        # ---- im2col: 9 shifted-window copies, one K = 9*cin MXU dot ---------
        for dy in range(3):
            for dx in range(3):
                k0 = (dy * 3 + dx) * cin
                col_ref[:, :, k0:k0 + cin] = slab_ref[dy:dy + th, dx:dx + W, :]

        lhs = col_ref[...].reshape(th * W, K)               # contiguous merge
        acc = jnp.dot(lhs, w_ref[...], preferred_element_type=jnp.float32)

        # Single write of the conv output + fused per-(n, h) channel stats.
        y_ref[...] = acc.reshape(1, th, W, cpad).astype(y_ref.dtype)
        s_ref[...] = jnp.sum(acc, axis=0).reshape(1, 1, cpad)
        q_ref[...] = jnp.sum(acc * acc, axis=0).reshape(1, 1, cpad)

    return kernel


def _conv3x3_bn_stats(x, w_mat, in_scale, in_shift, *, th, apply_act):
    """x: (N, H, W, cin) bf16 UNPADDED NHWC activation.
       w_mat: (9*cin, cpad) tap-major packed bf16 conv weights.
       in_scale / in_shift: (cin,) f32 folded BN affine of the previous layer,
       applied together with ReLU while rows are stored into the slab.
       Returns y (N, H, W, cpad) bf16 and per-channel sum / sum-sq (cpad,) f32."""
    N, H, W, cin = x.shape
    K, cpad = w_mat.shape
    nh = H // th
    kernel = _make_conv_kernel(H, W, th, cin, cpad, apply_act, nh)

    in_specs = [
        # main tile rows [h*th, h*th + th)
        pl.BlockSpec((1, th, W, cin), lambda n, h: (n, h, 0, 0)),
        # halo row above (clamped; unused and zeroed in-kernel at h == 0)
        pl.BlockSpec((1, 1, W, cin),
                     lambda n, h: (n, jnp.maximum(h * th - 1, 0), 0, 0)),
        # halo row below (clamped; unused and zeroed in-kernel at h == nh-1)
        pl.BlockSpec((1, 1, W, cin),
                     lambda n, h: (n, jnp.minimum((h + 1) * th, H - 1), 0, 0)),
        # packed weights: grid-invariant, stays resident in VMEM
        pl.BlockSpec((K, cpad), lambda n, h: (0, 0)),
    ]
    args = [x, x, x, w_mat]
    if apply_act:
        in_specs += [pl.BlockSpec((1, 1, cin), lambda n, h: (0, 0, 0)),
                     pl.BlockSpec((1, 1, cin), lambda n, h: (0, 0, 0))]
        args += [in_scale.reshape(1, 1, cin), in_shift.reshape(1, 1, cin)]

    y, s, q = pl.pallas_call(
        kernel,
        out_shape=(jax.ShapeDtypeStruct((N, H, W, cpad), jnp.bfloat16),
                   jax.ShapeDtypeStruct((N, nh, cpad), jnp.float32),
                   jax.ShapeDtypeStruct((N, nh, cpad), jnp.float32)),
        grid_spec=pltpu.PrefetchScalarGridSpec(
            num_scalar_prefetch=0,
            grid=(N, nh),
            in_specs=in_specs,
            out_specs=(
                pl.BlockSpec((1, th, W, cpad), lambda n, h: (n, h, 0, 0)),
                pl.BlockSpec((1, 1, cpad), lambda n, h: (n, h, 0)),
                pl.BlockSpec((1, 1, cpad), lambda n, h: (n, h, 0)),
            ),
            scratch_shapes=[
                pltpu.VMEM((th + 2, W + 2, cin), jnp.bfloat16),   # haloed slab
                pltpu.VMEM((th, W, K), jnp.bfloat16),             # im2col block
            ],
        ),
        compiler_params=pltpu.CompilerParams(
            dimension_semantics=("parallel", "parallel"),
            vmem_limit_bytes=48 << 20),
    )(*args)
    # tiny wrapper-side reduction of the per-(n, h) stat partials
    return y, jnp.sum(s, axis=(0, 1)), jnp.sum(q, axis=(0, 1))


# ---------------------------------------------------------------------------
# Epilogue: BN2 + ReLU + channel slice + NHWC -> NCHW, fused in one kernel
# ---------------------------------------------------------------------------
def _make_epilogue_kernel(th, W, cpad, cout):
    M = th * W

    def kernel(y_ref, sc_ref, sh_ref, o_ref):
        y = y_ref[...].reshape(M, cpad).astype(jnp.float32)
        z = jnp.maximum(y * sc_ref[...] + sh_ref[...], 0.0)
        zt = z.T                                   # (cpad, M) 2-D f32 transpose
        o_ref[...] = zt[:cout, :].reshape(1, cout, M)

    return kernel


def _bn_relu_to_nchw(y, scale, shift, *, cout, th):
    N, H, W, cpad = y.shape
    nh = H // th
    M = th * W
    out = pl.pallas_call(
        _make_epilogue_kernel(th, W, cpad, cout),
        out_shape=jax.ShapeDtypeStruct((N, cout, H * W), jnp.float32),
        grid_spec=pltpu.PrefetchScalarGridSpec(
            num_scalar_prefetch=0,
            grid=(N, nh),
            in_specs=[pl.BlockSpec((1, th, W, cpad), lambda n, h: (n, h, 0, 0)),
                      pl.BlockSpec((1, cpad), lambda n, h: (0, 0)),
                      pl.BlockSpec((1, cpad), lambda n, h: (0, 0))],
            out_specs=pl.BlockSpec((1, cout, M), lambda n, h: (n, 0, h)),
        ),
        compiler_params=pltpu.CompilerParams(
            dimension_semantics=("parallel", "parallel"),
            vmem_limit_bytes=48 << 20),
    )(y, scale.reshape(1, cpad), shift.reshape(1, cpad))
    return out.reshape(N, cout, H, W)    # free (contiguous) reshape


# ---------------------------------------------------------------------------
# Glue: weight packing, BN folding, tile sizing
# ---------------------------------------------------------------------------
def _pack_weight(w_oihw, cin_pad, cout_pad):
    # (O, I, 3, 3) -> (kh, kw, I, O) -> padded -> (9*cin_pad, cout_pad) bf16,
    # rows ordered k = (dy*3 + dx)*cin_pad + c (matches the im2col layout).
    O, I, kh, kw = w_oihw.shape
    w = jnp.transpose(w_oihw, (2, 3, 1, 0)).astype(jnp.float32)
    w = jnp.pad(w, ((0, 0), (0, 0), (0, cin_pad - I), (0, cout_pad - O)))
    return w.reshape(kh * kw * cin_pad, cout_pad).astype(jnp.bfloat16)


def _pad_vec(v, n):
    return jnp.pad(v.astype(jnp.float32), (0, n - v.shape[0]))


def _fold_bn(gamma_p, beta_p, s, sq, count, eps):
    # Training-mode BN: batch mean, biased variance.  E[x^2]-E[x]^2 in f32 is
    # adequate here; TODO(synk): use a centered/compensated variance if channel
    # means can be large.
    mean = s / count
    var = jnp.maximum(sq / count - mean * mean, 0.0)
    scale = gamma_p / jnp.sqrt(var + eps)     # padded channels: gamma=0 -> 0
    shift = beta_p - mean * scale
    return scale, shift


def _pick_th(H, W, cin, cpad, budget_bytes=8 << 20):
    """Largest row-tile height that divides H, keeps th*W lane-dense (multiple
    of 128, or the whole image) and whose per-step VMEM footprint fits a
    budget that is safe on v5e (16 MiB scoped default) and v7x (64 MiB VMEM)."""
    legal = [c for c in range(1, H + 1)
             if H % c == 0 and ((c * W) % 128 == 0 or c == H)]

    def cost(c):
        rows = c * W
        return ((c + 2) * (W + 2) * cin * 2       # slab (bf16)
                + rows * 9 * cin * 2              # im2col block (bf16)
                + 2 * rows * cin * 2              # main input block, 2 buffers
                + 2 * rows * cpad * 2             # y output block, 2 buffers
                + 2 * rows * cpad * 4)            # f32 accumulator / temporaries

    fitting = [c for c in legal if cost(c) <= budget_bytes]
    return max(fitting) if fitting else min(legal)


# ---------------------------------------------------------------------------
# DoubleConv forward
# ---------------------------------------------------------------------------
def double_conv(x_nchw, params, eps=1e-5):
    N, Cin, H, W = x_nchw.shape
    Cout = params["w1"].shape[0]

    # TODO(synk): pad W in the wrapper to support arbitrary widths.
    assert W % 8 == 0, "demo kernel assumes W % 8 == 0"

    cin1 = _round_up(max(Cin, 8), 8)     # layer-1 input channels
    cpad = _round_up(Cout, 128)          # lane-dense channel padding
    count = float(N * H * W)

    # NCHW -> NHWC bf16 (single XLA fusion); channel pad only, NO spatial pad:
    # the kernels build the zero ring in VMEM.
    x = jnp.transpose(x_nchw, (0, 2, 3, 1))
    x = jnp.pad(x, ((0, 0), (0, 0), (0, 0), (0, cin1 - Cin))).astype(jnp.bfloat16)

    # ---- conv1 + fused batch stats (conv bias absorbed by BN batch mean) ----
    th1 = _pick_th(H, W, cin1, cpad)
    w1 = _pack_weight(params["w1"], cin1, cpad)
    y1, s1, q1 = _conv3x3_bn_stats(x, w1, None, None, th=th1, apply_act=False)
    scale1, shift1 = _fold_bn(_pad_vec(params["g1"], cpad),
                              _pad_vec(params["be1"], cpad), s1, q1, count, eps)

    # ---- conv2 with BN1+ReLU fused into its slab assembly, + fused stats ----
    th2 = _pick_th(H, W, cpad, cpad)
    w2 = _pack_weight(params["w2"], cpad, cpad)
    y2, s2, q2 = _conv3x3_bn_stats(y1, w2, scale1, shift1, th=th2, apply_act=True)
    scale2, shift2 = _fold_bn(_pad_vec(params["g2"], cpad),
                              _pad_vec(params["be2"], cpad), s2, q2, count, eps)

    # ---- fused BN2 + ReLU + channel slice + NHWC -> NCHW --------------------
    return _bn_relu_to_nchw(y2, scale2, shift2, cout=Cout, th=th2)


# ---------------------------------------------------------------------------
# Pure-JAX reference (for correctness check)
# ---------------------------------------------------------------------------
def _ref_double_conv(x, params, eps=1e-5):
    def conv(x, w, b):
        y = lax.conv_general_dilated(
            x, w, window_strides=(1, 1), padding=((1, 1), (1, 1)),
            dimension_numbers=("NCHW", "OIHW", "NCHW"),
            precision=lax.Precision.HIGHEST)
        return y + b[None, :, None, None]

    def bn_relu(y, g, be):
        mean = jnp.mean(y, axis=(0, 2, 3), keepdims=True)
        var = jnp.mean((y - mean) ** 2, axis=(0, 2, 3), keepdims=True)
        z = (y - mean) / jnp.sqrt(var + eps) * g[None, :, None, None] \
            + be[None, :, None, None]
        return jnp.maximum(z, 0.0)

    y = bn_relu(conv(x, params["w1"], params["b1"]), params["g1"], params["be1"])
    y = bn_relu(conv(y, params["w2"], params["b2"]), params["g2"], params["be2"])
    return y


# ---------------------------------------------------------------------------
if __name__ == "__main__":
    key = jax.random.PRNGKey(0)
    N, Cin, Cout, H, W = 2, 4, 8, 16, 16
    ks = jax.random.split(key, 9)

    x = jax.random.normal(ks[0], (N, Cin, H, W), jnp.float32)
    params = dict(
        w1=0.2 * jax.random.normal(ks[1], (Cout, Cin, 3, 3), jnp.float32),
        b1=0.1 * jax.random.normal(ks[2], (Cout,), jnp.float32),
        g1=1.0 + 0.1 * jax.random.normal(ks[3], (Cout,), jnp.float32),
        be1=0.1 * jax.random.normal(ks[4], (Cout,), jnp.float32),
        w2=0.2 * jax.random.normal(ks[5], (Cout, Cout, 3, 3), jnp.float32),
        b2=0.1 * jax.random.normal(ks[6], (Cout,), jnp.float32),
        g2=1.0 + 0.1 * jax.random.normal(ks[7], (Cout,), jnp.float32),
        be2=0.1 * jax.random.normal(ks[8], (Cout,), jnp.float32),
    )

    out = jax.jit(double_conv)(x, params)
    out = jax.block_until_ready(out)
    assert out.shape == (N, Cout, H, W), out.shape

    ref = _ref_double_conv(x, params)
    max_err = float(jnp.max(jnp.abs(out - ref)))
    # bf16 activations/weights -> slightly looser tolerance than an f32 pipeline
    assert jnp.allclose(out, ref, atol=6e-2, rtol=6e-2), f"max abs err = {max_err}"

    print("KERNEL_OK")
</pallas_src>

<mosaic_0001>
module attributes {stable_mosaic.version = 11 : i64} {
  func.func @kernel(%arg0: i32, %arg1: i32, %arg2: memref<1x16x16x8xbf16, #tpu.memory_space<vmem>>, %arg3: memref<1x1x16x8xbf16, #tpu.memory_space<vmem>>, %arg4: memref<1x1x16x8xbf16, #tpu.memory_space<vmem>>, %arg5: memref<72x128xbf16, #tpu.memory_space<vmem>>, %arg6: memref<1x16x16x128xbf16, #tpu.memory_space<vmem>>, %arg7: memref<1x1x128xf32, #tpu.memory_space<vmem>>, %arg8: memref<1x1x128xf32, #tpu.memory_space<vmem>>, %arg9: memref<18x18x8xbf16, #tpu.memory_space<vmem>>, %arg10: memref<16x16x72xbf16, #tpu.memory_space<vmem>>) attributes {dimension_semantics = [#tpu.dimension_semantics<parallel>, #tpu.dimension_semantics<parallel>], iteration_bounds = array<i64: 2, 1>, scalar_prefetch = 0 : i64, scratch_operands = 2 : i64, tpu.core_type = #tpu.core_type<tc>, window_params = [{transform_indices = @transform_0, window_bounds = array<i64: 1, 16, 16, 8>}, {transform_indices = @transform_1, window_bounds = array<i64: 1, 1, 16, 8>}, {transform_indices = @transform_2, window_bounds = array<i64: 1, 1, 16, 8>}, {pipeline_mode = #tpu.pipeline_mode<synchronous>, transform_indices = @transform_3, window_bounds = array<i64: 72, 128>}, {transform_indices = @transform_4, window_bounds = array<i64: 1, 16, 16, 128>}, {transform_indices = @transform_5, window_bounds = array<i64: 1, 1, 128>}, {transform_indices = @transform_6, window_bounds = array<i64: 1, 1, 128>}]} {
    %cst = arith.constant 0.000000e+00 : bf16
    %0 = vector.broadcast %cst : bf16 to vector<18x1x8xbf16>
    %c0 = arith.constant 0 : index
    %c0_0 = arith.constant 0 : index
    %c0_1 = arith.constant 0 : index
    %1 = vector.load %arg9[%c0, %c0_0, %c0_1] : memref<18x18x8xbf16, #tpu.memory_space<vmem>>, vector<18x1x8xbf16>
    tpu.vector_store %arg9[%c0, %c0_0, %c0_1], %0 {strides = array<i32>} : memref<18x18x8xbf16, #tpu.memory_space<vmem>>, vector<18x1x8xbf16>,
    %c0_2 = arith.constant 0 : index
    %c17 = arith.constant 17 : index
    %c0_3 = arith.constant 0 : index
    %2 = vector.load %arg9[%c0_2, %c17, %c0_3] : memref<18x18x8xbf16, #tpu.memory_space<vmem>>, vector<18x1x8xbf16>
    tpu.vector_store %arg9[%c0_2, %c17, %c0_3], %0 {strides = array<i32>} : memref<18x18x8xbf16, #tpu.memory_space<vmem>>, vector<18x1x8xbf16>,
    %c0_4 = arith.constant 0 : index
    %c0_5 = arith.constant 0 : index
    %c0_6 = arith.constant 0 : index
    %c0_7 = arith.constant 0 : index
    %3 = vector.load %arg2[%c0_4, %c0_5, %c0_6, %c0_7] : memref<1x16x16x8xbf16, #tpu.memory_space<vmem>>, vector<1x16x16x8xbf16>
    %4 = vector.shape_cast %3 : vector<1x16x16x8xbf16> to vector<16x16x8xbf16>
    %c1 = arith.constant 1 : index
    %c1_8 = arith.constant 1 : index
    %c0_9 = arith.constant 0 : index
    %5 = vector.load %arg9[%c1, %c1_8, %c0_9] : memref<18x18x8xbf16, #tpu.memory_space<vmem>>, vector<16x16x8xbf16>
    tpu.vector_store %arg9[%c1, %c1_8, %c0_9], %4 {strides = array<i32>} : memref<18x18x8xbf16, #tpu.memory_space<vmem>>, vector<16x16x8xbf16>,
    %cst_10 = arith.constant 0.000000e+00 : bf16
    %6 = vector.broadcast %cst_10 : bf16 to vector<1x16x8xbf16>
    %c0_i32 = arith.constant 0 : i32
    %7 = arith.cmpi eq, %arg1, %c0_i32 : i32
    %8 = arith.extui %7 : i1 to i32
    %c0_i32_11 = arith.constant 0 : i32
    %9 = arith.cmpi ne, %8, %c0_i32_11 : i32
    scf.if %9 {
      %c0_81 = arith.constant 0 : index
      %c1_82 = arith.constant 1 : index
      %c0_83 = arith.constant 0 : index
      %51 = vector.load %arg9[%c0_81, %c1_82, %c0_83] : memref<18x18x8xbf16, #tpu.memory_space<vmem>>, vector<1x16x8xbf16>
      tpu.vector_store %arg9[%c0_81, %c1_82, %c0_83], %6 {strides = array<i32>} : memref<18x18x8xbf16, #tpu.memory_space<vmem>>, vector<1x16x8xbf16>,
    } else {
    }
    %c0_i32_12 = arith.constant 0 : i32
    %10 = arith.cmpi sgt, %arg1, %c0_i32_12 : i32
    %11 = arith.extui %10 : i1 to i32
    %c0_i32_13 = arith.constant 0 : i32
    %12 = arith.cmpi ne, %11, %c0_i32_13 : i32
    scf.if %12 {
      %c0_81 = arith.constant 0 : index
      %c0_82 = arith.constant 0 : index
      %c0_83 = arith.constant 0 : index
      %c0_84 = arith.constant 0 : index
      %51 = vector.load %arg3[%c0_81, %c0_82, %c0_83, %c0_84] : memref<1x1x16x8xbf16, #tpu.memory_space<vmem>>, vector<1x1x16x8xbf16>
      %52 = vector.shape_cast %51 : vector<1x1x16x8xbf16> to vector<1x16x8xbf16>
      %c0_85 = arith.constant 0 : index
      %c1_86 = arith.constant 1 : index
      %c0_87 = arith.constant 0 : index
      %53 = vector.load %arg9[%c0_85, %c1_86, %c0_87] : memref<18x18x8xbf16, #tpu.memory_space<vmem>>, vector<1x16x8xbf16>
      tpu.vector_store %arg9[%c0_85, %c1_86, %c0_87], %52 {strides = array<i32>} : memref<18x18x8xbf16, #tpu.memory_space<vmem>>, vector<1x16x8xbf16>,
    } else {
    }
    %c0_i32_14 = arith.constant 0 : i32
    %13 = arith.cmpi eq, %arg1, %c0_i32_14 : i32
    %14 = arith.extui %13 : i1 to i32
    %c0_i32_15 = arith.constant 0 : i32
    %15 = arith.cmpi ne, %14, %c0_i32_15 : i32
    scf.if %15 {
      %c17_81 = arith.constant 17 : index
      %c1_82 = arith.constant 1 : index
      %c0_83 = arith.constant 0 : index
      %51 = vector.load %arg9[%c17_81, %c1_82, %c0_83] : memref<18x18x8xbf16, #tpu.memory_space<vmem>>, vector<1x16x8xbf16>
      tpu.vector_store %arg9[%c17_81, %c1_82, %c0_83], %6 {strides = array<i32>} : memref<18x18x8xbf16, #tpu.memory_space<vmem>>, vector<1x16x8xbf16>,
    } else {
    }
    %c0_i32_16 = arith.constant 0 : i32
    %16 = arith.cmpi slt, %arg1, %c0_i32_16 : i32
    %17 = arith.extui %16 : i1 to i32
    %c0_i32_17 = arith.constant 0 : i32
    %18 = arith.cmpi ne, %17, %c0_i32_17 : i32
    scf.if %18 {
      %c0_81 = arith.constant 0 : index
      %c0_82 = arith.constant 0 : index
      %c0_83 = arith.constant 0 : index
      %c0_84 = arith.constant 0 : index
      %51 = vector.load %arg4[%c0_81, %c0_82, %c0_83, %c0_84] : memref<1x1x16x8xbf16, #tpu.memory_space<vmem>>, vector<1x1x16x8xbf16>
      %52 = vector.shape_cast %51 : vector<1x1x16x8xbf16> to vector<1x16x8xbf16>
      %c17_85 = arith.constant 17 : index
      %c1_86 = arith.constant 1 : index
      %c0_87 = arith.constant 0 : index
      %53 = vector.load %arg9[%c17_85, %c1_86, %c0_87] : memref<18x18x8xbf16, #tpu.memory_space<vmem>>, vector<1x16x8xbf16>
      tpu.vector_store %arg9[%c17_85, %c1_86, %c0_87], %52 {strides = array<i32>} : memref<18x18x8xbf16, #tpu.memory_space<vmem>>, vector<1x16x8xbf16>,
    } else {
    }
    %c0_18 = arith.constant 0 : index
    %c0_19 = arith.constant 0 : index
    %c0_20 = arith.constant 0 : index
    %19 = vector.load %arg9[%c0_18, %c0_19, %c0_20] : memref<18x18x8xbf16, #tpu.memory_space<vmem>>, vector<16x16x8xbf16>
    %c0_21 = arith.constant 0 : index
    %c0_22 = arith.constant 0 : index
    %c0_23 = arith.constant 0 : index
    %20 = vector.load %arg10[%c0_21, %c0_22, %c0_23] : memref<16x16x72xbf16, #tpu.memory_space<vmem>>, vector<16x16x8xbf16>
    tpu.vector_store %arg10[%c0_21, %c0_22, %c0_23], %19 {strides = array<i32>} : memref<16x16x72xbf16, #tpu.memory_space<vmem>>, vector<16x16x8xbf16>,
    %c0_24 = arith.constant 0 : index
    %c1_25 = arith.constant 1 : index
    %c0_26 = arith.constant 0 : index
    %21 = vector.load %arg9[%c0_24, %c1_25, %c0_26] : memref<18x18x8xbf16, #tpu.memory_space<vmem>>, vector<16x16x8xbf16>
    %c0_27 = arith.constant 0 : index
    %c0_28 = arith.constant 0 : index
    %c8 = arith.constant 8 : index
    %22 = vector.load %arg10[%c0_27, %c0_28, %c8] : memref<16x16x72xbf16, #tpu.memory_space<vmem>>, vector<16x16x8xbf16>
    tpu.vector_store %arg10[%c0_27, %c0_28, %c8], %21 {strides = array<i32>} : memref<16x16x72xbf16, #tpu.memory_space<vmem>>, vector<16x16x8xbf16>,
    %c0_29 = arith.constant 0 : index
    %c2 = arith.constant 2 : index
    %c0_30 = arith.constant 0 : index
    %23 = vector.load %arg9[%c0_29, %c2, %c0_30] : memref<18x18x8xbf16, #tpu.memory_space<vmem>>, vector<16x16x8xbf16>
    %c0_31 = arith.constant 0 : index
    %c0_32 = arith.constant 0 : index
    %c16 = arith.constant 16 : index
    %24 = vector.load %arg10[%c0_31, %c0_32, %c16] : memref<16x16x72xbf16, #tpu.memory_space<vmem>>, vector<16x16x8xbf16>
    tpu.vector_store %arg10[%c0_31, %c0_32, %c16], %23 {strides = array<i32>} : memref<16x16x72xbf16, #tpu.memory_space<vmem>>, vector<16x16x8xbf16>,
    %c1_33 = arith.constant 1 : index
    %c0_34 = arith.constant 0 : index
    %c0_35 = arith.constant 0 : index
    %25 = vector.load %arg9[%c1_33, %c0_34, %c0_35] : memref<18x18x8xbf16, #tpu.memory_space<vmem>>, vector<16x16x8xbf16>
    %c0_36 = arith.constant 0 : index
    %c0_37 = arith.constant 0 : index
    %c24 = arith.constant 24 : index
    %26 = vector.load %arg10[%c0_36, %c0_37, %c24] : memref<16x16x72xbf16, #tpu.memory_space<vmem>>, vector<16x16x8xbf16>
    tpu.vector_store %arg10[%c0_36, %c0_37, %c24], %25 {strides = array<i32>} : memref<16x16x72xbf16, #tpu.memory_space<vmem>>, vector<16x16x8xbf16>,
    %c1_38 = arith.constant 1 : index
    %c1_39 = arith.constant 1 : index
    %c0_40 = arith.constant 0 : index
    %27 = vector.load %arg9[%c1_38, %c1_39, %c0_40] : memref<18x18x8xbf16, #tpu.memory_space<vmem>>, vector<16x16x8xbf16>
    %c0_41 = arith.constant 0 : index
    %c0_42 = arith.constant 0 : index
    %c32 = arith.constant 32 : index
    %28 = vector.load %arg10[%c0_41, %c0_42, %c32] : memref<16x16x72xbf16, #tpu.memory_space<vmem>>, vector<16x16x8xbf16>
    tpu.vector_store %arg10[%c0_41, %c0_42, %c32], %27 {strides = array<i32>} : memref<16x16x72xbf16, #tpu.memory_space<vmem>>, vector<16x16x8xbf16>,
    %c1_43 = arith.constant 1 : index
    %c2_44 = arith.constant 2 : index
    %c0_45 = arith.constant 0 : index
    %29 = vector.load %arg9[%c1_43, %c2_44, %c0_45] : memref<18x18x8xbf16, #tpu.memory_space<vmem>>, vector<16x16x8xbf16>
    %c0_46 = arith.constant 0 : index
    %c0_47 = arith.constant 0 : index
    %c40 = arith.constant 40 : index
    %30 = vector.load %arg10[%c0_46, %c0_47, %c40] : memref<16x16x72xbf16, #tpu.memory_space<vmem>>, vector<16x16x8xbf16>
    tpu.vector_store %arg10[%c0_46, %c0_47, %c40], %29 {strides = array<i32>} : memref<16x16x72xbf16, #tpu.memory_space<vmem>>, vector<16x16x8xbf16>,
    %c2_48 = arith.constant 2 : index
    %c0_49 = arith.constant 0 : index
    %c0_50 = arith.constant 0 : index
    %31 = vector.load %arg9[%c2_48, %c0_49, %c0_50] : memref<18x18x8xbf16, #tpu.memory_space<vmem>>, vector<16x16x8xbf16>
    %c0_51 = arith.constant 0 : index
    %c0_52 = arith.constant 0 : index
    %c48 = arith.constant 48 : index
    %32 = vector.load %arg10[%c0_51, %c0_52, %c48] : memref<16x16x72xbf16, #tpu.memory_space<vmem>>, vector<16x16x8xbf16>
    tpu.vector_store %arg10[%c0_51, %c0_52, %c48], %31 {strides = array<i32>} : memref<16x16x72xbf16, #tpu.memory_space<vmem>>, vector<16x16x8xbf16>,
    %c2_53 = arith.constant 2 : index
    %c1_54 = arith.constant 1 : index
    %c0_55 = arith.constant 0 : index
    %33 = vector.load %arg9[%c2_53, %c1_54, %c0_55] : memref<18x18x8xbf16, #tpu.memory_space<vmem>>, vector<16x16x8xbf16>
    %c0_56 = arith.constant 0 : index
    %c0_57 = arith.constant 0 : index
    %c56 = arith.constant 56 : index
    %34 = vector.load %arg10[%c0_56, %c0_57, %c56] : memref<16x16x72xbf16, #tpu.memory_space<vmem>>, vector<16x16x8xbf16>
    tpu.vector_store %arg10[%c0_56, %c0_57, %c56], %33 {strides = array<i32>} : memref<16x16x72xbf16, #tpu.memory_space<vmem>>, vector<16x16x8xbf16>,
    %c2_58 = arith.constant 2 : index
    %c2_59 = arith.constant 2 : index
    %c0_60 = arith.constant 0 : index
    %35 = vector.load %arg9[%c2_58, %c2_59, %c0_60] : memref<18x18x8xbf16, #tpu.memory_space<vmem>>, vector<16x16x8xbf16>
    %c0_61 = arith.constant 0 : index
    %c0_62 = arith.constant 0 : index
    %c64 = arith.constant 64 : index
    %36 = vector.load %arg10[%c0_61, %c0_62, %c64] : memref<16x16x72xbf16, #tpu.memory_space<vmem>>, vector<16x16x8xbf16>
    tpu.vector_store %arg10[%c0_61, %c0_62, %c64], %35 {strides = array<i32>} : memref<16x16x72xbf16, #tpu.memory_space<vmem>>, vector<16x16x8xbf16>,
    %c0_63 = arith.constant 0 : index
    %c0_64 = arith.constant 0 : index
    %c0_65 = arith.constant 0 : index
    %37 = vector.load %arg10[%c0_63, %c0_64, %c0_65] : memref<16x16x72xbf16, #tpu.memory_space<vmem>>, vector<16x16x72xbf16>
    %38 = vector.shape_cast %37 : vector<16x16x72xbf16> to vector<256x72xbf16>
    %c0_66 = arith.constant 0 : index
    %c0_67 = arith.constant 0 : index
    %39 = vector.load %arg5[%c0_66, %c0_67] : memref<72x128xbf16, #tpu.memory_space<vmem>>, vector<72x128xbf16>
    %cst_68 = arith.constant dense<0.000000e+00> : vector<256x128xf32>
    %40 = tpu.matmul %38, %39, %cst_68 {dimension_numbers = #tpu.dot_dimension_numbers<[1], [0], [0], [1], [0, 0, 1, 1], [], []>} : vector<256x72xbf16>, vector<72x128xbf16>, vector<256x128xf32> -> vector<256x128xf32>
    %41 = vector.shape_cast %40 : vector<256x128xf32> to vector<1x16x16x128xf32>
    %42 = arith.truncf %41 : vector<1x16x16x128xf32> to vector<1x16x16x128xbf16>
    %c0_69 = arith.constant 0 : index
    %c0_70 = arith.constant 0 : index
    %c0_71 = arith.constant 0 : index
    %c0_72 = arith.constant 0 : index
    %43 = vector.load %arg6[%c0_69, %c0_70, %c0_71, %c0_72] : memref<1x16x16x128xbf16, #tpu.memory_space<vmem>>, vector<1x16x16x128xbf16>
    tpu.vector_store %arg6[%c0_69, %c0_70, %c0_71, %c0_72], %42 {strides = array<i32>} : memref<1x16x16x128xbf16, #tpu.memory_space<vmem>>, vector<1x16x16x128xbf16>,
    %cst_73 = arith.constant dense<0.000000e+00> : vector<128xf32>
    %44 = vector.multi_reduction <add>, %40, %cst_73 [0] : vector<256x128xf32> to vector<128xf32>
    %45 = vector.shape_cast %44 : vector<128xf32> to vector<1x1x128xf32>
    %c0_74 = arith.constant 0 : index
    %c0_75 = arith.constant 0 : index
    %c0_76 = arith.constant 0 : index
    %46 = vector.load %arg7[%c0_74, %c0_75, %c0_76] : memref<1x1x128xf32, #tpu.memory_space<vmem>>, vector<1x1x128xf32>
    tpu.vector_store %arg7[%c0_74, %c0_75, %c0_76], %45 {strides = array<i32>} : memref<1x1x128xf32, #tpu.memory_space<vmem>>, vector<1x1x128xf32>,
    %47 = arith.mulf %40, %40 : vector<256x128xf32>
    %cst_77 = arith.constant dense<0.000000e+00> : vector<128xf32>
    %48 = vector.multi_reduction <add>, %47, %cst_77 [0] : vector<256x128xf32> to vector<128xf32>
    %49 = vector.shape_cast %48 : vector<128xf32> to vector<1x1x128xf32>
    %c0_78 = arith.constant 0 : index
    %c0_79 = arith.constant 0 : index
    %c0_80 = arith.constant 0 : index
    %50 = vector.load %arg8[%c0_78, %c0_79, %c0_80] : memref<1x1x128xf32, #tpu.memory_space<vmem>>, vector<1x1x128xf32>
    tpu.vector_store %arg8[%c0_78, %c0_79, %c0_80], %49 {strides = array<i32>} : memref<1x1x128xf32, #tpu.memory_space<vmem>>, vector<1x1x128xf32>,
    return
  }
  func.func @transform_0(%arg0: i32, %arg1: i32) -> (i32, i32, i32, i32) {
    %c0_i32 = arith.constant 0 : i32
    %c0_i32_0 = arith.constant 0 : i32
    %c0_i32_1 = arith.constant 0 : i32
    return %arg0, %arg1, %c0_i32, %c0_i32_0 : i32, i32, i32, i32
  }
  func.func @transform_1(%arg0: i32, %arg1: i32) -> (i32, i32, i32, i32) {
    %c16_i32 = arith.constant 16 : i32
    %0 = arith.muli %arg1, %c16_i32 : i32
    %c1_i32 = arith.constant 1 : i32
    %1 = arith.subi %0, %c1_i32 : i32
    %c0_i32 = arith.constant 0 : i32
    %2 = arith.maxsi %1, %c0_i32 : i32
    %c0_i32_0 = arith.constant 0 : i32
    %c0_i32_1 = arith.constant 0 : i32
    %c0_i32_2 = arith.constant 0 : i32
    return %arg0, %2, %c0_i32_0, %c0_i32_1 : i32, i32, i32, i32
  }
  func.func @transform_2(%arg0: i32, %arg1: i32) -> (i32, i32, i32, i32) {
    %c1_i32 = arith.constant 1 : i32
    %0 = arith.addi %arg1, %c1_i32 : i32
    %c16_i32 = arith.constant 16 : i32
    %1 = arith.muli %0, %c16_i32 : i32
    %c15_i32 = arith.constant 15 : i32
    %2 = arith.minsi %1, %c15_i32 : i32
    %c0_i32 = arith.constant 0 : i32
    %c0_i32_0 = arith.constant 0 : i32
    %c0_i32_1 = arith.constant 0 : i32
    return %arg0, %2, %c0_i32, %c0_i32_0 : i32, i32, i32, i32
  }
  func.func @transform_3(%arg0: i32, %arg1: i32) -> (i32, i32) {
    %c0_i32 = arith.constant 0 : i32
    %c0_i32_0 = arith.constant 0 : i32
    %c0_i32_1 = arith.constant 0 : i32
    return %c0_i32, %c0_i32_0 : i32, i32
  }
  func.func @transform_4(%arg0: i32, %arg1: i32) -> (i32, i32, i32, i32) {
    %c0_i32 = arith.constant 0 : i32
    %c0_i32_0 = arith.constant 0 : i32
    %c0_i32_1 = arith.constant 0 : i32
    return %arg0, %arg1, %c0_i32, %c0_i32_0 : i32, i32, i32, i32
  }
  func.func @transform_5(%arg0: i32, %arg1: i32) -> (i32, i32, i32) {
    %c0_i32 = arith.constant 0 : i32
    %c0_i32_0 = arith.constant 0 : i32
    return %arg0, %arg1, %c0_i32 : i32, i32, i32
  }
  func.func @transform_6(%arg0: i32, %arg1: i32) -> (i32, i32, i32) {
    %c0_i32 = arith.constant 0 : i32
    %c0_i32_0 = arith.constant 0 : i32
    return %arg0, %arg1, %c0_i32 : i32, i32, i32
  }
}

module attributes {stable_mosaic.version = 11 : i64} {
  func.func @kernel(%arg0: i32, %arg1: i32, %arg2: memref<1x16x16x128xbf16, #tpu.memory_space<vmem>>, %arg3: memref<1x1x16x128xbf16, #tpu.memory_space<vmem>>, %arg4: memref<1x1x16x128xbf16, #tpu.memory_space<vmem>>, %arg5: memref<1152x128xbf16, #tpu.memory_space<vmem>>, %arg6: memref<1x1x128xf32, #tpu.memory_space<vmem>>, %arg7: memref<1x1x128xf32, #tpu.memory_space<vmem>>, %arg8: memref<1x16x16x128xbf16, #tpu.memory_space<vmem>>, %arg9: memref<1x1x128xf32, #tpu.memory_space<vmem>>, %arg10: memref<1x1x128xf32, #tpu.memory_space<vmem>>, %arg11: memref<18x18x128xbf16, #tpu.memory_space<vmem>>, %arg12: memref<16x16x1152xbf16, #tpu.memory_space<vmem>>) attributes {dimension_semantics = [#tpu.dimension_semantics<parallel>, #tpu.dimension_semantics<parallel>], iteration_bounds = array<i64: 2, 1>, scalar_prefetch = 0 : i64, scratch_operands = 2 : i64, tpu.core_type = #tpu.core_type<tc>, window_params = [{transform_indices = @transform_0, window_bounds = array<i64: 1, 16, 16, 128>}, {transform_indices = @transform_1, window_bounds = array<i64: 1, 1, 16, 128>}, {transform_indices = @transform_2, window_bounds = array<i64: 1, 1, 16, 128>}, {pipeline_mode = #tpu.pipeline_mode<synchronous>, transform_indices = @transform_3, window_bounds = array<i64: 1152, 128>}, {pipeline_mode = #tpu.pipeline_mode<synchronous>, transform_indices = @transform_4, window_bounds = array<i64: 1, 1, 128>}, {pipeline_mode = #tpu.pipeline_mode<synchronous>, transform_indices = @transform_5, window_bounds = array<i64: 1, 1, 128>}, {transform_indices = @transform_6, window_bounds = array<i64: 1, 16, 16, 128>}, {transform_indices = @transform_7, window_bounds = array<i64: 1, 1, 128>}, {transform_indices = @transform_8, window_bounds = array<i64: 1, 1, 128>}]} {
    %cst = arith.constant 0.000000e+00 : bf16
    %0 = vector.broadcast %cst : bf16 to vector<18x1x128xbf16>
    %c0 = arith.constant 0 : index
    %c0_0 = arith.constant 0 : index
    %c0_1 = arith.constant 0 : index
    %1 = vector.load %arg11[%c0, %c0_0, %c0_1] : memref<18x18x128xbf16, #tpu.memory_space<vmem>>, vector<18x1x128xbf16>
    tpu.vector_store %arg11[%c0, %c0_0, %c0_1], %0 {strides = array<i32>} : memref<18x18x128xbf16, #tpu.memory_space<vmem>>, vector<18x1x128xbf16>,
    %c0_2 = arith.constant 0 : index
    %c17 = arith.constant 17 : index
    %c0_3 = arith.constant 0 : index
    %2 = vector.load %arg11[%c0_2, %c17, %c0_3] : memref<18x18x128xbf16, #tpu.memory_space<vmem>>, vector<18x1x128xbf16>
    tpu.vector_store %arg11[%c0_2, %c17, %c0_3], %0 {strides = array<i32>} : memref<18x18x128xbf16, #tpu.memory_space<vmem>>, vector<18x1x128xbf16>,
    %c0_4 = arith.constant 0 : index
    %c0_5 = arith.constant 0 : index
    %c0_6 = arith.constant 0 : index
    %c0_7 = arith.constant 0 : index
    %3 = vector.load %arg2[%c0_4, %c0_5, %c0_6, %c0_7] : memref<1x16x16x128xbf16, #tpu.memory_space<vmem>>, vector<1x16x16x128xbf16>
    %4 = vector.shape_cast %3 : vector<1x16x16x128xbf16> to vector<16x16x128xbf16>
    %5 = arith.extf %4 : vector<16x16x128xbf16> to vector<16x16x128xf32>
    %c0_8 = arith.constant 0 : index
    %c0_9 = arith.constant 0 : index
    %c0_10 = arith.constant 0 : index
    %6 = vector.load %arg6[%c0_8, %c0_9, %c0_10] : memref<1x1x128xf32, #tpu.memory_space<vmem>>, vector<1x1x128xf32>
    %7 = vector.broadcast %6 : vector<1x1x128xf32> to vector<16x16x128xf32>
    %8 = arith.mulf %5, %7 : vector<16x16x128xf32>
    %c0_11 = arith.constant 0 : index
    %c0_12 = arith.constant 0 : index
    %c0_13 = arith.constant 0 : index
    %9 = vector.load %arg7[%c0_11, %c0_12, %c0_13] : memref<1x1x128xf32, #tpu.memory_space<vmem>>, vector<1x1x128xf32>
    %10 = vector.broadcast %9 : vector<1x1x128xf32> to vector<16x16x128xf32>
    %11 = arith.addf %8, %10 : vector<16x16x128xf32>
    %cst_14 = arith.constant 0.000000e+00 : f32
    %12 = vector.broadcast %cst_14 : f32 to vector<16x16x128xf32>
    %13 = arith.maximumf %11, %12 : vector<16x16x128xf32>
    %14 = arith.truncf %13 : vector<16x16x128xf32> to vector<16x16x128xbf16>
    %c1 = arith.constant 1 : index
    %c1_15 = arith.constant 1 : index
    %c0_16 = arith.constant 0 : index
    %15 = vector.load %arg11[%c1, %c1_15, %c0_16] : memref<18x18x128xbf16, #tpu.memory_space<vmem>>, vector<16x16x128xbf16>
    tpu.vector_store %arg11[%c1, %c1_15, %c0_16], %14 {strides = array<i32>} : memref<18x18x128xbf16, #tpu.memory_space<vmem>>, vector<16x16x128xbf16>,
    %cst_17 = arith.constant 0.000000e+00 : bf16
    %16 = vector.broadcast %cst_17 : bf16 to vector<1x16x128xbf16>
    %c0_i32 = arith.constant 0 : i32
    %17 = arith.cmpi eq, %arg1, %c0_i32 : i32
    %18 = arith.extui %17 : i1 to i32
    %c0_i32_18 = arith.constant 0 : i32
    %19 = arith.cmpi ne, %18, %c0_i32_18 : i32
    scf.if %19 {
      %c0_88 = arith.constant 0 : index
      %c1_89 = arith.constant 1 : index
      %c0_90 = arith.constant 0 : index
      %61 = vector.load %arg11[%c0_88, %c1_89, %c0_90] : memref<18x18x128xbf16, #tpu.memory_space<vmem>>, vector<1x16x128xbf16>
      tpu.vector_store %arg11[%c0_88, %c1_89, %c0_90], %16 {strides = array<i32>} : memref<18x18x128xbf16, #tpu.memory_space<vmem>>, vector<1x16x128xbf16>,
    } else {
    }
    %c0_i32_19 = arith.constant 0 : i32
    %20 = arith.cmpi sgt, %arg1, %c0_i32_19 : i32
    %21 = arith.extui %20 : i1 to i32
    %c0_i32_20 = arith.constant 0 : i32
    %22 = arith.cmpi ne, %21, %c0_i32_20 : i32
    scf.if %22 {
      %c0_88 = arith.constant 0 : index
      %c0_89 = arith.constant 0 : index
      %c0_90 = arith.constant 0 : index
      %c0_91 = arith.constant 0 : index
      %61 = vector.load %arg3[%c0_88, %c0_89, %c0_90, %c0_91] : memref<1x1x16x128xbf16, #tpu.memory_space<vmem>>, vector<1x1x16x128xbf16>
      %62 = vector.shape_cast %61 : vector<1x1x16x128xbf16> to vector<1x16x128xbf16>
      %63 = arith.extf %62 : vector<1x16x128xbf16> to vector<1x16x128xf32>
      %c0_92 = arith.constant 0 : index
      %c0_93 = arith.constant 0 : index
      %c0_94 = arith.constant 0 : index
      %64 = vector.load %arg6[%c0_92, %c0_93, %c0_94] : memref<1x1x128xf32, #tpu.memory_space<vmem>>, vector<1x1x128xf32>
      %65 = vector.broadcast %64 : vector<1x1x128xf32> to vector<1x16x128xf32>
      %66 = arith.mulf %63, %65 : vector<1x16x128xf32>
      %c0_95 = arith.constant 0 : index
      %c0_96 = arith.constant 0 : index
      %c0_97 = arith.constant 0 : index
      %67 = vector.load %arg7[%c0_95, %c0_96, %c0_97] : memref<1x1x128xf32, #tpu.memory_space<vmem>>, vector<1x1x128xf32>
      %68 = vector.broadcast %67 : vector<1x1x128xf32> to vector<1x16x128xf32>
      %69 = arith.addf %66, %68 : vector<1x16x128xf32>
      %cst_98 = arith.constant 0.000000e+00 : f32
      %70 = vector.broadcast %cst_98 : f32 to vector<1x16x128xf32>
      %71 = arith.maximumf %69, %70 : vector<1x16x128xf32>
      %72 = arith.truncf %71 : vector<1x16x128xf32> to vector<1x16x128xbf16>
      %c0_99 = arith.constant 0 : index
      %c1_100 = arith.constant 1 : index
      %c0_101 = arith.constant 0 : index
      %73 = vector.load %arg11[%c0_99, %c1_100, %c0_101] : memref<18x18x128xbf16, #tpu.memory_space<vmem>>, vector<1x16x128xbf16>
      tpu.vector_store %arg11[%c0_99, %c1_100, %c0_101], %72 {strides = array<i32>} : memref<18x18x128xbf16, #tpu.memory_space<vmem>>, vector<1x16x128xbf16>,
    } else {
    }
    %c0_i32_21 = arith.constant 0 : i32
    %23 = arith.cmpi eq, %arg1, %c0_i32_21 : i32
    %24 = arith.extui %23 : i1 to i32
    %c0_i32_22 = arith.constant 0 : i32
    %25 = arith.cmpi ne, %24, %c0_i32_22 : i32
    scf.if %25 {
      %c17_88 = arith.constant 17 : index
      %c1_89 = arith.constant 1 : index
      %c0_90 = arith.constant 0 : index
      %61 = vector.load %arg11[%c17_88, %c1_89, %c0_90] : memref<18x18x128xbf16, #tpu.memory_space<vmem>>, vector<1x16x128xbf16>
      tpu.vector_store %arg11[%c17_88, %c1_89, %c0_90], %16 {strides = array<i32>} : memref<18x18x128xbf16, #tpu.memory_space<vmem>>, vector<1x16x128xbf16>,
    } else {
    }
    %c0_i32_23 = arith.constant 0 : i32
    %26 = arith.cmpi slt, %arg1, %c0_i32_23 : i32
    %27 = arith.extui %26 : i1 to i32
    %c0_i32_24 = arith.constant 0 : i32
    %28 = arith.cmpi ne, %27, %c0_i32_24 : i32
    scf.if %28 {
      %c0_88 = arith.constant 0 : index
      %c0_89 = arith.constant 0 : index
      %c0_90 = arith.constant 0 : index
      %c0_91 = arith.constant 0 : index
      %61 = vector.load %arg4[%c0_88, %c0_89, %c0_90, %c0_91] : memref<1x1x16x128xbf16, #tpu.memory_space<vmem>>, vector<1x1x16x128xbf16>
      %62 = vector.shape_cast %61 : vector<1x1x16x128xbf16> to vector<1x16x128xbf16>
      %63 = arith.extf %62 : vector<1x16x128xbf16> to vector<1x16x128xf32>
      %c0_92 = arith.constant 0 : index
      %c0_93 = arith.constant 0 : index
      %c0_94 = arith.constant 0 : index
      %64 = vector.load %arg6[%c0_92, %c0_93, %c0_94] : memref<1x1x128xf32, #tpu.memory_space<vmem>>, vector<1x1x128xf32>
      %65 = vector.broadcast %64 : vector<1x1x128xf32> to vector<1x16x128xf32>
      %66 = arith.mulf %63, %65 : vector<1x16x128xf32>
      %c0_95 = arith.constant 0 : index
      %c0_96 = arith.constant 0 : index
      %c0_97 = arith.constant 0 : index
      %67 = vector.load %arg7[%c0_95, %c0_96, %c0_97] : memref<1x1x128xf32, #tpu.memory_space<vmem>>, vector<1x1x128xf32>
      %68 = vector.broadcast %67 : vector<1x1x128xf32> to vector<1x16x128xf32>
      %69 = arith.addf %66, %68 : vector<1x16x128xf32>
      %cst_98 = arith.constant 0.000000e+00 : f32
      %70 = vector.broadcast %cst_98 : f32 to vector<1x16x128xf32>
      %71 = arith.maximumf %69, %70 : vector<1x16x128xf32>
      %72 = arith.truncf %71 : vector<1x16x128xf32> to vector<1x16x128xbf16>
      %c17_99 = arith.constant 17 : index
      %c1_100 = arith.constant 1 : index
      %c0_101 = arith.constant 0 : index
      %73 = vector.load %arg11[%c17_99, %c1_100, %c0_101] : memref<18x18x128xbf16, #tpu.memory_space<vmem>>, vector<1x16x128xbf16>
      tpu.vector_store %arg11[%c17_99, %c1_100, %c0_101], %72 {strides = array<i32>} : memref<18x18x128xbf16, #tpu.memory_space<vmem>>, vector<1x16x128xbf16>,
    } else {
    }
    %c0_25 = arith.constant 0 : index
    %c0_26 = arith.constant 0 : index
    %c0_27 = arith.constant 0 : index
    %29 = vector.load %arg11[%c0_25, %c0_26, %c0_27] : memref<18x18x128xbf16, #tpu.memory_space<vmem>>, vector<16x16x128xbf16>
    %c0_28 = arith.constant 0 : index
    %c0_29 = arith.constant 0 : index
    %c0_30 = arith.constant 0 : index
    %30 = vector.load %arg12[%c0_28, %c0_29, %c0_30] : memref<16x16x1152xbf16, #tpu.memory_space<vmem>>, vector<16x16x128xbf16>
    tpu.vector_store %arg12[%c0_28, %c0_29, %c0_30], %29 {strides = array<i32>} : memref<16x16x1152xbf16, #tpu.memory_space<vmem>>, vector<16x16x128xbf16>,
    %c0_31 = arith.constant 0 : index
    %c1_32 = arith.constant 1 : index
    %c0_33 = arith.constant 0 : index
    %31 = vector.load %arg11[%c0_31, %c1_32, %c0_33] : memref<18x18x128xbf16, #tpu.memory_space<vmem>>, vector<16x16x128xbf16>
    %c0_34 = arith.constant 0 : index
    %c0_35 = arith.constant 0 : index
    %c128 = arith.constant 128 : index
    %32 = vector.load %arg12[%c0_34, %c0_35, %c128] : memref<16x16x1152xbf16, #tpu.memory_space<vmem>>, vector<16x16x128xbf16>
    tpu.vector_store %arg12[%c0_34, %c0_35, %c128], %31 {strides = array<i32>} : memref<16x16x1152xbf16, #tpu.memory_space<vmem>>, vector<16x16x128xbf16>,
    %c0_36 = arith.constant 0 : index
    %c2 = arith.constant 2 : index
    %c0_37 = arith.constant 0 : index
    %33 = vector.load %arg11[%c0_36, %c2, %c0_37] : memref<18x18x128xbf16, #tpu.memory_space<vmem>>, vector<16x16x128xbf16>
    %c0_38 = arith.constant 0 : index
    %c0_39 = arith.constant 0 : index
    %c256 = arith.constant 256 : index
    %34 = vector.load %arg12[%c0_38, %c0_39, %c256] : memref<16x16x1152xbf16, #tpu.memory_space<vmem>>, vector<16x16x128xbf16>
    tpu.vector_store %arg12[%c0_38, %c0_39, %c256], %33 {strides = array<i32>} : memref<16x16x1152xbf16, #tpu.memory_space<vmem>>, vector<16x16x128xbf16>,
    %c1_40 = arith.constant 1 : index
    %c0_41 = arith.constant 0 : index
    %c0_42 = arith.constant 0 : index
    %35 = vector.load %arg11[%c1_40, %c0_41, %c0_42] : memref<18x18x128xbf16, #tpu.memory_space<vmem>>, vector<16x16x128xbf16>
    %c0_43 = arith.constant 0 : index
    %c0_44 = arith.constant 0 : index
    %c384 = arith.constant 384 : index
    %36 = vector.load %arg12[%c0_43, %c0_44, %c384] : memref<16x16x1152xbf16, #tpu.memory_space<vmem>>, vector<16x16x128xbf16>
    tpu.vector_store %arg12[%c0_43, %c0_44, %c384], %35 {strides = array<i32>} : memref<16x16x1152xbf16, #tpu.memory_space<vmem>>, vector<16x16x128xbf16>,
    %c1_45 = arith.constant 1 : index
    %c1_46 = arith.constant 1 : index
    %c0_47 = arith.constant 0 : index
    %37 = vector.load %arg11[%c1_45, %c1_46, %c0_47] : memref<18x18x128xbf16, #tpu.memory_space<vmem>>, vector<16x16x128xbf16>
    %c0_48 = arith.constant 0 : index
    %c0_49 = arith.constant 0 : index
    %c512 = arith.constant 512 : index
    %38 = vector.load %arg12[%c0_48, %c0_49, %c512] : memref<16x16x1152xbf16, #tpu.memory_space<vmem>>, vector<16x16x128xbf16>
    tpu.vector_store %arg12[%c0_48, %c0_49, %c512], %37 {strides = array<i32>} : memref<16x16x1152xbf16, #tpu.memory_space<vmem>>, vector<16x16x128xbf16>,
    %c1_50 = arith.constant 1 : index
    %c2_51 = arith.constant 2 : index
    %c0_52 = arith.constant 0 : index
    %39 = vector.load %arg11[%c1_50, %c2_51, %c0_52] : memref<18x18x128xbf16, #tpu.memory_space<vmem>>, vector<16x16x128xbf16>
    %c0_53 = arith.constant 0 : index
    %c0_54 = arith.constant 0 : index
    %c640 = arith.constant 640 : index
    %40 = vector.load %arg12[%c0_53, %c0_54, %c640] : memref<16x16x1152xbf16, #tpu.memory_space<vmem>>, vector<16x16x128xbf16>
    tpu.vector_store %arg12[%c0_53, %c0_54, %c640], %39 {strides = array<i32>} : memref<16x16x1152xbf16, #tpu.memory_space<vmem>>, vector<16x16x128xbf16>,
    %c2_55 = arith.constant 2 : index
    %c0_56 = arith.constant 0 : index
    %c0_57 = arith.constant 0 : index
    %41 = vector.load %arg11[%c2_55, %c0_56, %c0_57] : memref<18x18x128xbf16, #tpu.memory_space<vmem>>, vector<16x16x128xbf16>
    %c0_58 = arith.constant 0 : index
    %c0_59 = arith.constant 0 : index
    %c768 = arith.constant 768 : index
    %42 = vector.load %arg12[%c0_58, %c0_59, %c768] : memref<16x16x1152xbf16, #tpu.memory_space<vmem>>, vector<16x16x128xbf16>
    tpu.vector_store %arg12[%c0_58, %c0_59, %c768], %41 {strides = array<i32>} : memref<16x16x1152xbf16, #tpu.memory_space<vmem>>, vector<16x16x128xbf16>,
    %c2_60 = arith.constant 2 : index
    %c1_61 = arith.constant 1 : index
    %c0_62 = arith.constant 0 : index
    %43 = vector.load %arg11[%c2_60, %c1_61, %c0_62] : memref<18x18x128xbf16, #tpu.memory_space<vmem>>, vector<16x16x128xbf16>
    %c0_63 = arith.constant 0 : index
    %c0_64 = arith.constant 0 : index
    %c896 = arith.constant 896 : index
    %44 = vector.load %arg12[%c0_63, %c0_64, %c896] : memref<16x16x1152xbf16, #tpu.memory_space<vmem>>, vector<16x16x128xbf16>
    tpu.vector_store %arg12[%c0_63, %c0_64, %c896], %43 {strides = array<i32>} : memref<16x16x1152xbf16, #tpu.memory_space<vmem>>, vector<16x16x128xbf16>,
    %c2_65 = arith.constant 2 : index
    %c2_66 = arith.constant 2 : index
    %c0_67 = arith.constant 0 : index
    %45 = vector.load %arg11[%c2_65, %c2_66, %c0_67] : memref<18x18x128xbf16, #tpu.memory_space<vmem>>, vector<16x16x128xbf16>
    %c0_68 = arith.constant 0 : index
    %c0_69 = arith.constant 0 : index
    %c1024 = arith.constant 1024 : index
    %46 = vector.load %arg12[%c0_68, %c0_69, %c1024] : memref<16x16x1152xbf16, #tpu.memory_space<vmem>>, vector<16x16x128xbf16>
    tpu.vector_store %arg12[%c0_68, %c0_69, %c1024], %45 {strides = array<i32>} : memref<16x16x1152xbf16, #tpu.memory_space<vmem>>, vector<16x16x128xbf16>,
    %c0_70 = arith.constant 0 : index
    %c0_71 = arith.constant 0 : index
    %c0_72 = arith.constant 0 : index
    %47 = vector.load %arg12[%c0_70, %c0_71, %c0_72] : memref<16x16x1152xbf16, #tpu.memory_space<vmem>>, vector<16x16x1152xbf16>
    %48 = vector.shape_cast %47 : vector<16x16x1152xbf16> to vector<256x1152xbf16>
    %c0_73 = arith.constant 0 : index
    %c0_74 = arith.constant 0 : index
    %49 = vector.load %arg5[%c0_73, %c0_74] : memref<1152x128xbf16, #tpu.memory_space<vmem>>, vector<1152x128xbf16>
    %cst_75 = arith.constant dense<0.000000e+00> : vector<256x128xf32>
    %50 = tpu.matmul %48, %49, %cst_75 {dimension_numbers = #tpu.dot_dimension_numbers<[1], [0], [0], [1], [0, 0, 1, 1], [], []>} : vector<256x1152xbf16>, vector<1152x128xbf16>, vector<256x128xf32> -> vector<256x128xf32>
    %51 = vector.shape_cast %50 : vector<256x128xf32> to vector<1x16x16x128xf32>
    %52 = arith.truncf %51 : vector<1x16x16x128xf32> to vector<1x16x16x128xbf16>
    %c0_76 = arith.constant 0 : index
    %c0_77 = arith.constant 0 : index
    %c0_78 = arith.constant 0 : index
    %c0_79 = arith.constant 0 : index
    %53 = vector.load %arg8[%c0_76, %c0_77, %c0_78, %c0_79] : memref<1x16x16x128xbf16, #tpu.memory_space<vmem>>, vector<1x16x16x128xbf16>
    tpu.vector_store %arg8[%c0_76, %c0_77, %c0_78, %c0_79], %52 {strides = array<i32>} : memref<1x16x16x128xbf16, #tpu.memory_space<vmem>>, vector<1x16x16x128xbf16>,
    %cst_80 = arith.constant dense<0.000000e+00> : vector<128xf32>
    %54 = vector.multi_reduction <add>, %50, %cst_80 [0] : vector<256x128xf32> to vector<128xf32>
    %55 = vector.shape_cast %54 : vector<128xf32> to vector<1x1x128xf32>
    %c0_81 = arith.constant 0 : index
    %c0_82 = arith.constant 0 : index
    %c0_83 = arith.constant 0 : index
    %56 = vector.load %arg9[%c0_81, %c0_82, %c0_83] : memref<1x1x128xf32, #tpu.memory_space<vmem>>, vector<1x1x128xf32>
    tpu.vector_store %arg9[%c0_81, %c0_82, %c0_83], %55 {strides = array<i32>} : memref<1x1x128xf32, #tpu.memory_space<vmem>>, vector<1x1x128xf32>,
    %57 = arith.mulf %50, %50 : vector<256x128xf32>
    %cst_84 = arith.constant dense<0.000000e+00> : vector<128xf32>
    %58 = vector.multi_reduction <add>, %57, %cst_84 [0] : vector<256x128xf32> to vector<128xf32>
    %59 = vector.shape_cast %58 : vector<128xf32> to vector<1x1x128xf32>
    %c0_85 = arith.constant 0 : index
    %c0_86 = arith.constant 0 : index
    %c0_87 = arith.constant 0 : index
    %60 = vector.load %arg10[%c0_85, %c0_86, %c0_87] : memref<1x1x128xf32, #tpu.memory_space<vmem>>, vector<1x1x128xf32>
    tpu.vector_store %arg10[%c0_85, %c0_86, %c0_87], %59 {strides = array<i32>} : memref<1x1x128xf32, #tpu.memory_space<vmem>>, vector<1x1x128xf32>,
    return
  }
  func.func @transform_0(%arg0: i32, %arg1: i32) -> (i32, i32, i32, i32) {
    %c0_i32 = arith.constant 0 : i32
    %c0_i32_0 = arith.constant 0 : i32
    %c0_i32_1 = arith.constant 0 : i32
    return %arg0, %arg1, %c0_i32, %c0_i32_0 : i32, i32, i32, i32
  }
  func.func @transform_1(%arg0: i32, %arg1: i32) -> (i32, i32, i32, i32) {
    %c16_i32 = arith.constant 16 : i32
    %0 = arith.muli %arg1, %c16_i32 : i32
    %c1_i32 = arith.constant 1 : i32
    %1 = arith.subi %0, %c1_i32 : i32
    %c0_i32 = arith.constant 0 : i32
    %2 = arith.maxsi %1, %c0_i32 : i32
    %c0_i32_0 = arith.constant 0 : i32
    %c0_i32_1 = arith.constant 0 : i32
    %c0_i32_2 = arith.constant 0 : i32
    return %arg0, %2, %c0_i32_0, %c0_i32_1 : i32, i32, i32, i32
  }
  func.func @transform_2(%arg0: i32, %arg1: i32) -> (i32, i32, i32, i32) {
    %c1_i32 = arith.constant 1 : i32
    %0 = arith.addi %arg1, %c1_i32 : i32
    %c16_i32 = arith.constant 16 : i32
    %1 = arith.muli %0, %c16_i32 : i32
    %c15_i32 = arith.constant 15 : i32
    %2 = arith.minsi %1, %c15_i32 : i32
    %c0_i32 = arith.constant 0 : i32
    %c0_i32_0 = arith.constant 0 : i32
    %c0_i32_1 = arith.constant 0 : i32
    return %arg0, %2, %c0_i32, %c0_i32_0 : i32, i32, i32, i32
  }
  func.func @transform_3(%arg0: i32, %arg1: i32) -> (i32, i32) {
    %c0_i32 = arith.constant 0 : i32
    %c0_i32_0 = arith.constant 0 : i32
    %c0_i32_1 = arith.constant 0 : i32
    return %c0_i32, %c0_i32_0 : i32, i32
  }
  func.func @transform_4(%arg0: i32, %arg1: i32) -> (i32, i32, i32) {
    %c0_i32 = arith.constant 0 : i32
    %c0_i32_0 = arith.constant 0 : i32
    %c0_i32_1 = arith.constant 0 : i32
    %c0_i32_2 = arith.constant 0 : i32
    return %c0_i32, %c0_i32_0, %c0_i32_1 : i32, i32, i32
  }
  func.func @transform_5(%arg0: i32, %arg1: i32) -> (i32, i32, i32) {
    %c0_i32 = arith.constant 0 : i32
    %c0_i32_0 = arith.constant 0 : i32
    %c0_i32_1 = arith.constant 0 : i32
    %c0_i32_2 = arith.constant 0 : i32
    return %c0_i32, %c0_i32_0, %c0_i32_1 : i32, i32, i32
  }
  func.func @transform_6(%arg0: i32, %arg1: i32) -> (i32, i32, i32, i32) {
    %c0_i32 = arith.constant 0 : i32
    %c0_i32_0 = arith.constant 0 : i32
    %c0_i32_1 = arith.constant 0 : i32
    return %arg0, %arg1, %c0_i32, %c0_i32_0 : i32, i32, i32, i32
  }
  func.func @transform_7(%arg0: i32, %arg1: i32) -> (i32, i32, i32) {
    %c0_i32 = arith.constant 0 : i32
    %c0_i32_0 = arith.constant 0 : i32
    return %arg0, %arg1, %c0_i32 : i32, i32, i32
  }
  func.func @transform_8(%arg0: i32, %arg1: i32) -> (i32, i32, i32) {
    %c0_i32 = arith.constant 0 : i32
    %c0_i32_0 = arith.constant 0 : i32
    return %arg0, %arg1, %c0_i32 : i32, i32, i32
  }
}

module attributes {stable_mosaic.version = 11 : i64} {
  func.func @kernel(%arg0: i32, %arg1: i32, %arg2: memref<1x16x16x128xbf16, #tpu.memory_space<vmem>>, %arg3: memref<1x128xf32, #tpu.memory_space<vmem>>, %arg4: memref<1x128xf32, #tpu.memory_space<vmem>>, %arg5: memref<1x8x256xf32, #tpu.memory_space<vmem>>) attributes {dimension_semantics = [#tpu.dimension_semantics<parallel>, #tpu.dimension_semantics<parallel>], iteration_bounds = array<i64: 2, 1>, scalar_prefetch = 0 : i64, scratch_operands = 0 : i64, tpu.core_type = #tpu.core_type<tc>, window_params = [{transform_indices = @transform_0, window_bounds = array<i64: 1, 16, 16, 128>}, {pipeline_mode = #tpu.pipeline_mode<synchronous>, transform_indices = @transform_1, window_bounds = array<i64: 1, 128>}, {pipeline_mode = #tpu.pipeline_mode<synchronous>, transform_indices = @transform_2, window_bounds = array<i64: 1, 128>}, {transform_indices = @transform_3, window_bounds = array<i64: 1, 8, 256>}]} {
    %c0 = arith.constant 0 : index
    %c0_0 = arith.constant 0 : index
    %c0_1 = arith.constant 0 : index
    %c0_2 = arith.constant 0 : index
    %0 = vector.load %arg2[%c0, %c0_0, %c0_1, %c0_2] : memref<1x16x16x128xbf16, #tpu.memory_space<vmem>>, vector<1x16x16x128xbf16>
    %1 = vector.shape_cast %0 : vector<1x16x16x128xbf16> to vector<256x128xbf16>
    %2 = arith.extf %1 : vector<256x128xbf16> to vector<256x128xf32>
    %c0_3 = arith.constant 0 : index
    %c0_4 = arith.constant 0 : index
    %3 = vector.load %arg3[%c0_3, %c0_4] : memref<1x128xf32, #tpu.memory_space<vmem>>, vector<1x128xf32>
    %4 = vector.broadcast %3 : vector<1x128xf32> to vector<256x128xf32>
    %5 = arith.mulf %2, %4 : vector<256x128xf32>
    %c0_5 = arith.constant 0 : index
    %c0_6 = arith.constant 0 : index
    %6 = vector.load %arg4[%c0_5, %c0_6] : memref<1x128xf32, #tpu.memory_space<vmem>>, vector<1x128xf32>
    %7 = vector.broadcast %6 : vector<1x128xf32> to vector<256x128xf32>
    %8 = arith.addf %5, %7 : vector<256x128xf32>
    %cst = arith.constant 0.000000e+00 : f32
    %9 = vector.broadcast %cst : f32 to vector<256x128xf32>
    %10 = arith.maximumf %8, %9 : vector<256x128xf32>
    %11 = tpu.transpose %10, [1, 0] : vector<256x128xf32> -> vector<128x256xf32>
    %12 = vector.extract_strided_slice %11 {offsets = [0, 0], sizes = [8, 256], strides = [1, 1]} : vector<128x256xf32> to vector<8x256xf32>
    %13 = vector.shape_cast %12 : vector<8x256xf32> to vector<1x8x256xf32>
    %c0_7 = arith.constant 0 : index
    %c0_8 = arith.constant 0 : index
    %c0_9 = arith.constant 0 : index
    %14 = vector.load %arg5[%c0_7, %c0_8, %c0_9] : memref<1x8x256xf32, #tpu.memory_space<vmem>>, vector<1x8x256xf32>
    tpu.vector_store %arg5[%c0_7, %c0_8, %c0_9], %13 {strides = array<i32>} : memref<1x8x256xf32, #tpu.memory_space<vmem>>, vector<1x8x256xf32>,
    return
  }
  func.func @transform_0(%arg0: i32, %arg1: i32) -> (i32, i32, i32, i32) {
    %c0_i32 = arith.constant 0 : i32
    %c0_i32_0 = arith.constant 0 : i32
    %c0_i32_1 = arith.constant 0 : i32
    return %arg0, %arg1, %c0_i32, %c0_i32_0 : i32, i32, i32, i32
  }
  func.func @transform_1(%arg0: i32, %arg1: i32) -> (i32, i32) {
    %c0_i32 = arith.constant 0 : i32
    %c0_i32_0 = arith.constant 0 : i32
    %c0_i32_1 = arith.constant 0 : i32
    return %c0_i32, %c0_i32_0 : i32, i32
  }
  func.func @transform_2(%arg0: i32, %arg1: i32) -> (i32, i32) {
    %c0_i32 = arith.constant 0 : i32
    %c0_i32_0 = arith.constant 0 : i32
    %c0_i32_1 = arith.constant 0 : i32
    return %c0_i32, %c0_i32_0 : i32, i32
  }
  func.func @transform_3(%arg0: i32, %arg1: i32) -> (i32, i32, i32) {
    %c0_i32 = arith.constant 0 : i32
    %c0_i32_0 = arith.constant 0 : i32
    return %arg0, %c0_i32, %arg1 : i32, i32, i32
  }
}

</mosaic_0001>

<llo_original>
// kernel: double_conv.5
$region0: #{double_conv.5}
  #allocation0 [shape = 'u32[]', space=smem, size = 0x4, offset = 0x4, fixed_abs, tag = 'smem constant byte address 0x4 - core index']
  #allocation1 [shape = 'u32[72,128]{1,0:T(1,128)}', space=vmem, size = 0x9000, scoped, tag = 'internal scratch']
  %s0 = inlined_call_operand.vmem [shape: bf16[2,16,16,128], index: 0, kind: input, shape index: {}]
  %s1 = inlined_call_operand.vmem [shape: f32[1,128], index: 1, kind: input, shape index: {}]
  %s2 = inlined_call_operand.vmem [shape: f32[1,128], index: 2, kind: input, shape index: {}]
  %s3 = inlined_call_operand.vmem [shape: f32[2,8,256], index: 3, kind: output, shape index: {}]
  %s4 = sld [smem:[#allocation0]]
  $region45: #{double_conv.5} parent=0
    _
  %s6 = ssub.s32 1, %s4
  %s7 = scalar_select 0, %s6, %s4
  loop: start=0, step=1, limit=4
  $region2: #{double_conv.5} parent=0 // loop_pre_header
    _
  $region3: #{double_conv.5} parent=0 // loop_header
    %s9 = sphi 0, %s13
    %p10 = scmp.ge.s32.totalorder %s9, 4
    %s16 = sphi 0, %s28
    %s17 = sphi 0, %s24
    %s18 = sphi 0, %s16
    %s19 = sphi 0, %s17
    %s20 = sphi 0, %s18
    %s21 = sphi 0, %s19
    %s33 = sphi 0, %s35
    %s36 = sphi 0, %s33
    %s37 = sphi 0, %s36
    %s53 = sphi 0, %s37
    %s57 = sphi 0, %s57
    %s59 = sphi 0, %s57
    %s60 = sphi 0, %s59
    %s74 = sphi 0, %s60
    %s78 = sphi 0, %s78
    %s80 = sphi 0, %s78
    %s81 = sphi 0, %s80
    %s95 = sphi 0, %s81
    %s103 = sphi 0, %s105
    %s106 = sphi 0, %s103
    %s107 = sphi 0, %s106
    %s123 = sphi 0, %s107
  $region4: #{double_conv.5} parent=0 // loop_header_branch
    %12 = sbr.rel (%p10) target = $region8
  $region5: #{double_conv.5} parent=0 // loop_body
    %s14 = ssub.s32 %s9, 1
    %s15 = ssub.s32 %s9, 2
    %s22 = sadd.s32 1, %s17
    %p23 = scmp.ge.s32.totalorder %s22, 1
    %s24 = scalar_select %p23, 0, %s22
    %s25 = sadd.s32 1, %s16
    %s26 = scalar_select %p23, %s25, %s16
    %p27 = scmp.ge.s32.totalorder %s26, 2
    %s28 = scalar_select %p27, 0, %s26
    %s29 = ssub.s32 %s16, %s28
    %s30 = ssub.s32 %s17, %s24
    %s31 = sor.u32 %s29, %s30
    %p32 = scmp.eq.s32.totalorder %s31, 0
    %s34 = sadd.s32 %s33, 1
    %s35 = scalar_select %p32, %s33, %s34
    %p38 = pneg %p32
    %p39 = scmp.eq.s32.totalorder %s9, 1
    %p40 = por %p38, %p39
    %p41 = scmp.ne.s32.totalorder %s33, %s36
    %p42 = scmp.eq.s32.totalorder %s9, 0
    %p43 = por %p41, %p42
    %p44 = scmp.ne.s32.totalorder %s33, %s36
    %p45 = scmp.eq.s32.totalorder %s14, 1
    %p46 = por %p44, %p45
    %p47 = scmp.ne.s32.totalorder %s36, %s37
    %p48 = scmp.eq.s32.totalorder %s14, 0
    %p49 = por %p47, %p48
    %p50 = scmp.ne.s32.totalorder %s36, %s37
    %p51 = scmp.eq.s32.totalorder %s15, 1
    %p52 = por %p50, %p51
    %p54 = scmp.ne.s32.totalorder %s37, %s53
    %p55 = scmp.eq.s32.totalorder %s15, 0
    %p56 = por %p54, %p55
    %s58 = sadd.s32 %s57, 1
    %p61 = scmp.eq.s32.totalorder %s9, 1
    %p62 = scmp.ne.s32.totalorder %s57, %s59
    %p63 = scmp.eq.s32.totalorder %s9, 0
    %p64 = por %p62, %p63
    %p65 = scmp.ne.s32.totalorder %s57, %s59
    %p66 = scmp.eq.s32.totalorder %s14, 1
    %p67 = por %p65, %p66
    %p68 = scmp.ne.s32.totalorder %s59, %s60
    %p69 = scmp.eq.s32.totalorder %s14, 0
    %p70 = por %p68, %p69
    %p71 = scmp.ne.s32.totalorder %s59, %s60
    %p72 = scmp.eq.s32.totalorder %s15, 1
    %p73 = por %p71, %p72
    %p75 = scmp.ne.s32.totalorder %s60, %s74
    %p76 = scmp.eq.s32.totalorder %s15, 0
    %p77 = por %p75, %p76
    %s79 = sadd.s32 %s78, 1
    %p82 = scmp.eq.s32.totalorder %s9, 1
    %p83 = scmp.ne.s32.totalorder %s78, %s80
    %p84 = scmp.eq.s32.totalorder %s9, 0
    %p85 = por %p83, %p84
    %p86 = scmp.ne.s32.totalorder %s78, %s80
    %p87 = scmp.eq.s32.totalorder %s14, 1
    %p88 = por %p86, %p87
    %p89 = scmp.ne.s32.totalorder %s80, %s81
    %p90 = scmp.eq.s32.totalorder %s14, 0
    %p91 = por %p89, %p90
    %p92 = scmp.ne.s32.totalorder %s80, %s81
    %p93 = scmp.eq.s32.totalorder %s15, 1
    %p94 = por %p92, %p93
    %p96 = scmp.ne.s32.totalorder %s81, %s95
    %p97 = scmp.eq.s32.totalorder %s15, 0
    %p98 = por %p96, %p97
    %s99 = ssub.s32 %s16, %s28
    %s100 = ssub.s32 %s17, %s24
    %s101 = sor.u32 %s99, %s100
    %p102 = scmp.eq.s32.totalorder %s101, 0
    %s104 = sadd.s32 %s103, 1
    %s105 = scalar_select %p102, %s103, %s104
    %p108 = pneg %p102
    %p109 = scmp.eq.s32.totalorder %s9, 1
    %p110 = por %p108, %p109
    %p111 = scmp.ne.s32.totalorder %s103, %s106
    %p112 = scmp.eq.s32.totalorder %s9, 0
    %p113 = por %p111, %p112
    %p114 = scmp.ne.s32.totalorder %s103, %s106
    %p115 = scmp.eq.s32.totalorder %s14, 1
    %p116 = por %p114, %p115
    %p117 = scmp.ne.s32.totalorder %s106, %s107
    %p118 = scmp.eq.s32.totalorder %s14, 0
    %p119 = por %p117, %p118
    %p120 = scmp.ne.s32.totalorder %s106, %s107
    %p121 = scmp.eq.s32.totalorder %s15, 1
    %p122 = por %p120, %p121
    %p124 = scmp.ne.s32.totalorder %s107, %s123
    %p125 = scmp.eq.s32.totalorder %s15, 0
    %p126 = por %p124, %p125
    %p127 = scmp.le.s32.totalorder 1, %s9
    %p128 = scmp.lt.s32.totalorder %s9, 3
    %p129 = pnand %p127, %p128
    %p130 = pneg %p129
    // Predicated region
    $region9: #{double_conv.5} parent=5 // pred_check
      _
    $region10: #{double_conv.5} parent=5 // pred_check_branch
      %132 = sbr.rel (%p129) target = $region12
    $region11: #{double_conv.5} parent=5 // pred_region
      %s133 = ssub.s32 %s9, 1
      // Predicated region
      $region13: #{double_conv.5} parent=11 // pred_check
        %p134 = pneg %p70
      $region14: #{double_conv.5} parent=11 // pred_check_branch
        %136 = sbr.rel (%p134) target = $region16
      $region15: #{double_conv.5} parent=11 // pred_region
        _
      $region16: #{double_conv.5} parent=11 // pred_fallthru
        _
      // Predicated region
      $region17: #{double_conv.5} parent=11 // pred_check
        %p137 = pneg %p91
      $region18: #{double_conv.5} parent=11 // pred_check_branch
        %139 = sbr.rel (%p137) target = $region20
      $region19: #{double_conv.5} parent=11 // pred_region
        _
      $region20: #{double_conv.5} parent=11 // pred_fallthru
        _
    $region12: #{double_conv.5} parent=5 // pred_fallthru
      _
    %p140 = scmp.lt.s32.totalorder %s9, 2
    // Predicated region
    $region21: #{double_conv.5} parent=5 // pred_check
      %p141 = pneg %p140
    $region22: #{double_conv.5} parent=5 // pred_check_branch
      %143 = sbr.rel (%p141) target = $region24
    $region23: #{double_conv.5} parent=5 // pred_region
      // Predicated region
      $region25: #{double_conv.5} parent=23 // pred_check
        %p144 = pneg %p43
      $region26: #{double_conv.5} parent=23 // pred_check_branch
        %146 = sbr.rel (%p144) target = $region28
      $region27: #{double_conv.5} parent=23 // pred_region
        %s147 = smul.u32 16, %s17
        %p148 = scmp.lt.s32.totalorder %s16, 1
        %s149 = scalar_select %p148, %s16, 1
        %p150 = scmp.lt.s32.totalorder %s147, 15
        %s151 = scalar_select %p150, %s147, 15
        %s152 = smul.addr %s151, 2
        %s153 = smul.addr %s149, 32
        %s154 = sadd.s32 %s152, %s153
        %s155 = smul.addr %s154, 4
        %s156 = scalar_lea.vmem %s0, %s155
        %s157 = smul.u32 16, %s17
      $region28: #{double_conv.5} parent=23 // pred_fallthru
        _
    $region24: #{double_conv.5} parent=5 // pred_fallthru
      _
    %p158 = scmp.le.s32.totalorder 1, %s9
    %p159 = scmp.lt.s32.totalorder %s9, 3
    %p160 = pnand %p158, %p159
    %p161 = pneg %p160
    // Predicated region
    $region29: #{double_conv.5} parent=5 // pred_check
      _
    $region30: #{double_conv.5} parent=5 // pred_check_branch
      %163 = sbr.rel (%p160) target = $region32
    $region31: #{double_conv.5} parent=5 // pred_region
      %s164 = ssub.s32 %s9, 1
      %s165 = smul.u32 16, %s19
      %p166 = scmp.lt.s32.totalorder %s18, 1
      %s167 = scalar_select %p166, %s18, 1
      %p168 = scmp.lt.s32.totalorder %s165, 15
      %s169 = scalar_select %p168, %s165, 15
      %s170 = smul.addr %s169, 2
      %s171 = smul.addr %s167, 32
      %s172 = sadd.s32 %s170, %s171
      %s173 = smul.addr %s172, 4
      %s174 = scalar_lea.vmem %s0, %s173
      %p175 = pneg %p49
      %p176 = pneg %p46
      %p177 = pneg %p70
      %p178 = pneg %p67
      %p179 = pneg %p91
      %p180 = pneg %p88
      %p181 = pneg %p119
      %p182 = pneg %p116
      %s183 = smul.u32 2, %s19
      %p184 = scmp.lt.s32.totalorder %s18, 1
      %s185 = scalar_select %p184, %s18, 1
      %p186 = scmp.lt.s32.totalorder %s183, 1
      %s187 = scalar_select %p186, %s183, 1
      %s188 = smul.addr %s185, 2
      %s189 = sadd.s32 %s187, %s188
      %s190 = smul.addr %s189, 8
      %s191 = scalar_lea.vmem %s3, %s190
      %s192 = smul.u32 16, %s19
      %p193 = scmp.lt.s32.totalorder %s18, 1
      %s194 = scalar_select %p193, %s18, 1
      %p195 = scmp.lt.s32.totalorder %s192, 15
      %s196 = scalar_select %p195, %s192, 15
      %s197 = smul.addr %s196, 2
      %s198 = smul.addr %s194, 32
      %s199 = sadd.s32 %s197, %s198
      %s200 = smul.addr %s199, 4
      %s201 = scalar_lea.vmem %s0, %s200
      %s202 = smul.u32 16, %s19
      %s203 = smul.u32 2, %s19
      %p204 = scmp.lt.s32.totalorder %s18, 1
      %s205 = scalar_select %p204, %s18, 1
      %p206 = scmp.lt.s32.totalorder %s203, 1
      %s207 = scalar_select %p206, %s203, 1
      %s208 = smul.addr %s205, 2
      %s209 = sadd.s32 %s207, %s208
      %s210 = smul.addr %s209, 8
      %s211 = scalar_lea.vmem %s3, %s210
      %s212 = smul.u32 2, %s19
      %v213 = vld [vmem:[%s201] sm:$0xf]
      %v214 = vld [vmem:[%s201 + $0x4] sm:$0xf]
      %v215 = vld [vmem:[%s201 + $0x8] sm:$0xf]
      %v216 = vld [vmem:[%s201 + $0xc] sm:$0xf]
      %v217 = vld [vmem:[%s201 + $0x10] sm:$0xf]
      %v218 = vld [vmem:[%s201 + $0x14] sm:$0xf]
      %v219 = vld [vmem:[%s201 + $0x18] sm:$0xf]
      %v220 = vld [vmem:[%s201 + $0x1c] sm:$0xf]
      %v221 = vld [vmem:[%s201 + $0x20] sm:$0xf]
      %v222 = vld [vmem:[%s201 + $0x24] sm:$0xf]
      %v223 = vld [vmem:[%s201 + $0x28] sm:$0xf]
      %v224 = vld [vmem:[%s201 + $0x2c] sm:$0xf]
      %v225 = vld [vmem:[%s201 + $0x30] sm:$0xf]
      %v226 = vld [vmem:[%s201 + $0x34] sm:$0xf]
      %v227 = vld [vmem:[%s201 + $0x38] sm:$0xf]
      %v228 = vld [vmem:[%s201 + $0x3c] sm:$0xf]
      %v229 = vld [vmem:[%s201 + $0x40] sm:$0xf]
      %v230 = vld [vmem:[%s201 + $0x44] sm:$0xf]
      %v231 = vld [vmem:[%s201 + $0x48] sm:$0xf]
      %v232 = vld [vmem:[%s201 + $0x4c] sm:$0xf]
      %v233 = vld [vmem:[%s201 + $0x50] sm:$0xf]
      %v234 = vld [vmem:[%s201 + $0x54] sm:$0xf]
      %v235 = vld [vmem:[%s201 + $0x58] sm:$0xf]
      %v236 = vld [vmem:[%s201 + $0x5c] sm:$0xf]
      %v237 = vld [vmem:[%s201 + $0x60] sm:$0xf]
      %v238 = vld [vmem:[%s201 + $0x64] sm:$0xf]
      %v239 = vld [vmem:[%s201 + $0x68] sm:$0xf]
      %v240 = vld [vmem:[%s201 + $0x6c] sm:$0xf]
      %v241 = vld [vmem:[%s201 + $0x70] sm:$0xf]
      %v242 = vld [vmem:[%s201 + $0x74] sm:$0xf]
      %v243 = vld [vmem:[%s201 + $0x78] sm:$0xf]
      %v244 = vld [vmem:[%s201 + $0x7c] sm:$0xf]
      %v245 = vunpack.c.l.bf16 %v213
      %v246 = vunpack.c.l.bf16 %v214
      %v247 = vunpack.c.l.bf16 %v215
      %v248 = vunpack.c.l.bf16 %v216
      %v249 = vunpack.c.l.bf16 %v217
      %v250 = vunpack.c.l.bf16 %v218
      %v251 = vunpack.c.l.bf16 %v219
      %v252 = vunpack.c.l.bf16 %v220
      %v253 = vunpack.c.l.bf16 %v221
      %v254 = vunpack.c.l.bf16 %v222
      %v255 = vunpack.c.l.bf16 %v223
      %v256 = vunpack.c.l.bf16 %v224
      %v257 = vunpack.c.l.bf16 %v225
      %v258 = vunpack.c.l.bf16 %v226
      %v259 = vunpack.c.l.bf16 %v227
      %v260 = vunpack.c.l.bf16 %v228
      %v261 = vunpack.c.l.bf16 %v229
      %v262 = vunpack.c.l.bf16 %v230
      %v263 = vunpack.c.l.bf16 %v231
      %v264 = vunpack.c.l.bf16 %v232
      %v265 = vunpack.c.l.bf16 %v233
      %v266 = vunpack.c.l.bf16 %v234
      %v267 = vunpack.c.l.bf16 %v235
      %v268 = vunpack.c.l.bf16 %v236
      %v269 = vunpack.c.l.bf16 %v237
      %v270 = vunpack.c.l.bf16 %v238
      %v271 = vunpack.c.l.bf16 %v239
      %v272 = vunpack.c.l.bf16 %v240
      %v273 = vunpack.c.l.bf16 %v241
      %v274 = vunpack.c.l.bf16 %v242
      %v275 = vunpack.c.l.bf16 %v243
      %v276 = vunpack.c.l.bf16 %v244
      %v277 = vld [vmem:[%s1] sm:$0x1]
      %v279 = vperm.slane %v277, 0
      %v281 = vmul.f32 %v245, %v279
      %v282 = vmul.f32 %v246, %v279
      %v283 = vmul.f32 %v247, %v279
      %v284 = vmul.f32 %v248, %v279
      %v285 = vmul.f32 %v249, %v279
      %v286 = vmul.f32 %v250, %v279
      %v287 = vmul.f32 %v251, %v279
      %v288 = vmul.f32 %v252, %v279
      %v289 = vmul.f32 %v253, %v279
      %v290 = vmul.f32 %v254, %v279
      %v291 = vmul.f32 %v255, %v279
      %v292 = vmul.f32 %v256, %v279
      %v293 = vmul.f32 %v257, %v279
      %v294 = vmul.f32 %v258, %v279
      %v295 = vmul.f32 %v259, %v279
      %v296 = vmul.f32 %v260, %v279
      %v297 = vmul.f32 %v261, %v279
      %v298 = vmul.f32 %v262, %v279
      %v299 = vmul.f32 %v263, %v279
      %v300 = vmul.f32 %v264, %v279
      %v301 = vmul.f32 %v265, %v279
      %v302 = vmul.f32 %v266, %v279
      %v303 = vmul.f32 %v267, %v279
      %v304 = vmul.f32 %v268, %v279
      %v305 = vmul.f32 %v269, %v279
      %v306 = vmul.f32 %v270, %v279
      %v307 = vmul.f32 %v271, %v279
      %v308 = vmul.f32 %v272, %v279
      %v309 = vmul.f32 %v273, %v279
      %v310 = vmul.f32 %v274, %v279
      %v311 = vmul.f32 %v275, %v279
      %v312 = vmul.f32 %v276, %v279
      %v313 = vld [vmem:[%s2] sm:$0x1]
      %v315 = vperm.slane %v313, 0
      %v317 = vadd.f32 %v281, %v315
      %v318 = vadd.f32 %v282, %v315
      %v319 = vadd.f32 %v283, %v315
      %v320 = vadd.f32 %v284, %v315
      %v321 = vadd.f32 %v285, %v315
      %v322 = vadd.f32 %v286, %v315
      %v323 = vadd.f32 %v287, %v315
      %v324 = vadd.f32 %v288, %v315
      %v325 = vadd.f32 %v289, %v315
      %v326 = vadd.f32 %v290, %v315
      %v327 = vadd.f32 %v291, %v315
      %v328 = vadd.f32 %v292, %v315
      %v329 = vadd.f32 %v293, %v315
      %v330 = vadd.f32 %v294, %v315
      %v331 = vadd.f32 %v295, %v315
      %v332 = vadd.f32 %v296, %v315
      %v333 = vadd.f32 %v297, %v315
      %v334 = vadd.f32 %v298, %v315
      %v335 = vadd.f32 %v299, %v315
      %v336 = vadd.f32 %v300, %v315
      %v337 = vadd.f32 %v301, %v315
      %v338 = vadd.f32 %v302, %v315
      %v339 = vadd.f32 %v303, %v315
      %v340 = vadd.f32 %v304, %v315
      %v341 = vadd.f32 %v305, %v315
      %v342 = vadd.f32 %v306, %v315
      %v343 = vadd.f32 %v307, %v315
      %v344 = vadd.f32 %v308, %v315
      %v345 = vadd.f32 %v309, %v315
      %v346 = vadd.f32 %v310, %v315
      %v347 = vadd.f32 %v311, %v315
      %v348 = vadd.f32 %v312, %v315
      %v349 = vmax.f32 %v317, 0.0
      %v350 = vmax.f32 %v318, 0.0
      %v351 = vmax.f32 %v319, 0.0
      %v352 = vmax.f32 %v320, 0.0
      %v353 = vmax.f32 %v321, 0.0
      %v354 = vmax.f32 %v322, 0.0
      %v355 = vmax.f32 %v323, 0.0
      %v356 = vmax.f32 %v324, 0.0
      %v357 = vmax.f32 %v325, 0.0
      %v358 = vmax.f32 %v326, 0.0
      %v359 = vmax.f32 %v327, 0.0
      %v360 = vmax.f32 %v328, 0.0
      %v361 = vmax.f32 %v329, 0.0
      %v362 = vmax.f32 %v330, 0.0
      %v363 = vmax.f32 %v331, 0.0
      %v364 = vmax.f32 %v332, 0.0
      %v365 = vmax.f32 %v333, 0.0
      %v366 = vmax.f32 %v334, 0.0
      %v367 = vmax.f32 %v335, 0.0
      %v368 = vmax.f32 %v336, 0.0
      %v369 = vmax.f32 %v337, 0.0
      %v370 = vmax.f32 %v338, 0.0
      %v371 = vmax.f32 %v339, 0.0
      %v372 = vmax.f32 %v340, 0.0
      %v373 = vmax.f32 %v341, 0.0
      %v374 = vmax.f32 %v342, 0.0
      %v375 = vmax.f32 %v343, 0.0
      %v376 = vmax.f32 %v344, 0.0
      %v377 = vmax.f32 %v345, 0.0
      %v378 = vmax.f32 %v346, 0.0
      %v379 = vmax.f32 %v347, 0.0
      %v380 = vmax.f32 %v348, 0.0
      %381 = vxpose.xlu0.b32.start [1/16] %v349, 128
      %382 = vxpose.xlu0.b32.cont [2/16] %v350, 128
      %383 = vxpose.xlu0.b32.cont [3/16] %v351, 128
      %384 = vxpose.xlu0.b32.cont [4/16] %v352, 128
      %385 = vxpose.xlu0.b32.cont [5/16] %v353, 128
      %386 = vxpose.xlu0.b32.cont [6/16] %v354, 128
      %387 = vxpose.xlu0.b32.cont [7/16] %v355, 128
      %388 = vxpose.xlu0.b32.cont [8/16] %v356, 128
      %389 = vxpose.xlu0.b32.cont [9/16] %v357, 128
      %390 = vxpose.xlu0.b32.cont [10/16] %v358, 128
      %391 = vxpose.xlu0.b32.cont [11/16] %v359, 128
      %392 = vxpose.xlu0.b32.cont [12/16] %v360, 128
      %393 = vxpose.xlu0.b32.cont [13/16] %v361, 128
      %394 = vxpose.xlu0.b32.cont [14/16] %v362, 128
      %395 = vxpose.xlu0.b32.cont [15/16] %v363, 128
      %396 = vxpose.xlu0.b32.end [16/16] %v364, 128
      %v397 = vpop.trf.xlu0
      %v398 = vpop.trf.xlu0
      %v399 = vpop.trf.xlu0
      %v400 = vpop.trf.xlu0
      %v401 = vpop.trf.xlu0
      %v402 = vpop.trf.xlu0
      %v403 = vpop.trf.xlu0
      %v404 = vpop.trf.xlu0
      %v405 = vpop.trf.xlu0
      %v406 = vpop.trf.xlu0
      %v407 = vpop.trf.xlu0
      %v408 = vpop.trf.xlu0
      %v409 = vpop.trf.xlu0
      %v410 = vpop.trf.xlu0
      %v411 = vpop.trf.xlu0
      %v412 = vpop.trf.xlu0
      %413 = vxpose.xlu0.b32.start [1/16] %v365, 128
      %414 = vxpose.xlu0.b32.cont [2/16] %v366, 128
      %415 = vxpose.xlu0.b32.cont [3/16] %v367, 128
      %416 = vxpose.xlu0.b32.cont [4/16] %v368, 128
      %417 = vxpose.xlu0.b32.cont [5/16] %v369, 128
      %418 = vxpose.xlu0.b32.cont [6/16] %v370, 128
      %419 = vxpose.xlu0.b32.cont [7/16] %v371, 128
      %420 = vxpose.xlu0.b32.cont [8/16] %v372, 128
      %421 = vxpose.xlu0.b32.cont [9/16] %v373, 128
      %422 = vxpose.xlu0.b32.cont [10/16] %v374, 128
      %423 = vxpose.xlu0.b32.cont [11/16] %v375, 128
      %424 = vxpose.xlu0.b32.cont [12/16] %v376, 128
      %425 = vxpose.xlu0.b32.cont [13/16] %v377, 128
      %426 = vxpose.xlu0.b32.cont [14/16] %v378, 128
      %427 = vxpose.xlu0.b32.cont [15/16] %v379, 128
      %428 = vxpose.xlu0.b32.end [16/16] %v380, 128
      %v429 = vpop.trf.xlu0
      %v430 = vpop.trf.xlu0
      %v431 = vpop.trf.xlu0
      %v432 = vpop.trf.xlu0
      %v433 = vpop.trf.xlu0
      %v434 = vpop.trf.xlu0
      %v435 = vpop.trf.xlu0
      %v436 = vpop.trf.xlu0
      %v437 = vpop.trf.xlu0
      %v438 = vpop.trf.xlu0
      %v439 = vpop.trf.xlu0
      %v440 = vpop.trf.xlu0
      %v441 = vpop.trf.xlu0
      %v442 = vpop.trf.xlu0
      %v443 = vpop.trf.xlu0
      %v444 = vpop.trf.xlu0
      %445 = vst [vmem:[%s211] sm:$0xff] %v397
      %446 = vst [vmem:[%s211 + $0x8] sm:$0xff] %v429
      %s447 = smul.u32 2, %s19
      %p448 = scmp.lt.s32.totalorder %s18, 1
      %s449 = scalar_select %p448, %s18, 1
      %p450 = scmp.lt.s32.totalorder %s447, 1
      %s451 = scalar_select %p450, %s447, 1
      %s452 = smul.addr %s449, 2
      %s453 = sadd.s32 %s451, %s452
      %s454 = smul.addr %s453, 8
      %s455 = scalar_lea.vmem %s3, %s454
      // Predicated region
      $region33: #{double_conv.5} parent=31 // pred_check
        %p456 = pneg %p116
      $region34: #{double_conv.5} parent=31 // pred_check_branch
        %458 = sbr.rel (%p456) target = $region36
      $region35: #{double_conv.5} parent=31 // pred_region
        %s459 = smul.u32 2, %s19
      $region36: #{double_conv.5} parent=31 // pred_fallthru
        _
    $region32: #{double_conv.5} parent=5 // pred_fallthru
      _
    %p460 = scmp.le.s32.totalorder 2, %s9
    // Predicated region
    $region37: #{double_conv.5} parent=5 // pred_check
      %p461 = pneg %p460
    $region38: #{double_conv.5} parent=5 // pred_check_branch
      %463 = sbr.rel (%p461) target = $region40
    $region39: #{double_conv.5} parent=5 // pred_region
      %s464 = ssub.s32 %s9, 2
      // Predicated region
      $region41: #{double_conv.5} parent=39 // pred_check
        %p465 = pneg %p122
      $region42: #{double_conv.5} parent=39 // pred_check_branch
        %467 = sbr.rel (%p465) target = $region44
      $region43: #{double_conv.5} parent=39 // pred_region
        %s468 = smul.u32 2, %s21
        %p469 = scmp.lt.s32.totalorder %s20, 1
        %s470 = scalar_select %p469, %s20, 1
        %p471 = scmp.lt.s32.totalorder %s468, 1
        %s472 = scalar_select %p471, %s468, 1
        %s473 = smul.addr %s470, 2
        %s474 = sadd.s32 %s472, %s473
        %s475 = smul.addr %s474, 8
        %s476 = scalar_lea.vmem %s3, %s475
      $region44: #{double_conv.5} parent=39 // pred_fallthru
        _
    $region40: #{double_conv.5} parent=5 // pred_fallthru
      _
  $region6: #{double_conv.5} parent=0 // loop_footer
    %s13 = sadd.s32 1, %s9
  $region7: #{double_conv.5} parent=0 // loop_footer_branch
    %8 = sbr.rel target = $region3
  $region8: #{double_conv.5} parent=0 // loop_exit
    _

// kernel: double_conv.3
$region0: #{double_conv.3}
  #allocation0 [shape = 'u32[]', space=smem, size = 0x4, offset = 0x4, fixed_abs, tag = 'smem constant byte address 0x4 - core index']
  #allocation1 [shape = 'u32[72,128]{1,0:T(1,128)}', space=vmem, size = 0x9000, scoped, tag = 'internal scratch']
  #allocation2 [shape = 'bf16[18,18,8]{2,1,0:T(8,128)(2,1)}', space=vmem, size = 0x1b000, scoped, tag = 'scratch operand']
  #allocation3 [shape = 'bf16[16,16,72]{2,1,0:T(8,128)(2,1)}', space=vmem, size = 0x10000, scoped, tag = 'scratch operand']
  %s0 = inlined_call_operand.vmem [shape: bf16[2,16,16,8], index: 0, kind: input, shape index: {}, may-alias: {0,1,2}]
  %s1 = inlined_call_operand.vmem [shape: bf16[2,16,16,8], index: 1, kind: input, shape index: {}, may-alias: {0,1,2}]
  %s2 = inlined_call_operand.vmem [shape: bf16[2,16,16,8], index: 2, kind: input, shape index: {}, may-alias: {0,1,2}]
  %s3 = inlined_call_operand.vmem [shape: bf16[72,128], index: 3, kind: input, shape index: {}]
  %s4 = inlined_call_operand.vmem [shape: bf16[2,16,16,128], index: 4, kind: output, shape index: {0}]
  %s5 = inlined_call_operand.vmem [shape: f32[2,1,128], index: 5, kind: output, shape index: {1}]
  %s6 = inlined_call_operand.vmem [shape: f32[2,1,128], index: 6, kind: output, shape index: {2}]
  %7 = xla_tuple %s4, %s5, %s6
  %s8 = sld [smem:[#allocation0]]
  $region81: #{double_conv.3} parent=0
    _
  %s10 = ssub.s32 1, %s8
  %s11 = scalar_select 0, %s10, %s8
  loop: start=0, step=1, limit=4
  $region2: #{double_conv.3} parent=0 // loop_pre_header
    _
  $region3: #{double_conv.3} parent=0 // loop_header
    %s13 = sphi 0, %s17
    %p14 = scmp.ge.s32.totalorder %s13, 4
    %s20 = sphi 0, %s32
    %s21 = sphi 0, %s28
    %s22 = sphi 0, %s20
    %s23 = sphi 0, %s21
    %s24 = sphi 0, %s22
    %s25 = sphi 0, %s23
    %s37 = sphi 0, %s39
    %s40 = sphi 0, %s37
    %s41 = sphi 0, %s40
    %s57 = sphi 0, %s41
    %s73 = sphi 0, %s75
    %s76 = sphi 0, %s73
    %s77 = sphi 0, %s76
    %s93 = sphi 0, %s77
    %s109 = sphi 0, %s111
    %s112 = sphi 0, %s109
    %s113 = sphi 0, %s112
    %s129 = sphi 0, %s113
    %s133 = sphi 0, %s133
    %s135 = sphi 0, %s133
    %s136 = sphi 0, %s135
    %s150 = sphi 0, %s136
    %s158 = sphi 0, %s160
    %s161 = sphi 0, %s158
    %s162 = sphi 0, %s161
    %s178 = sphi 0, %s162
    %s186 = sphi 0, %s188
    %s189 = sphi 0, %s186
    %s190 = sphi 0, %s189
    %s206 = sphi 0, %s190
    %s214 = sphi 0, %s216
    %s217 = sphi 0, %s214
    %s218 = sphi 0, %s217
    %s234 = sphi 0, %s218
  $region4: #{double_conv.3} parent=0 // loop_header_branch
    %16 = sbr.rel (%p14) target = $region8
  $region5: #{double_conv.3} parent=0 // loop_body
    %s18 = ssub.s32 %s13, 1
    %s19 = ssub.s32 %s13, 2
    %s26 = sadd.s32 1, %s21
    %p27 = scmp.ge.s32.totalorder %s26, 1
    %s28 = scalar_select %p27, 0, %s26
    %s29 = sadd.s32 1, %s20
    %s30 = scalar_select %p27, %s29, %s20
    %p31 = scmp.ge.s32.totalorder %s30, 2
    %s32 = scalar_select %p31, 0, %s30
    %s33 = ssub.s32 %s20, %s32
    %s34 = ssub.s32 %s21, %s28
    %s35 = sor.u32 %s33, %s34
    %p36 = scmp.eq.s32.totalorder %s35, 0
    %s38 = sadd.s32 %s37, 1
    %s39 = scalar_select %p36, %s37, %s38
    %p42 = pneg %p36
    %p43 = scmp.eq.s32.totalorder %s13, 1
    %p44 = por %p42, %p43
    %p45 = scmp.ne.s32.totalorder %s37, %s40
    %p46 = scmp.eq.s32.totalorder %s13, 0
    %p47 = por %p45, %p46
    %p48 = scmp.ne.s32.totalorder %s37, %s40
    %p49 = scmp.eq.s32.totalorder %s18, 1
    %p50 = por %p48, %p49
    %p51 = scmp.ne.s32.totalorder %s40, %s41
    %p52 = scmp.eq.s32.totalorder %s18, 0
    %p53 = por %p51, %p52
    %p54 = scmp.ne.s32.totalorder %s40, %s41
    %p55 = scmp.eq.s32.totalorder %s19, 1
    %p56 = por %p54, %p55
    %p58 = scmp.ne.s32.totalorder %s41, %s57
    %p59 = scmp.eq.s32.totalorder %s19, 0
    %p60 = por %p58, %p59
    %s61 = smul.u32 %s21, 16
    %s62 = ssub.s32 %s61, 1
    %p63 = scmp.gt.s32.totalorder %s62, 0
    %s64 = scalar_select %p63, %s62, 0
    %s65 = smul.u32 %s28, 16
    %s66 = ssub.s32 %s65, 1
    %p67 = scmp.gt.s32.totalorder %s66, 0
    %s68 = scalar_select %p67, %s66, 0
    %s69 = ssub.s32 %s20, %s32
    %s70 = ssub.s32 %s64, %s68
    %s71 = sor.u32 %s69, %s70
    %p72 = scmp.eq.s32.totalorder %s71, 0
    %s74 = sadd.s32 %s73, 1
    %s75 = scalar_select %p72, %s73, %s74
    %p78 = pneg %p72
    %p79 = scmp.eq.s32.totalorder %s13, 1
    %p80 = por %p78, %p79
    %p81 = scmp.ne.s32.totalorder %s73, %s76
    %p82 = scmp.eq.s32.totalorder %s13, 0
    %p83 = por %p81, %p82
    %p84 = scmp.ne.s32.totalorder %s73, %s76
    %p85 = scmp.eq.s32.totalorder %s18, 1
    %p86 = por %p84, %p85
    %p87 = scmp.ne.s32.totalorder %s76, %s77
    %p88 = scmp.eq.s32.totalorder %s18, 0
    %p89 = por %p87, %p88
    %p90 = scmp.ne.s32.totalorder %s76, %s77
    %p91 = scmp.eq.s32.totalorder %s19, 1
    %p92 = por %p90, %p91
    %p94 = scmp.ne.s32.totalorder %s77, %s93
    %p95 = scmp.eq.s32.totalorder %s19, 0
    %p96 = por %p94, %p95
    %s97 = sadd.s32 %s21, 1
    %s98 = smul.u32 %s97, 16
    %p99 = scmp.lt.s32.totalorder %s98, 15
    %s100 = scalar_select %p99, %s98, 15
    %s101 = sadd.s32 %s28, 1
    %s102 = smul.u32 %s101, 16
    %p103 = scmp.lt.s32.totalorder %s102, 15
    %s104 = scalar_select %p103, %s102, 15
    %s105 = ssub.s32 %s20, %s32
    %s106 = ssub.s32 %s100, %s104
    %s107 = sor.u32 %s105, %s106
    %p108 = scmp.eq.s32.totalorder %s107, 0
    %s110 = sadd.s32 %s109, 1
    %s111 = scalar_select %p108, %s109, %s110
    %p114 = pneg %p108
    %p115 = scmp.eq.s32.totalorder %s13, 1
    %p116 = por %p114, %p115
    %p117 = scmp.ne.s32.totalorder %s109, %s112
    %p118 = scmp.eq.s32.totalorder %s13, 0
    %p119 = por %p117, %p118
    %p120 = scmp.ne.s32.totalorder %s109, %s112
    %p121 = scmp.eq.s32.totalorder %s18, 1
    %p122 = por %p120, %p121
    %p123 = scmp.ne.s32.totalorder %s112, %s113
    %p124 = scmp.eq.s32.totalorder %s18, 0
    %p125 = por %p123, %p124
    %p126 = scmp.ne.s32.totalorder %s112, %s113
    %p127 = scmp.eq.s32.totalorder %s19, 1
    %p128 = por %p126, %p127
    %p130 = scmp.ne.s32.totalorder %s113, %s129
    %p131 = scmp.eq.s32.totalorder %s19, 0
    %p132 = por %p130, %p131
    %s134 = sadd.s32 %s133, 1
    %p137 = scmp.eq.s32.totalorder %s13, 1
    %p138 = scmp.ne.s32.totalorder %s133, %s135
    %p139 = scmp.eq.s32.totalorder %s13, 0
    %p140 = por %p138, %p139
    %p141 = scmp.ne.s32.totalorder %s133, %s135
    %p142 = scmp.eq.s32.totalorder %s18, 1
    %p143 = por %p141, %p142
    %p144 = scmp.ne.s32.totalorder %s135, %s136
    %p145 = scmp.eq.s32.totalorder %s18, 0
    %p146 = por %p144, %p145
    %p147 = scmp.ne.s32.totalorder %s135, %s136
    %p148 = scmp.eq.s32.totalorder %s19, 1
    %p149 = por %p147, %p148
    %p151 = scmp.ne.s32.totalorder %s136, %s150
    %p152 = scmp.eq.s32.totalorder %s19, 0
    %p153 = por %p151, %p152
    %s154 = ssub.s32 %s20, %s32
    %s155 = ssub.s32 %s21, %s28
    %s156 = sor.u32 %s154, %s155
    %p157 = scmp.eq.s32.totalorder %s156, 0
    %s159 = sadd.s32 %s158, 1
    %s160 = scalar_select %p157, %s158, %s159
    %p163 = pneg %p157
    %p164 = scmp.eq.s32.totalorder %s13, 1
    %p165 = por %p163, %p164
    %p166 = scmp.ne.s32.totalorder %s158, %s161
    %p167 = scmp.eq.s32.totalorder %s13, 0
    %p168 = por %p166, %p167
    %p169 = scmp.ne.s32.totalorder %s158, %s161
    %p170 = scmp.eq.s32.totalorder %s18, 1
    %p171 = por %p169, %p170
    %p172 = scmp.ne.s32.totalorder %s161, %s162
    %p173 = scmp.eq.s32.totalorder %s18, 0
    %p174 = por %p172, %p173
    %p175 = scmp.ne.s32.totalorder %s161, %s162
    %p176 = scmp.eq.s32.totalorder %s19, 1
    %p177 = por %p175, %p176
    %p179 = scmp.ne.s32.totalorder %s162, %s178
    %p180 = scmp.eq.s32.totalorder %s19, 0
    %p181 = por %p179, %p180
    %s182 = ssub.s32 %s20, %s32
    %s183 = ssub.s32 %s21, %s28
    %s184 = sor.u32 %s182, %s183
    %p185 = scmp.eq.s32.totalorder %s184, 0
    %s187 = sadd.s32 %s186, 1
    %s188 = scalar_select %p185, %s186, %s187
    %p191 = pneg %p185
    %p192 = scmp.eq.s32.totalorder %s13, 1
    %p193 = por %p191, %p192
    %p194 = scmp.ne.s32.totalorder %s186, %s189
    %p195 = scmp.eq.s32.totalorder %s13, 0
    %p196 = por %p194, %p195
    %p197 = scmp.ne.s32.totalorder %s186, %s189
    %p198 = scmp.eq.s32.totalorder %s18, 1
    %p199 = por %p197, %p198
    %p200 = scmp.ne.s32.totalorder %s189, %s190
    %p201 = scmp.eq.s32.totalorder %s18, 0
    %p202 = por %p200, %p201
    %p203 = scmp.ne.s32.totalorder %s189, %s190
    %p204 = scmp.eq.s32.totalorder %s19, 1
    %p205 = por %p203, %p204
    %p207 = scmp.ne.s32.totalorder %s190, %s206
    %p208 = scmp.eq.s32.totalorder %s19, 0
    %p209 = por %p207, %p208
    %s210 = ssub.s32 %s20, %s32
    %s211 = ssub.s32 %s21, %s28
    %s212 = sor.u32 %s210, %s211
    %p213 = scmp.eq.s32.totalorder %s212, 0
    %s215 = sadd.s32 %s214, 1
    %s216 = scalar_select %p213, %s214, %s215
    %p219 = pneg %p213
    %p220 = scmp.eq.s32.totalorder %s13, 1
    %p221 = por %p219, %p220
    %p222 = scmp.ne.s32.totalorder %s214, %s217
    %p223 = scmp.eq.s32.totalorder %s13, 0
    %p224 = por %p222, %p223
    %p225 = scmp.ne.s32.totalorder %s214, %s217
    %p226 = scmp.eq.s32.totalorder %s18, 1
    %p227 = por %p225, %p226
    %p228 = scmp.ne.s32.totalorder %s217, %s218
    %p229 = scmp.eq.s32.totalorder %s18, 0
    %p230 = por %p228, %p229
    %p231 = scmp.ne.s32.totalorder %s217, %s218
    %p232 = scmp.eq.s32.totalorder %s19, 1
    %p233 = por %p231, %p232
    %p235 = scmp.ne.s32.totalorder %s218, %s234
    %p236 = scmp.eq.s32.totalorder %s19, 0
    %p237 = por %p235, %p236
    %p238 = scmp.le.s32.totalorder 1, %s13
    %p239 = scmp.lt.s32.totalorder %s13, 3
    %p240 = pnand %p238, %p239
    %p241 = pneg %p240
    // Predicated region
    $region9: #{double_conv.3} parent=5 // pred_check
      _
    $region10: #{double_conv.3} parent=5 // pred_check_branch
      %243 = sbr.rel (%p240) target = $region12
    $region11: #{double_conv.3} parent=5 // pred_region
      %s244 = ssub.s32 %s13, 1
      // Predicated region
      $region13: #{double_conv.3} parent=11 // pred_check
        %p245 = pneg %p146
      $region14: #{double_conv.3} parent=11 // pred_check_branch
        %247 = sbr.rel (%p245) target = $region16
      $region15: #{double_conv.3} parent=11 // pred_region
        _
      $region16: #{double_conv.3} parent=11 // pred_fallthru
        _
    $region12: #{double_conv.3} parent=5 // pred_fallthru
      _
    %p248 = scmp.lt.s32.totalorder %s13, 2
    // Predicated region
    $region17: #{double_conv.3} parent=5 // pred_check
      %p249 = pneg %p248
    $region18: #{double_conv.3} parent=5 // pred_check_branch
      %251 = sbr.rel (%p249) target = $region20
    $region19: #{double_conv.3} parent=5 // pred_region
      // Predicated region
      $region21: #{double_conv.3} parent=19 // pred_check
        %p252 = pneg %p47
      $region22: #{double_conv.3} parent=19 // pred_check_branch
        %254 = sbr.rel (%p252) target = $region24
      $region23: #{double_conv.3} parent=19 // pred_region
        %s255 = smul.u32 16, %s21
        %p256 = scmp.lt.s32.totalorder %s20, 1
        %s257 = scalar_select %p256, %s20, 1
        %p258 = scmp.lt.s32.totalorder %s255, 15
        %s259 = scalar_select %p258, %s255, 15
        %s260 = smul.addr %s259, 2
        %s261 = smul.addr %s257, 32
        %s262 = sadd.s32 %s260, %s261
        %s263 = smul.addr %s262, 4
        %s264 = scalar_lea.vmem %s0, %s263
        %s265 = smul.u32 16, %s21
      $region24: #{double_conv.3} parent=19 // pred_fallthru
        _
      // Predicated region
      $region25: #{double_conv.3} parent=19 // pred_check
        %p266 = pneg %p83
      $region26: #{double_conv.3} parent=19 // pred_check_branch
        %268 = sbr.rel (%p266) target = $region28
      $region27: #{double_conv.3} parent=19 // pred_region
        %s269 = smul.u32 %s21, 16
        %s270 = ssub.s32 %s269, 1
        %p271 = scmp.gt.s32.totalorder %s270, 0
        %s272 = scalar_select %p271, %s270, 0
        %p273 = scmp.lt.s32.totalorder %s20, 1
        %s274 = scalar_select %p273, %s20, 1
        %p275 = scmp.lt.s32.totalorder %s272, 15
        %s276 = scalar_select %p275, %s272, 15
        %s277 = smul.addr %s276, 2
        %s278 = smul.addr %s274, 32
        %s279 = sadd.s32 %s277, %s278
        %s280 = smul.addr %s279, 4
        %s281 = scalar_lea.vmem %s1, %s280
        %s282 = smul.u32 %s21, 16
        %s283 = ssub.s32 %s282, 1
        %p284 = scmp.gt.s32.totalorder %s283, 0
        %s285 = scalar_select %p284, %s283, 0
      $region28: #{double_conv.3} parent=19 // pred_fallthru
        _
      // Predicated region
      $region29: #{double_conv.3} parent=19 // pred_check
        %p286 = pneg %p119
      $region30: #{double_conv.3} parent=19 // pred_check_branch
        %288 = sbr.rel (%p286) target = $region32
      $region31: #{double_conv.3} parent=19 // pred_region
        %s289 = sadd.s32 %s21, 1
        %s290 = smul.u32 %s289, 16
        %p291 = scmp.lt.s32.totalorder %s290, 15
        %s292 = scalar_select %p291, %s290, 15
        %p293 = scmp.lt.s32.totalorder %s20, 1
        %s294 = scalar_select %p293, %s20, 1
        %p295 = scmp.lt.s32.totalorder %s292, 15
        %s296 = scalar_select %p295, %s292, 15
        %s297 = smul.addr %s296, 2
        %s298 = smul.addr %s294, 32
        %s299 = sadd.s32 %s297, %s298
        %s300 = smul.addr %s299, 4
        %s301 = scalar_lea.vmem %s2, %s300
        %s302 = sadd.s32 %s21, 1
        %s303 = smul.u32 %s302, 16
        %p304 = scmp.lt.s32.totalorder %s303, 15
        %s305 = scalar_select %p304, %s303, 15
      $region32: #{double_conv.3} parent=19 // pred_fallthru
        _
    $region20: #{double_conv.3} parent=5 // pred_fallthru
      _
    %p306 = scmp.le.s32.totalorder 1, %s13
    %p307 = scmp.lt.s32.totalorder %s13, 3
    %p308 = pnand %p306, %p307
    %p309 = pneg %p308
    // Predicated region
    $region33: #{double_conv.3} parent=5 // pred_check
      _
    $region34: #{double_conv.3} parent=5 // pred_check_branch
      %311 = sbr.rel (%p308) target = $region36
    $region35: #{double_conv.3} parent=5 // pred_region
      %s312 = ssub.s32 %s13, 1
      %s313 = smul.u32 16, %s23
      %p314 = scmp.lt.s32.totalorder %s22, 1
      %s315 = scalar_select %p314, %s22, 1
      %p316 = scmp.lt.s32.totalorder %s313, 15
      %s317 = scalar_select %p316, %s313, 15
      %s318 = smul.addr %s317, 2
      %s319 = smul.addr %s315, 32
      %s320 = sadd.s32 %s318, %s319
      %s321 = smul.addr %s320, 4
      %s322 = scalar_lea.vmem %s0, %s321
      %p323 = pneg %p53
      %p324 = pneg %p50
      %s325 = smul.u32 %s23, 16
      %s326 = ssub.s32 %s325, 1
      %p327 = scmp.gt.s32.totalorder %s326, 0
      %s328 = scalar_select %p327, %s326, 0
      %p329 = scmp.lt.s32.totalorder %s22, 1
      %s330 = scalar_select %p329, %s22, 1
      %p331 = scmp.lt.s32.totalorder %s328, 15
      %s332 = scalar_select %p331, %s328, 15
      %s333 = smul.addr %s332, 2
      %s334 = smul.addr %s330, 32
      %s335 = sadd.s32 %s333, %s334
      %s336 = smul.addr %s335, 4
      %s337 = scalar_lea.vmem %s1, %s336
      %p338 = pneg %p89
      %p339 = pneg %p86
      %s340 = sadd.s32 %s23, 1
      %s341 = smul.u32 %s340, 16
      %p342 = scmp.lt.s32.totalorder %s341, 15
      %s343 = scalar_select %p342, %s341, 15
      %p344 = scmp.lt.s32.totalorder %s22, 1
      %s345 = scalar_select %p344, %s22, 1
      %p346 = scmp.lt.s32.totalorder %s343, 15
      %s347 = scalar_select %p346, %s343, 15
      %s348 = smul.addr %s347, 2
      %s349 = smul.addr %s345, 32
      %s350 = sadd.s32 %s348, %s349
      %s351 = smul.addr %s350, 4
      %s352 = scalar_lea.vmem %s2, %s351
      %p353 = pneg %p125
      %p354 = pneg %p122
      %p355 = pneg %p146
      %p356 = pneg %p143
      %p357 = pneg %p174
      %p358 = pneg %p171
      %s359 = smul.u32 16, %s23
      %p360 = scmp.lt.s32.totalorder %s22, 1
      %s361 = scalar_select %p360, %s22, 1
      %p362 = scmp.lt.s32.totalorder %s359, 15
      %s363 = scalar_select %p362, %s359, 15
      %s364 = smul.addr %s363, 2
      %s365 = smul.addr %s361, 32
      %s366 = sadd.s32 %s364, %s365
      %s367 = smul.addr %s366, 4
      %s368 = scalar_lea.vmem %s4, %s367
      %p369 = pneg %p202
      %p370 = pneg %p199
      %p371 = scmp.lt.s32.totalorder %s22, 1
      %s372 = scalar_select %p371, %s22, 1
      %p373 = scmp.lt.s32.totalorder %s23, 0
      %s374 = scalar_select %p373, %s23, 0
      %s375 = sadd.s32 %s374, %s372
      %s376 = scalar_lea.vmem %s5, %s375
      %p377 = pneg %p230
      %p378 = pneg %p227
      %p379 = scmp.lt.s32.totalorder %s22, 1
      %s380 = scalar_select %p379, %s22, 1
      %p381 = scmp.lt.s32.totalorder %s23, 0
      %s382 = scalar_select %p381, %s23, 0
      %s383 = sadd.s32 %s382, %s380
      %s384 = scalar_lea.vmem %s6, %s383
      %s385 = smul.u32 16, %s23
      %p386 = scmp.lt.s32.totalorder %s22, 1
      %s387 = scalar_select %p386, %s22, 1
      %p388 = scmp.lt.s32.totalorder %s385, 15
      %s389 = scalar_select %p388, %s385, 15
      %s390 = smul.addr %s389, 2
      %s391 = smul.addr %s387, 32
      %s392 = sadd.s32 %s390, %s391
      %s393 = smul.addr %s392, 4
      %s394 = scalar_lea.vmem %s0, %s393
      %s395 = smul.u32 16, %s23
      %s396 = smul.u32 %s23, 16
      %s397 = ssub.s32 %s396, 1
      %p398 = scmp.gt.s32.totalorder %s397, 0
      %s399 = scalar_select %p398, %s397, 0
      %p400 = scmp.lt.s32.totalorder %s22, 1
      %s401 = scalar_select %p400, %s22, 1
      %p402 = scmp.lt.s32.totalorder %s399, 15
      %s403 = scalar_select %p402, %s399, 15
      %s404 = smul.addr %s403, 2
      %s405 = smul.addr %s401, 32
      %s406 = sadd.s32 %s404, %s405
      %s407 = smul.addr %s406, 4
      %s408 = scalar_lea.vmem %s1, %s407
      %s409 = smul.u32 %s23, 16
      %s410 = ssub.s32 %s409, 1
      %p411 = scmp.gt.s32.totalorder %s410, 0
      %s412 = scalar_select %p411, %s410, 0
      %s413 = sadd.s32 %s23, 1
      %s414 = smul.u32 %s413, 16
      %p415 = scmp.lt.s32.totalorder %s414, 15
      %s416 = scalar_select %p415, %s414, 15
      %p417 = scmp.lt.s32.totalorder %s22, 1
      %s418 = scalar_select %p417, %s22, 1
      %p419 = scmp.lt.s32.totalorder %s416, 15
      %s420 = scalar_select %p419, %s416, 15
      %s421 = smul.addr %s420, 2
      %s422 = smul.addr %s418, 32
      %s423 = sadd.s32 %s421, %s422
      %s424 = smul.addr %s423, 4
      %s425 = scalar_lea.vmem %s2, %s424
      %s426 = sadd.s32 %s23, 1
      %s427 = smul.u32 %s426, 16
      %p428 = scmp.lt.s32.totalorder %s427, 15
      %s429 = scalar_select %p428, %s427, 15
      %s430 = smul.u32 16, %s23
      %p431 = scmp.lt.s32.totalorder %s22, 1
      %s432 = scalar_select %p431, %s22, 1
      %p433 = scmp.lt.s32.totalorder %s430, 15
      %s434 = scalar_select %p433, %s430, 15
      %s435 = smul.addr %s434, 2
      %s436 = smul.addr %s432, 32
      %s437 = sadd.s32 %s435, %s436
      %s438 = smul.addr %s437, 4
      %s439 = scalar_lea.vmem %s4, %s438
      %s440 = smul.u32 16, %s23
      %p441 = scmp.lt.s32.totalorder %s22, 1
      %s442 = scalar_select %p441, %s22, 1
      %p443 = scmp.lt.s32.totalorder %s23, 0
      %s444 = scalar_select %p443, %s23, 0
      %s445 = sadd.s32 %s444, %s442
      %s446 = scalar_lea.vmem %s5, %s445
      %p447 = scmp.lt.s32.totalorder %s22, 1
      %s448 = scalar_select %p447, %s22, 1
      %p449 = scmp.lt.s32.totalorder %s23, 0
      %s450 = scalar_select %p449, %s23, 0
      %s451 = sadd.s32 %s450, %s448
      %s452 = scalar_lea.vmem %s6, %s451
      %vm454 = vcmask 57344
      %vm455 = vsmask.f32 256
      %vm456 = vmand %vm454, %vm455
      %v457 = vld [vmem:[#allocation2] sm:$0x1]
      %v458 = vsel %vm456, 0, %v457
      %459 = vst [vmem:[#allocation2] sm:$0x1] %v458
      %v460 = vld [vmem:[#allocation2 + $0xc] sm:$0x1]
      %v461 = vsel %vm456, 0, %v460
      %462 = vst [vmem:[#allocation2 + $0xc] sm:$0x1] %v461
      %v463 = vld [vmem:[#allocation2 + $0x18] sm:$0x1]
      %v464 = vsel %vm456, 0, %v463
      %465 = vst [vmem:[#allocation2 + $0x18] sm:$0x1] %v464
      %v466 = vld [vmem:[#allocation2 + $0x24] sm:$0x1]
      %v467 = vsel %vm456, 0, %v466
      %468 = vst [vmem:[#allocation2 + $0x24] sm:$0x1] %v467
      %v469 = vld [vmem:[#allocation2 + $0x30] sm:$0x1]
      %v470 = vsel %vm456, 0, %v469
      %471 = vst [vmem:[#allocation2 + $0x30] sm:$0x1] %v470
      %v472 = vld [vmem:[#allocation2 + $0x3c] sm:$0x1]
      %v473 = vsel %vm456, 0, %v472
      %474 = vst [vmem:[#allocation2 + $0x3c] sm:$0x1] %v473
      %v475 = vld [vmem:[#allocation2 + $0x48] sm:$0x1]
      %v476 = vsel %vm456, 0, %v475
      %477 = vst [vmem:[#allocation2 + $0x48] sm:$0x1] %v476
      %v478 = vld [vmem:[#allocation2 + $0x54] sm:$0x1]
      %v479 = vsel %vm456, 0, %v478
      %480 = vst [vmem:[#allocation2 + $0x54] sm:$0x1] %v479
      %v481 = vld [vmem:[#allocation2 + $0x60] sm:$0x1]
      %v482 = vsel %vm456, 0, %v481
      %483 = vst [vmem:[#allocation2 + $0x60] sm:$0x1] %v482
      %v484 = vld [vmem:[#allocation2 + $0x6c] sm:$0x1]
      %v485 = vsel %vm456, 0, %v484
      %486 = vst [vmem:[#allocation2 + $0x6c] sm:$0x1] %v485
      %v487 = vld [vmem:[#allocation2 + $0x78] sm:$0x1]
      %v488 = vsel %vm456, 0, %v487
      %489 = vst [vmem:[#allocation2 + $0x78] sm:$0x1] %v488
      %v490 = vld [vmem:[#allocation2 + $0x84] sm:$0x1]
      %v491 = vsel %vm456, 0, %v490
      %492 = vst [vmem:[#allocation2 + $0x84] sm:$0x1] %v491
      %v493 = vld [vmem:[#allocation2 + $0x90] sm:$0x1]
      %v494 = vsel %vm456, 0, %v493
      %495 = vst [vmem:[#allocation2 + $0x90] sm:$0x1] %v494
      %v496 = vld [vmem:[#allocation2 + $0x9c] sm:$0x1]
      %v497 = vsel %vm456, 0, %v496
      %498 = vst [vmem:[#allocation2 + $0x9c] sm:$0x1] %v497
      %v499 = vld [vmem:[#allocation2 + $0xa8] sm:$0x1]
      %v500 = vsel %vm456, 0, %v499
      %501 = vst [vmem:[#allocation2 + $0xa8] sm:$0x1] %v500
      %v502 = vld [vmem:[#allocation2 + $0xb4] sm:$0x1]
      %v503 = vsel %vm456, 0, %v502
      %504 = vst [vmem:[#allocation2 + $0xb4] sm:$0x1] %v503
      %v505 = vld [vmem:[#allocation2 + $0xc0] sm:$0x1]
      %v506 = vsel %vm456, 0, %v505
      %507 = vst [vmem:[#allocation2 + $0xc0] sm:$0x1] %v506
      %v508 = vld [vmem:[#allocation2 + $0xcc] sm:$0x1]
      %v509 = vsel %vm456, 0, %v508
      %510 = vst [vmem:[#allocation2 + $0xcc] sm:$0x1] %v509
      %vm511 = vsmask.f32 7938
      %vm512 = vmand %vm454, %vm511
      %v513 = vld [vmem:[#allocation2 + $0x8] sm:$0x1]
      %v514 = vsel %vm512, 0, %v513
      %515 = vst [vmem:[#allocation2 + $0x8] sm:$0x1] %v514
      %v516 = vld [vmem:[#allocation2 + $0x14] sm:$0x1]
      %v517 = vsel %vm512, 0, %v516
      %518 = vst [vmem:[#allocation2 + $0x14] sm:$0x1] %v517
      %v519 = vld [vmem:[#allocation2 + $0x20] sm:$0x1]
      %v520 = vsel %vm512, 0, %v519
      %521 = vst [vmem:[#allocation2 + $0x20] sm:$0x1] %v520
      %v522 = vld [vmem:[#allocation2 + $0x2c] sm:$0x1]
      %v523 = vsel %vm512, 0, %v522
      %524 = vst [vmem:[#allocation2 + $0x2c] sm:$0x1] %v523
      %v525 = vld [vmem:[#allocation2 + $0x38] sm:$0x1]
      %v526 = vsel %vm512, 0, %v525
      %527 = vst [vmem:[#allocation2 + $0x38] sm:$0x1] %v526
      %v528 = vld [vmem:[#allocation2 + $0x44] sm:$0x1]
      %v529 = vsel %vm512, 0, %v528
      %530 = vst [vmem:[#allocation2 + $0x44] sm:$0x1] %v529
      %v531 = vld [vmem:[#allocation2 + $0x50] sm:$0x1]
      %v532 = vsel %vm512, 0, %v531
      %533 = vst [vmem:[#allocation2 + $0x50] sm:$0x1] %v532
      %v534 = vld [vmem:[#allocation2 + $0x5c] sm:$0x1]
      %v535 = vsel %vm512, 0, %v534
      %536 = vst [vmem:[#allocation2 + $0x5c] sm:$0x1] %v535
      %v537 = vld [vmem:[#allocation2 + $0x68] sm:$0x1]
      %v538 = vsel %vm512, 0, %v537
      %539 = vst [vmem:[#allocation2 + $0x68] sm:$0x1] %v538
      %v540 = vld [vmem:[#allocation2 + $0x74] sm:$0x1]
      %v541 = vsel %vm512, 0, %v540
      %542 = vst [vmem:[#allocation2 + $0x74] sm:$0x1] %v541
      %v543 = vld [vmem:[#allocation2 + $0x80] sm:$0x1]
      %v544 = vsel %vm512, 0, %v543
      %545 = vst [vmem:[#allocation2 + $0x80] sm:$0x1] %v544
      %v546 = vld [vmem:[#allocation2 + $0x8c] sm:$0x1]
      %v547 = vsel %vm512, 0, %v546
      %548 = vst [vmem:[#allocation2 + $0x8c] sm:$0x1] %v547
      %v549 = vld [vmem:[#allocation2 + $0x98] sm:$0x1]
      %v550 = vsel %vm512, 0, %v549
      %551 = vst [vmem:[#allocation2 + $0x98] sm:$0x1] %v550
      %v552 = vld [vmem:[#allocation2 + $0xa4] sm:$0x1]
      %v553 = vsel %vm512, 0, %v552
      %554 = vst [vmem:[#allocation2 + $0xa4] sm:$0x1] %v553
      %v555 = vld [vmem:[#allocation2 + $0xb0] sm:$0x1]
      %v556 = vsel %vm512, 0, %v555
      %557 = vst [vmem:[#allocation2 + $0xb0] sm:$0x1] %v556
      %v558 = vld [vmem:[#allocation2 + $0xbc] sm:$0x1]
      %v559 = vsel %vm512, 0, %v558
      %560 = vst [vmem:[#allocation2 + $0xbc] sm:$0x1] %v559
      %v561 = vld [vmem:[#allocation2 + $0xc8] sm:$0x1]
      %v562 = vsel %vm512, 0, %v561
      %563 = vst [vmem:[#allocation2 + $0xc8] sm:$0x1] %v562
      %v564 = vld [vmem:[#allocation2 + $0xd4] sm:$0x1]
      %v565 = vsel %vm512, 0, %v564
      %566 = vst [vmem:[#allocation2 + $0xd4] sm:$0x1] %v565
      %v567 = vld [vmem:[%s394] sm:$0xf]
      %v568 = vld [vmem:[%s394 + $0x4] sm:$0xf]
      %v569 = vld [vmem:[%s394 + $0x8] sm:$0xf]
      %v570 = vld [vmem:[%s394 + $0xc] sm:$0xf]
      %v571 = vld [vmem:[%s394 + $0x10] sm:$0xf]
      %v572 = vld [vmem:[%s394 + $0x14] sm:$0xf]
      %v573 = vld [vmem:[%s394 + $0x18] sm:$0xf]
      %v574 = vld [vmem:[%s394 + $0x1c] sm:$0xf]
      %v575 = vld [vmem:[%s394 + $0x20] sm:$0xf]
      %v576 = vld [vmem:[%s394 + $0x24] sm:$0xf]
      %v577 = vld [vmem:[%s394 + $0x28] sm:$0xf]
      %v578 = vld [vmem:[%s394 + $0x2c] sm:$0xf]
      %v579 = vld [vmem:[%s394 + $0x30] sm:$0xf]
      %v580 = vld [vmem:[%s394 + $0x34] sm:$0xf]
      %v581 = vld [vmem:[%s394 + $0x38] sm:$0xf]
      %v582 = vld [vmem:[%s394 + $0x3c] sm:$0xf]
      %v583 = vld [vmem:[%s394 + $0x40] sm:$0xf]
      %v584 = vld [vmem:[%s394 + $0x44] sm:$0xf]
      %v585 = vld [vmem:[%s394 + $0x48] sm:$0xf]
      %v586 = vld [vmem:[%s394 + $0x4c] sm:$0xf]
      %v587 = vld [vmem:[%s394 + $0x50] sm:$0xf]
      %v588 = vld [vmem:[%s394 + $0x54] sm:$0xf]
      %v589 = vld [vmem:[%s394 + $0x58] sm:$0xf]
      %v590 = vld [vmem:[%s394 + $0x5c] sm:$0xf]
      %v591 = vld [vmem:[%s394 + $0x60] sm:$0xf]
      %v592 = vld [vmem:[%s394 + $0x64] sm:$0xf]
      %v593 = vld [vmem:[%s394 + $0x68] sm:$0xf]
      %v594 = vld [vmem:[%s394 + $0x6c] sm:$0xf]
      %v595 = vld [vmem:[%s394 + $0x70] sm:$0xf]
      %v596 = vld [vmem:[%s394 + $0x74] sm:$0xf]
      %v597 = vld [vmem:[%s394 + $0x78] sm:$0xf]
      %v598 = vld [vmem:[%s394 + $0x7c] sm:$0xf]
      %vm599 = vsmask.f32 4368
      %vm600 = vmor %vm455, %vm599
      %v602 = vshrl.u32 %v567, 16
      %v604 = vrot.slane %v602, 7
      %v605 = vshll.u32 %v567, 16
      %v607 = vor.u32 %v604, %v605
      %v608 = vrot.slane %v604, 4
      %v610 = vshrl.u32 %v568, 16
      %v612 = vrot.slane %v610, 7
      %v613 = vshll.u32 %v568, 16
      %v615 = vor.u32 %v612, %v613
      %v616 = vsel %vm600, %v608, %v615
      %v617 = vrot.slane %v612, 4
      %v619 = vshrl.u32 %v569, 16
      %v621 = vrot.slane %v619, 7
      %v622 = vshll.u32 %v569, 16
      %v624 = vor.u32 %v621, %v622
      %v625 = vrot.slane %v621, 4
      %v627 = vshrl.u32 %v570, 16
      %v629 = vrot.slane %v627, 7
      %v630 = vshll.u32 %v570, 16
      %v632 = vor.u32 %v629, %v630
      %v633 = vsel %vm600, %v625, %v632
      %v634 = vrot.slane %v629, 4
      %v636 = vshrl.u32 %v571, 16
      %v638 = vrot.slane %v636, 7
      %v639 = vshll.u32 %v571, 16
      %v641 = vor.u32 %v638, %v639
      %v642 = vrot.slane %v638, 4
      %v644 = vshrl.u32 %v572, 16
      %v646 = vrot.slane %v644, 7
      %v647 = vshll.u32 %v572, 16
      %v649 = vor.u32 %v646, %v647
      %v650 = vsel %vm600, %v642, %v649
      %v651 = vrot.slane %v646, 4
      %v653 = vshrl.u32 %v573, 16
      %v655 = vrot.slane %v653, 7
      %v656 = vshll.u32 %v573, 16
      %v658 = vor.u32 %v655, %v656
      %v659 = vrot.slane %v655, 4
      %v661 = vshrl.u32 %v574, 16
      %v663 = vrot.slane %v661, 7
      %v664 = vshll.u32 %v574, 16
      %v666 = vor.u32 %v663, %v664
      %v667 = vsel %vm600, %v659, %v666
      %v668 = vrot.slane %v663, 4
      %v670 = vshrl.u32 %v575, 16
      %v672 = vrot.slane %v670, 7
      %v673 = vshll.u32 %v575, 16
      %v675 = vor.u32 %v672, %v673
      %v676 = vrot.slane %v672, 4
      %v678 = vshrl.u32 %v576, 16
      %v680 = vrot.slane %v678, 7
      %v681 = vshll.u32 %v576, 16
      %v683 = vor.u32 %v680, %v681
      %v684 = vsel %vm600, %v676, %v683
      %v685 = vrot.slane %v680, 4
      %v687 = vshrl.u32 %v577, 16
      %v689 = vrot.slane %v687, 7
      %v690 = vshll.u32 %v577, 16
      %v692 = vor.u32 %v689, %v690
      %v693 = vrot.slane %v689, 4
      %v695 = vshrl.u32 %v578, 16
      %v697 = vrot.slane %v695, 7
      %v698 = vshll.u32 %v578, 16
      %v700 = vor.u32 %v697, %v698
      %v701 = vsel %vm600, %v693, %v700
      %v702 = vrot.slane %v697, 4
      %v704 = vshrl.u32 %v579, 16
      %v706 = vrot.slane %v704, 7
      %v707 = vshll.u32 %v579, 16
      %v709 = vor.u32 %v706, %v707
      %v710 = vrot.slane %v706, 4
      %v712 = vshrl.u32 %v580, 16
      %v714 = vrot.slane %v712, 7
      %v715 = vshll.u32 %v580, 16
      %v717 = vor.u32 %v714, %v715
      %v718 = vsel %vm600, %v710, %v717
      %v719 = vrot.slane %v714, 4
      %v721 = vshrl.u32 %v581, 16
      %v723 = vrot.slane %v721, 7
      %v724 = vshll.u32 %v581, 16
      %v726 = vor.u32 %v723, %v724
      %v727 = vrot.slane %v723, 4
      %v729 = vshrl.u32 %v582, 16
      %v731 = vrot.slane %v729, 7
      %v732 = vshll.u32 %v582, 16
      %v734 = vor.u32 %v731, %v732
      %v735 = vsel %vm600, %v727, %v734
      %v736 = vrot.slane %v731, 4
      %v738 = vshrl.u32 %v583, 16
      %v740 = vrot.slane %v738, 7
      %v741 = vshll.u32 %v583, 16
      %v743 = vor.u32 %v740, %v741
      %v744 = vrot.slane %v740, 4
      %v746 = vshrl.u32 %v584, 16
      %v748 = vrot.slane %v746, 7
      %v749 = vshll.u32 %v584, 16
      %v751 = vor.u32 %v748, %v749
      %v752 = vsel %vm600, %v744, %v751
      %v753 = vrot.slane %v748, 4
      %v755 = vshrl.u32 %v585, 16
      %v757 = vrot.slane %v755, 7
      %v758 = vshll.u32 %v585, 16
      %v760 = vor.u32 %v757, %v758
      %v761 = vrot.slane %v757, 4
      %v763 = vshrl.u32 %v586, 16
      %v765 = vrot.slane %v763, 7
      %v766 = vshll.u32 %v586, 16
      %v768 = vor.u32 %v765, %v766
      %v769 = vsel %vm600, %v761, %v768
      %v770 = vrot.slane %v765, 4
      %v772 = vshrl.u32 %v587, 16
      %v774 = vrot.slane %v772, 7
      %v775 = vshll.u32 %v587, 16
      %v777 = vor.u32 %v774, %v775
      %v778 = vrot.slane %v774, 4
      %v780 = vshrl.u32 %v588, 16
      %v782 = vrot.slane %v780, 7
      %v783 = vshll.u32 %v588, 16
      %v785 = vor.u32 %v782, %v783
      %v786 = vsel %vm600, %v778, %v785
      %v787 = vrot.slane %v782, 4
      %v789 = vshrl.u32 %v589, 16
      %v791 = vrot.slane %v789, 7
      %v792 = vshll.u32 %v589, 16
      %v794 = vor.u32 %v791, %v792
      %v795 = vrot.slane %v791, 4
      %v797 = vshrl.u32 %v590, 16
      %v799 = vrot.slane %v797, 7
      %v800 = vshll.u32 %v590, 16
      %v802 = vor.u32 %v799, %v800
      %v803 = vsel %vm600, %v795, %v802
      %v804 = vrot.slane %v799, 4
      %v806 = vshrl.u32 %v591, 16
      %v808 = vrot.slane %v806, 7
      %v809 = vshll.u32 %v591, 16
      %v811 = vor.u32 %v808, %v809
      %v812 = vrot.slane %v808, 4
      %v814 = vshrl.u32 %v592, 16
      %v816 = vrot.slane %v814, 7
      %v817 = vshll.u32 %v592, 16
      %v819 = vor.u32 %v816, %v817
      %v820 = vsel %vm600, %v812, %v819
      %v821 = vrot.slane %v816, 4
      %v823 = vshrl.u32 %v593, 16
      %v825 = vrot.slane %v823, 7
      %v826 = vshll.u32 %v593, 16
      %v828 = vor.u32 %v825, %v826
      %v829 = vrot.slane %v825, 4
      %v831 = vshrl.u32 %v594, 16
      %v833 = vrot.slane %v831, 7
      %v834 = vshll.u32 %v594, 16
      %v836 = vor.u32 %v833, %v834
      %v837 = vsel %vm600, %v829, %v836
      %v838 = vrot.slane %v833, 4
      %v840 = vshrl.u32 %v595, 16
      %v842 = vrot.slane %v840, 7
      %v843 = vshll.u32 %v595, 16
      %v845 = vor.u32 %v842, %v843
      %v846 = vrot.slane %v842, 4
      %v848 = vshrl.u32 %v596, 16
      %v850 = vrot.slane %v848, 7
      %v851 = vshll.u32 %v596, 16
      %v853 = vor.u32 %v850, %v851
      %v854 = vsel %vm600, %v846, %v853
      %v855 = vrot.slane %v850, 4
      %v857 = vshrl.u32 %v597, 16
      %v859 = vrot.slane %v857, 7
      %v860 = vshll.u32 %v597, 16
      %v862 = vor.u32 %v859, %v860
      %v863 = vrot.slane %v859, 4
      %v865 = vshrl.u32 %v598, 16
      %v867 = vrot.slane %v865, 7
      %v868 = vshll.u32 %v598, 16
      %v870 = vor.u32 %v867, %v868
      %v871 = vsel %vm600, %v863, %v870
      %v872 = vrot.slane %v867, 4
      %s921 = scalar_lea.vmem [#allocation2], 12
      %vm922 = vcmask 60416
      %vm923 = vmand %vm922, %vm511
      %v924 = vld [vmem:[%s921] sm:$0xf]
      %v925 = vsel %vm923, %v607, %v924
      %926 = vst [vmem:[%s921] sm:$0xf] %v925
      %vm927 = vcmask 60416
      %928 = vst.msk [vmem:[%s921 + $0x4] sm:$0xf] %vm927, %v616
      %v929 = vld [vmem:[%s921 + $0x8] sm:$0x1]
      %v930 = vsel %vm456, %v617, %v929
      %931 = vst [vmem:[%s921 + $0x8] sm:$0x1] %v930
      %v932 = vld [vmem:[%s921 + $0xc] sm:$0xf]
      %v933 = vsel %vm923, %v624, %v932
      %934 = vst [vmem:[%s921 + $0xc] sm:$0xf] %v933
      %935 = vst.msk [vmem:[%s921 + $0x10] sm:$0xf] %vm927, %v633
      %v936 = vld [vmem:[%s921 + $0x14] sm:$0x1]
      %v937 = vsel %vm456, %v634, %v936
      %938 = vst [vmem:[%s921 + $0x14] sm:$0x1] %v937
      %v939 = vld [vmem:[%s921 + $0x18] sm:$0xf]
      %v940 = vsel %vm923, %v641, %v939
      %941 = vst [vmem:[%s921 + $0x18] sm:$0xf] %v940
      %942 = vst.msk [vmem:[%s921 + $0x1c] sm:$0xf] %vm927, %v650
      %v943 = vld [vmem:[%s921 + $0x20] sm:$0x1]
      %v944 = vsel %vm456, %v651, %v943
      %945 = vst [vmem:[%s921 + $0x20] sm:$0x1] %v944
      %v946 = vld [vmem:[%s921 + $0x24] sm:$0xf]
      %v947 = vsel %vm923, %v658, %v946
      %948 = vst [vmem:[%s921 + $0x24] sm:$0xf] %v947
      %949 = vst.msk [vmem:[%s921 + $0x28] sm:$0xf] %vm927, %v667
      %v950 = vld [vmem:[%s921 + $0x2c] sm:$0x1]
      %v951 = vsel %vm456, %v668, %v950
      %952 = vst [vmem:[%s921 + $0x2c] sm:$0x1] %v951
      %v953 = vld [vmem:[%s921 + $0x30] sm:$0xf]
      %v954 = vsel %vm923, %v675, %v953
      %955 = vst [vmem:[%s921 + $0x30] sm:$0xf] %v954
      %956 = vst.msk [vmem:[%s921 + $0x34] sm:$0xf] %vm927, %v684
      %v957 = vld [vmem:[%s921 + $0x38] sm:$0x1]
      %v958 = vsel %vm456, %v685, %v957
      %959 = vst [vmem:[%s921 + $0x38] sm:$0x1] %v958
      %v960 = vld [vmem:[%s921 + $0x3c] sm:$0xf]
      %v961 = vsel %vm923, %v692, %v960
      %962 = vst [vmem:[%s921 + $0x3c] sm:$0xf] %v961
      %963 = vst.msk [vmem:[%s921 + $0x40] sm:$0xf] %vm927, %v701
      %v964 = vld [vmem:[%s921 + $0x44] sm:$0x1]
      %v965 = vsel %vm456, %v702, %v964
      %966 = vst [vmem:[%s921 + $0x44] sm:$0x1] %v965
      %v967 = vld [vmem:[%s921 + $0x48] sm:$0xf]
      %v968 = vsel %vm923, %v709, %v967
      %969 = vst [vmem:[%s921 + $0x48] sm:$0xf] %v968
      %970 = vst.msk [vmem:[%s921 + $0x4c] sm:$0xf] %vm927, %v718
      %v971 = vld [vmem:[%s921 + $0x50] sm:$0x1]
      %v972 = vsel %vm456, %v719, %v971
      %973 = vst [vmem:[%s921 + $0x50] sm:$0x1] %v972
      %v974 = vld [vmem:[%s921 + $0x54] sm:$0xf]
      %v975 = vsel %vm923, %v726, %v974
      %976 = vst [vmem:[%s921 + $0x54] sm:$0xf] %v975
      %977 = vst.msk [vmem:[%s921 + $0x58] sm:$0xf] %vm927, %v735
      %v978 = vld [vmem:[%s921 + $0x5c] sm:$0x1]
      %v979 = vsel %vm456, %v736, %v978
      %980 = vst [vmem:[%s921 + $0x5c] sm:$0x1] %v979
      %v981 = vld [vmem:[%s921 + $0x60] sm:$0xf]
      %v982 = vsel %vm923, %v743, %v981
      %983 = vst [vmem:[%s921 + $0x60] sm:$0xf] %v982
      %984 = vst.msk [vmem:[%s921 + $0x64] sm:$0xf] %vm927, %v752
      %v985 = vld [vmem:[%s921 + $0x68] sm:$0x1]
      %v986 = vsel %vm456, %v753, %v985
      %987 = vst [vmem:[%s921 + $0x68] sm:$0x1] %v986
      %v988 = vld [vmem:[%s921 + $0x6c] sm:$0xf]
      %v989 = vsel %vm923, %v760, %v988
      %990 = vst [vmem:[%s921 + $0x6c] sm:$0xf] %v989
      %991 = vst.msk [vmem:[%s921 + $0x70] sm:$0xf] %vm927, %v769
      %v992 = vld [vmem:[%s921 + $0x74] sm:$0x1]
      %v993 = vsel %vm456, %v770, %v992
      %994 = vst [vmem:[%s921 + $0x74] sm:$0x1] %v993
      %v995 = vld [vmem:[%s921 + $0x78] sm:$0xf]
      %v996 = vsel %vm923, %v777, %v995
      %997 = vst [vmem:[%s921 + $0x78] sm:$0xf] %v996
      %998 = vst.msk [vmem:[%s921 + $0x7c] sm:$0xf] %vm927, %v786
      %v999 = vld [vmem:[%s921 + $0x80] sm:$0x1]
      %v1000 = vsel %vm456, %v787, %v999
      %1001 = vst [vmem:[%s921 + $0x80] sm:$0x1] %v1000
      %v1002 = vld [vmem:[%s921 + $0x84] sm:$0xf]
      %v1003 = vsel %vm923, %v794, %v1002
      %1004 = vst [vmem:[%s921 + $0x84] sm:$0xf] %v1003
      %1005 = vst.msk [vmem:[%s921 + $0x88] sm:$0xf] %vm927, %v803
      %v1006 = vld [vmem:[%s921 + $0x8c] sm:$0x1]
      %v1007 = vsel %vm456, %v804, %v1006
      %1008 = vst [vmem:[%s921 + $0x8c] sm:$0x1] %v1007
      %v1009 = vld [vmem:[%s921 + $0x90] sm:$0xf]
      %v1010 = vsel %vm923, %v811, %v1009
      %1011 = vst [vmem:[%s921 + $0x90] sm:$0xf] %v1010
      %1012 = vst.msk [vmem:[%s921 + $0x94] sm:$0xf] %vm927, %v820
      %v1013 = vld [vmem:[%s921 + $0x98] sm:$0x1]
      %v1014 = vsel %vm456, %v821, %v1013
      %1015 = vst [vmem:[%s921 + $0x98] sm:$0x1] %v1014
      %v1016 = vld [vmem:[%s921 + $0x9c] sm:$0xf]
      %v1017 = vsel %vm923, %v828, %v1016
      %1018 = vst [vmem:[%s921 + $0x9c] sm:$0xf] %v1017
      %1019 = vst.msk [vmem:[%s921 + $0xa0] sm:$0xf] %vm927, %v837
      %v1020 = vld [vmem:[%s921 + $0xa4] sm:$0x1]
      %v1021 = vsel %vm456, %v838, %v1020
      %1022 = vst [vmem:[%s921 + $0xa4] sm:$0x1] %v1021
      %v1023 = vld [vmem:[%s921 + $0xa8] sm:$0xf]
      %v1024 = vsel %vm923, %v845, %v1023
      %1025 = vst [vmem:[%s921 + $0xa8] sm:$0xf] %v1024
      %1026 = vst.msk [vmem:[%s921 + $0xac] sm:$0xf] %vm927, %v854
      %v1027 = vld [vmem:[%s921 + $0xb0] sm:$0x1]
      %v1028 = vsel %vm456, %v855, %v1027
      %1029 = vst [vmem:[%s921 + $0xb0] sm:$0x1] %v1028
      %v1030 = vld [vmem:[%s921 + $0xb4] sm:$0xf]
      %v1031 = vsel %vm923, %v862, %v1030
      %1032 = vst [vmem:[%s921 + $0xb4] sm:$0xf] %v1031
      %1033 = vst.msk [vmem:[%s921 + $0xb8] sm:$0xf] %vm927, %v871
      %v1034 = vld [vmem:[%s921 + $0xbc] sm:$0x1]
      %v1035 = vsel %vm456, %v872, %v1034
      %1036 = vst [vmem:[%s921 + $0xbc] sm:$0x1] %v1035
      %p1037 = scmp.eq.s32.totalorder %s23, 0
      // Predicated region
      $region37: #{double_conv.3} parent=35 // pred_check
        %p1038 = pneg %p1037
      $region38: #{double_conv.3} parent=35 // pred_check_branch
        %1040 = sbr.rel (%p1038) target = $region40
      $region39: #{double_conv.3} parent=35 // pred_region
        %v1041 = vld [vmem:[#allocation2] sm:$0xf]
        %v1042 = vsel %vm923, 0, %v1041
        %1043 = vst [vmem:[#allocation2] sm:$0xf] %v1042
        %1044 = vst.msk [vmem:[#allocation2 + $0x4] sm:$0xf] %vm927, 0
        %v1045 = vld [vmem:[#allocation2 + $0x8] sm:$0x1]
        %v1046 = vsel %vm456, 0, %v1045
        %1047 = vst [vmem:[#allocation2 + $0x8] sm:$0x1] %v1046
      $region40: #{double_conv.3} parent=35 // pred_fallthru
        _
      %p1048 = scmp.gt.s32.totalorder %s23, 0
      // Predicated region
      $region41: #{double_conv.3} parent=35 // pred_check
        %p1049 = pneg %p1048
      $region42: #{double_conv.3} parent=35 // pred_check_branch
        %1051 = sbr.rel (%p1049) target = $region44
      $region43: #{double_conv.3} parent=35 // pred_region
        %v1052 = vld [vmem:[%s408] sm:$0xf]
        %v1053 = vld [vmem:[%s408 + $0x4] sm:$0xf]
        %v1055 = vshrl.u32 %v1052, 16
        %v1057 = vrot.slane %v1055, 7
        %v1058 = vshll.u32 %v1052, 16
        %v1060 = vor.u32 %v1057, %v1058
        %v1061 = vrot.slane %v1057, 4
        %v1063 = vshrl.u32 %v1053, 16
        %v1065 = vrot.slane %v1063, 7
        %v1066 = vshll.u32 %v1053, 16
        %v1068 = vor.u32 %v1065, %v1066
        %v1069 = vsel %vm600, %v1061, %v1068
        %v1070 = vrot.slane %v1065, 4
        %v1074 = vld [vmem:[#allocation2] sm:$0xf]
        %v1075 = vsel %vm923, %v1060, %v1074
        %1076 = vst [vmem:[#allocation2] sm:$0xf] %v1075
        %1077 = vst.msk [vmem:[#allocation2 + $0x4] sm:$0xf] %vm927, %v1069
        %v1078 = vld [vmem:[#allocation2 + $0x8] sm:$0x1]
        %v1079 = vsel %vm456, %v1070, %v1078
        %1080 = vst [vmem:[#allocation2 + $0x8] sm:$0x1] %v1079
      $region44: #{double_conv.3} parent=35 // pred_fallthru
        _
      // Predicated region
      $region45: #{double_conv.3} parent=35 // pred_check
        %p1081 = pneg %p1037
      $region46: #{double_conv.3} parent=35 // pred_check_branch
        %1083 = sbr.rel (%p1081) target = $region48
      $region47: #{double_conv.3} parent=35 // pred_region
        %s1084 = scalar_lea.vmem [#allocation2], 204
        %v1085 = vld [vmem:[%s1084] sm:$0xf]
        %v1086 = vsel %vm923, 0, %v1085
        %1087 = vst [vmem:[%s1084] sm:$0xf] %v1086
        %1088 = vst.msk [vmem:[%s1084 + $0x4] sm:$0xf] %vm927, 0
        %v1089 = vld [vmem:[%s1084 + $0x8] sm:$0x1]
        %v1090 = vsel %vm456, 0, %v1089
        %1091 = vst [vmem:[%s1084 + $0x8] sm:$0x1] %v1090
      $region48: #{double_conv.3} parent=35 // pred_fallthru
        _
      %p1092 = scmp.lt.s32.totalorder %s23, 0
      // Predicated region
      $region49: #{double_conv.3} parent=35 // pred_check
        %p1093 = pneg %p1092
      $region50: #{double_conv.3} parent=35 // pred_check_branch
        %1095 = sbr.rel (%p1093) target = $region52
      $region51: #{double_conv.3} parent=35 // pred_region
        %v1096 = vld [vmem:[%s425] sm:$0xf]
        %v1097 = vld [vmem:[%s425 + $0x4] sm:$0xf]
        %v1099 = vshrl.u32 %v1096, 16
        %v1101 = vrot.slane %v1099, 7
        %v1102 = vshll.u32 %v1096, 16
        %v1104 = vor.u32 %v1101, %v1102
        %v1105 = vrot.slane %v1101, 4
        %v1107 = vshrl.u32 %v1097, 16
        %v1109 = vrot.slane %v1107, 7
        %v1110 = vshll.u32 %v1097, 16
        %v1112 = vor.u32 %v1109, %v1110
        %v1113 = vsel %vm600, %v1105, %v1112
        %v1114 = vrot.slane %v1109, 4
        %s1118 = scalar_lea.vmem [#allocation2], 204
        %v1119 = vld [vmem:[%s1118] sm:$0xf]
        %v1120 = vsel %vm923, %v1104, %v1119
        %1121 = vst [vmem:[%s1118] sm:$0xf] %v1120
        %1122 = vst.msk [vmem:[%s1118 + $0x4] sm:$0xf] %vm927, %v1113
        %v1123 = vld [vmem:[%s1118 + $0x8] sm:$0x1]
        %v1124 = vsel %vm456, %v1114, %v1123
        %1125 = vst [vmem:[%s1118 + $0x8] sm:$0x1] %v1124
      $region52: #{double_conv.3} parent=35 // pred_fallthru
        _
      %v1126 = vld [vmem:[#allocation2] sm:$0xf]
      %v1127 = vld [vmem:[#allocation2 + $0x4] sm:$0xf]
      %v1128 = vld [vmem:[#allocation2 + $0xc] sm:$0xf]
      %v1129 = vld [vmem:[#allocation2 + $0x10] sm:$0xf]
      %v1130 = vld [vmem:[#allocation2 + $0x18] sm:$0xf]
      %v1131 = vld [vmem:[#allocation2 + $0x1c] sm:$0xf]
      %v1132 = vld [vmem:[#allocation2 + $0x24] sm:$0xf]
      %v1133 = vld [vmem:[#allocation2 + $0x28] sm:$0xf]
      %v1134 = vld [vmem:[#allocation2 + $0x30] sm:$0xf]
      %v1135 = vld [vmem:[#allocation2 + $0x34] sm:$0xf]
      %v1136 = vld [vmem:[#allocation2 + $0x3c] sm:$0xf]
      %v1137 = vld [vmem:[#allocation2 + $0x40] sm:$0xf]
      %v1138 = vld [vmem:[#allocation2 + $0x48] sm:$0xf]
      %v1139 = vld [vmem:[#allocation2 + $0x4c] sm:$0xf]
      %v1140 = vld [vmem:[#allocation2 + $0x54] sm:$0xf]
      %v1141 = vld [vmem:[#allocation2 + $0x58] sm:$0xf]
      %v1142 = vld [vmem:[#allocation2 + $0x60] sm:$0xf]
      %v1143 = vld [vmem:[#allocation2 + $0x64] sm:$0xf]
      %v1144 = vld [vmem:[#allocation2 + $0x6c] sm:$0xf]
      %v1145 = vld [vmem:[#allocation2 + $0x70] sm:$0xf]
      %v1146 = vld [vmem:[#allocation2 + $0x78] sm:$0xf]
      %v1147 = vld [vmem:[#allocation2 + $0x7c] sm:$0xf]
      %v1148 = vld [vmem:[#allocation2 + $0x84] sm:$0xf]
      %v1149 = vld [vmem:[#allocation2 + $0x88] sm:$0xf]
      %v1150 = vld [vmem:[#allocation2 + $0x90] sm:$0xf]
      %v1151 = vld [vmem:[#allocation2 + $0x94] sm:$0xf]
      %v1152 = vld [vmem:[#allocation2 + $0x9c] sm:$0xf]
      %v1153 = vld [vmem:[#allocation2 + $0xa0] sm:$0xf]
      %v1154 = vld [vmem:[#allocation2 + $0xa8] sm:$0xf]
      %v1155 = vld [vmem:[#allocation2 + $0xac] sm:$0xf]
      %v1156 = vld [vmem:[#allocation2 + $0xb4] sm:$0xf]
      %v1157 = vld [vmem:[#allocation2 + $0xb8] sm:$0xf]
      %1158 = vst.msk [vmem:[#allocation3] sm:$0xf] %vm927, %v1126
      %1159 = vst.msk [vmem:[#allocation3 + $0x4] sm:$0xf] %vm927, %v1127
      %1160 = vst.msk [vmem:[#allocation3 + $0x8] sm:$0xf] %vm927, %v1128
      %1161 = vst.msk [vmem:[#allocation3 + $0xc] sm:$0xf] %vm927, %v1129
      %1162 = vst.msk [vmem:[#allocation3 + $0x10] sm:$0xf] %vm927, %v1130
      %1163 = vst.msk [vmem:[#allocation3 + $0x14] sm:$0xf] %vm927, %v1131
      %1164 = vst.msk [vmem:[#allocation3 + $0x18] sm:$0xf] %vm927, %v1132
      %1165 = vst.msk [vmem:[#allocation3 + $0x1c] sm:$0xf] %vm927, %v1133
      %1166 = vst.msk [vmem:[#allocation3 + $0x20] sm:$0xf] %vm927, %v1134
      %1167 = vst.msk [vmem:[#allocation3 + $0x24] sm:$0xf] %vm927, %v1135
      %1168 = vst.msk [vmem:[#allocation3 + $0x28] sm:$0xf] %vm927, %v1136
      %1169 = vst.msk [vmem:[#allocation3 + $0x2c] sm:$0xf] %vm927, %v1137
      %1170 = vst.msk [vmem:[#allocation3 + $0x30] sm:$0xf] %vm927, %v1138
      %1171 = vst.msk [vmem:[#allocation3 + $0x34] sm:$0xf] %vm927, %v1139
      %1172 = vst.msk [vmem:[#allocation3 + $0x38] sm:$0xf] %vm927, %v1140
      %1173 = vst.msk [vmem:[#allocation3 + $0x3c] sm:$0xf] %vm927, %v1141
      %1174 = vst.msk [vmem:[#allocation3 + $0x40] sm:$0xf] %vm927, %v1142
      %1175 = vst.msk [vmem:[#allocation3 + $0x44] sm:$0xf] %vm927, %v1143
      %1176 = vst.msk [vmem:[#allocation3 + $0x48] sm:$0xf] %vm927, %v1144
      %1177 = vst.msk [vmem:[#allocation3 + $0x4c] sm:$0xf] %vm927, %v1145
      %1178 = vst.msk [vmem:[#allocation3 + $0x50] sm:$0xf] %vm927, %v1146
      %1179 = vst.msk [vmem:[#allocation3 + $0x54] sm:$0xf] %vm927, %v1147
      %1180 = vst.msk [vmem:[#allocation3 + $0x58] sm:$0xf] %vm927, %v1148
      %1181 = vst.msk [vmem:[#allocation3 + $0x5c] sm:$0xf] %vm927, %v1149
      %1182 = vst.msk [vmem:[#allocation3 + $0x60] sm:$0xf] %vm927, %v1150
      %1183 = vst.msk [vmem:[#allocation3 + $0x64] sm:$0xf] %vm927, %v1151
      %1184 = vst.msk [vmem:[#allocation3 + $0x68] sm:$0xf] %vm927, %v1152
      %1185 = vst.msk [vmem:[#allocation3 + $0x6c] sm:$0xf] %vm927, %v1153
      %1186 = vst.msk [vmem:[#allocation3 + $0x70] sm:$0xf] %vm927, %v1154
      %1187 = vst.msk [vmem:[#allocation3 + $0x74] sm:$0xf] %vm927, %v1155
      %1188 = vst.msk [vmem:[#allocation3 + $0x78] sm:$0xf] %vm927, %v1156
      %1189 = vst.msk [vmem:[#allocation3 + $0x7c] sm:$0xf] %vm927, %v1157
      %v1190 = vld [vmem:[#allocation2] sm:$0xf]
      %v1191 = vld [vmem:[#allocation2 + $0x4] sm:$0xf]
      %v1192 = vld [vmem:[#allocation2 + $0x8] sm:$0x1]
      %v1193 = vld [vmem:[#allocation2 + $0xc] sm:$0xf]
      %v1194 = vld [vmem:[#allocation2 + $0x10] sm:$0xf]
      %v1195 = vld [vmem:[#allocation2 + $0x14] sm:$0x1]
      %v1196 = vld [vmem:[#allocation2 + $0x18] sm:$0xf]
      %v1197 = vld [vmem:[#allocation2 + $0x1c] sm:$0xf]
      %v1198 = vld [vmem:[#allocation2 + $0x20] sm:$0x1]
      %v1199 = vld [vmem:[#allocation2 + $0x24] sm:$0xf]
      %v1200 = vld [vmem:[#allocation2 + $0x28] sm:$0xf]
      %v1201 = vld [vmem:[#allocation2 + $0x2c] sm:$0x1]
      %v1202 = vld [vmem:[#allocation2 + $0x30] sm:$0xf]
      %v1203 = vld [vmem:[#allocation2 + $0x34] sm:$0xf]
      %v1204 = vld [vmem:[#allocation2 + $0x38] sm:$0x1]
      %v1205 = vld [vmem:[#allocation2 + $0x3c] sm:$0xf]
      %v1206 = vld [vmem:[#allocation2 + $0x40] sm:$0xf]
      %v1207 = vld [vmem:[#allocation2 + $0x44] sm:$0x1]
      %v1208 = vld [vmem:[#allocation2 + $0x48] sm:$0xf]
      %v1209 = vld [vmem:[#allocation2 + $0x4c] sm:$0xf]
      %v1210 = vld [vmem:[#allocation2 + $0x50] sm:$0x1]
      %v1211 = vld [vmem:[#allocation2 + $0x54] sm:$0xf]
      %v1212 = vld [vmem:[#allocation2 + $0x58] sm:$0xf]
      %v1213 = vld [vmem:[#allocation2 + $0x5c] sm:$0x1]
      %v1214 = vld [vmem:[#allocation2 + $0x60] sm:$0xf]
      %v1215 = vld [vmem:[#allocation2 + $0x64] sm:$0xf]
      %v1216 = vld [vmem:[#allocation2 + $0x68] sm:$0x1]
      %v1217 = vld [vmem:[#allocation2 + $0x6c] sm:$0xf]
      %v1218 = vld [vmem:[#allocation2 + $0x70] sm:$0xf]
      %v1219 = vld [vmem:[#allocation2 + $0x74] sm:$0x1]
      %v1220 = vld [vmem:[#allocation2 + $0x78] sm:$0xf]
      %v1221 = vld [vmem:[#allocation2 + $0x7c] sm:$0xf]
      %v1222 = vld [vmem:[#allocation2 + $0x80] sm:$0x1]
      %v1223 = vld [vmem:[#allocation2 + $0x84] sm:$0xf]
      %v1224 = vld [vmem:[#allocation2 + $0x88] sm:$0xf]
      %v1225 = vld [vmem:[#allocation2 + $0x8c] sm:$0x1]
      %v1226 = vld [vmem:[#allocation2 + $0x90] sm:$0xf]
      %v1227 = vld [vmem:[#allocation2 + $0x94] sm:$0xf]
      %v1228 = vld [vmem:[#allocation2 + $0x98] sm:$0x1]
      %v1229 = vld [vmem:[#allocation2 + $0x9c] sm:$0xf]
      %v1230 = vld [vmem:[#allocation2 + $0xa0] sm:$0xf]
      %v1231 = vld [vmem:[#allocation2 + $0xa4] sm:$0x1]
      %v1232 = vld [vmem:[#allocation2 + $0xa8] sm:$0xf]
      %v1233 = vld [vmem:[#allocation2 + $0xac] sm:$0xf]
      %v1234 = vld [vmem:[#allocation2 + $0xb0] sm:$0x1]
      %v1235 = vld [vmem:[#allocation2 + $0xb4] sm:$0xf]
      %v1236 = vld [vmem:[#allocation2 + $0xb8] sm:$0xf]
      %v1237 = vld [vmem:[#allocation2 + $0xbc] sm:$0x1]
      %vm1238 = vsmask.f32 3328
      %vm1239 = vsmask.f32 7440
      %vm1240 = vmor %vm1238, %vm1239
      %v1242 = vshrl.u32 %v1190, 16
      %v1244 = vrot.slane %v1242, 4
      %v1245 = vshll.u32 %v1190, 16
      %v1247 = vrot.slane %v1245, 5
      %v1248 = vor.u32 %v1244, %v1247
      %v1249 = vrot.slane %v1248, 4
      %v1251 = vshll.u32 %v1191, 16
      %v1253 = vrot.slane %v1251, 5
      %v1254 = vsel %vm1240, %v1249, %v1253
      %v1255 = vshrl.u32 %v1191, 16
      %v1257 = vrot.slane %v1255, 4
      %v1258 = vor.u32 %v1257, %v1253
      %v1259 = vrot.slane %v1258, 4
      %v1261 = vshll.u32 %v1192, 16
      %v1263 = vrot.slane %v1261, 5
      %v1264 = vsel %vm1240, %v1259, %v1263
      %v1266 = vshrl.u32 %v1193, 16
      %v1268 = vrot.slane %v1266, 4
      %v1269 = vshll.u32 %v1193, 16
      %v1271 = vrot.slane %v1269, 5
      %v1272 = vor.u32 %v1268, %v1271
      %v1273 = vrot.slane %v1272, 4
      %v1275 = vshll.u32 %v1194, 16
      %v1277 = vrot.slane %v1275, 5
      %v1278 = vsel %vm1240, %v1273, %v1277
      %v1279 = vshrl.u32 %v1194, 16
      %v1281 = vrot.slane %v1279, 4
      %v1282 = vor.u32 %v1281, %v1277
      %v1283 = vrot.slane %v1282, 4
      %v1285 = vshll.u32 %v1195, 16
      %v1287 = vrot.slane %v1285, 5
      %v1288 = vsel %vm1240, %v1283, %v1287
      %v1290 = vshrl.u32 %v1196, 16
      %v1292 = vrot.slane %v1290, 4
      %v1293 = vshll.u32 %v1196, 16
      %v1295 = vrot.slane %v1293, 5
      %v1296 = vor.u32 %v1292, %v1295
      %v1297 = vrot.slane %v1296, 4
      %v1299 = vshll.u32 %v1197, 16
      %v1301 = vrot.slane %v1299, 5
      %v1302 = vsel %vm1240, %v1297, %v1301
      %v1303 = vshrl.u32 %v1197, 16
      %v1305 = vrot.slane %v1303, 4
      %v1306 = vor.u32 %v1305, %v1301
      %v1307 = vrot.slane %v1306, 4
      %v1309 = vshll.u32 %v1198, 16
      %v1311 = vrot.slane %v1309, 5
      %v1312 = vsel %vm1240, %v1307, %v1311
      %v1314 = vshrl.u32 %v1199, 16
      %v1316 = vrot.slane %v1314, 4
      %v1317 = vshll.u32 %v1199, 16
      %v1319 = vrot.slane %v1317, 5
      %v1320 = vor.u32 %v1316, %v1319
      %v1321 = vrot.slane %v1320, 4
      %v1323 = vshll.u32 %v1200, 16
      %v1325 = vrot.slane %v1323, 5
      %v1326 = vsel %vm1240, %v1321, %v1325
      %v1327 = vshrl.u32 %v1200, 16
      %v1329 = vrot.slane %v1327, 4
      %v1330 = vor.u32 %v1329, %v1325
      %v1331 = vrot.slane %v1330, 4
      %v1333 = vshll.u32 %v1201, 16
      %v1335 = vrot.slane %v1333, 5
      %v1336 = vsel %vm1240, %v1331, %v1335
      %v1338 = vshrl.u32 %v1202, 16
      %v1340 = vrot.slane %v1338, 4
      %v1341 = vshll.u32 %v1202, 16
      %v1343 = vrot.slane %v1341, 5
      %v1344 = vor.u32 %v1340, %v1343
      %v1345 = vrot.slane %v1344, 4
      %v1347 = vshll.u32 %v1203, 16
      %v1349 = vrot.slane %v1347, 5
      %v1350 = vsel %vm1240, %v1345, %v1349
      %v1351 = vshrl.u32 %v1203, 16
      %v1353 = vrot.slane %v1351, 4
      %v1354 = vor.u32 %v1353, %v1349
      %v1355 = vrot.slane %v1354, 4
      %v1357 = vshll.u32 %v1204, 16
      %v1359 = vrot.slane %v1357, 5
      %v1360 = vsel %vm1240, %v1355, %v1359
      %v1362 = vshrl.u32 %v1205, 16
      %v1364 = vrot.slane %v1362, 4
      %v1365 = vshll.u32 %v1205, 16
      %v1367 = vrot.slane %v1365, 5
      %v1368 = vor.u32 %v1364, %v1367
      %v1369 = vrot.slane %v1368, 4
      %v1371 = vshll.u32 %v1206, 16
      %v1373 = vrot.slane %v1371, 5
      %v1374 = vsel %vm1240, %v1369, %v1373
      %v1375 = vshrl.u32 %v1206, 16
      %v1377 = vrot.slane %v1375, 4
      %v1378 = vor.u32 %v1377, %v1373
      %v1379 = vrot.slane %v1378, 4
      %v1381 = vshll.u32 %v1207, 16
      %v1383 = vrot.slane %v1381, 5
      %v1384 = vsel %vm1240, %v1379, %v1383
      %v1386 = vshrl.u32 %v1208, 16
      %v1388 = vrot.slane %v1386, 4
      %v1389 = vshll.u32 %v1208, 16
      %v1391 = vrot.slane %v1389, 5
      %v1392 = vor.u32 %v1388, %v1391
      %v1393 = vrot.slane %v1392, 4
      %v1395 = vshll.u32 %v1209, 16
      %v1397 = vrot.slane %v1395, 5
      %v1398 = vsel %vm1240, %v1393, %v1397
      %v1399 = vshrl.u32 %v1209, 16
      %v1401 = vrot.slane %v1399, 4
      %v1402 = vor.u32 %v1401, %v1397
      %v1403 = vrot.slane %v1402, 4
      %v1405 = vshll.u32 %v1210, 16
      %v1407 = vrot.slane %v1405, 5
      %v1408 = vsel %vm1240, %v1403, %v1407
      %v1410 = vshrl.u32 %v1211, 16
      %v1412 = vrot.slane %v1410, 4
      %v1413 = vshll.u32 %v1211, 16
      %v1415 = vrot.slane %v1413, 5
      %v1416 = vor.u32 %v1412, %v1415
      %v1417 = vrot.slane %v1416, 4
      %v1419 = vshll.u32 %v1212, 16
      %v1421 = vrot.slane %v1419, 5
      %v1422 = vsel %vm1240, %v1417, %v1421
      %v1423 = vshrl.u32 %v1212, 16
      %v1425 = vrot.slane %v1423, 4
      %v1426 = vor.u32 %v1425, %v1421
      %v1427 = vrot.slane %v1426, 4
      %v1429 = vshll.u32 %v1213, 16
      %v1431 = vrot.slane %v1429, 5
      %v1432 = vsel %vm1240, %v1427, %v1431
      %v1434 = vshrl.u32 %v1214, 16
      %v1436 = vrot.slane %v1434, 4
      %v1437 = vshll.u32 %v1214, 16
      %v1439 = vrot.slane %v1437, 5
      %v1440 = vor.u32 %v1436, %v1439
      %v1441 = vrot.slane %v1440, 4
      %v1443 = vshll.u32 %v1215, 16
      %v1445 = vrot.slane %v1443, 5
      %v1446 = vsel %vm1240, %v1441, %v1445
      %v1447 = vshrl.u32 %v1215, 16
      %v1449 = vrot.slane %v1447, 4
      %v1450 = vor.u32 %v1449, %v1445
      %v1451 = vrot.slane %v1450, 4
      %v1453 = vshll.u32 %v1216, 16
      %v1455 = vrot.slane %v1453, 5
      %v1456 = vsel %vm1240, %v1451, %v1455
      %v1458 = vshrl.u32 %v1217, 16
      %v1460 = vrot.slane %v1458, 4
      %v1461 = vshll.u32 %v1217, 16
      %v1463 = vrot.slane %v1461, 5
      %v1464 = vor.u32 %v1460, %v1463
      %v1465 = vrot.slane %v1464, 4
      %v1467 = vshll.u32 %v1218, 16
      %v1469 = vrot.slane %v1467, 5
      %v1470 = vsel %vm1240, %v1465, %v1469
      %v1471 = vshrl.u32 %v1218, 16
      %v1473 = vrot.slane %v1471, 4
      %v1474 = vor.u32 %v1473, %v1469
      %v1475 = vrot.slane %v1474, 4
      %v1477 = vshll.u32 %v1219, 16
      %v1479 = vrot.slane %v1477, 5
      %v1480 = vsel %vm1240, %v1475, %v1479
      %v1482 = vshrl.u32 %v1220, 16
      %v1484 = vrot.slane %v1482, 4
      %v1485 = vshll.u32 %v1220, 16
      %v1487 = vrot.slane %v1485, 5
      %v1488 = vor.u32 %v1484, %v1487
      %v1489 = vrot.slane %v1488, 4
      %v1491 = vshll.u32 %v1221, 16
      %v1493 = vrot.slane %v1491, 5
      %v1494 = vsel %vm1240, %v1489, %v1493
      %v1495 = vshrl.u32 %v1221, 16
      %v1497 = vrot.slane %v1495, 4
      %v1498 = vor.u32 %v1497, %v1493
      %v1499 = vrot.slane %v1498, 4
      %v1501 = vshll.u32 %v1222, 16
      %v1503 = vrot.slane %v1501, 5
      %v1504 = vsel %vm1240, %v1499, %v1503
      %v1506 = vshrl.u32 %v1223, 16
      %v1508 = vrot.slane %v1506, 4
      %v1509 = vshll.u32 %v1223, 16
      %v1511 = vrot.slane %v1509, 5
      %v1512 = vor.u32 %v1508, %v1511
      %v1513 = vrot.slane %v1512, 4
      %v1515 = vshll.u32 %v1224, 16
      %v1517 = vrot.slane %v1515, 5
      %v1518 = vsel %vm1240, %v1513, %v1517
      %v1519 = vshrl.u32 %v1224, 16
      %v1521 = vrot.slane %v1519, 4
      %v1522 = vor.u32 %v1521, %v1517
      %v1523 = vrot.slane %v1522, 4
      %v1525 = vshll.u32 %v1225, 16
      %v1527 = vrot.slane %v1525, 5
      %v1528 = vsel %vm1240, %v1523, %v1527
      %v1530 = vshrl.u32 %v1226, 16
      %v1532 = vrot.slane %v1530, 4
      %v1533 = vshll.u32 %v1226, 16
      %v1535 = vrot.slane %v1533, 5
      %v1536 = vor.u32 %v1532, %v1535
      %v1537 = vrot.slane %v1536, 4
      %v1539 = vshll.u32 %v1227, 16
      %v1541 = vrot.slane %v1539, 5
      %v1542 = vsel %vm1240, %v1537, %v1541
      %v1543 = vshrl.u32 %v1227, 16
      %v1545 = vrot.slane %v1543, 4
      %v1546 = vor.u32 %v1545, %v1541
      %v1547 = vrot.slane %v1546, 4
      %v1549 = vshll.u32 %v1228, 16
      %v1551 = vrot.slane %v1549, 5
      %v1552 = vsel %vm1240, %v1547, %v1551
      %v1554 = vshrl.u32 %v1229, 16
      %v1556 = vrot.slane %v1554, 4
      %v1557 = vshll.u32 %v1229, 16
      %v1559 = vrot.slane %v1557, 5
      %v1560 = vor.u32 %v1556, %v1559
      %v1561 = vrot.slane %v1560, 4
      %v1563 = vshll.u32 %v1230, 16
      %v1565 = vrot.slane %v1563, 5
      %v1566 = vsel %vm1240, %v1561, %v1565
      %v1567 = vshrl.u32 %v1230, 16
      %v1569 = vrot.slane %v1567, 4
      %v1570 = vor.u32 %v1569, %v1565
      %v1571 = vrot.slane %v1570, 4
      %v1573 = vshll.u32 %v1231, 16
      %v1575 = vrot.slane %v1573, 5
      %v1576 = vsel %vm1240, %v1571, %v1575
      %v1578 = vshrl.u32 %v1232, 16
      %v1580 = vrot.slane %v1578, 4
      %v1581 = vshll.u32 %v1232, 16
      %v1583 = vrot.slane %v1581, 5
      %v1584 = vor.u32 %v1580, %v1583
      %v1585 = vrot.slane %v1584, 4
      %v1587 = vshll.u32 %v1233, 16
      %v1589 = vrot.slane %v1587, 5
      %v1590 = vsel %vm1240, %v1585, %v1589
      %v1591 = vshrl.u32 %v1233, 16
      %v1593 = vrot.slane %v1591, 4
      %v1594 = vor.u32 %v1593, %v1589
      %v1595 = vrot.slane %v1594, 4
      %v1597 = vshll.u32 %v1234, 16
      %v1599 = vrot.slane %v1597, 5
      %v1600 = vsel %vm1240, %v1595, %v1599
      %v1602 = vshrl.u32 %v1235, 16
      %v1604 = vrot.slane %v1602, 4
      %v1605 = vshll.u32 %v1235, 16
      %v1607 = vrot.slane %v1605, 5
      %v1608 = vor.u32 %v1604, %v1607
      %v1609 = vrot.slane %v1608, 4
      %v1611 = vshll.u32 %v1236, 16
      %v1613 = vrot.slane %v1611, 5
      %v1614 = vsel %vm1240, %v1609, %v1613
      %v1615 = vshrl.u32 %v1236, 16
      %v1617 = vrot.slane %v1615, 4
      %v1618 = vor.u32 %v1617, %v1613
      %v1619 = vrot.slane %v1618, 4
      %v1621 = vshll.u32 %v1237, 16
      %v1623 = vrot.slane %v1621, 5
      %v1624 = vsel %vm1240, %v1619, %v1623
      %1625 = vrot.lane.b32.xlu0 %v1254, 8
      %v1626 = vpop.permute.xlu0 %1625
      %1627 = vrot.lane.b32.xlu0 %v1264, 8
      %v1628 = vpop.permute.xlu0 %1627
      %1629 = vrot.lane.b32.xlu0 %v1278, 8
      %v1630 = vpop.permute.xlu0 %1629
      %1631 = vrot.lane.b32.xlu0 %v1288, 8
      %v1632 = vpop.permute.xlu0 %1631
      %1633 = vrot.lane.b32.xlu0 %v1302, 8
      %v1634 = vpop.permute.xlu0 %1633
      %1635 = vrot.lane.b32.xlu0 %v1312, 8
      %v1636 = vpop.permute.xlu0 %1635
      %1637 = vrot.lane.b32.xlu0 %v1326, 8
      %v1638 = vpop.permute.xlu0 %1637
      %1639 = vrot.lane.b32.xlu0 %v1336, 8
      %v1640 = vpop.permute.xlu0 %1639
      %1641 = vrot.lane.b32.xlu0 %v1350, 8
      %v1642 = vpop.permute.xlu0 %1641
      %1643 = vrot.lane.b32.xlu0 %v1360, 8
      %v1644 = vpop.permute.xlu0 %1643
      %1645 = vrot.lane.b32.xlu0 %v1374, 8
      %v1646 = vpop.permute.xlu0 %1645
      %1647 = vrot.lane.b32.xlu0 %v1384, 8
      %v1648 = vpop.permute.xlu0 %1647
      %1649 = vrot.lane.b32.xlu0 %v1398, 8
      %v1650 = vpop.permute.xlu0 %1649
      %1651 = vrot.lane.b32.xlu0 %v1408, 8
      %v1652 = vpop.permute.xlu0 %1651
      %1653 = vrot.lane.b32.xlu0 %v1422, 8
      %v1654 = vpop.permute.xlu0 %1653
      %1655 = vrot.lane.b32.xlu0 %v1432, 8
      %v1656 = vpop.permute.xlu0 %1655
      %1657 = vrot.lane.b32.xlu0 %v1446, 8
      %v1658 = vpop.permute.xlu0 %1657
      %1659 = vrot.lane.b32.xlu0 %v1456, 8
      %v1660 = vpop.permute.xlu0 %1659
      %1661 = vrot.lane.b32.xlu0 %v1470, 8
      %v1662 = vpop.permute.xlu0 %1661
      %1663 = vrot.lane.b32.xlu0 %v1480, 8
      %v1664 = vpop.permute.xlu0 %1663
      %1665 = vrot.lane.b32.xlu0 %v1494, 8
      %v1666 = vpop.permute.xlu0 %1665
      %1667 = vrot.lane.b32.xlu0 %v1504, 8
      %v1668 = vpop.permute.xlu0 %1667
      %1669 = vrot.lane.b32.xlu0 %v1518, 8
      %v1670 = vpop.permute.xlu0 %1669
      %1671 = vrot.lane.b32.xlu0 %v1528, 8
      %v1672 = vpop.permute.xlu0 %1671
      %1673 = vrot.lane.b32.xlu0 %v1542, 8
      %v1674 = vpop.permute.xlu0 %1673
      %1675 = vrot.lane.b32.xlu0 %v1552, 8
      %v1676 = vpop.permute.xlu0 %1675
      %1677 = vrot.lane.b32.xlu0 %v1566, 8
      %v1678 = vpop.permute.xlu0 %1677
      %1679 = vrot.lane.b32.xlu0 %v1576, 8
      %v1680 = vpop.permute.xlu0 %1679
      %1681 = vrot.lane.b32.xlu0 %v1590, 8
      %v1682 = vpop.permute.xlu0 %1681
      %1683 = vrot.lane.b32.xlu0 %v1600, 8
      %v1684 = vpop.permute.xlu0 %1683
      %1685 = vrot.lane.b32.xlu0 %v1614, 8
      %v1686 = vpop.permute.xlu0 %1685
      %1687 = vrot.lane.b32.xlu0 %v1624, 8
      %v1688 = vpop.permute.xlu0 %1687
      %vm1721 = vcmask 126016
      %1722 = vst.msk [vmem:[#allocation3] sm:$0xf] %vm1721, %v1626
      %1723 = vst.msk [vmem:[#allocation3 + $0x4] sm:$0xf] %vm1721, %v1628
      %1724 = vst.msk [vmem:[#allocation3 + $0x8] sm:$0xf] %vm1721, %v1630
      %1725 = vst.msk [vmem:[#allocation3 + $0xc] sm:$0xf] %vm1721, %v1632
      %1726 = vst.msk [vmem:[#allocation3 + $0x10] sm:$0xf] %vm1721, %v1634
      %1727 = vst.msk [vmem:[#allocation3 + $0x14] sm:$0xf] %vm1721, %v1636
      %1728 = vst.msk [vmem:[#allocation3 + $0x18] sm:$0xf] %vm1721, %v1638
      %1729 = vst.msk [vmem:[#allocation3 + $0x1c] sm:$0xf] %vm1721, %v1640
      %1730 = vst.msk [vmem:[#allocation3 + $0x20] sm:$0xf] %vm1721, %v1642
      %1731 = vst.msk [vmem:[#allocation3 + $0x24] sm:$0xf] %vm1721, %v1644
      %1732 = vst.msk [vmem:[#allocation3 + $0x28] sm:$0xf] %vm1721, %v1646
      %1733 = vst.msk [vmem:[#allocation3 + $0x2c] sm:$0xf] %vm1721, %v1648
      %1734 = vst.msk [vmem:[#allocation3 + $0x30] sm:$0xf] %vm1721, %v1650
      %1735 = vst.msk [vmem:[#allocation3 + $0x34] sm:$0xf] %vm1721, %v1652
      %1736 = vst.msk [vmem:[#allocation3 + $0x38] sm:$0xf] %vm1721, %v1654
      %1737 = vst.msk [vmem:[#allocation3 + $0x3c] sm:$0xf] %vm1721, %v1656
      %1738 = vst.msk [vmem:[#allocation3 + $0x40] sm:$0xf] %vm1721, %v1658
      %1739 = vst.msk [vmem:[#allocation3 + $0x44] sm:$0xf] %vm1721, %v1660
      %1740 = vst.msk [vmem:[#allocation3 + $0x48] sm:$0xf] %vm1721, %v1662
      %1741 = vst.msk [vmem:[#allocation3 + $0x4c] sm:$0xf] %vm1721, %v1664
      %1742 = vst.msk [vmem:[#allocation3 + $0x50] sm:$0xf] %vm1721, %v1666
      %1743 = vst.msk [vmem:[#allocation3 + $0x54] sm:$0xf] %vm1721, %v1668
      %1744 = vst.msk [vmem:[#allocation3 + $0x58] sm:$0xf] %vm1721, %v1670
      %1745 = vst.msk [vmem:[#allocation3 + $0x5c] sm:$0xf] %vm1721, %v1672
      %1746 = vst.msk [vmem:[#allocation3 + $0x60] sm:$0xf] %vm1721, %v1674
      %1747 = vst.msk [vmem:[#allocation3 + $0x64] sm:$0xf] %vm1721, %v1676
      %1748 = vst.msk [vmem:[#allocation3 + $0x68] sm:$0xf] %vm1721, %v1678
      %1749 = vst.msk [vmem:[#allocation3 + $0x6c] sm:$0xf] %vm1721, %v1680
      %1750 = vst.msk [vmem:[#allocation3 + $0x70] sm:$0xf] %vm1721, %v1682
      %1751 = vst.msk [vmem:[#allocation3 + $0x74] sm:$0xf] %vm1721, %v1684
      %1752 = vst.msk [vmem:[#allocation3 + $0x78] sm:$0xf] %vm1721, %v1686
      %1753 = vst.msk [vmem:[#allocation3 + $0x7c] sm:$0xf] %vm1721, %v1688
      %v1754 = vld [vmem:[#allocation2] sm:$0xe]
      %v1755 = vld [vmem:[#allocation2 + $0x4] sm:$0xf]
      %v1756 = vld [vmem:[#allocation2 + $0x8] sm:$0x1]
      %v1757 = vld [vmem:[#allocation2 + $0xc] sm:$0xe]
      %v1758 = vld [vmem:[#allocation2 + $0x10] sm:$0xf]
      %v1759 = vld [vmem:[#allocation2 + $0x14] sm:$0x1]
      %v1760 = vld [vmem:[#allocation2 + $0x18] sm:$0xe]
      %v1761 = vld [vmem:[#allocation2 + $0x1c] sm:$0xf]
      %v1762 = vld [vmem:[#allocation2 + $0x20] sm:$0x1]
      %v1763 = vld [vmem:[#allocation2 + $0x24] sm:$0xe]
      %v1764 = vld [vmem:[#allocation2 + $0x28] sm:$0xf]
      %v1765 = vld [vmem:[#allocation2 + $0x2c] sm:$0x1]
      %v1766 = vld [vmem:[#allocation2 + $0x30] sm:$0xe]
      %v1767 = vld [vmem:[#allocation2 + $0x34] sm:$0xf]
      %v1768 = vld [vmem:[#allocation2 + $0x38] sm:$0x1]
      %v1769 = vld [vmem:[#allocation2 + $0x3c] sm:$0xe]
      %v1770 = vld [vmem:[#allocation2 + $0x40] sm:$0xf]
      %v1771 = vld [vmem:[#allocation2 + $0x44] sm:$0x1]
      %v1772 = vld [vmem:[#allocation2 + $0x48] sm:$0xe]
      %v1773 = vld [vmem:[#allocation2 + $0x4c] sm:$0xf]
      %v1774 = vld [vmem:[#allocation2 + $0x50] sm:$0x1]
      %v1775 = vld [vmem:[#allocation2 + $0x54] sm:$0xe]
      %v1776 = vld [vmem:[#allocation2 + $0x58] sm:$0xf]
      %v1777 = vld [vmem:[#allocation2 + $0x5c] sm:$0x1]
      %v1778 = vld [vmem:[#allocation2 + $0x60] sm:$0xe]
      %v1779 = vld [vmem:[#allocation2 + $0x64] sm:$0xf]
      %v1780 = vld [vmem:[#allocation2 + $0x68] sm:$0x1]
      %v1781 = vld [vmem:[#allocation2 + $0x6c] sm:$0xe]
      %v1782 = vld [vmem:[#allocation2 + $0x70] sm:$0xf]
      %v1783 = vld [vmem:[#allocation2 + $0x74] sm:$0x1]
      %v1784 = vld [vmem:[#allocation2 + $0x78] sm:$0xe]
      %v1785 = vld [vmem:[#allocation2 + $0x7c] sm:$0xf]
      %v1786 = vld [vmem:[#allocation2 + $0x80] sm:$0x1]
      %v1787 = vld [vmem:[#allocation2 + $0x84] sm:$0xe]
      %v1788 = vld [vmem:[#allocation2 + $0x88] sm:$0xf]
      %v1789 = vld [vmem:[#allocation2 + $0x8c] sm:$0x1]
      %v1790 = vld [vmem:[#allocation2 + $0x90] sm:$0xe]
      %v1791 = vld [vmem:[#allocation2 + $0x94] sm:$0xf]
      %v1792 = vld [vmem:[#allocation2 + $0x98] sm:$0x1]
      %v1793 = vld [vmem:[#allocation2 + $0x9c] sm:$0xe]
      %v1794 = vld [vmem:[#allocation2 + $0xa0] sm:$0xf]
      %v1795 = vld [vmem:[#allocation2 + $0xa4] sm:$0x1]
      %v1796 = vld [vmem:[#allocation2 + $0xa8] sm:$0xe]
      %v1797 = vld [vmem:[#allocation2 + $0xac] sm:$0xf]
      %v1798 = vld [vmem:[#allocation2 + $0xb0] sm:$0x1]
      %v1799 = vld [vmem:[#allocation2 + $0xb4] sm:$0xe]
      %v1800 = vld [vmem:[#allocation2 + $0xb8] sm:$0xf]
      %v1801 = vld [vmem:[#allocation2 + $0xbc] sm:$0x1]
      %vm1850 = vcmask 1042432
      %vm1851 = vcmask 1046532
      %vm1852 = vmor %vm1850, %vm1851
      %v1853 = vrot.slane %v1754, 5
      %v1854 = vrot.slane %v1853, 4
      %v1855 = vrot.slane %v1755, 5
      %v1856 = vsel %vm1852, %v1854, %v1855
      %v1857 = vrot.slane %v1855, 4
      %v1858 = vrot.slane %v1756, 5
      %v1859 = vsel %vm1852, %v1857, %v1858
      %v1860 = vrot.slane %v1757, 5
      %v1861 = vrot.slane %v1860, 4
      %v1862 = vrot.slane %v1758, 5
      %v1863 = vsel %vm1852, %v1861, %v1862
      %v1864 = vrot.slane %v1862, 4
      %v1865 = vrot.slane %v1759, 5
      %v1866 = vsel %vm1852, %v1864, %v1865
      %v1867 = vrot.slane %v1760, 5
      %v1868 = vrot.slane %v1867, 4
      %v1869 = vrot.slane %v1761, 5
      %v1870 = vsel %vm1852, %v1868, %v1869
      %v1871 = vrot.slane %v1869, 4
      %v1872 = vrot.slane %v1762, 5
      %v1873 = vsel %vm1852, %v1871, %v1872
      %v1874 = vrot.slane %v1763, 5
      %v1875 = vrot.slane %v1874, 4
      %v1876 = vrot.slane %v1764, 5
      %v1877 = vsel %vm1852, %v1875, %v1876
      %v1878 = vrot.slane %v1876, 4
      %v1879 = vrot.slane %v1765, 5
      %v1880 = vsel %vm1852, %v1878, %v1879
      %v1881 = vrot.slane %v1766, 5
      %v1882 = vrot.slane %v1881, 4
      %v1883 = vrot.slane %v1767, 5
      %v1884 = vsel %vm1852, %v1882, %v1883
      %v1885 = vrot.slane %v1883, 4
      %v1886 = vrot.slane %v1768, 5
      %v1887 = vsel %vm1852, %v1885, %v1886
      %v1888 = vrot.slane %v1769, 5
      %v1889 = vrot.slane %v1888, 4
      %v1890 = vrot.slane %v1770, 5
      %v1891 = vsel %vm1852, %v1889, %v1890
      %v1892 = vrot.slane %v1890, 4
      %v1893 = vrot.slane %v1771, 5
      %v1894 = vsel %vm1852, %v1892, %v1893
      %v1895 = vrot.slane %v1772, 5
      %v1896 = vrot.slane %v1895, 4
      %v1897 = vrot.slane %v1773, 5
      %v1898 = vsel %vm1852, %v1896, %v1897
      %v1899 = vrot.slane %v1897, 4
      %v1900 = vrot.slane %v1774, 5
      %v1901 = vsel %vm1852, %v1899, %v1900
      %v1902 = vrot.slane %v1775, 5
      %v1903 = vrot.slane %v1902, 4
      %v1904 = vrot.slane %v1776, 5
      %v1905 = vsel %vm1852, %v1903, %v1904
      %v1906 = vrot.slane %v1904, 4
      %v1907 = vrot.slane %v1777, 5
      %v1908 = vsel %vm1852, %v1906, %v1907
      %v1909 = vrot.slane %v1778, 5
      %v1910 = vrot.slane %v1909, 4
      %v1911 = vrot.slane %v1779, 5
      %v1912 = vsel %vm1852, %v1910, %v1911
      %v1913 = vrot.slane %v1911, 4
      %v1914 = vrot.slane %v1780, 5
      %v1915 = vsel %vm1852, %v1913, %v1914
      %v1916 = vrot.slane %v1781, 5
      %v1917 = vrot.slane %v1916, 4
      %v1918 = vrot.slane %v1782, 5
      %v1919 = vsel %vm1852, %v1917, %v1918
      %v1920 = vrot.slane %v1918, 4
      %v1921 = vrot.slane %v1783, 5
      %v1922 = vsel %vm1852, %v1920, %v1921
      %v1923 = vrot.slane %v1784, 5
      %v1924 = vrot.slane %v1923, 4
      %v1925 = vrot.slane %v1785, 5
      %v1926 = vsel %vm1852, %v1924, %v1925
      %v1927 = vrot.slane %v1925, 4
      %v1928 = vrot.slane %v1786, 5
      %v1929 = vsel %vm1852, %v1927, %v1928
      %v1930 = vrot.slane %v1787, 5
      %v1931 = vrot.slane %v1930, 4
      %v1932 = vrot.slane %v1788, 5
      %v1933 = vsel %vm1852, %v1931, %v1932
      %v1934 = vrot.slane %v1932, 4
      %v1935 = vrot.slane %v1789, 5
      %v1936 = vsel %vm1852, %v1934, %v1935
      %v1937 = vrot.slane %v1790, 5
      %v1938 = vrot.slane %v1937, 4
      %v1939 = vrot.slane %v1791, 5
      %v1940 = vsel %vm1852, %v1938, %v1939
      %v1941 = vrot.slane %v1939, 4
      %v1942 = vrot.slane %v1792, 5
      %v1943 = vsel %vm1852, %v1941, %v1942
      %v1944 = vrot.slane %v1793, 5
      %v1945 = vrot.slane %v1944, 4
      %v1946 = vrot.slane %v1794, 5
      %v1947 = vsel %vm1852, %v1945, %v1946
      %v1948 = vrot.slane %v1946, 4
      %v1949 = vrot.slane %v1795, 5
      %v1950 = vsel %vm1852, %v1948, %v1949
      %v1951 = vrot.slane %v1796, 5
      %v1952 = vrot.slane %v1951, 4
      %v1953 = vrot.slane %v1797, 5
      %v1954 = vsel %vm1852, %v1952, %v1953
      %v1955 = vrot.slane %v1953, 4
      %v1956 = vrot.slane %v1798, 5
      %v1957 = vsel %vm1852, %v1955, %v1956
      %v1958 = vrot.slane %v1799, 5
      %v1959 = vrot.slane %v1958, 4
      %v1960 = vrot.slane %v1800, 5
      %v1961 = vsel %vm1852, %v1959, %v1960
      %v1962 = vrot.slane %v1960, 4
      %v1963 = vrot.slane %v1801, 5
      %v1964 = vsel %vm1852, %v1962, %v1963
      %1965 = vrot.lane.b32.xlu0 %v1856, 16
      %v1966 = vpop.permute.xlu0 %1965
      %1967 = vrot.lane.b32.xlu0 %v1859, 16
      %v1968 = vpop.permute.xlu0 %1967
      %1969 = vrot.lane.b32.xlu0 %v1863, 16
      %v1970 = vpop.permute.xlu0 %1969
      %1971 = vrot.lane.b32.xlu0 %v1866, 16
      %v1972 = vpop.permute.xlu0 %1971
      %1973 = vrot.lane.b32.xlu0 %v1870, 16
      %v1974 = vpop.permute.xlu0 %1973
      %1975 = vrot.lane.b32.xlu0 %v1873, 16
      %v1976 = vpop.permute.xlu0 %1975
      %1977 = vrot.lane.b32.xlu0 %v1877, 16
      %v1978 = vpop.permute.xlu0 %1977
      %1979 = vrot.lane.b32.xlu0 %v1880, 16
      %v1980 = vpop.permute.xlu0 %1979
      %1981 = vrot.lane.b32.xlu0 %v1884, 16
      %v1982 = vpop.permute.xlu0 %1981
      %1983 = vrot.lane.b32.xlu0 %v1887, 16
      %v1984 = vpop.permute.xlu0 %1983
      %1985 = vrot.lane.b32.xlu0 %v1891, 16
      %v1986 = vpop.permute.xlu0 %1985
      %1987 = vrot.lane.b32.xlu0 %v1894, 16
      %v1988 = vpop.permute.xlu0 %1987
      %1989 = vrot.lane.b32.xlu0 %v1898, 16
      %v1990 = vpop.permute.xlu0 %1989
      %1991 = vrot.lane.b32.xlu0 %v1901, 16
      %v1992 = vpop.permute.xlu0 %1991
      %1993 = vrot.lane.b32.xlu0 %v1905, 16
      %v1994 = vpop.permute.xlu0 %1993
      %1995 = vrot.lane.b32.xlu0 %v1908, 16
      %v1996 = vpop.permute.xlu0 %1995
      %1997 = vrot.lane.b32.xlu0 %v1912, 16
      %v1998 = vpop.permute.xlu0 %1997
      %1999 = vrot.lane.b32.xlu0 %v1915, 16
      %v2000 = vpop.permute.xlu0 %1999
      %2001 = vrot.lane.b32.xlu0 %v1919, 16
      %v2002 = vpop.permute.xlu0 %2001
      %2003 = vrot.lane.b32.xlu0 %v1922, 16
      %v2004 = vpop.permute.xlu0 %2003
      %2005 = vrot.lane.b32.xlu0 %v1926, 16
      %v2006 = vpop.permute.xlu0 %2005
      %2007 = vrot.lane.b32.xlu0 %v1929, 16
      %v2008 = vpop.permute.xlu0 %2007
      %2009 = vrot.lane.b32.xlu0 %v1933, 16
      %v2010 = vpop.permute.xlu0 %2009
      %2011 = vrot.lane.b32.xlu0 %v1936, 16
      %v2012 = vpop.permute.xlu0 %2011
      %2013 = vrot.lane.b32.xlu0 %v1940, 16
      %v2014 = vpop.permute.xlu0 %2013
      %2015 = vrot.lane.b32.xlu0 %v1943, 16
      %v2016 = vpop.permute.xlu0 %2015
      %2017 = vrot.lane.b32.xlu0 %v1947, 16
      %v2018 = vpop.permute.xlu0 %2017
      %2019 = vrot.lane.b32.xlu0 %v1950, 16
      %v2020 = vpop.permute.xlu0 %2019
      %2021 = vrot.lane.b32.xlu0 %v1954, 16
      %v2022 = vpop.permute.xlu0 %2021
      %2023 = vrot.lane.b32.xlu0 %v1957, 16
      %v2024 = vpop.permute.xlu0 %2023
      %2025 = vrot.lane.b32.xlu0 %v1961, 16
      %v2026 = vpop.permute.xlu0 %2025
      %2027 = vrot.lane.b32.xlu0 %v1964, 16
      %v2028 = vpop.permute.xlu0 %2027
      %vm2061 = vcmask 191616
      %2062 = vst.msk [vmem:[#allocation3] sm:$0xf] %vm2061, %v1966
      %2063 = vst.msk [vmem:[#allocation3 + $0x4] sm:$0xf] %vm2061, %v1968
      %2064 = vst.msk [vmem:[#allocation3 + $0x8] sm:$0xf] %vm2061, %v1970
      %2065 = vst.msk [vmem:[#allocation3 + $0xc] sm:$0xf] %vm2061, %v1972
      %2066 = vst.msk [vmem:[#allocation3 + $0x10] sm:$0xf] %vm2061, %v1974
      %2067 = vst.msk [vmem:[#allocation3 + $0x14] sm:$0xf] %vm2061, %v1976
      %2068 = vst.msk [vmem:[#allocation3 + $0x18] sm:$0xf] %vm2061, %v1978
      %2069 = vst.msk [vmem:[#allocation3 + $0x1c] sm:$0xf] %vm2061, %v1980
      %2070 = vst.msk [vmem:[#allocation3 + $0x20] sm:$0xf] %vm2061, %v1982
      %2071 = vst.msk [vmem:[#allocation3 + $0x24] sm:$0xf] %vm2061, %v1984
      %2072 = vst.msk [vmem:[#allocation3 + $0x28] sm:$0xf] %vm2061, %v1986
      %2073 = vst.msk [vmem:[#allocation3 + $0x2c] sm:$0xf] %vm2061, %v1988
      %2074 = vst.msk [vmem:[#allocation3 + $0x30] sm:$0xf] %vm2061, %v1990
      %2075 = vst.msk [vmem:[#allocation3 + $0x34] sm:$0xf] %vm2061, %v1992
      %2076 = vst.msk [vmem:[#allocation3 + $0x38] sm:$0xf] %vm2061, %v1994
      %2077 = vst.msk [vmem:[#allocation3 + $0x3c] sm:$0xf] %vm2061, %v1996
      %2078 = vst.msk [vmem:[#allocation3 + $0x40] sm:$0xf] %vm2061, %v1998
      %2079 = vst.msk [vmem:[#allocation3 + $0x44] sm:$0xf] %vm2061, %v2000
      %2080 = vst.msk [vmem:[#allocation3 + $0x48] sm:$0xf] %vm2061, %v2002
      %2081 = vst.msk [vmem:[#allocation3 + $0x4c] sm:$0xf] %vm2061, %v2004
      %2082 = vst.msk [vmem:[#allocation3 + $0x50] sm:$0xf] %vm2061, %v2006
      %2083 = vst.msk [vmem:[#allocation3 + $0x54] sm:$0xf] %vm2061, %v2008
      %2084 = vst.msk [vmem:[#allocation3 + $0x58] sm:$0xf] %vm2061, %v2010
      %2085 = vst.msk [vmem:[#allocation3 + $0x5c] sm:$0xf] %vm2061, %v2012
      %2086 = vst.msk [vmem:[#allocation3 + $0x60] sm:$0xf] %vm2061, %v2014
      %2087 = vst.msk [vmem:[#allocation3 + $0x64] sm:$0xf] %vm2061, %v2016
      %2088 = vst.msk [vmem:[#allocation3 + $0x68] sm:$0xf] %vm2061, %v2018
      %2089 = vst.msk [vmem:[#allocation3 + $0x6c] sm:$0xf] %vm2061, %v2020
      %2090 = vst.msk [vmem:[#allocation3 + $0x70] sm:$0xf] %vm2061, %v2022
      %2091 = vst.msk [vmem:[#allocation3 + $0x74] sm:$0xf] %vm2061, %v2024
      %2092 = vst.msk [vmem:[#allocation3 + $0x78] sm:$0xf] %vm2061, %v2026
      %2093 = vst.msk [vmem:[#allocation3 + $0x7c] sm:$0xf] %vm2061, %v2028
      %v2094 = vld [vmem:[%s921] sm:$0xf]
      %v2095 = vld [vmem:[%s921 + $0x4] sm:$0xf]
      %v2096 = vld [vmem:[%s921 + $0xc] sm:$0xf]
      %v2097 = vld [vmem:[%s921 + $0x10] sm:$0xf]
      %v2098 = vld [vmem:[%s921 + $0x18] sm:$0xf]
      %v2099 = vld [vmem:[%s921 + $0x1c] sm:$0xf]
      %v2100 = vld [vmem:[%s921 + $0x24] sm:$0xf]
      %v2101 = vld [vmem:[%s921 + $0x28] sm:$0xf]
      %v2102 = vld [vmem:[%s921 + $0x30] sm:$0xf]
      %v2103 = vld [vmem:[%s921 + $0x34] sm:$0xf]
      %v2104 = vld [vmem:[%s921 + $0x3c] sm:$0xf]
      %v2105 = vld [vmem:[%s921 + $0x40] sm:$0xf]
      %v2106 = vld [vmem:[%s921 + $0x48] sm:$0xf]
      %v2107 = vld [vmem:[%s921 + $0x4c] sm:$0xf]
      %v2108 = vld [vmem:[%s921 + $0x54] sm:$0xf]
      %v2109 = vld [vmem:[%s921 + $0x58] sm:$0xf]
      %v2110 = vld [vmem:[%s921 + $0x60] sm:$0xf]
      %v2111 = vld [vmem:[%s921 + $0x64] sm:$0xf]
      %v2112 = vld [vmem:[%s921 + $0x6c] sm:$0xf]
      %v2113 = vld [vmem:[%s921 + $0x70] sm:$0xf]
      %v2114 = vld [vmem:[%s921 + $0x78] sm:$0xf]
      %v2115 = vld [vmem:[%s921 + $0x7c] sm:$0xf]
      %v2116 = vld [vmem:[%s921 + $0x84] sm:$0xf]
      %v2117 = vld [vmem:[%s921 + $0x88] sm:$0xf]
      %v2118 = vld [vmem:[%s921 + $0x90] sm:$0xf]
      %v2119 = vld [vmem:[%s921 + $0x94] sm:$0xf]
      %v2120 = vld [vmem:[%s921 + $0x9c] sm:$0xf]
      %v2121 = vld [vmem:[%s921 + $0xa0] sm:$0xf]
      %v2122 = vld [vmem:[%s921 + $0xa8] sm:$0xf]
      %v2123 = vld [vmem:[%s921 + $0xac] sm:$0xf]
      %v2124 = vld [vmem:[%s921 + $0xb4] sm:$0xf]
      %v2125 = vld [vmem:[%s921 + $0xb8] sm:$0xf]
      %2158 = vrot.lane.b32.xlu0 %v2094, 24
      %v2159 = vpop.permute.xlu0 %2158
      %2160 = vrot.lane.b32.xlu0 %v2095, 24
      %v2161 = vpop.permute.xlu0 %2160
      %2162 = vrot.lane.b32.xlu0 %v2096, 24
      %v2163 = vpop.permute.xlu0 %2162
      %2164 = vrot.lane.b32.xlu0 %v2097, 24
      %v2165 = vpop.permute.xlu0 %2164
      %2166 = vrot.lane.b32.xlu0 %v2098, 24
      %v2167 = vpop.permute.xlu0 %2166
      %2168 = vrot.lane.b32.xlu0 %v2099, 24
      %v2169 = vpop.permute.xlu0 %2168
      %2170 = vrot.lane.b32.xlu0 %v2100, 24
      %v2171 = vpop.permute.xlu0 %2170
      %2172 = vrot.lane.b32.xlu0 %v2101, 24
      %v2173 = vpop.permute.xlu0 %2172
      %2174 = vrot.lane.b32.xlu0 %v2102, 24
      %v2175 = vpop.permute.xlu0 %2174
      %2176 = vrot.lane.b32.xlu0 %v2103, 24
      %v2177 = vpop.permute.xlu0 %2176
      %2178 = vrot.lane.b32.xlu0 %v2104, 24
      %v2179 = vpop.permute.xlu0 %2178
      %2180 = vrot.lane.b32.xlu0 %v2105, 24
      %v2181 = vpop.permute.xlu0 %2180
      %2182 = vrot.lane.b32.xlu0 %v2106, 24
      %v2183 = vpop.permute.xlu0 %2182
      %2184 = vrot.lane.b32.xlu0 %v2107, 24
      %v2185 = vpop.permute.xlu0 %2184
      %2186 = vrot.lane.b32.xlu0 %v2108, 24
      %v2187 = vpop.permute.xlu0 %2186
      %2188 = vrot.lane.b32.xlu0 %v2109, 24
      %v2189 = vpop.permute.xlu0 %2188
      %2190 = vrot.lane.b32.xlu0 %v2110, 24
      %v2191 = vpop.permute.xlu0 %2190
      %2192 = vrot.lane.b32.xlu0 %v2111, 24
      %v2193 = vpop.permute.xlu0 %2192
      %2194 = vrot.lane.b32.xlu0 %v2112, 24
      %v2195 = vpop.permute.xlu0 %2194
      %2196 = vrot.lane.b32.xlu0 %v2113, 24
      %v2197 = vpop.permute.xlu0 %2196
      %2198 = vrot.lane.b32.xlu0 %v2114, 24
      %v2199 = vpop.permute.xlu0 %2198
      %2200 = vrot.lane.b32.xlu0 %v2115, 24
      %v2201 = vpop.permute.xlu0 %2200
      %2202 = vrot.lane.b32.xlu0 %v2116, 24
      %v2203 = vpop.permute.xlu0 %2202
      %2204 = vrot.lane.b32.xlu0 %v2117, 24
      %v2205 = vpop.permute.xlu0 %2204
      %2206 = vrot.lane.b32.xlu0 %v2118, 24
      %v2207 = vpop.permute.xlu0 %2206
      %2208 = vrot.lane.b32.xlu0 %v2119, 24
      %v2209 = vpop.permute.xlu0 %2208
      %2210 = vrot.lane.b32.xlu0 %v2120, 24
      %v2211 = vpop.permute.xlu0 %2210
      %2212 = vrot.lane.b32.xlu0 %v2121, 24
      %v2213 = vpop.permute.xlu0 %2212
      %2214 = vrot.lane.b32.xlu0 %v2122, 24
      %v2215 = vpop.permute.xlu0 %2214
      %2216 = vrot.lane.b32.xlu0 %v2123, 24
      %v2217 = vpop.permute.xlu0 %2216
      %2218 = vrot.lane.b32.xlu0 %v2124, 24
      %v2219 = vpop.permute.xlu0 %2218
      %2220 = vrot.lane.b32.xlu0 %v2125, 24
      %v2221 = vpop.permute.xlu0 %2220
      %vm2254 = vcmask 257216
      %2255 = vst.msk [vmem:[#allocation3] sm:$0xf] %vm2254, %v2159
      %2256 = vst.msk [vmem:[#allocation3 + $0x4] sm:$0xf] %vm2254, %v2161
      %2257 = vst.msk [vmem:[#allocation3 + $0x8] sm:$0xf] %vm2254, %v2163
      %2258 = vst.msk [vmem:[#allocation3 + $0xc] sm:$0xf] %vm2254, %v2165
      %2259 = vst.msk [vmem:[#allocation3 + $0x10] sm:$0xf] %vm2254, %v2167
      %2260 = vst.msk [vmem:[#allocation3 + $0x14] sm:$0xf] %vm2254, %v2169
      %2261 = vst.msk [vmem:[#allocation3 + $0x18] sm:$0xf] %vm2254, %v2171
      %2262 = vst.msk [vmem:[#allocation3 + $0x1c] sm:$0xf] %vm2254, %v2173
      %2263 = vst.msk [vmem:[#allocation3 + $0x20] sm:$0xf] %vm2254, %v2175
      %2264 = vst.msk [vmem:[#allocation3 + $0x24] sm:$0xf] %vm2254, %v2177
      %2265 = vst.msk [vmem:[#allocation3 + $0x28] sm:$0xf] %vm2254, %v2179
      %2266 = vst.msk [vmem:[#allocation3 + $0x2c] sm:$0xf] %vm2254, %v2181
      %2267 = vst.msk [vmem:[#allocation3 + $0x30] sm:$0xf] %vm2254, %v2183
      %2268 = vst.msk [vmem:[#allocation3 + $0x34] sm:$0xf] %vm2254, %v2185
      %2269 = vst.msk [vmem:[#allocation3 + $0x38] sm:$0xf] %vm2254, %v2187
      %2270 = vst.msk [vmem:[#allocation3 + $0x3c] sm:$0xf] %vm2254, %v2189
      %2271 = vst.msk [vmem:[#allocation3 + $0x40] sm:$0xf] %vm2254, %v2191
      %2272 = vst.msk [vmem:[#allocation3 + $0x44] sm:$0xf] %vm2254, %v2193
      %2273 = vst.msk [vmem:[#allocation3 + $0x48] sm:$0xf] %vm2254, %v2195
      %2274 = vst.msk [vmem:[#allocation3 + $0x4c] sm:$0xf] %vm2254, %v2197
      %2275 = vst.msk [vmem:[#allocation3 + $0x50] sm:$0xf] %vm2254, %v2199
      %2276 = vst.msk [vmem:[#allocation3 + $0x54] sm:$0xf] %vm2254, %v2201
      %2277 = vst.msk [vmem:[#allocation3 + $0x58] sm:$0xf] %vm2254, %v2203
      %2278 = vst.msk [vmem:[#allocation3 + $0x5c] sm:$0xf] %vm2254, %v2205
      %2279 = vst.msk [vmem:[#allocation3 + $0x60] sm:$0xf] %vm2254, %v2207
      %2280 = vst.msk [vmem:[#allocation3 + $0x64] sm:$0xf] %vm2254, %v2209
      %2281 = vst.msk [vmem:[#allocation3 + $0x68] sm:$0xf] %vm2254, %v2211
      %2282 = vst.msk [vmem:[#allocation3 + $0x6c] sm:$0xf] %vm2254, %v2213
      %2283 = vst.msk [vmem:[#allocation3 + $0x70] sm:$0xf] %vm2254, %v2215
      %2284 = vst.msk [vmem:[#allocation3 + $0x74] sm:$0xf] %vm2254, %v2217
      %2285 = vst.msk [vmem:[#allocation3 + $0x78] sm:$0xf] %vm2254, %v2219
      %2286 = vst.msk [vmem:[#allocation3 + $0x7c] sm:$0xf] %vm2254, %v2221
      %v2287 = vld [vmem:[%s921] sm:$0xf]
      %v2288 = vld [vmem:[%s921 + $0x4] sm:$0xf]
      %v2289 = vld [vmem:[%s921 + $0x8] sm:$0x1]
      %v2290 = vld [vmem:[%s921 + $0xc] sm:$0xf]
      %v2291 = vld [vmem:[%s921 + $0x10] sm:$0xf]
      %v2292 = vld [vmem:[%s921 + $0x14] sm:$0x1]
      %v2293 = vld [vmem:[%s921 + $0x18] sm:$0xf]
      %v2294 = vld [vmem:[%s921 + $0x1c] sm:$0xf]
      %v2295 = vld [vmem:[%s921 + $0x20] sm:$0x1]
      %v2296 = vld [vmem:[%s921 + $0x24] sm:$0xf]
      %v2297 = vld [vmem:[%s921 + $0x28] sm:$0xf]
      %v2298 = vld [vmem:[%s921 + $0x2c] sm:$0x1]
      %v2299 = vld [vmem:[%s921 + $0x30] sm:$0xf]
      %v2300 = vld [vmem:[%s921 + $0x34] sm:$0xf]
      %v2301 = vld [vmem:[%s921 + $0x38] sm:$0x1]
      %v2302 = vld [vmem:[%s921 + $0x3c] sm:$0xf]
      %v2303 = vld [vmem:[%s921 + $0x40] sm:$0xf]
      %v2304 = vld [vmem:[%s921 + $0x44] sm:$0x1]
      %v2305 = vld [vmem:[%s921 + $0x48] sm:$0xf]
      %v2306 = vld [vmem:[%s921 + $0x4c] sm:$0xf]
      %v2307 = vld [vmem:[%s921 + $0x50] sm:$0x1]
      %v2308 = vld [vmem:[%s921 + $0x54] sm:$0xf]
      %v2309 = vld [vmem:[%s921 + $0x58] sm:$0xf]
      %v2310 = vld [vmem:[%s921 + $0x5c] sm:$0x1]
      %v2311 = vld [vmem:[%s921 + $0x60] sm:$0xf]
      %v2312 = vld [vmem:[%s921 + $0x64] sm:$0xf]
      %v2313 = vld [vmem:[%s921 + $0x68] sm:$0x1]
      %v2314 = vld [vmem:[%s921 + $0x6c] sm:$0xf]
      %v2315 = vld [vmem:[%s921 + $0x70] sm:$0xf]
      %v2316 = vld [vmem:[%s921 + $0x74] sm:$0x1]
      %v2317 = vld [vmem:[%s921 + $0x78] sm:$0xf]
      %v2318 = vld [vmem:[%s921 + $0x7c] sm:$0xf]
      %v2319 = vld [vmem:[%s921 + $0x80] sm:$0x1]
      %v2320 = vld [vmem:[%s921 + $0x84] sm:$0xf]
      %v2321 = vld [vmem:[%s921 + $0x88] sm:$0xf]
      %v2322 = vld [vmem:[%s921 + $0x8c] sm:$0x1]
      %v2323 = vld [vmem:[%s921 + $0x90] sm:$0xf]
      %v2324 = vld [vmem:[%s921 + $0x94] sm:$0xf]
      %v2325 = vld [vmem:[%s921 + $0x98] sm:$0x1]
      %v2326 = vld [vmem:[%s921 + $0x9c] sm:$0xf]
      %v2327 = vld [vmem:[%s921 + $0xa0] sm:$0xf]
      %v2328 = vld [vmem:[%s921 + $0xa4] sm:$0x1]
      %v2329 = vld [vmem:[%s921 + $0xa8] sm:$0xf]
      %v2330 = vld [vmem:[%s921 + $0xac] sm:$0xf]
      %v2331 = vld [vmem:[%s921 + $0xb0] sm:$0x1]
      %v2332 = vld [vmem:[%s921 + $0xb4] sm:$0xf]
      %v2333 = vld [vmem:[%s921 + $0xb8] sm:$0xf]
      %v2334 = vld [vmem:[%s921 + $0xbc] sm:$0x1]
      %v2336 = vshrl.u32 %v2287, 16
      %v2338 = vrot.slane %v2336, 4
      %v2339 = vshll.u32 %v2287, 16
      %v2341 = vrot.slane %v2339, 5
      %v2342 = vor.u32 %v2338, %v2341
      %v2343 = vrot.slane %v2342, 4
      %v2345 = vshll.u32 %v2288, 16
      %v2347 = vrot.slane %v2345, 5
      %v2348 = vsel %vm1240, %v2343, %v2347
      %v2349 = vshrl.u32 %v2288, 16
      %v2351 = vrot.slane %v2349, 4
      %v2352 = vor.u32 %v2351, %v2347
      %v2353 = vrot.slane %v2352, 4
      %v2355 = vshll.u32 %v2289, 16
      %v2357 = vrot.slane %v2355, 5
      %v2358 = vsel %vm1240, %v2353, %v2357
      %v2360 = vshrl.u32 %v2290, 16
      %v2362 = vrot.slane %v2360, 4
      %v2363 = vshll.u32 %v2290, 16
      %v2365 = vrot.slane %v2363, 5
      %v2366 = vor.u32 %v2362, %v2365
      %v2367 = vrot.slane %v2366, 4
      %v2369 = vshll.u32 %v2291, 16
      %v2371 = vrot.slane %v2369, 5
      %v2372 = vsel %vm1240, %v2367, %v2371
      %v2373 = vshrl.u32 %v2291, 16
      %v2375 = vrot.slane %v2373, 4
      %v2376 = vor.u32 %v2375, %v2371
      %v2377 = vrot.slane %v2376, 4
      %v2379 = vshll.u32 %v2292, 16
      %v2381 = vrot.slane %v2379, 5
      %v2382 = vsel %vm1240, %v2377, %v2381
      %v2384 = vshrl.u32 %v2293, 16
      %v2386 = vrot.slane %v2384, 4
      %v2387 = vshll.u32 %v2293, 16
      %v2389 = vrot.slane %v2387, 5
      %v2390 = vor.u32 %v2386, %v2389
      %v2391 = vrot.slane %v2390, 4
      %v2393 = vshll.u32 %v2294, 16
      %v2395 = vrot.slane %v2393, 5
      %v2396 = vsel %vm1240, %v2391, %v2395
      %v2397 = vshrl.u32 %v2294, 16
      %v2399 = vrot.slane %v2397, 4
      %v2400 = vor.u32 %v2399, %v2395
      %v2401 = vrot.slane %v2400, 4
      %v2403 = vshll.u32 %v2295, 16
      %v2405 = vrot.slane %v2403, 5
      %v2406 = vsel %vm1240, %v2401, %v2405
      %v2408 = vshrl.u32 %v2296, 16
      %v2410 = vrot.slane %v2408, 4
      %v2411 = vshll.u32 %v2296, 16
      %v2413 = vrot.slane %v2411, 5
      %v2414 = vor.u32 %v2410, %v2413
      %v2415 = vrot.slane %v2414, 4
      %v2417 = vshll.u32 %v2297, 16
      %v2419 = vrot.slane %v2417, 5
      %v2420 = vsel %vm1240, %v2415, %v2419
      %v2421 = vshrl.u32 %v2297, 16
      %v2423 = vrot.slane %v2421, 4
      %v2424 = vor.u32 %v2423, %v2419
      %v2425 = vrot.slane %v2424, 4
      %v2427 = vshll.u32 %v2298, 16
      %v2429 = vrot.slane %v2427, 5
      %v2430 = vsel %vm1240, %v2425, %v2429
      %v2432 = vshrl.u32 %v2299, 16
      %v2434 = vrot.slane %v2432, 4
      %v2435 = vshll.u32 %v2299, 16
      %v2437 = vrot.slane %v2435, 5
      %v2438 = vor.u32 %v2434, %v2437
      %v2439 = vrot.slane %v2438, 4
      %v2441 = vshll.u32 %v2300, 16
      %v2443 = vrot.slane %v2441, 5
      %v2444 = vsel %vm1240, %v2439, %v2443
      %v2445 = vshrl.u32 %v2300, 16
      %v2447 = vrot.slane %v2445, 4
      %v2448 = vor.u32 %v2447, %v2443
      %v2449 = vrot.slane %v2448, 4
      %v2451 = vshll.u32 %v2301, 16
      %v2453 = vrot.slane %v2451, 5
      %v2454 = vsel %vm1240, %v2449, %v2453
      %v2456 = vshrl.u32 %v2302, 16
      %v2458 = vrot.slane %v2456, 4
      %v2459 = vshll.u32 %v2302, 16
      %v2461 = vrot.slane %v2459, 5
      %v2462 = vor.u32 %v2458, %v2461
      %v2463 = vrot.slane %v2462, 4
      %v2465 = vshll.u32 %v2303, 16
      %v2467 = vrot.slane %v2465, 5
      %v2468 = vsel %vm1240, %v2463, %v2467
      %v2469 = vshrl.u32 %v2303, 16
      %v2471 = vrot.slane %v2469, 4
      %v2472 = vor.u32 %v2471, %v2467
      %v2473 = vrot.slane %v2472, 4
      %v2475 = vshll.u32 %v2304, 16
      %v2477 = vrot.slane %v2475, 5
      %v2478 = vsel %vm1240, %v2473, %v2477
      %v2480 = vshrl.u32 %v2305, 16
      %v2482 = vrot.slane %v2480, 4
      %v2483 = vshll.u32 %v2305, 16
      %v2485 = vrot.slane %v2483, 5
      %v2486 = vor.u32 %v2482, %v2485
      %v2487 = vrot.slane %v2486, 4
      %v2489 = vshll.u32 %v2306, 16
      %v2491 = vrot.slane %v2489, 5
      %v2492 = vsel %vm1240, %v2487, %v2491
      %v2493 = vshrl.u32 %v2306, 16
      %v2495 = vrot.slane %v2493, 4
      %v2496 = vor.u32 %v2495, %v2491
      %v2497 = vrot.slane %v2496, 4
      %v2499 = vshll.u32 %v2307, 16
      %v2501 = vrot.slane %v2499, 5
      %v2502 = vsel %vm1240, %v2497, %v2501
      %v2504 = vshrl.u32 %v2308, 16
      %v2506 = vrot.slane %v2504, 4
      %v2507 = vshll.u32 %v2308, 16
      %v2509 = vrot.slane %v2507, 5
      %v2510 = vor.u32 %v2506, %v2509
      %v2511 = vrot.slane %v2510, 4
      %v2513 = vshll.u32 %v2309, 16
      %v2515 = vrot.slane %v2513, 5
      %v2516 = vsel %vm1240, %v2511, %v2515
      %v2517 = vshrl.u32 %v2309, 16
      %v2519 = vrot.slane %v2517, 4
      %v2520 = vor.u32 %v2519, %v2515
      %v2521 = vrot.slane %v2520, 4
      %v2523 = vshll.u32 %v2310, 16
      %v2525 = vrot.slane %v2523, 5
      %v2526 = vsel %vm1240, %v2521, %v2525
      %v2528 = vshrl.u32 %v2311, 16
      %v2530 = vrot.slane %v2528, 4
      %v2531 = vshll.u32 %v2311, 16
      %v2533 = vrot.slane %v2531, 5
      %v2534 = vor.u32 %v2530, %v2533
      %v2535 = vrot.slane %v2534, 4
      %v2537 = vshll.u32 %v2312, 16
      %v2539 = vrot.slane %v2537, 5
      %v2540 = vsel %vm1240, %v2535, %v2539
      %v2541 = vshrl.u32 %v2312, 16
      %v2543 = vrot.slane %v2541, 4
      %v2544 = vor.u32 %v2543, %v2539
      %v2545 = vrot.slane %v2544, 4
      %v2547 = vshll.u32 %v2313, 16
      %v2549 = vrot.slane %v2547, 5
      %v2550 = vsel %vm1240, %v2545, %v2549
      %v2552 = vshrl.u32 %v2314, 16
      %v2554 = vrot.slane %v2552, 4
      %v2555 = vshll.u32 %v2314, 16
      %v2557 = vrot.slane %v2555, 5
      %v2558 = vor.u32 %v2554, %v2557
      %v2559 = vrot.slane %v2558, 4
      %v2561 = vshll.u32 %v2315, 16
      %v2563 = vrot.slane %v2561, 5
      %v2564 = vsel %vm1240, %v2559, %v2563
      %v2565 = vshrl.u32 %v2315, 16
      %v2567 = vrot.slane %v2565, 4
      %v2568 = vor.u32 %v2567, %v2563
      %v2569 = vrot.slane %v2568, 4
      %v2571 = vshll.u32 %v2316, 16
      %v2573 = vrot.slane %v2571, 5
      %v2574 = vsel %vm1240, %v2569, %v2573
      %v2576 = vshrl.u32 %v2317, 16
      %v2578 = vrot.slane %v2576, 4
      %v2579 = vshll.u32 %v2317, 16
      %v2581 = vrot.slane %v2579, 5
      %v2582 = vor.u32 %v2578, %v2581
      %v2583 = vrot.slane %v2582, 4
      %v2585 = vshll.u32 %v2318, 16
      %v2587 = vrot.slane %v2585, 5
      %v2588 = vsel %vm1240, %v2583, %v2587
      %v2589 = vshrl.u32 %v2318, 16
      %v2591 = vrot.slane %v2589, 4
      %v2592 = vor.u32 %v2591, %v2587
      %v2593 = vrot.slane %v2592, 4
      %v2595 = vshll.u32 %v2319, 16
      %v2597 = vrot.slane %v2595, 5
      %v2598 = vsel %vm1240, %v2593, %v2597
      %v2600 = vshrl.u32 %v2320, 16
      %v2602 = vrot.slane %v2600, 4
      %v2603 = vshll.u32 %v2320, 16
      %v2605 = vrot.slane %v2603, 5
      %v2606 = vor.u32 %v2602, %v2605
      %v2607 = vrot.slane %v2606, 4
      %v2609 = vshll.u32 %v2321, 16
      %v2611 = vrot.slane %v2609, 5
      %v2612 = vsel %vm1240, %v2607, %v2611
      %v2613 = vshrl.u32 %v2321, 16
      %v2615 = vrot.slane %v2613, 4
      %v2616 = vor.u32 %v2615, %v2611
      %v2617 = vrot.slane %v2616, 4
      %v2619 = vshll.u32 %v2322, 16
      %v2621 = vrot.slane %v2619, 5
      %v2622 = vsel %vm1240, %v2617, %v2621
      %v2624 = vshrl.u32 %v2323, 16
      %v2626 = vrot.slane %v2624, 4
      %v2627 = vshll.u32 %v2323, 16
      %v2629 = vrot.slane %v2627, 5
      %v2630 = vor.u32 %v2626, %v2629
      %v2631 = vrot.slane %v2630, 4
      %v2633 = vshll.u32 %v2324, 16
      %v2635 = vrot.slane %v2633, 5
      %v2636 = vsel %vm1240, %v2631, %v2635
      %v2637 = vshrl.u32 %v2324, 16
      %v2639 = vrot.slane %v2637, 4
      %v2640 = vor.u32 %v2639, %v2635
      %v2641 = vrot.slane %v2640, 4
      %v2643 = vshll.u32 %v2325, 16
      %v2645 = vrot.slane %v2643, 5
      %v2646 = vsel %vm1240, %v2641, %v2645
      %v2648 = vshrl.u32 %v2326, 16
      %v2650 = vrot.slane %v2648, 4
      %v2651 = vshll.u32 %v2326, 16
      %v2653 = vrot.slane %v2651, 5
      %v2654 = vor.u32 %v2650, %v2653
      %v2655 = vrot.slane %v2654, 4
      %v2657 = vshll.u32 %v2327, 16
      %v2659 = vrot.slane %v2657, 5
      %v2660 = vsel %vm1240, %v2655, %v2659
      %v2661 = vshrl.u32 %v2327, 16
      %v2663 = vrot.slane %v2661, 4
      %v2664 = vor.u32 %v2663, %v2659
      %v2665 = vrot.slane %v2664, 4
      %v2667 = vshll.u32 %v2328, 16
      %v2669 = vrot.slane %v2667, 5
      %v2670 = vsel %vm1240, %v2665, %v2669
      %v2672 = vshrl.u32 %v2329, 16
      %v2674 = vrot.slane %v2672, 4
      %v2675 = vshll.u32 %v2329, 16
      %v2677 = vrot.slane %v2675, 5
      %v2678 = vor.u32 %v2674, %v2677
      %v2679 = vrot.slane %v2678, 4
      %v2681 = vshll.u32 %v2330, 16
      %v2683 = vrot.slane %v2681, 5
      %v2684 = vsel %vm1240, %v2679, %v2683
      %v2685 = vshrl.u32 %v2330, 16
      %v2687 = vrot.slane %v2685, 4
      %v2688 = vor.u32 %v2687, %v2683
      %v2689 = vrot.slane %v2688, 4
      %v2691 = vshll.u32 %v2331, 16
      %v2693 = vrot.slane %v2691, 5
      %v2694 = vsel %vm1240, %v2689, %v2693
      %v2696 = vshrl.u32 %v2332, 16
      %v2698 = vrot.slane %v2696, 4
      %v2699 = vshll.u32 %v2332, 16
      %v2701 = vrot.slane %v2699, 5
      %v2702 = vor.u32 %v2698, %v2701
      %v2703 = vrot.slane %v2702, 4
      %v2705 = vshll.u32 %v2333, 16
      %v2707 = vrot.slane %v2705, 5
      %v2708 = vsel %vm1240, %v2703, %v2707
      %v2709 = vshrl.u32 %v2333, 16
      %v2711 = vrot.slane %v2709, 4
      %v2712 = vor.u32 %v2711, %v2707
      %v2713 = vrot.slane %v2712, 4
      %v2715 = vshll.u32 %v2334, 16
      %v2717 = vrot.slane %v2715, 5
      %v2718 = vsel %vm1240, %v2713, %v2717
      %2719 = vrot.lane.b32.xlu0 %v2348, 32
      %v2720 = vpop.permute.xlu0 %2719
      %2721 = vrot.lane.b32.xlu0 %v2358, 32
      %v2722 = vpop.permute.xlu0 %2721
      %2723 = vrot.lane.b32.xlu0 %v2372, 32
      %v2724 = vpop.permute.xlu0 %2723
      %2725 = vrot.lane.b32.xlu0 %v2382, 32
      %v2726 = vpop.permute.xlu0 %2725
      %2727 = vrot.lane.b32.xlu0 %v2396, 32
      %v2728 = vpop.permute.xlu0 %2727
      %2729 = vrot.lane.b32.xlu0 %v2406, 32
      %v2730 = vpop.permute.xlu0 %2729
      %2731 = vrot.lane.b32.xlu0 %v2420, 32
      %v2732 = vpop.permute.xlu0 %2731
      %2733 = vrot.lane.b32.xlu0 %v2430, 32
      %v2734 = vpop.permute.xlu0 %2733
      %2735 = vrot.lane.b32.xlu0 %v2444, 32
      %v2736 = vpop.permute.xlu0 %2735
      %2737 = vrot.lane.b32.xlu0 %v2454, 32
      %v2738 = vpop.permute.xlu0 %2737
      %2739 = vrot.lane.b32.xlu0 %v2468, 32
      %v2740 = vpop.permute.xlu0 %2739
      %2741 = vrot.lane.b32.xlu0 %v2478, 32
      %v2742 = vpop.permute.xlu0 %2741
      %2743 = vrot.lane.b32.xlu0 %v2492, 32
      %v2744 = vpop.permute.xlu0 %2743
      %2745 = vrot.lane.b32.xlu0 %v2502, 32
      %v2746 = vpop.permute.xlu0 %2745
      %2747 = vrot.lane.b32.xlu0 %v2516, 32
      %v2748 = vpop.permute.xlu0 %2747
      %2749 = vrot.lane.b32.xlu0 %v2526, 32
      %v2750 = vpop.permute.xlu0 %2749
      %2751 = vrot.lane.b32.xlu0 %v2540, 32
      %v2752 = vpop.permute.xlu0 %2751
      %2753 = vrot.lane.b32.xlu0 %v2550, 32
      %v2754 = vpop.permute.xlu0 %2753
      %2755 = vrot.lane.b32.xlu0 %v2564, 32
      %v2756 = vpop.permute.xlu0 %2755
      %2757 = vrot.lane.b32.xlu0 %v2574, 32
      %v2758 = vpop.permute.xlu0 %2757
      %2759 = vrot.lane.b32.xlu0 %v2588, 32
      %v2760 = vpop.permute.xlu0 %2759
      %2761 = vrot.lane.b32.xlu0 %v2598, 32
      %v2762 = vpop.permute.xlu0 %2761
      %2763 = vrot.lane.b32.xlu0 %v2612, 32
      %v2764 = vpop.permute.xlu0 %2763
      %2765 = vrot.lane.b32.xlu0 %v2622, 32
      %v2766 = vpop.permute.xlu0 %2765
      %2767 = vrot.lane.b32.xlu0 %v2636, 32
      %v2768 = vpop.permute.xlu0 %2767
      %2769 = vrot.lane.b32.xlu0 %v2646, 32
      %v2770 = vpop.permute.xlu0 %2769
      %2771 = vrot.lane.b32.xlu0 %v2660, 32
      %v2772 = vpop.permute.xlu0 %2771
      %2773 = vrot.lane.b32.xlu0 %v2670, 32
      %v2774 = vpop.permute.xlu0 %2773
      %2775 = vrot.lane.b32.xlu0 %v2684, 32
      %v2776 = vpop.permute.xlu0 %2775
      %2777 = vrot.lane.b32.xlu0 %v2694, 32
      %v2778 = vpop.permute.xlu0 %2777
      %2779 = vrot.lane.b32.xlu0 %v2708, 32
      %v2780 = vpop.permute.xlu0 %2779
      %2781 = vrot.lane.b32.xlu0 %v2718, 32
      %v2782 = vpop.permute.xlu0 %2781
      %vm2815 = vcmask 322816
      %2816 = vst.msk [vmem:[#allocation3] sm:$0xf] %vm2815, %v2720
      %2817 = vst.msk [vmem:[#allocation3 + $0x4] sm:$0xf] %vm2815, %v2722
      %2818 = vst.msk [vmem:[#allocation3 + $0x8] sm:$0xf] %vm2815, %v2724
      %2819 = vst.msk [vmem:[#allocation3 + $0xc] sm:$0xf] %vm2815, %v2726
      %2820 = vst.msk [vmem:[#allocation3 + $0x10] sm:$0xf] %vm2815, %v2728
      %2821 = vst.msk [vmem:[#allocation3 + $0x14] sm:$0xf] %vm2815, %v2730
      %2822 = vst.msk [vmem:[#allocation3 + $0x18] sm:$0xf] %vm2815, %v2732
      %2823 = vst.msk [vmem:[#allocation3 + $0x1c] sm:$0xf] %vm2815, %v2734
      %2824 = vst.msk [vmem:[#allocation3 + $0x20] sm:$0xf] %vm2815, %v2736
      %2825 = vst.msk [vmem:[#allocation3 + $0x24] sm:$0xf] %vm2815, %v2738
      %2826 = vst.msk [vmem:[#allocation3 + $0x28] sm:$0xf] %vm2815, %v2740
      %2827 = vst.msk [vmem:[#allocation3 + $0x2c] sm:$0xf] %vm2815, %v2742
      %2828 = vst.msk [vmem:[#allocation3 + $0x30] sm:$0xf] %vm2815, %v2744
      %2829 = vst.msk [vmem:[#allocation3 + $0x34] sm:$0xf] %vm2815, %v2746
      %2830 = vst.msk [vmem:[#allocation3 + $0x38] sm:$0xf] %vm2815, %v2748
      %2831 = vst.msk [vmem:[#allocation3 + $0x3c] sm:$0xf] %vm2815, %v2750
      %2832 = vst.msk [vmem:[#allocation3 + $0x40] sm:$0xf] %vm2815, %v2752
      %2833 = vst.msk [vmem:[#allocation3 + $0x44] sm:$0xf] %vm2815, %v2754
      %2834 = vst.msk [vmem:[#allocation3 + $0x48] sm:$0xf] %vm2815, %v2756
      %2835 = vst.msk [vmem:[#allocation3 + $0x4c] sm:$0xf] %vm2815, %v2758
      %2836 = vst.msk [vmem:[#allocation3 + $0x50] sm:$0xf] %vm2815, %v2760
      %2837 = vst.msk [vmem:[#allocation3 + $0x54] sm:$0xf] %vm2815, %v2762
      %2838 = vst.msk [vmem:[#allocation3 + $0x58] sm:$0xf] %vm2815, %v2764
      %2839 = vst.msk [vmem:[#allocation3 + $0x5c] sm:$0xf] %vm2815, %v2766
      %2840 = vst.msk [vmem:[#allocation3 + $0x60] sm:$0xf] %vm2815, %v2768
      %2841 = vst.msk [vmem:[#allocation3 + $0x64] sm:$0xf] %vm2815, %v2770
      %2842 = vst.msk [vmem:[#allocation3 + $0x68] sm:$0xf] %vm2815, %v2772
      %2843 = vst.msk [vmem:[#allocation3 + $0x6c] sm:$0xf] %vm2815, %v2774
      %2844 = vst.msk [vmem:[#allocation3 + $0x70] sm:$0xf] %vm2815, %v2776
      %2845 = vst.msk [vmem:[#allocation3 + $0x74] sm:$0xf] %vm2815, %v2778
      %2846 = vst.msk [vmem:[#allocation3 + $0x78] sm:$0xf] %vm2815, %v2780
      %2847 = vst.msk [vmem:[#allocation3 + $0x7c] sm:$0xf] %vm2815, %v2782
      %v2848 = vld [vmem:[%s921] sm:$0xe]
      %v2849 = vld [vmem:[%s921 + $0x4] sm:$0xf]
      %v2850 = vld [vmem:[%s921 + $0x8] sm:$0x1]
      %v2851 = vld [vmem:[%s921 + $0xc] sm:$0xe]
      %v2852 = vld [vmem:[%s921 + $0x10] sm:$0xf]
      %v2853 = vld [vmem:[%s921 + $0x14] sm:$0x1]
      %v2854 = vld [vmem:[%s921 + $0x18] sm:$0xe]
      %v2855 = vld [vmem:[%s921 + $0x1c] sm:$0xf]
      %v2856 = vld [vmem:[%s921 + $0x20] sm:$0x1]
      %v2857 = vld [vmem:[%s921 + $0x24] sm:$0xe]
      %v2858 = vld [vmem:[%s921 + $0x28] sm:$0xf]
      %v2859 = vld [vmem:[%s921 + $0x2c] sm:$0x1]
      %v2860 = vld [vmem:[%s921 + $0x30] sm:$0xe]
      %v2861 = vld [vmem:[%s921 + $0x34] sm:$0xf]
      %v2862 = vld [vmem:[%s921 + $0x38] sm:$0x1]
      %v2863 = vld [vmem:[%s921 + $0x3c] sm:$0xe]
      %v2864 = vld [vmem:[%s921 + $0x40] sm:$0xf]
      %v2865 = vld [vmem:[%s921 + $0x44] sm:$0x1]
      %v2866 = vld [vmem:[%s921 + $0x48] sm:$0xe]
      %v2867 = vld [vmem:[%s921 + $0x4c] sm:$0xf]
      %v2868 = vld [vmem:[%s921 + $0x50] sm:$0x1]
      %v2869 = vld [vmem:[%s921 + $0x54] sm:$0xe]
      %v2870 = vld [vmem:[%s921 + $0x58] sm:$0xf]
      %v2871 = vld [vmem:[%s921 + $0x5c] sm:$0x1]
      %v2872 = vld [vmem:[%s921 + $0x60] sm:$0xe]
      %v2873 = vld [vmem:[%s921 + $0x64] sm:$0xf]
      %v2874 = vld [vmem:[%s921 + $0x68] sm:$0x1]
      %v2875 = vld [vmem:[%s921 + $0x6c] sm:$0xe]
      %v2876 = vld [vmem:[%s921 + $0x70] sm:$0xf]
      %v2877 = vld [vmem:[%s921 + $0x74] sm:$0x1]
      %v2878 = vld [vmem:[%s921 + $0x78] sm:$0xe]
      %v2879 = vld [vmem:[%s921 + $0x7c] sm:$0xf]
      %v2880 = vld [vmem:[%s921 + $0x80] sm:$0x1]
      %v2881 = vld [vmem:[%s921 + $0x84] sm:$0xe]
      %v2882 = vld [vmem:[%s921 + $0x88] sm:$0xf]
      %v2883 = vld [vmem:[%s921 + $0x8c] sm:$0x1]
      %v2884 = vld [vmem:[%s921 + $0x90] sm:$0xe]
      %v2885 = vld [vmem:[%s921 + $0x94] sm:$0xf]
      %v2886 = vld [vmem:[%s921 + $0x98] sm:$0x1]
      %v2887 = vld [vmem:[%s921 + $0x9c] sm:$0xe]
      %v2888 = vld [vmem:[%s921 + $0xa0] sm:$0xf]
      %v2889 = vld [vmem:[%s921 + $0xa4] sm:$0x1]
      %v2890 = vld [vmem:[%s921 + $0xa8] sm:$0xe]
      %v2891 = vld [vmem:[%s921 + $0xac] sm:$0xf]
      %v2892 = vld [vmem:[%s921 + $0xb0] sm:$0x1]
      %v2893 = vld [vmem:[%s921 + $0xb4] sm:$0xe]
      %v2894 = vld [vmem:[%s921 + $0xb8] sm:$0xf]
      %v2895 = vld [vmem:[%s921 + $0xbc] sm:$0x1]
      %v2944 = vrot.slane %v2848, 5
      %v2945 = vrot.slane %v2944, 4
      %v2946 = vrot.slane %v2849, 5
      %v2947 = vsel %vm1852, %v2945, %v2946
      %v2948 = vrot.slane %v2946, 4
      %v2949 = vrot.slane %v2850, 5
      %v2950 = vsel %vm1852, %v2948, %v2949
      %v2951 = vrot.slane %v2851, 5
      %v2952 = vrot.slane %v2951, 4
      %v2953 = vrot.slane %v2852, 5
      %v2954 = vsel %vm1852, %v2952, %v2953
      %v2955 = vrot.slane %v2953, 4
      %v2956 = vrot.slane %v2853, 5
      %v2957 = vsel %vm1852, %v2955, %v2956
      %v2958 = vrot.slane %v2854, 5
      %v2959 = vrot.slane %v2958, 4
      %v2960 = vrot.slane %v2855, 5
      %v2961 = vsel %vm1852, %v2959, %v2960
      %v2962 = vrot.slane %v2960, 4
      %v2963 = vrot.slane %v2856, 5
      %v2964 = vsel %vm1852, %v2962, %v2963
      %v2965 = vrot.slane %v2857, 5
      %v2966 = vrot.slane %v2965, 4
      %v2967 = vrot.slane %v2858, 5
      %v2968 = vsel %vm1852, %v2966, %v2967
      %v2969 = vrot.slane %v2967, 4
      %v2970 = vrot.slane %v2859, 5
      %v2971 = vsel %vm1852, %v2969, %v2970
      %v2972 = vrot.slane %v2860, 5
      %v2973 = vrot.slane %v2972, 4
      %v2974 = vrot.slane %v2861, 5
      %v2975 = vsel %vm1852, %v2973, %v2974
      %v2976 = vrot.slane %v2974, 4
      %v2977 = vrot.slane %v2862, 5
      %v2978 = vsel %vm1852, %v2976, %v2977
      %v2979 = vrot.slane %v2863, 5
      %v2980 = vrot.slane %v2979, 4
      %v2981 = vrot.slane %v2864, 5
      %v2982 = vsel %vm1852, %v2980, %v2981
      %v2983 = vrot.slane %v2981, 4
      %v2984 = vrot.slane %v2865, 5
      %v2985 = vsel %vm1852, %v2983, %v2984
      %v2986 = vrot.slane %v2866, 5
      %v2987 = vrot.slane %v2986, 4
      %v2988 = vrot.slane %v2867, 5
      %v2989 = vsel %vm1852, %v2987, %v2988
      %v2990 = vrot.slane %v2988, 4
      %v2991 = vrot.slane %v2868, 5
      %v2992 = vsel %vm1852, %v2990, %v2991
      %v2993 = vrot.slane %v2869, 5
      %v2994 = vrot.slane %v2993, 4
      %v2995 = vrot.slane %v2870, 5
      %v2996 = vsel %vm1852, %v2994, %v2995
      %v2997 = vrot.slane %v2995, 4
      %v2998 = vrot.slane %v2871, 5
      %v2999 = vsel %vm1852, %v2997, %v2998
      %v3000 = vrot.slane %v2872, 5
      %v3001 = vrot.slane %v3000, 4
      %v3002 = vrot.slane %v2873, 5
      %v3003 = vsel %vm1852, %v3001, %v3002
      %v3004 = vrot.slane %v3002, 4
      %v3005 = vrot.slane %v2874, 5
      %v3006 = vsel %vm1852, %v3004, %v3005
      %v3007 = vrot.slane %v2875, 5
      %v3008 = vrot.slane %v3007, 4
      %v3009 = vrot.slane %v2876, 5
      %v3010 = vsel %vm1852, %v3008, %v3009
      %v3011 = vrot.slane %v3009, 4
      %v3012 = vrot.slane %v2877, 5
      %v3013 = vsel %vm1852, %v3011, %v3012
      %v3014 = vrot.slane %v2878, 5
      %v3015 = vrot.slane %v3014, 4
      %v3016 = vrot.slane %v2879, 5
      %v3017 = vsel %vm1852, %v3015, %v3016
      %v3018 = vrot.slane %v3016, 4
      %v3019 = vrot.slane %v2880, 5
      %v3020 = vsel %vm1852, %v3018, %v3019
      %v3021 = vrot.slane %v2881, 5
      %v3022 = vrot.slane %v3021, 4
      %v3023 = vrot.slane %v2882, 5
      %v3024 = vsel %vm1852, %v3022, %v3023
      %v3025 = vrot.slane %v3023, 4
      %v3026 = vrot.slane %v2883, 5
      %v3027 = vsel %vm1852, %v3025, %v3026
      %v3028 = vrot.slane %v2884, 5
      %v3029 = vrot.slane %v3028, 4
      %v3030 = vrot.slane %v2885, 5
      %v3031 = vsel %vm1852, %v3029, %v3030
      %v3032 = vrot.slane %v3030, 4
      %v3033 = vrot.slane %v2886, 5
      %v3034 = vsel %vm1852, %v3032, %v3033
      %v3035 = vrot.slane %v2887, 5
      %v3036 = vrot.slane %v3035, 4
      %v3037 = vrot.slane %v2888, 5
      %v3038 = vsel %vm1852, %v3036, %v3037
      %v3039 = vrot.slane %v3037, 4
      %v3040 = vrot.slane %v2889, 5
      %v3041 = vsel %vm1852, %v3039, %v3040
      %v3042 = vrot.slane %v2890, 5
      %v3043 = vrot.slane %v3042, 4
      %v3044 = vrot.slane %v2891, 5
      %v3045 = vsel %vm1852, %v3043, %v3044
      %v3046 = vrot.slane %v3044, 4
      %v3047 = vrot.slane %v2892, 5
      %v3048 = vsel %vm1852, %v3046, %v3047
      %v3049 = vrot.slane %v2893, 5
      %v3050 = vrot.slane %v3049, 4
      %v3051 = vrot.slane %v2894, 5
      %v3052 = vsel %vm1852, %v3050, %v3051
      %v3053 = vrot.slane %v3051, 4
      %v3054 = vrot.slane %v2895, 5
      %v3055 = vsel %vm1852, %v3053, %v3054
      %3056 = vrot.lane.b32.xlu0 %v2947, 40
      %v3057 = vpop.permute.xlu0 %3056
      %3058 = vrot.lane.b32.xlu0 %v2950, 40
      %v3059 = vpop.permute.xlu0 %3058
      %3060 = vrot.lane.b32.xlu0 %v2954, 40
      %v3061 = vpop.permute.xlu0 %3060
      %3062 = vrot.lane.b32.xlu0 %v2957, 40
      %v3063 = vpop.permute.xlu0 %3062
      %3064 = vrot.lane.b32.xlu0 %v2961, 40
      %v3065 = vpop.permute.xlu0 %3064
      %3066 = vrot.lane.b32.xlu0 %v2964, 40
      %v3067 = vpop.permute.xlu0 %3066
      %3068 = vrot.lane.b32.xlu0 %v2968, 40
      %v3069 = vpop.permute.xlu0 %3068
      %3070 = vrot.lane.b32.xlu0 %v2971, 40
      %v3071 = vpop.permute.xlu0 %3070
      %3072 = vrot.lane.b32.xlu0 %v2975, 40
      %v3073 = vpop.permute.xlu0 %3072
      %3074 = vrot.lane.b32.xlu0 %v2978, 40
      %v3075 = vpop.permute.xlu0 %3074
      %3076 = vrot.lane.b32.xlu0 %v2982, 40
      %v3077 = vpop.permute.xlu0 %3076
      %3078 = vrot.lane.b32.xlu0 %v2985, 40
      %v3079 = vpop.permute.xlu0 %3078
      %3080 = vrot.lane.b32.xlu0 %v2989, 40
      %v3081 = vpop.permute.xlu0 %3080
      %3082 = vrot.lane.b32.xlu0 %v2992, 40
      %v3083 = vpop.permute.xlu0 %3082
      %3084 = vrot.lane.b32.xlu0 %v2996, 40
      %v3085 = vpop.permute.xlu0 %3084
      %3086 = vrot.lane.b32.xlu0 %v2999, 40
      %v3087 = vpop.permute.xlu0 %3086
      %3088 = vrot.lane.b32.xlu0 %v3003, 40
      %v3089 = vpop.permute.xlu0 %3088
      %3090 = vrot.lane.b32.xlu0 %v3006, 40
      %v3091 = vpop.permute.xlu0 %3090
      %3092 = vrot.lane.b32.xlu0 %v3010, 40
      %v3093 = vpop.permute.xlu0 %3092
      %3094 = vrot.lane.b32.xlu0 %v3013, 40
      %v3095 = vpop.permute.xlu0 %3094
      %3096 = vrot.lane.b32.xlu0 %v3017, 40
      %v3097 = vpop.permute.xlu0 %3096
      %3098 = vrot.lane.b32.xlu0 %v3020, 40
      %v3099 = vpop.permute.xlu0 %3098
      %3100 = vrot.lane.b32.xlu0 %v3024, 40
      %v3101 = vpop.permute.xlu0 %3100
      %3102 = vrot.lane.b32.xlu0 %v3027, 40
      %v3103 = vpop.permute.xlu0 %3102
      %3104 = vrot.lane.b32.xlu0 %v3031, 40
      %v3105 = vpop.permute.xlu0 %3104
      %3106 = vrot.lane.b32.xlu0 %v3034, 40
      %v3107 = vpop.permute.xlu0 %3106
      %3108 = vrot.lane.b32.xlu0 %v3038, 40
      %v3109 = vpop.permute.xlu0 %3108
      %3110 = vrot.lane.b32.xlu0 %v3041, 40
      %v3111 = vpop.permute.xlu0 %3110
      %3112 = vrot.lane.b32.xlu0 %v3045, 40
      %v3113 = vpop.permute.xlu0 %3112
      %3114 = vrot.lane.b32.xlu0 %v3048, 40
      %v3115 = vpop.permute.xlu0 %3114
      %3116 = vrot.lane.b32.xlu0 %v3052, 40
      %v3117 = vpop.permute.xlu0 %3116
      %3118 = vrot.lane.b32.xlu0 %v3055, 40
      %v3119 = vpop.permute.xlu0 %3118
      %vm3152 = vcmask 388416
      %3153 = vst.msk [vmem:[#allocation3] sm:$0xf] %vm3152, %v3057
      %3154 = vst.msk [vmem:[#allocation3 + $0x4] sm:$0xf] %vm3152, %v3059
      %3155 = vst.msk [vmem:[#allocation3 + $0x8] sm:$0xf] %vm3152, %v3061
      %3156 = vst.msk [vmem:[#allocation3 + $0xc] sm:$0xf] %vm3152, %v3063
      %3157 = vst.msk [vmem:[#allocation3 + $0x10] sm:$0xf] %vm3152, %v3065
      %3158 = vst.msk [vmem:[#allocation3 + $0x14] sm:$0xf] %vm3152, %v3067
      %3159 = vst.msk [vmem:[#allocation3 + $0x18] sm:$0xf] %vm3152, %v3069
      %3160 = vst.msk [vmem:[#allocation3 + $0x1c] sm:$0xf] %vm3152, %v3071
      %3161 = vst.msk [vmem:[#allocation3 + $0x20] sm:$0xf] %vm3152, %v3073
      %3162 = vst.msk [vmem:[#allocation3 + $0x24] sm:$0xf] %vm3152, %v3075
      %3163 = vst.msk [vmem:[#allocation3 + $0x28] sm:$0xf] %vm3152, %v3077
      %3164 = vst.msk [vmem:[#allocation3 + $0x2c] sm:$0xf] %vm3152, %v3079
      %3165 = vst.msk [vmem:[#allocation3 + $0x30] sm:$0xf] %vm3152, %v3081
      %3166 = vst.msk [vmem:[#allocation3 + $0x34] sm:$0xf] %vm3152, %v3083
      %3167 = vst.msk [vmem:[#allocation3 + $0x38] sm:$0xf] %vm3152, %v3085
      %3168 = vst.msk [vmem:[#allocation3 + $0x3c] sm:$0xf] %vm3152, %v3087
      %3169 = vst.msk [vmem:[#allocation3 + $0x40] sm:$0xf] %vm3152, %v3089
      %3170 = vst.msk [vmem:[#allocation3 + $0x44] sm:$0xf] %vm3152, %v3091
      %3171 = vst.msk [vmem:[#allocation3 + $0x48] sm:$0xf] %vm3152, %v3093
      %3172 = vst.msk [vmem:[#allocation3 + $0x4c] sm:$0xf] %vm3152, %v3095
      %3173 = vst.msk [vmem:[#allocation3 + $0x50] sm:$0xf] %vm3152, %v3097
      %3174 = vst.msk [vmem:[#allocation3 + $0x54] sm:$0xf] %vm3152, %v3099
      %3175 = vst.msk [vmem:[#allocation3 + $0x58] sm:$0xf] %vm3152, %v3101
      %3176 = vst.msk [vmem:[#allocation3 + $0x5c] sm:$0xf] %vm3152, %v3103
      %3177 = vst.msk [vmem:[#allocation3 + $0x60] sm:$0xf] %vm3152, %v3105
      %3178 = vst.msk [vmem:[#allocation3 + $0x64] sm:$0xf] %vm3152, %v3107
      %3179 = vst.msk [vmem:[#allocation3 + $0x68] sm:$0xf] %vm3152, %v3109
      %3180 = vst.msk [vmem:[#allocation3 + $0x6c] sm:$0xf] %vm3152, %v3111
      %3181 = vst.msk [vmem:[#allocation3 + $0x70] sm:$0xf] %vm3152, %v3113
      %3182 = vst.msk [vmem:[#allocation3 + $0x74] sm:$0xf] %vm3152, %v3115
      %3183 = vst.msk [vmem:[#allocation3 + $0x78] sm:$0xf] %vm3152, %v3117
      %3184 = vst.msk [vmem:[#allocation3 + $0x7c] sm:$0xf] %vm3152, %v3119
      %s3185 = scalar_lea.vmem [#allocation2], 24
      %v3186 = vld [vmem:[%s3185] sm:$0xf]
      %v3187 = vld [vmem:[%s3185 + $0x4] sm:$0xf]
      %v3188 = vld [vmem:[%s3185 + $0xc] sm:$0xf]
      %v3189 = vld [vmem:[%s3185 + $0x10] sm:$0xf]
      %v3190 = vld [vmem:[%s3185 + $0x18] sm:$0xf]
      %v3191 = vld [vmem:[%s3185 + $0x1c] sm:$0xf]
      %v3192 = vld [vmem:[%s3185 + $0x24] sm:$0xf]
      %v3193 = vld [vmem:[%s3185 + $0x28] sm:$0xf]
      %v3194 = vld [vmem:[%s3185 + $0x30] sm:$0xf]
      %v3195 = vld [vmem:[%s3185 + $0x34] sm:$0xf]
      %v3196 = vld [vmem:[%s3185 + $0x3c] sm:$0xf]
      %v3197 = vld [vmem:[%s3185 + $0x40] sm:$0xf]
      %v3198 = vld [vmem:[%s3185 + $0x48] sm:$0xf]
      %v3199 = vld [vmem:[%s3185 + $0x4c] sm:$0xf]
      %v3200 = vld [vmem:[%s3185 + $0x54] sm:$0xf]
      %v3201 = vld [vmem:[%s3185 + $0x58] sm:$0xf]
      %v3202 = vld [vmem:[%s3185 + $0x60] sm:$0xf]
      %v3203 = vld [vmem:[%s3185 + $0x64] sm:$0xf]
      %v3204 = vld [vmem:[%s3185 + $0x6c] sm:$0xf]
      %v3205 = vld [vmem:[%s3185 + $0x70] sm:$0xf]
      %v3206 = vld [vmem:[%s3185 + $0x78] sm:$0xf]
      %v3207 = vld [vmem:[%s3185 + $0x7c] sm:$0xf]
      %v3208 = vld [vmem:[%s3185 + $0x84] sm:$0xf]
      %v3209 = vld [vmem:[%s3185 + $0x88] sm:$0xf]
      %v3210 = vld [vmem:[%s3185 + $0x90] sm:$0xf]
      %v3211 = vld [vmem:[%s3185 + $0x94] sm:$0xf]
      %v3212 = vld [vmem:[%s3185 + $0x9c] sm:$0xf]
      %v3213 = vld [vmem:[%s3185 + $0xa0] sm:$0xf]
      %v3214 = vld [vmem:[%s3185 + $0xa8] sm:$0xf]
      %v3215 = vld [vmem:[%s3185 + $0xac] sm:$0xf]
      %v3216 = vld [vmem:[%s3185 + $0xb4] sm:$0xf]
      %v3217 = vld [vmem:[%s3185 + $0xb8] sm:$0xf]
      %3250 = vrot.lane.b32.xlu0 %v3186, 48
      %v3251 = vpop.permute.xlu0 %3250
      %3252 = vrot.lane.b32.xlu0 %v3187, 48
      %v3253 = vpop.permute.xlu0 %3252
      %3254 = vrot.lane.b32.xlu0 %v3188, 48
      %v3255 = vpop.permute.xlu0 %3254
      %3256 = vrot.lane.b32.xlu0 %v3189, 48
      %v3257 = vpop.permute.xlu0 %3256
      %3258 = vrot.lane.b32.xlu0 %v3190, 48
      %v3259 = vpop.permute.xlu0 %3258
      %3260 = vrot.lane.b32.xlu0 %v3191, 48
      %v3261 = vpop.permute.xlu0 %3260
      %3262 = vrot.lane.b32.xlu0 %v3192, 48
      %v3263 = vpop.permute.xlu0 %3262
      %3264 = vrot.lane.b32.xlu0 %v3193, 48
      %v3265 = vpop.permute.xlu0 %3264
      %3266 = vrot.lane.b32.xlu0 %v3194, 48
      %v3267 = vpop.permute.xlu0 %3266
      %3268 = vrot.lane.b32.xlu0 %v3195, 48
      %v3269 = vpop.permute.xlu0 %3268
      %3270 = vrot.lane.b32.xlu0 %v3196, 48
      %v3271 = vpop.permute.xlu0 %3270
      %3272 = vrot.lane.b32.xlu0 %v3197, 48
      %v3273 = vpop.permute.xlu0 %3272
      %3274 = vrot.lane.b32.xlu0 %v3198, 48
      %v3275 = vpop.permute.xlu0 %3274
      %3276 = vrot.lane.b32.xlu0 %v3199, 48
      %v3277 = vpop.permute.xlu0 %3276
      %3278 = vrot.lane.b32.xlu0 %v3200, 48
      %v3279 = vpop.permute.xlu0 %3278
      %3280 = vrot.lane.b32.xlu0 %v3201, 48
      %v3281 = vpop.permute.xlu0 %3280
      %3282 = vrot.lane.b32.xlu0 %v3202, 48
      %v3283 = vpop.permute.xlu0 %3282
      %3284 = vrot.lane.b32.xlu0 %v3203, 48
      %v3285 = vpop.permute.xlu0 %3284
      %3286 = vrot.lane.b32.xlu0 %v3204, 48
      %v3287 = vpop.permute.xlu0 %3286
      %3288 = vrot.lane.b32.xlu0 %v3205, 48
      %v3289 = vpop.permute.xlu0 %3288
      %3290 = vrot.lane.b32.xlu0 %v3206, 48
      %v3291 = vpop.permute.xlu0 %3290
      %3292 = vrot.lane.b32.xlu0 %v3207, 48
      %v3293 = vpop.permute.xlu0 %3292
      %3294 = vrot.lane.b32.xlu0 %v3208, 48
      %v3295 = vpop.permute.xlu0 %3294
      %3296 = vrot.lane.b32.xlu0 %v3209, 48
      %v3297 = vpop.permute.xlu0 %3296
      %3298 = vrot.lane.b32.xlu0 %v3210, 48
      %v3299 = vpop.permute.xlu0 %3298
      %3300 = vrot.lane.b32.xlu0 %v3211, 48
      %v3301 = vpop.permute.xlu0 %3300
      %3302 = vrot.lane.b32.xlu0 %v3212, 48
      %v3303 = vpop.permute.xlu0 %3302
      %3304 = vrot.lane.b32.xlu0 %v3213, 48
      %v3305 = vpop.permute.xlu0 %3304
      %3306 = vrot.lane.b32.xlu0 %v3214, 48
      %v3307 = vpop.permute.xlu0 %3306
      %3308 = vrot.lane.b32.xlu0 %v3215, 48
      %v3309 = vpop.permute.xlu0 %3308
      %3310 = vrot.lane.b32.xlu0 %v3216, 48
      %v3311 = vpop.permute.xlu0 %3310
      %3312 = vrot.lane.b32.xlu0 %v3217, 48
      %v3313 = vpop.permute.xlu0 %3312
      %vm3346 = vcmask 454016
      %3347 = vst.msk [vmem:[#allocation3] sm:$0xf] %vm3346, %v3251
      %3348 = vst.msk [vmem:[#allocation3 + $0x4] sm:$0xf] %vm3346, %v3253
      %3349 = vst.msk [vmem:[#allocation3 + $0x8] sm:$0xf] %vm3346, %v3255
      %3350 = vst.msk [vmem:[#allocation3 + $0xc] sm:$0xf] %vm3346, %v3257
      %3351 = vst.msk [vmem:[#allocation3 + $0x10] sm:$0xf] %vm3346, %v3259
      %3352 = vst.msk [vmem:[#allocation3 + $0x14] sm:$0xf] %vm3346, %v3261
      %3353 = vst.msk [vmem:[#allocation3 + $0x18] sm:$0xf] %vm3346, %v3263
      %3354 = vst.msk [vmem:[#allocation3 + $0x1c] sm:$0xf] %vm3346, %v3265
      %3355 = vst.msk [vmem:[#allocation3 + $0x20] sm:$0xf] %vm3346, %v3267
      %3356 = vst.msk [vmem:[#allocation3 + $0x24] sm:$0xf] %vm3346, %v3269
      %3357 = vst.msk [vmem:[#allocation3 + $0x28] sm:$0xf] %vm3346, %v3271
      %3358 = vst.msk [vmem:[#allocation3 + $0x2c] sm:$0xf] %vm3346, %v3273
      %3359 = vst.msk [vmem:[#allocation3 + $0x30] sm:$0xf] %vm3346, %v3275
      %3360 = vst.msk [vmem:[#allocation3 + $0x34] sm:$0xf] %vm3346, %v3277
      %3361 = vst.msk [vmem:[#allocation3 + $0x38] sm:$0xf] %vm3346, %v3279
      %3362 = vst.msk [vmem:[#allocation3 + $0x3c] sm:$0xf] %vm3346, %v3281
      %3363 = vst.msk [vmem:[#allocation3 + $0x40] sm:$0xf] %vm3346, %v3283
      %3364 = vst.msk [vmem:[#allocation3 + $0x44] sm:$0xf] %vm3346, %v3285
      %3365 = vst.msk [vmem:[#allocation3 + $0x48] sm:$0xf] %vm3346, %v3287
      %3366 = vst.msk [vmem:[#allocation3 + $0x4c] sm:$0xf] %vm3346, %v3289
      %3367 = vst.msk [vmem:[#allocation3 + $0x50] sm:$0xf] %vm3346, %v3291
      %3368 = vst.msk [vmem:[#allocation3 + $0x54] sm:$0xf] %vm3346, %v3293
      %3369 = vst.msk [vmem:[#allocation3 + $0x58] sm:$0xf] %vm3346, %v3295
      %3370 = vst.msk [vmem:[#allocation3 + $0x5c] sm:$0xf] %vm3346, %v3297
      %3371 = vst.msk [vmem:[#allocation3 + $0x60] sm:$0xf] %vm3346, %v3299
      %3372 = vst.msk [vmem:[#allocation3 + $0x64] sm:$0xf] %vm3346, %v3301
      %3373 = vst.msk [vmem:[#allocation3 + $0x68] sm:$0xf] %vm3346, %v3303
      %3374 = vst.msk [vmem:[#allocation3 + $0x6c] sm:$0xf] %vm3346, %v3305
      %3375 = vst.msk [vmem:[#allocation3 + $0x70] sm:$0xf] %vm3346, %v3307
      %3376 = vst.msk [vmem:[#allocation3 + $0x74] sm:$0xf] %vm3346, %v3309
      %3377 = vst.msk [vmem:[#allocation3 + $0x78] sm:$0xf] %vm3346, %v3311
      %3378 = vst.msk [vmem:[#allocation3 + $0x7c] sm:$0xf] %vm3346, %v3313
      %v3379 = vld [vmem:[%s3185] sm:$0xf]
      %v3380 = vld [vmem:[%s3185 + $0x4] sm:$0xf]
      %v3381 = vld [vmem:[%s3185 + $0x8] sm:$0x1]
      %v3382 = vld [vmem:[%s3185 + $0xc] sm:$0xf]
      %v3383 = vld [vmem:[%s3185 + $0x10] sm:$0xf]
      %v3384 = vld [vmem:[%s3185 + $0x14] sm:$0x1]
      %v3385 = vld [vmem:[%s3185 + $0x18] sm:$0xf]
      %v3386 = vld [vmem:[%s3185 + $0x1c] sm:$0xf]
      %v3387 = vld [vmem:[%s3185 + $0x20] sm:$0x1]
      %v3388 = vld [vmem:[%s3185 + $0x24] sm:$0xf]
      %v3389 = vld [vmem:[%s3185 + $0x28] sm:$0xf]
      %v3390 = vld [vmem:[%s3185 + $0x2c] sm:$0x1]
      %v3391 = vld [vmem:[%s3185 + $0x30] sm:$0xf]
      %v3392 = vld [vmem:[%s3185 + $0x34] sm:$0xf]
      %v3393 = vld [vmem:[%s3185 + $0x38] sm:$0x1]
      %v3394 = vld [vmem:[%s3185 + $0x3c] sm:$0xf]
      %v3395 = vld [vmem:[%s3185 + $0x40] sm:$0xf]
      %v3396 = vld [vmem:[%s3185 + $0x44] sm:$0x1]
      %v3397 = vld [vmem:[%s3185 + $0x48] sm:$0xf]
      %v3398 = vld [vmem:[%s3185 + $0x4c] sm:$0xf]
      %v3399 = vld [vmem:[%s3185 + $0x50] sm:$0x1]
      %v3400 = vld [vmem:[%s3185 + $0x54] sm:$0xf]
      %v3401 = vld [vmem:[%s3185 + $0x58] sm:$0xf]
      %v3402 = vld [vmem:[%s3185 + $0x5c] sm:$0x1]
      %v3403 = vld [vmem:[%s3185 + $0x60] sm:$0xf]
      %v3404 = vld [vmem:[%s3185 + $0x64] sm:$0xf]
      %v3405 = vld [vmem:[%s3185 + $0x68] sm:$0x1]
      %v3406 = vld [vmem:[%s3185 + $0x6c] sm:$0xf]
      %v3407 = vld [vmem:[%s3185 + $0x70] sm:$0xf]
      %v3408 = vld [vmem:[%s3185 + $0x74] sm:$0x1]
      %v3409 = vld [vmem:[%s3185 + $0x78] sm:$0xf]
      %v3410 = vld [vmem:[%s3185 + $0x7c] sm:$0xf]
      %v3411 = vld [vmem:[%s3185 + $0x80] sm:$0x1]
      %v3412 = vld [vmem:[%s3185 + $0x84] sm:$0xf]
      %v3413 = vld [vmem:[%s3185 + $0x88] sm:$0xf]
      %v3414 = vld [vmem:[%s3185 + $0x8c] sm:$0x1]
      %v3415 = vld [vmem:[%s3185 + $0x90] sm:$0xf]
      %v3416 = vld [vmem:[%s3185 + $0x94] sm:$0xf]
      %v3417 = vld [vmem:[%s3185 + $0x98] sm:$0x1]
      %v3418 = vld [vmem:[%s3185 + $0x9c] sm:$0xf]
      %v3419 = vld [vmem:[%s3185 + $0xa0] sm:$0xf]
      %v3420 = vld [vmem:[%s3185 + $0xa4] sm:$0x1]
      %v3421 = vld [vmem:[%s3185 + $0xa8] sm:$0xf]
      %v3422 = vld [vmem:[%s3185 + $0xac] sm:$0xf]
      %v3423 = vld [vmem:[%s3185 + $0xb0] sm:$0x1]
      %v3424 = vld [vmem:[%s3185 + $0xb4] sm:$0xf]
      %v3425 = vld [vmem:[%s3185 + $0xb8] sm:$0xf]
      %v3426 = vld [vmem:[%s3185 + $0xbc] sm:$0x1]
      %v3428 = vshrl.u32 %v3379, 16
      %v3430 = vrot.slane %v3428, 4
      %v3431 = vshll.u32 %v3379, 16
      %v3433 = vrot.slane %v3431, 5
      %v3434 = vor.u32 %v3430, %v3433
      %v3435 = vrot.slane %v3434, 4
      %v3437 = vshll.u32 %v3380, 16
      %v3439 = vrot.slane %v3437, 5
      %v3440 = vsel %vm1240, %v3435, %v3439
      %v3441 = vshrl.u32 %v3380, 16
      %v3443 = vrot.slane %v3441, 4
      %v3444 = vor.u32 %v3443, %v3439
      %v3445 = vrot.slane %v3444, 4
      %v3447 = vshll.u32 %v3381, 16
      %v3449 = vrot.slane %v3447, 5
      %v3450 = vsel %vm1240, %v3445, %v3449
      %v3452 = vshrl.u32 %v3382, 16
      %v3454 = vrot.slane %v3452, 4
      %v3455 = vshll.u32 %v3382, 16
      %v3457 = vrot.slane %v3455, 5
      %v3458 = vor.u32 %v3454, %v3457
      %v3459 = vrot.slane %v3458, 4
      %v3461 = vshll.u32 %v3383, 16
      %v3463 = vrot.slane %v3461, 5
      %v3464 = vsel %vm1240, %v3459, %v3463
      %v3465 = vshrl.u32 %v3383, 16
      %v3467 = vrot.slane %v3465, 4
      %v3468 = vor.u32 %v3467, %v3463
      %v3469 = vrot.slane %v3468, 4
      %v3471 = vshll.u32 %v3384, 16
      %v3473 = vrot.slane %v3471, 5
      %v3474 = vsel %vm1240, %v3469, %v3473
      %v3476 = vshrl.u32 %v3385, 16
      %v3478 = vrot.slane %v3476, 4
      %v3479 = vshll.u32 %v3385, 16
      %v3481 = vrot.slane %v3479, 5
      %v3482 = vor.u32 %v3478, %v3481
      %v3483 = vrot.slane %v3482, 4
      %v3485 = vshll.u32 %v3386, 16
      %v3487 = vrot.slane %v3485, 5
      %v3488 = vsel %vm1240, %v3483, %v3487
      %v3489 = vshrl.u32 %v3386, 16
      %v3491 = vrot.slane %v3489, 4
      %v3492 = vor.u32 %v3491, %v3487
      %v3493 = vrot.slane %v3492, 4
      %v3495 = vshll.u32 %v3387, 16
      %v3497 = vrot.slane %v3495, 5
      %v3498 = vsel %vm1240, %v3493, %v3497
      %v3500 = vshrl.u32 %v3388, 16
      %v3502 = vrot.slane %v3500, 4
      %v3503 = vshll.u32 %v3388, 16
      %v3505 = vrot.slane %v3503, 5
      %v3506 = vor.u32 %v3502, %v3505
      %v3507 = vrot.slane %v3506, 4
      %v3509 = vshll.u32 %v3389, 16
      %v3511 = vrot.slane %v3509, 5
      %v3512 = vsel %vm1240, %v3507, %v3511
      %v3513 = vshrl.u32 %v3389, 16
      %v3515 = vrot.slane %v3513, 4
      %v3516 = vor.u32 %v3515, %v3511
      %v3517 = vrot.slane %v3516, 4
      %v3519 = vshll.u32 %v3390, 16
      %v3521 = vrot.slane %v3519, 5
      %v3522 = vsel %vm1240, %v3517, %v3521
      %v3524 = vshrl.u32 %v3391, 16
      %v3526 = vrot.slane %v3524, 4
      %v3527 = vshll.u32 %v3391, 16
      %v3529 = vrot.slane %v3527, 5
      %v3530 = vor.u32 %v3526, %v3529
      %v3531 = vrot.slane %v3530, 4
      %v3533 = vshll.u32 %v3392, 16
      %v3535 = vrot.slane %v3533, 5
      %v3536 = vsel %vm1240, %v3531, %v3535
      %v3537 = vshrl.u32 %v3392, 16
      %v3539 = vrot.slane %v3537, 4
      %v3540 = vor.u32 %v3539, %v3535
      %v3541 = vrot.slane %v3540, 4
      %v3543 = vshll.u32 %v3393, 16
      %v3545 = vrot.slane %v3543, 5
      %v3546 = vsel %vm1240, %v3541, %v3545
      %v3548 = vshrl.u32 %v3394, 16
      %v3550 = vrot.slane %v3548, 4
      %v3551 = vshll.u32 %v3394, 16
      %v3553 = vrot.slane %v3551, 5
      %v3554 = vor.u32 %v3550, %v3553
      %v3555 = vrot.slane %v3554, 4
      %v3557 = vshll.u32 %v3395, 16
      %v3559 = vrot.slane %v3557, 5
      %v3560 = vsel %vm1240, %v3555, %v3559
      %v3561 = vshrl.u32 %v3395, 16
      %v3563 = vrot.slane %v3561, 4
      %v3564 = vor.u32 %v3563, %v3559
      %v3565 = vrot.slane %v3564, 4
      %v3567 = vshll.u32 %v3396, 16
      %v3569 = vrot.slane %v3567, 5
      %v3570 = vsel %vm1240, %v3565, %v3569
      %v3572 = vshrl.u32 %v3397, 16
      %v3574 = vrot.slane %v3572, 4
      %v3575 = vshll.u32 %v3397, 16
      %v3577 = vrot.slane %v3575, 5
      %v3578 = vor.u32 %v3574, %v3577
      %v3579 = vrot.slane %v3578, 4
      %v3581 = vshll.u32 %v3398, 16
      %v3583 = vrot.slane %v3581, 5
      %v3584 = vsel %vm1240, %v3579, %v3583
      %v3585 = vshrl.u32 %v3398, 16
      %v3587 = vrot.slane %v3585, 4
      %v3588 = vor.u32 %v3587, %v3583
      %v3589 = vrot.slane %v3588, 4
      %v3591 = vshll.u32 %v3399, 16
      %v3593 = vrot.slane %v3591, 5
      %v3594 = vsel %vm1240, %v3589, %v3593
      %v3596 = vshrl.u32 %v3400, 16
      %v3598 = vrot.slane %v3596, 4
      %v3599 = vshll.u32 %v3400, 16
      %v3601 = vrot.slane %v3599, 5
      %v3602 = vor.u32 %v3598, %v3601
      %v3603 = vrot.slane %v3602, 4
      %v3605 = vshll.u32 %v3401, 16
      %v3607 = vrot.slane %v3605, 5
      %v3608 = vsel %vm1240, %v3603, %v3607
      %v3609 = vshrl.u32 %v3401, 16
      %v3611 = vrot.slane %v3609, 4
      %v3612 = vor.u32 %v3611, %v3607
      %v3613 = vrot.slane %v3612, 4
      %v3615 = vshll.u32 %v3402, 16
      %v3617 = vrot.slane %v3615, 5
      %v3618 = vsel %vm1240, %v3613, %v3617
      %v3620 = vshrl.u32 %v3403, 16
      %v3622 = vrot.slane %v3620, 4
      %v3623 = vshll.u32 %v3403, 16
      %v3625 = vrot.slane %v3623, 5
      %v3626 = vor.u32 %v3622, %v3625
      %v3627 = vrot.slane %v3626, 4
      %v3629 = vshll.u32 %v3404, 16
      %v3631 = vrot.slane %v3629, 5
      %v3632 = vsel %vm1240, %v3627, %v3631
      %v3633 = vshrl.u32 %v3404, 16
      %v3635 = vrot.slane %v3633, 4
      %v3636 = vor.u32 %v3635, %v3631
      %v3637 = vrot.slane %v3636, 4
      %v3639 = vshll.u32 %v3405, 16
      %v3641 = vrot.slane %v3639, 5
      %v3642 = vsel %vm1240, %v3637, %v3641
      %v3644 = vshrl.u32 %v3406, 16
      %v3646 = vrot.slane %v3644, 4
      %v3647 = vshll.u32 %v3406, 16
      %v3649 = vrot.slane %v3647, 5
      %v3650 = vor.u32 %v3646, %v3649
      %v3651 = vrot.slane %v3650, 4
      %v3653 = vshll.u32 %v3407, 16
      %v3655 = vrot.slane %v3653, 5
      %v3656 = vsel %vm1240, %v3651, %v3655
      %v3657 = vshrl.u32 %v3407, 16
      %v3659 = vrot.slane %v3657, 4
      %v3660 = vor.u32 %v3659, %v3655
      %v3661 = vrot.slane %v3660, 4
      %v3663 = vshll.u32 %v3408, 16
      %v3665 = vrot.slane %v3663, 5
      %v3666 = vsel %vm1240, %v3661, %v3665
      %v3668 = vshrl.u32 %v3409, 16
      %v3670 = vrot.slane %v3668, 4
      %v3671 = vshll.u32 %v3409, 16
      %v3673 = vrot.slane %v3671, 5
      %v3674 = vor.u32 %v3670, %v3673
      %v3675 = vrot.slane %v3674, 4
      %v3677 = vshll.u32 %v3410, 16
      %v3679 = vrot.slane %v3677, 5
      %v3680 = vsel %vm1240, %v3675, %v3679
      %v3681 = vshrl.u32 %v3410, 16
      %v3683 = vrot.slane %v3681, 4
      %v3684 = vor.u32 %v3683, %v3679
      %v3685 = vrot.slane %v3684, 4
      %v3687 = vshll.u32 %v3411, 16
      %v3689 = vrot.slane %v3687, 5
      %v3690 = vsel %vm1240, %v3685, %v3689
      %v3692 = vshrl.u32 %v3412, 16
      %v3694 = vrot.slane %v3692, 4
      %v3695 = vshll.u32 %v3412, 16
      %v3697 = vrot.slane %v3695, 5
      %v3698 = vor.u32 %v3694, %v3697
      %v3699 = vrot.slane %v3698, 4
      %v3701 = vshll.u32 %v3413, 16
      %v3703 = vrot.slane %v3701, 5
      %v3704 = vsel %vm1240, %v3699, %v3703
      %v3705 = vshrl.u32 %v3413, 16
      %v3707 = vrot.slane %v3705, 4
      %v3708 = vor.u32 %v3707, %v3703
      %v3709 = vrot.slane %v3708, 4
      %v3711 = vshll.u32 %v3414, 16
      %v3713 = vrot.slane %v3711, 5
      %v3714 = vsel %vm1240, %v3709, %v3713
      %v3716 = vshrl.u32 %v3415, 16
      %v3718 = vrot.slane %v3716, 4
      %v3719 = vshll.u32 %v3415, 16
      %v3721 = vrot.slane %v3719, 5
      %v3722 = vor.u32 %v3718, %v3721
      %v3723 = vrot.slane %v3722, 4
      %v3725 = vshll.u32 %v3416, 16
      %v3727 = vrot.slane %v3725, 5
      %v3728 = vsel %vm1240, %v3723, %v3727
      %v3729 = vshrl.u32 %v3416, 16
      %v3731 = vrot.slane %v3729, 4
      %v3732 = vor.u32 %v3731, %v3727
      %v3733 = vrot.slane %v3732, 4
      %v3735 = vshll.u32 %v3417, 16
      %v3737 = vrot.slane %v3735, 5
      %v3738 = vsel %vm1240, %v3733, %v3737
      %v3740 = vshrl.u32 %v3418, 16
      %v3742 = vrot.slane %v3740, 4
      %v3743 = vshll.u32 %v3418, 16
      %v3745 = vrot.slane %v3743, 5
      %v3746 = vor.u32 %v3742, %v3745
      %v3747 = vrot.slane %v3746, 4
      %v3749 = vshll.u32 %v3419, 16
      %v3751 = vrot.slane %v3749, 5
      %v3752 = vsel %vm1240, %v3747, %v3751
      %v3753 = vshrl.u32 %v3419, 16
      %v3755 = vrot.slane %v3753, 4
      %v3756 = vor.u32 %v3755, %v3751
      %v3757 = vrot.slane %v3756, 4
      %v3759 = vshll.u32 %v3420, 16
      %v3761 = vrot.slane %v3759, 5
      %v3762 = vsel %vm1240, %v3757, %v3761
      %v3764 = vshrl.u32 %v3421, 16
      %v3766 = vrot.slane %v3764, 4
      %v3767 = vshll.u32 %v3421, 16
      %v3769 = vrot.slane %v3767, 5
      %v3770 = vor.u32 %v3766, %v3769
      %v3771 = vrot.slane %v3770, 4
      %v3773 = vshll.u32 %v3422, 16
      %v3775 = vrot.slane %v3773, 5
      %v3776 = vsel %vm1240, %v3771, %v3775
      %v3777 = vshrl.u32 %v3422, 16
      %v3779 = vrot.slane %v3777, 4
      %v3780 = vor.u32 %v3779, %v3775
      %v3781 = vrot.slane %v3780, 4
      %v3783 = vshll.u32 %v3423, 16
      %v3785 = vrot.slane %v3783, 5
      %v3786 = vsel %vm1240, %v3781, %v3785
      %v3788 = vshrl.u32 %v3424, 16
      %v3790 = vrot.slane %v3788, 4
      %v3791 = vshll.u32 %v3424, 16
      %v3793 = vrot.slane %v3791, 5
      %v3794 = vor.u32 %v3790, %v3793
      %v3795 = vrot.slane %v3794, 4
      %v3797 = vshll.u32 %v3425, 16
      %v3799 = vrot.slane %v3797, 5
      %v3800 = vsel %vm1240, %v3795, %v3799
      %v3801 = vshrl.u32 %v3425, 16
      %v3803 = vrot.slane %v3801, 4
      %v3804 = vor.u32 %v3803, %v3799
      %v3805 = vrot.slane %v3804, 4
      %v3807 = vshll.u32 %v3426, 16
      %v3809 = vrot.slane %v3807, 5
      %v3810 = vsel %vm1240, %v3805, %v3809
      %3811 = vrot.lane.b32.xlu0 %v3440, 56
      %v3812 = vpop.permute.xlu0 %3811
      %3813 = vrot.lane.b32.xlu0 %v3450, 56
      %v3814 = vpop.permute.xlu0 %3813
      %3815 = vrot.lane.b32.xlu0 %v3464, 56
      %v3816 = vpop.permute.xlu0 %3815
      %3817 = vrot.lane.b32.xlu0 %v3474, 56
      %v3818 = vpop.permute.xlu0 %3817
      %3819 = vrot.lane.b32.xlu0 %v3488, 56
      %v3820 = vpop.permute.xlu0 %3819
      %3821 = vrot.lane.b32.xlu0 %v3498, 56
      %v3822 = vpop.permute.xlu0 %3821
      %3823 = vrot.lane.b32.xlu0 %v3512, 56
      %v3824 = vpop.permute.xlu0 %3823
      %3825 = vrot.lane.b32.xlu0 %v3522, 56
      %v3826 = vpop.permute.xlu0 %3825
      %3827 = vrot.lane.b32.xlu0 %v3536, 56
      %v3828 = vpop.permute.xlu0 %3827
      %3829 = vrot.lane.b32.xlu0 %v3546, 56
      %v3830 = vpop.permute.xlu0 %3829
      %3831 = vrot.lane.b32.xlu0 %v3560, 56
      %v3832 = vpop.permute.xlu0 %3831
      %3833 = vrot.lane.b32.xlu0 %v3570, 56
      %v3834 = vpop.permute.xlu0 %3833
      %3835 = vrot.lane.b32.xlu0 %v3584, 56
      %v3836 = vpop.permute.xlu0 %3835
      %3837 = vrot.lane.b32.xlu0 %v3594, 56
      %v3838 = vpop.permute.xlu0 %3837
      %3839 = vrot.lane.b32.xlu0 %v3608, 56
      %v3840 = vpop.permute.xlu0 %3839
      %3841 = vrot.lane.b32.xlu0 %v3618, 56
      %v3842 = vpop.permute.xlu0 %3841
      %3843 = vrot.lane.b32.xlu0 %v3632, 56
      %v3844 = vpop.permute.xlu0 %3843
      %3845 = vrot.lane.b32.xlu0 %v3642, 56
      %v3846 = vpop.permute.xlu0 %3845
      %3847 = vrot.lane.b32.xlu0 %v3656, 56
      %v3848 = vpop.permute.xlu0 %3847
      %3849 = vrot.lane.b32.xlu0 %v3666, 56
      %v3850 = vpop.permute.xlu0 %3849
      %3851 = vrot.lane.b32.xlu0 %v3680, 56
      %v3852 = vpop.permute.xlu0 %3851
      %3853 = vrot.lane.b32.xlu0 %v3690, 56
      %v3854 = vpop.permute.xlu0 %3853
      %3855 = vrot.lane.b32.xlu0 %v3704, 56
      %v3856 = vpop.permute.xlu0 %3855
      %3857 = vrot.lane.b32.xlu0 %v3714, 56
      %v3858 = vpop.permute.xlu0 %3857
      %3859 = vrot.lane.b32.xlu0 %v3728, 56
      %v3860 = vpop.permute.xlu0 %3859
      %3861 = vrot.lane.b32.xlu0 %v3738, 56
      %v3862 = vpop.permute.xlu0 %3861
      %3863 = vrot.lane.b32.xlu0 %v3752, 56
      %v3864 = vpop.permute.xlu0 %3863
      %3865 = vrot.lane.b32.xlu0 %v3762, 56
      %v3866 = vpop.permute.xlu0 %3865
      %3867 = vrot.lane.b32.xlu0 %v3776, 56
      %v3868 = vpop.permute.xlu0 %3867
      %3869 = vrot.lane.b32.xlu0 %v3786, 56
      %v3870 = vpop.permute.xlu0 %3869
      %3871 = vrot.lane.b32.xlu0 %v3800, 56
      %v3872 = vpop.permute.xlu0 %3871
      %3873 = vrot.lane.b32.xlu0 %v3810, 56
      %v3874 = vpop.permute.xlu0 %3873
      %vm3907 = vcmask 519616
      %3908 = vst.msk [vmem:[#allocation3] sm:$0xf] %vm3907, %v3812
      %3909 = vst.msk [vmem:[#allocation3 + $0x4] sm:$0xf] %vm3907, %v3814
      %3910 = vst.msk [vmem:[#allocation3 + $0x8] sm:$0xf] %vm3907, %v3816
      %3911 = vst.msk [vmem:[#allocation3 + $0xc] sm:$0xf] %vm3907, %v3818
      %3912 = vst.msk [vmem:[#allocation3 + $0x10] sm:$0xf] %vm3907, %v3820
      %3913 = vst.msk [vmem:[#allocation3 + $0x14] sm:$0xf] %vm3907, %v3822
      %3914 = vst.msk [vmem:[#allocation3 + $0x18] sm:$0xf] %vm3907, %v3824
      %3915 = vst.msk [vmem:[#allocation3 + $0x1c] sm:$0xf] %vm3907, %v3826
      %3916 = vst.msk [vmem:[#allocation3 + $0x20] sm:$0xf] %vm3907, %v3828
      %3917 = vst.msk [vmem:[#allocation3 + $0x24] sm:$0xf] %vm3907, %v3830
      %3918 = vst.msk [vmem:[#allocation3 + $0x28] sm:$0xf] %vm3907, %v3832
      %3919 = vst.msk [vmem:[#allocation3 + $0x2c] sm:$0xf] %vm3907, %v3834
      %3920 = vst.msk [vmem:[#allocation3 + $0x30] sm:$0xf] %vm3907, %v3836
      %3921 = vst.msk [vmem:[#allocation3 + $0x34] sm:$0xf] %vm3907, %v3838
      %3922 = vst.msk [vmem:[#allocation3 + $0x38] sm:$0xf] %vm3907, %v3840
      %3923 = vst.msk [vmem:[#allocation3 + $0x3c] sm:$0xf] %vm3907, %v3842
      %3924 = vst.msk [vmem:[#allocation3 + $0x40] sm:$0xf] %vm3907, %v3844
      %3925 = vst.msk [vmem:[#allocation3 + $0x44] sm:$0xf] %vm3907, %v3846
      %3926 = vst.msk [vmem:[#allocation3 + $0x48] sm:$0xf] %vm3907, %v3848
      %3927 = vst.msk [vmem:[#allocation3 + $0x4c] sm:$0xf] %vm3907, %v3850
      %3928 = vst.msk [vmem:[#allocation3 + $0x50] sm:$0xf] %vm3907, %v3852
      %3929 = vst.msk [vmem:[#allocation3 + $0x54] sm:$0xf] %vm3907, %v3854
      %3930 = vst.msk [vmem:[#allocation3 + $0x58] sm:$0xf] %vm3907, %v3856
      %3931 = vst.msk [vmem:[#allocation3 + $0x5c] sm:$0xf] %vm3907, %v3858
      %3932 = vst.msk [vmem:[#allocation3 + $0x60] sm:$0xf] %vm3907, %v3860
      %3933 = vst.msk [vmem:[#allocation3 + $0x64] sm:$0xf] %vm3907, %v3862
      %3934 = vst.msk [vmem:[#allocation3 + $0x68] sm:$0xf] %vm3907, %v3864
      %3935 = vst.msk [vmem:[#allocation3 + $0x6c] sm:$0xf] %vm3907, %v3866
      %3936 = vst.msk [vmem:[#allocation3 + $0x70] sm:$0xf] %vm3907, %v3868
      %3937 = vst.msk [vmem:[#allocation3 + $0x74] sm:$0xf] %vm3907, %v3870
      %3938 = vst.msk [vmem:[#allocation3 + $0x78] sm:$0xf] %vm3907, %v3872
      %3939 = vst.msk [vmem:[#allocation3 + $0x7c] sm:$0xf] %vm3907, %v3874
      %v3940 = vld [vmem:[%s3185] sm:$0xe]
      %v3941 = vld [vmem:[%s3185 + $0x4] sm:$0xf]
      %v3942 = vld [vmem:[%s3185 + $0x8] sm:$0x1]
      %v3943 = vld [vmem:[%s3185 + $0xc] sm:$0xe]
      %v3944 = vld [vmem:[%s3185 + $0x10] sm:$0xf]
      %v3945 = vld [vmem:[%s3185 + $0x14] sm:$0x1]
      %v3946 = vld [vmem:[%s3185 + $0x18] sm:$0xe]
      %v3947 = vld [vmem:[%s3185 + $0x1c] sm:$0xf]
      %v3948 = vld [vmem:[%s3185 + $0x20] sm:$0x1]
      %v3949 = vld [vmem:[%s3185 + $0x24] sm:$0xe]
      %v3950 = vld [vmem:[%s3185 + $0x28] sm:$0xf]
      %v3951 = vld [vmem:[%s3185 + $0x2c] sm:$0x1]
      %v3952 = vld [vmem:[%s3185 + $0x30] sm:$0xe]
      %v3953 = vld [vmem:[%s3185 + $0x34] sm:$0xf]
      %v3954 = vld [vmem:[%s3185 + $0x38] sm:$0x1]
      %v3955 = vld [vmem:[%s3185 + $0x3c] sm:$0xe]
      %v3956 = vld [vmem:[%s3185 + $0x40] sm:$0xf]
      %v3957 = vld [vmem:[%s3185 + $0x44] sm:$0x1]
      %v3958 = vld [vmem:[%s3185 + $0x48] sm:$0xe]
      %v3959 = vld [vmem:[%s3185 + $0x4c] sm:$0xf]
      %v3960 = vld [vmem:[%s3185 + $0x50] sm:$0x1]
      %v3961 = vld [vmem:[%s3185 + $0x54] sm:$0xe]
      %v3962 = vld [vmem:[%s3185 + $0x58] sm:$0xf]
      %v3963 = vld [vmem:[%s3185 + $0x5c] sm:$0x1]
      %v3964 = vld [vmem:[%s3185 + $0x60] sm:$0xe]
      %v3965 = vld [vmem:[%s3185 + $0x64] sm:$0xf]
      %v3966 = vld [vmem:[%s3185 + $0x68] sm:$0x1]
      %v3967 = vld [vmem:[%s3185 + $0x6c] sm:$0xe]
      %v3968 = vld [vmem:[%s3185 + $0x70] sm:$0xf]
      %v3969 = vld [vmem:[%s3185 + $0x74] sm:$0x1]
      %v3970 = vld [vmem:[%s3185 + $0x78] sm:$0xe]
      %v3971 = vld [vmem:[%s3185 + $0x7c] sm:$0xf]
      %v3972 = vld [vmem:[%s3185 + $0x80] sm:$0x1]
      %v3973 = vld [vmem:[%s3185 + $0x84] sm:$0xe]
      %v3974 = vld [vmem:[%s3185 + $0x88] sm:$0xf]
      %v3975 = vld [vmem:[%s3185 + $0x8c] sm:$0x1]
      %v3976 = vld [vmem:[%s3185 + $0x90] sm:$0xe]
      %v3977 = vld [vmem:[%s3185 + $0x94] sm:$0xf]
      %v3978 = vld [vmem:[%s3185 + $0x98] sm:$0x1]
      %v3979 = vld [vmem:[%s3185 + $0x9c] sm:$0xe]
      %v3980 = vld [vmem:[%s3185 + $0xa0] sm:$0xf]
      %v3981 = vld [vmem:[%s3185 + $0xa4] sm:$0x1]
      %v3982 = vld [vmem:[%s3185 + $0xa8] sm:$0xe]
      %v3983 = vld [vmem:[%s3185 + $0xac] sm:$0xf]
      %v3984 = vld [vmem:[%s3185 + $0xb0] sm:$0x1]
      %v3985 = vld [vmem:[%s3185 + $0xb4] sm:$0xe]
      %v3986 = vld [vmem:[%s3185 + $0xb8] sm:$0xf]
      %v3987 = vld [vmem:[%s3185 + $0xbc] sm:$0x1]
      %v4036 = vrot.slane %v3940, 5
      %v4037 = vrot.slane %v4036, 4
      %v4038 = vrot.slane %v3941, 5
      %v4039 = vsel %vm1852, %v4037, %v4038
      %v4040 = vrot.slane %v4038, 4
      %v4041 = vrot.slane %v3942, 5
      %v4042 = vsel %vm1852, %v4040, %v4041
      %v4043 = vrot.slane %v3943, 5
      %v4044 = vrot.slane %v4043, 4
      %v4045 = vrot.slane %v3944, 5
      %v4046 = vsel %vm1852, %v4044, %v4045
      %v4047 = vrot.slane %v4045, 4
      %v4048 = vrot.slane %v3945, 5
      %v4049 = vsel %vm1852, %v4047, %v4048
      %v4050 = vrot.slane %v3946, 5
      %v4051 = vrot.slane %v4050, 4
      %v4052 = vrot.slane %v3947, 5
      %v4053 = vsel %vm1852, %v4051, %v4052
      %v4054 = vrot.slane %v4052, 4
      %v4055 = vrot.slane %v3948, 5
      %v4056 = vsel %vm1852, %v4054, %v4055
      %v4057 = vrot.slane %v3949, 5
      %v4058 = vrot.slane %v4057, 4
      %v4059 = vrot.slane %v3950, 5
      %v4060 = vsel %vm1852, %v4058, %v4059
      %v4061 = vrot.slane %v4059, 4
      %v4062 = vrot.slane %v3951, 5
      %v4063 = vsel %vm1852, %v4061, %v4062
      %v4064 = vrot.slane %v3952, 5
      %v4065 = vrot.slane %v4064, 4
      %v4066 = vrot.slane %v3953, 5
      %v4067 = vsel %vm1852, %v4065, %v4066
      %v4068 = vrot.slane %v4066, 4
      %v4069 = vrot.slane %v3954, 5
      %v4070 = vsel %vm1852, %v4068, %v4069
      %v4071 = vrot.slane %v3955, 5
      %v4072 = vrot.slane %v4071, 4
      %v4073 = vrot.slane %v3956, 5
      %v4074 = vsel %vm1852, %v4072, %v4073
      %v4075 = vrot.slane %v4073, 4
      %v4076 = vrot.slane %v3957, 5
      %v4077 = vsel %vm1852, %v4075, %v4076
      %v4078 = vrot.slane %v3958, 5
      %v4079 = vrot.slane %v4078, 4
      %v4080 = vrot.slane %v3959, 5
      %v4081 = vsel %vm1852, %v4079, %v4080
      %v4082 = vrot.slane %v4080, 4
      %v4083 = vrot.slane %v3960, 5
      %v4084 = vsel %vm1852, %v4082, %v4083
      %v4085 = vrot.slane %v3961, 5
      %v4086 = vrot.slane %v4085, 4
      %v4087 = vrot.slane %v3962, 5
      %v4088 = vsel %vm1852, %v4086, %v4087
      %v4089 = vrot.slane %v4087, 4
      %v4090 = vrot.slane %v3963, 5
      %v4091 = vsel %vm1852, %v4089, %v4090
      %v4092 = vrot.slane %v3964, 5
      %v4093 = vrot.slane %v4092, 4
      %v4094 = vrot.slane %v3965, 5
      %v4095 = vsel %vm1852, %v4093, %v4094
      %v4096 = vrot.slane %v4094, 4
      %v4097 = vrot.slane %v3966, 5
      %v4098 = vsel %vm1852, %v4096, %v4097
      %v4099 = vrot.slane %v3967, 5
      %v4100 = vrot.slane %v4099, 4
      %v4101 = vrot.slane %v3968, 5
      %v4102 = vsel %vm1852, %v4100, %v4101
      %v4103 = vrot.slane %v4101, 4
      %v4104 = vrot.slane %v3969, 5
      %v4105 = vsel %vm1852, %v4103, %v4104
      %v4106 = vrot.slane %v3970, 5
      %v4107 = vrot.slane %v4106, 4
      %v4108 = vrot.slane %v3971, 5
      %v4109 = vsel %vm1852, %v4107, %v4108
      %v4110 = vrot.slane %v4108, 4
      %v4111 = vrot.slane %v3972, 5
      %v4112 = vsel %vm1852, %v4110, %v4111
      %v4113 = vrot.slane %v3973, 5
      %v4114 = vrot.slane %v4113, 4
      %v4115 = vrot.slane %v3974, 5
      %v4116 = vsel %vm1852, %v4114, %v4115
      %v4117 = vrot.slane %v4115, 4
      %v4118 = vrot.slane %v3975, 5
      %v4119 = vsel %vm1852, %v4117, %v4118
      %v4120 = vrot.slane %v3976, 5
      %v4121 = vrot.slane %v4120, 4
      %v4122 = vrot.slane %v3977, 5
      %v4123 = vsel %vm1852, %v4121, %v4122
      %v4124 = vrot.slane %v4122, 4
      %v4125 = vrot.slane %v3978, 5
      %v4126 = vsel %vm1852, %v4124, %v4125
      %v4127 = vrot.slane %v3979, 5
      %v4128 = vrot.slane %v4127, 4
      %v4129 = vrot.slane %v3980, 5
      %v4130 = vsel %vm1852, %v4128, %v4129
      %v4131 = vrot.slane %v4129, 4
      %v4132 = vrot.slane %v3981, 5
      %v4133 = vsel %vm1852, %v4131, %v4132
      %v4134 = vrot.slane %v3982, 5
      %v4135 = vrot.slane %v4134, 4
      %v4136 = vrot.slane %v3983, 5
      %v4137 = vsel %vm1852, %v4135, %v4136
      %v4138 = vrot.slane %v4136, 4
      %v4139 = vrot.slane %v3984, 5
      %v4140 = vsel %vm1852, %v4138, %v4139
      %v4141 = vrot.slane %v3985, 5
      %v4142 = vrot.slane %v4141, 4
      %v4143 = vrot.slane %v3986, 5
      %v4144 = vsel %vm1852, %v4142, %v4143
      %v4145 = vrot.slane %v4143, 4
      %v4146 = vrot.slane %v3987, 5
      %v4147 = vsel %vm1852, %v4145, %v4146
      %4148 = vrot.lane.b32.xlu0 %v4039, 64
      %v4149 = vpop.permute.xlu0 %4148
      %4150 = vrot.lane.b32.xlu0 %v4042, 64
      %v4151 = vpop.permute.xlu0 %4150
      %4152 = vrot.lane.b32.xlu0 %v4046, 64
      %v4153 = vpop.permute.xlu0 %4152
      %4154 = vrot.lane.b32.xlu0 %v4049, 64
      %v4155 = vpop.permute.xlu0 %4154
      %4156 = vrot.lane.b32.xlu0 %v4053, 64
      %v4157 = vpop.permute.xlu0 %4156
      %4158 = vrot.lane.b32.xlu0 %v4056, 64
      %v4159 = vpop.permute.xlu0 %4158
      %4160 = vrot.lane.b32.xlu0 %v4060, 64
      %v4161 = vpop.permute.xlu0 %4160
      %4162 = vrot.lane.b32.xlu0 %v4063, 64
      %v4163 = vpop.permute.xlu0 %4162
      %4164 = vrot.lane.b32.xlu0 %v4067, 64
      %v4165 = vpop.permute.xlu0 %4164
      %4166 = vrot.lane.b32.xlu0 %v4070, 64
      %v4167 = vpop.permute.xlu0 %4166
      %4168 = vrot.lane.b32.xlu0 %v4074, 64
      %v4169 = vpop.permute.xlu0 %4168
      %4170 = vrot.lane.b32.xlu0 %v4077, 64
      %v4171 = vpop.permute.xlu0 %4170
      %4172 = vrot.lane.b32.xlu0 %v4081, 64
      %v4173 = vpop.permute.xlu0 %4172
      %4174 = vrot.lane.b32.xlu0 %v4084, 64
      %v4175 = vpop.permute.xlu0 %4174
      %4176 = vrot.lane.b32.xlu0 %v4088, 64
      %v4177 = vpop.permute.xlu0 %4176
      %4178 = vrot.lane.b32.xlu0 %v4091, 64
      %v4179 = vpop.permute.xlu0 %4178
      %4180 = vrot.lane.b32.xlu0 %v4095, 64
      %v4181 = vpop.permute.xlu0 %4180
      %4182 = vrot.lane.b32.xlu0 %v4098, 64
      %v4183 = vpop.permute.xlu0 %4182
      %4184 = vrot.lane.b32.xlu0 %v4102, 64
      %v4185 = vpop.permute.xlu0 %4184
      %4186 = vrot.lane.b32.xlu0 %v4105, 64
      %v4187 = vpop.permute.xlu0 %4186
      %4188 = vrot.lane.b32.xlu0 %v4109, 64
      %v4189 = vpop.permute.xlu0 %4188
      %4190 = vrot.lane.b32.xlu0 %v4112, 64
      %v4191 = vpop.permute.xlu0 %4190
      %4192 = vrot.lane.b32.xlu0 %v4116, 64
      %v4193 = vpop.permute.xlu0 %4192
      %4194 = vrot.lane.b32.xlu0 %v4119, 64
      %v4195 = vpop.permute.xlu0 %4194
      %4196 = vrot.lane.b32.xlu0 %v4123, 64
      %v4197 = vpop.permute.xlu0 %4196
      %4198 = vrot.lane.b32.xlu0 %v4126, 64
      %v4199 = vpop.permute.xlu0 %4198
      %4200 = vrot.lane.b32.xlu0 %v4130, 64
      %v4201 = vpop.permute.xlu0 %4200
      %4202 = vrot.lane.b32.xlu0 %v4133, 64
      %v4203 = vpop.permute.xlu0 %4202
      %4204 = vrot.lane.b32.xlu0 %v4137, 64
      %v4205 = vpop.permute.xlu0 %4204
      %4206 = vrot.lane.b32.xlu0 %v4140, 64
      %v4207 = vpop.permute.xlu0 %4206
      %4208 = vrot.lane.b32.xlu0 %v4144, 64
      %v4209 = vpop.permute.xlu0 %4208
      %4210 = vrot.lane.b32.xlu0 %v4147, 64
      %v4211 = vpop.permute.xlu0 %4210
      %vm4244 = vcmask 585216
      %4245 = vst.msk [vmem:[#allocation3] sm:$0xf] %vm4244, %v4149
      %4246 = vst.msk [vmem:[#allocation3 + $0x4] sm:$0xf] %vm4244, %v4151
      %4247 = vst.msk [vmem:[#allocation3 + $0x8] sm:$0xf] %vm4244, %v4153
      %4248 = vst.msk [vmem:[#allocation3 + $0xc] sm:$0xf] %vm4244, %v4155
      %4249 = vst.msk [vmem:[#allocation3 + $0x10] sm:$0xf] %vm4244, %v4157
      %4250 = vst.msk [vmem:[#allocation3 + $0x14] sm:$0xf] %vm4244, %v4159
      %4251 = vst.msk [vmem:[#allocation3 + $0x18] sm:$0xf] %vm4244, %v4161
      %4252 = vst.msk [vmem:[#allocation3 + $0x1c] sm:$0xf] %vm4244, %v4163
      %4253 = vst.msk [vmem:[#allocation3 + $0x20] sm:$0xf] %vm4244, %v4165
      %4254 = vst.msk [vmem:[#allocation3 + $0x24] sm:$0xf] %vm4244, %v4167
      %4255 = vst.msk [vmem:[#allocation3 + $0x28] sm:$0xf] %vm4244, %v4169
      %4256 = vst.msk [vmem:[#allocation3 + $0x2c] sm:$0xf] %vm4244, %v4171
      %4257 = vst.msk [vmem:[#allocation3 + $0x30] sm:$0xf] %vm4244, %v4173
      %4258 = vst.msk [vmem:[#allocation3 + $0x34] sm:$0xf] %vm4244, %v4175
      %4259 = vst.msk [vmem:[#allocation3 + $0x38] sm:$0xf] %vm4244, %v4177
      %4260 = vst.msk [vmem:[#allocation3 + $0x3c] sm:$0xf] %vm4244, %v4179
      %4261 = vst.msk [vmem:[#allocation3 + $0x40] sm:$0xf] %vm4244, %v4181
      %4262 = vst.msk [vmem:[#allocation3 + $0x44] sm:$0xf] %vm4244, %v4183
      %4263 = vst.msk [vmem:[#allocation3 + $0x48] sm:$0xf] %vm4244, %v4185
      %4264 = vst.msk [vmem:[#allocation3 + $0x4c] sm:$0xf] %vm4244, %v4187
      %4265 = vst.msk [vmem:[#allocation3 + $0x50] sm:$0xf] %vm4244, %v4189
      %4266 = vst.msk [vmem:[#allocation3 + $0x54] sm:$0xf] %vm4244, %v4191
      %4267 = vst.msk [vmem:[#allocation3 + $0x58] sm:$0xf] %vm4244, %v4193
      %4268 = vst.msk [vmem:[#allocation3 + $0x5c] sm:$0xf] %vm4244, %v4195
      %4269 = vst.msk [vmem:[#allocation3 + $0x60] sm:$0xf] %vm4244, %v4197
      %4270 = vst.msk [vmem:[#allocation3 + $0x64] sm:$0xf] %vm4244, %v4199
      %4271 = vst.msk [vmem:[#allocation3 + $0x68] sm:$0xf] %vm4244, %v4201
      %4272 = vst.msk [vmem:[#allocation3 + $0x6c] sm:$0xf] %vm4244, %v4203
      %4273 = vst.msk [vmem:[#allocation3 + $0x70] sm:$0xf] %vm4244, %v4205
      %4274 = vst.msk [vmem:[#allocation3 + $0x74] sm:$0xf] %vm4244, %v4207
      %4275 = vst.msk [vmem:[#allocation3 + $0x78] sm:$0xf] %vm4244, %v4209
      %4276 = vst.msk [vmem:[#allocation3 + $0x7c] sm:$0xf] %vm4244, %v4211
      %v4277 = vld [vmem:[#allocation3] sm:$0xf]
      %v4278 = vld [vmem:[#allocation3 + $0x4] sm:$0xf]
      %v4279 = vld [vmem:[#allocation3 + $0x8] sm:$0xf]
      %v4280 = vld [vmem:[#allocation3 + $0xc] sm:$0xf]
      %v4281 = vld [vmem:[#allocation3 + $0x10] sm:$0xf]
      %v4282 = vld [vmem:[#allocation3 + $0x14] sm:$0xf]
      %v4283 = vld [vmem:[#allocation3 + $0x18] sm:$0xf]
      %v4284 = vld [vmem:[#allocation3 + $0x1c] sm:$0xf]
      %v4285 = vld [vmem:[#allocation3 + $0x20] sm:$0xf]
      %v4286 = vld [vmem:[#allocation3 + $0x24] sm:$0xf]
      %v4287 = vld [vmem:[#allocation3 + $0x28] sm:$0xf]
      %v4288 = vld [vmem:[#allocation3 + $0x2c] sm:$0xf]
      %v4289 = vld [vmem:[#allocation3 + $0x30] sm:$0xf]
      %v4290 = vld [vmem:[#allocation3 + $0x34] sm:$0xf]
      %v4291 = vld [vmem:[#allocation3 + $0x38] sm:$0xf]
      %v4292 = vld [vmem:[#allocation3 + $0x3c] sm:$0xf]
      %v4293 = vld [vmem:[#allocation3 + $0x40] sm:$0xf]
      %v4294 = vld [vmem:[#allocation3 + $0x44] sm:$0xf]
      %v4295 = vld [vmem:[#allocation3 + $0x48] sm:$0xf]
      %v4296 = vld [vmem:[#allocation3 + $0x4c] sm:$0xf]
      %v4297 = vld [vmem:[#allocation3 + $0x50] sm:$0xf]
      %v4298 = vld [vmem:[#allocation3 + $0x54] sm:$0xf]
      %v4299 = vld [vmem:[#allocation3 + $0x58] sm:$0xf]
      %v4300 = vld [vmem:[#allocation3 + $0x5c] sm:$0xf]
      %v4301 = vld [vmem:[#allocation3 + $0x60] sm:$0xf]
      %v4302 = vld [vmem:[#allocation3 + $0x64] sm:$0xf]
      %v4303 = vld [vmem:[#allocation3 + $0x68] sm:$0xf]
      %v4304 = vld [vmem:[#allocation3 + $0x6c] sm:$0xf]
      %v4305 = vld [vmem:[#allocation3 + $0x70] sm:$0xf]
      %v4306 = vld [vmem:[#allocation3 + $0x74] sm:$0xf]
      %v4307 = vld [vmem:[#allocation3 + $0x78] sm:$0xf]
      %v4308 = vld [vmem:[#allocation3 + $0x7c] sm:$0xf]
      %v4309 = vld [vmem:[%s3] sm:$0xf]
      %v4310 = vld [vmem:[%s3 + $0x4] sm:$0xf]
      %v4311 = vld [vmem:[%s3 + $0x8] sm:$0xf]
      %v4312 = vld [vmem:[%s3 + $0xc] sm:$0xf]
      %v4313 = vld [vmem:[%s3 + $0x10] sm:$0xf]
      %v4314 = vld [vmem:[%s3 + $0x14] sm:$0xf]
      %v4315 = vld [vmem:[%s3 + $0x18] sm:$0xf]
      %v4316 = vld [vmem:[%s3 + $0x1c] sm:$0xf]
      %v4317 = vld [vmem:[%s3 + $0x20] sm:$0xf]
      %v4350 = vunpack.c.l.b16 %v4277
      %v4351 = vunpack.c.l.b16 %v4278
      %v4352 = vunpack.c.l.b16 %v4279
      %v4353 = vunpack.c.l.b16 %v4280
      %v4354 = vunpack.c.l.b16 %v4281
      %v4355 = vunpack.c.l.b16 %v4282
      %v4356 = vunpack.c.l.b16 %v4283
      %v4357 = vunpack.c.l.b16 %v4284
      %v4358 = vunpack.c.l.b16 %v4285
      %v4359 = vunpack.c.l.b16 %v4286
      %v4360 = vunpack.c.l.b16 %v4287
      %v4361 = vunpack.c.l.b16 %v4288
      %v4362 = vunpack.c.l.b16 %v4289
      %v4363 = vunpack.c.l.b16 %v4290
      %v4364 = vunpack.c.l.b16 %v4291
      %v4365 = vunpack.c.l.b16 %v4292
      %v4366 = vunpack.c.l.b16 %v4293
      %v4367 = vunpack.c.l.b16 %v4294
      %v4368 = vunpack.c.l.b16 %v4295
      %v4369 = vunpack.c.l.b16 %v4296
      %v4370 = vunpack.c.l.b16 %v4297
      %v4371 = vunpack.c.l.b16 %v4298
      %v4372 = vunpack.c.l.b16 %v4299
      %v4373 = vunpack.c.l.b16 %v4300
      %v4374 = vunpack.c.l.b16 %v4301
      %v4375 = vunpack.c.l.b16 %v4302
      %v4376 = vunpack.c.l.b16 %v4303
      %v4377 = vunpack.c.l.b16 %v4304
      %v4378 = vunpack.c.l.b16 %v4305
      %v4379 = vunpack.c.l.b16 %v4306
      %v4380 = vunpack.c.l.b16 %v4307
      %v4381 = vunpack.c.l.b16 %v4308
      %v4382 = vpack.c.b16 %v4351, %v4350
      %v4383 = vpack.c.b16 %v4353, %v4352
      %v4384 = vpack.c.b16 %v4355, %v4354
      %v4385 = vpack.c.b16 %v4357, %v4356
      %v4386 = vpack.c.b16 %v4359, %v4358
      %v4387 = vpack.c.b16 %v4361, %v4360
      %v4388 = vpack.c.b16 %v4363, %v4362
      %v4389 = vpack.c.b16 %v4365, %v4364
      %v4390 = vpack.c.b16 %v4367, %v4366
      %v4391 = vpack.c.b16 %v4369, %v4368
      %v4392 = vpack.c.b16 %v4371, %v4370
      %v4393 = vpack.c.b16 %v4373, %v4372
      %v4394 = vpack.c.b16 %v4375, %v4374
      %v4395 = vpack.c.b16 %v4377, %v4376
      %v4396 = vpack.c.b16 %v4379, %v4378
      %v4397 = vpack.c.b16 %v4381, %v4380
      %v4407 = vunpack.c.l.b16 %v4309
      %v4408 = vunpack.c.l.b16 %v4310
      %v4409 = vunpack.c.l.b16 %v4311
      %v4410 = vunpack.c.l.b16 %v4312
      %v4411 = vunpack.c.l.b16 %v4313
      %v4412 = vunpack.c.l.b16 %v4314
      %v4413 = vunpack.c.l.b16 %v4315
      %v4414 = vunpack.c.l.b16 %v4316
      %v4415 = vunpack.c.l.b16 %v4317
      %v4416 = vpack.c.b16 %v4408, %v4407
      %v4417 = vpack.c.b16 %v4410, %v4409
      %v4418 = vpack.c.b16 %v4412, %v4411
      %v4419 = vpack.c.b16 %v4414, %v4413
      %v4420 = vpack.c.b16 %v4415, %v4415
      %vm4425 = vcmask 588800
      %v4427 = vsel %vm4425, %v4382, 0
      %v4430 = vsel %vm4425, %v4383, 0
      %v4433 = vsel %vm4425, %v4384, 0
      %v4436 = vsel %vm4425, %v4385, 0
      %v4439 = vsel %vm4425, %v4386, 0
      %v4442 = vsel %vm4425, %v4387, 0
      %v4445 = vsel %vm4425, %v4388, 0
      %v4448 = vsel %vm4425, %v4389, 0
      %v4451 = vsel %vm4425, %v4390, 0
      %v4454 = vsel %vm4425, %v4391, 0
      %v4457 = vsel %vm4425, %v4392, 0
      %v4460 = vsel %vm4425, %v4393, 0
      %v4463 = vsel %vm4425, %v4394, 0
      %v4466 = vsel %vm4425, %v4395, 0
      %v4469 = vsel %vm4425, %v4396, 0
      %v4472 = vsel %vm4425, %v4397, 0
      %vm4474 = vcmask 1043456
      %v4476 = vsel %vm4474, %v4420, 0
      %4478 = vmatpush.bf16.msra.mxu0 0
      %4479 = vmatpush.bf16.msra.mxu0 0
      %4480 = vmatpush.bf16.msra.mxu0 0
      %4481 = vmatpush.bf16.msra.mxu0 %v4476
      %4482 = vmatpush.bf16.msra.mxu0 %v4419
      %4483 = vmatpush.bf16.msra.mxu0 %v4418
      %4484 = vmatpush.bf16.msra.mxu0 %v4417
      %4485 = vmatpush.bf16.msra.mxu0 %v4416
      %4486 = vmatmul.bf16.gmra.mxu0 %v4427
      %v4487 = vpop.f32.mrf.mxu0
      %v4488 = vadd.f32 0.0, %v4487
      %v4489 = vpop.f32.mrf.mxu0
      %v4490 = vadd.f32 0.0, %v4489
      %4491 = vmatmul.bf16.gmra.mxu0 %v4430
      %v4492 = vpop.f32.mrf.mxu0
      %v4493 = vadd.f32 0.0, %v4492
      %v4494 = vpop.f32.mrf.mxu0
      %v4495 = vadd.f32 0.0, %v4494
      %4496 = vmatmul.bf16.gmra.mxu0 %v4433
      %v4497 = vpop.f32.mrf.mxu0
      %v4498 = vadd.f32 0.0, %v4497
      %v4499 = vpop.f32.mrf.mxu0
      %v4500 = vadd.f32 0.0, %v4499
      %4501 = vmatmul.bf16.gmra.mxu0 %v4436
      %v4502 = vpop.f32.mrf.mxu0
      %v4503 = vadd.f32 0.0, %v4502
      %v4504 = vpop.f32.mrf.mxu0
      %v4505 = vadd.f32 0.0, %v4504
      %4506 = vmatmul.bf16.gmra.mxu0 %v4439
      %v4507 = vpop.f32.mrf.mxu0
      %v4508 = vadd.f32 0.0, %v4507
      %v4509 = vpop.f32.mrf.mxu0
      %v4510 = vadd.f32 0.0, %v4509
      %4511 = vmatmul.bf16.gmra.mxu0 %v4442
      %v4512 = vpop.f32.mrf.mxu0
      %v4513 = vadd.f32 0.0, %v4512
      %v4514 = vpop.f32.mrf.mxu0
      %v4515 = vadd.f32 0.0, %v4514
      %4516 = vmatmul.bf16.gmra.mxu0 %v4445
      %v4517 = vpop.f32.mrf.mxu0
      %v4518 = vadd.f32 0.0, %v4517
      %v4519 = vpop.f32.mrf.mxu0
      %v4520 = vadd.f32 0.0, %v4519
      %4521 = vmatmul.bf16.gmra.mxu0 %v4448
      %v4522 = vpop.f32.mrf.mxu0
      %v4523 = vadd.f32 0.0, %v4522
      %v4524 = vpop.f32.mrf.mxu0
      %v4525 = vadd.f32 0.0, %v4524
      %4526 = vmatmul.bf16.gmra.mxu0 %v4451
      %v4527 = vpop.f32.mrf.mxu0
      %v4528 = vadd.f32 0.0, %v4527
      %v4529 = vpop.f32.mrf.mxu0
      %v4530 = vadd.f32 0.0, %v4529
      %4531 = vmatmul.bf16.gmra.mxu0 %v4454
      %v4532 = vpop.f32.mrf.mxu0
      %v4533 = vadd.f32 0.0, %v4532
      %v4534 = vpop.f32.mrf.mxu0
      %v4535 = vadd.f32 0.0, %v4534
      %4536 = vmatmul.bf16.gmra.mxu0 %v4457
      %v4537 = vpop.f32.mrf.mxu0
      %v4538 = vadd.f32 0.0, %v4537
      %v4539 = vpop.f32.mrf.mxu0
      %v4540 = vadd.f32 0.0, %v4539
      %4541 = vmatmul.bf16.gmra.mxu0 %v4460
      %v4542 = vpop.f32.mrf.mxu0
      %v4543 = vadd.f32 0.0, %v4542
      %v4544 = vpop.f32.mrf.mxu0
      %v4545 = vadd.f32 0.0, %v4544
      %4546 = vmatmul.bf16.gmra.mxu0 %v4463
      %v4547 = vpop.f32.mrf.mxu0
      %v4548 = vadd.f32 0.0, %v4547
      %v4549 = vpop.f32.mrf.mxu0
      %v4550 = vadd.f32 0.0, %v4549
      %4551 = vmatmul.bf16.gmra.mxu0 %v4466
      %v4552 = vpop.f32.mrf.mxu0
      %v4553 = vadd.f32 0.0, %v4552
      %v4554 = vpop.f32.mrf.mxu0
      %v4555 = vadd.f32 0.0, %v4554
      %4556 = vmatmul.bf16.gmra.mxu0 %v4469
      %v4557 = vpop.f32.mrf.mxu0
      %v4558 = vadd.f32 0.0, %v4557
      %v4559 = vpop.f32.mrf.mxu0
      %v4560 = vadd.f32 0.0, %v4559
      %4561 = vmatmul.bf16.gmra.mxu0 %v4472
      %v4562 = vpop.f32.mrf.mxu0
      %v4563 = vadd.f32 0.0, %v4562
      %v4564 = vpop.f32.mrf.mxu0
      %v4565 = vadd.f32 0.0, %v4564
      %4566 = vdwg.mxu0
      %v4567 = vpack.c.bf16 %v4488, %v4488
      %v4568 = vpack.c.bf16 %v4490, %v4490
      %v4569 = vpack.c.bf16 %v4493, %v4493
      %v4570 = vpack.c.bf16 %v4495, %v4495
      %v4571 = vpack.c.bf16 %v4498, %v4498
      %v4572 = vpack.c.bf16 %v4500, %v4500
      %v4573 = vpack.c.bf16 %v4503, %v4503
      %v4574 = vpack.c.bf16 %v4505, %v4505
      %v4575 = vpack.c.bf16 %v4508, %v4508
      %v4576 = vpack.c.bf16 %v4510, %v4510
      %v4577 = vpack.c.bf16 %v4513, %v4513
      %v4578 = vpack.c.bf16 %v4515, %v4515
      %v4579 = vpack.c.bf16 %v4518, %v4518
      %v4580 = vpack.c.bf16 %v4520, %v4520
      %v4581 = vpack.c.bf16 %v4523, %v4523
      %v4582 = vpack.c.bf16 %v4525, %v4525
      %v4583 = vpack.c.bf16 %v4528, %v4528
      %v4584 = vpack.c.bf16 %v4530, %v4530
      %v4585 = vpack.c.bf16 %v4533, %v4533
      %v4586 = vpack.c.bf16 %v4535, %v4535
      %v4587 = vpack.c.bf16 %v4538, %v4538
      %v4588 = vpack.c.bf16 %v4540, %v4540
      %v4589 = vpack.c.bf16 %v4543, %v4543
      %v4590 = vpack.c.bf16 %v4545, %v4545
      %v4591 = vpack.c.bf16 %v4548, %v4548
      %v4592 = vpack.c.bf16 %v4550, %v4550
      %v4593 = vpack.c.bf16 %v4553, %v4553
      %v4594 = vpack.c.bf16 %v4555, %v4555
      %v4595 = vpack.c.bf16 %v4558, %v4558
      %v4596 = vpack.c.bf16 %v4560, %v4560
      %v4597 = vpack.c.bf16 %v4563, %v4563
      %v4598 = vpack.c.bf16 %v4565, %v4565
      %4599 = vst [vmem:[%s439] sm:$0xf] %v4567
      %4600 = vst [vmem:[%s439 + $0x4] sm:$0xf] %v4568
      %4601 = vst [vmem:[%s439 + $0x8] sm:$0xf] %v4569
      %4602 = vst [vmem:[%s439 + $0xc] sm:$0xf] %v4570
      %4603 = vst [vmem:[%s439 + $0x10] sm:$0xf] %v4571
      %4604 = vst [vmem:[%s439 + $0x14] sm:$0xf] %v4572
      %4605 = vst [vmem:[%s439 + $0x18] sm:$0xf] %v4573
      %4606 = vst [vmem:[%s439 + $0x1c] sm:$0xf] %v4574
      %4607 = vst [vmem:[%s439 + $0x20] sm:$0xf] %v4575
      %4608 = vst [vmem:[%s439 + $0x24] sm:$0xf] %v4576
      %4609 = vst [vmem:[%s439 + $0x28] sm:$0xf] %v4577
      %4610 = vst [vmem:[%s439 + $0x2c] sm:$0xf] %v4578
      %4611 = vst [vmem:[%s439 + $0x30] sm:$0xf] %v4579
      %4612 = vst [vmem:[%s439 + $0x34] sm:$0xf] %v4580
      %4613 = vst [vmem:[%s439 + $0x38] sm:$0xf] %v4581
      %4614 = vst [vmem:[%s439 + $0x3c] sm:$0xf] %v4582
      %4615 = vst [vmem:[%s439 + $0x40] sm:$0xf] %v4583
      %4616 = vst [vmem:[%s439 + $0x44] sm:$0xf] %v4584
      %4617 = vst [vmem:[%s439 + $0x48] sm:$0xf] %v4585
      %4618 = vst [vmem:[%s439 + $0x4c] sm:$0xf] %v4586
      %4619 = vst [vmem:[%s439 + $0x50] sm:$0xf] %v4587
      %4620 = vst [vmem:[%s439 + $0x54] sm:$0xf] %v4588
      %4621 = vst [vmem:[%s439 + $0x58] sm:$0xf] %v4589
      %4622 = vst [vmem:[%s439 + $0x5c] sm:$0xf] %v4590
      %4623 = vst [vmem:[%s439 + $0x60] sm:$0xf] %v4591
      %4624 = vst [vmem:[%s439 + $0x64] sm:$0xf] %v4592
      %4625 = vst [vmem:[%s439 + $0x68] sm:$0xf] %v4593
      %4626 = vst [vmem:[%s439 + $0x6c] sm:$0xf] %v4594
      %4627 = vst [vmem:[%s439 + $0x70] sm:$0xf] %v4595
      %4628 = vst [vmem:[%s439 + $0x74] sm:$0xf] %v4596
      %4629 = vst [vmem:[%s439 + $0x78] sm:$0xf] %v4597
      %4630 = vst [vmem:[%s439 + $0x7c] sm:$0xf] %v4598
      %v4631 = vadd.f32 %v4488, %v4490
      %v4632 = vadd.f32 %v4631, %v4493
      %v4633 = vadd.f32 %v4632, %v4495
      %v4634 = vadd.f32 %v4633, %v4498
      %v4635 = vadd.f32 %v4634, %v4500
      %v4636 = vadd.f32 %v4635, %v4503
      %v4637 = vadd.f32 %v4636, %v4505
      %v4638 = vadd.f32 %v4637, %v4508
      %v4639 = vadd.f32 %v4638, %v4510
      %v4640 = vadd.f32 %v4639, %v4513
      %v4641 = vadd.f32 %v4640, %v4515
      %v4642 = vadd.f32 %v4641, %v4518
      %v4643 = vadd.f32 %v4642, %v4520
      %v4644 = vadd.f32 %v4643, %v4523
      %v4645 = vadd.f32 %v4644, %v4525
      %v4646 = vadd.f32 %v4645, %v4528
      %v4647 = vadd.f32 %v4646, %v4530
      %v4648 = vadd.f32 %v4647, %v4533
      %v4649 = vadd.f32 %v4648, %v4535
      %v4650 = vadd.f32 %v4649, %v4538
      %v4651 = vadd.f32 %v4650, %v4540
      %v4652 = vadd.f32 %v4651, %v4543
      %v4653 = vadd.f32 %v4652, %v4545
      %v4654 = vadd.f32 %v4653, %v4548
      %v4655 = vadd.f32 %v4654, %v4550
      %v4656 = vadd.f32 %v4655, %v4553
      %v4657 = vadd.f32 %v4656, %v4555
      %v4658 = vadd.f32 %v4657, %v4558
      %v4659 = vadd.f32 %v4658, %v4560
      %v4660 = vadd.f32 %v4659, %v4563
      %v4661 = vadd.f32 %v4660, %v4565
      %v4662 = vrot.slane %v4661, 4
      %v4663 = vadd.f32 %v4661, %v4662
      %v4664 = vrot.slane %v4663, 2
      %v4665 = vadd.f32 %v4663, %v4664
      %v4666 = vrot.slane %v4665, 1
      %v4667 = vadd.f32 %v4665, %v4666
      %4668 = vst [vmem:[%s446] sm:$0x1] %v4667
      %v4669 = vmul.f32 %v4488, %v4488
      %v4670 = vmul.f32 %v4490, %v4490
      %v4671 = vmul.f32 %v4493, %v4493
      %v4672 = vmul.f32 %v4495, %v4495
      %v4673 = vmul.f32 %v4498, %v4498
      %v4674 = vmul.f32 %v4500, %v4500
      %v4675 = vmul.f32 %v4503, %v4503
      %v4676 = vmul.f32 %v4505, %v4505
      %v4677 = vmul.f32 %v4508, %v4508
      %v4678 = vmul.f32 %v4510, %v4510
      %v4679 = vmul.f32 %v4513, %v4513
      %v4680 = vmul.f32 %v4515, %v4515
      %v4681 = vmul.f32 %v4518, %v4518
      %v4682 = vmul.f32 %v4520, %v4520
      %v4683 = vmul.f32 %v4523, %v4523
      %v4684 = vmul.f32 %v4525, %v4525
      %v4685 = vmul.f32 %v4528, %v4528
      %v4686 = vmul.f32 %v4530, %v4530
      %v4687 = vmul.f32 %v4533, %v4533
      %v4688 = vmul.f32 %v4535, %v4535
      %v4689 = vmul.f32 %v4538, %v4538
      %v4690 = vmul.f32 %v4540, %v4540
      %v4691 = vmul.f32 %v4543, %v4543
      %v4692 = vmul.f32 %v4545, %v4545
      %v4693 = vmul.f32 %v4548, %v4548
      %v4694 = vmul.f32 %v4550, %v4550
      %v4695 = vmul.f32 %v4553, %v4553
      %v4696 = vmul.f32 %v4555, %v4555
      %v4697 = vmul.f32 %v4558, %v4558
      %v4698 = vmul.f32 %v4560, %v4560
      %v4699 = vmul.f32 %v4563, %v4563
      %v4700 = vmul.f32 %v4565, %v4565
      %v4701 = vadd.f32 %v4669, %v4670
      %v4702 = vadd.f32 %v4701, %v4671
      %v4703 = vadd.f32 %v4702, %v4672
      %v4704 = vadd.f32 %v4703, %v4673
      %v4705 = vadd.f32 %v4704, %v4674
      %v4706 = vadd.f32 %v4705, %v4675
      %v4707 = vadd.f32 %v4706, %v4676
      %v4708 = vadd.f32 %v4707, %v4677
      %v4709 = vadd.f32 %v4708, %v4678
      %v4710 = vadd.f32 %v4709, %v4679
      %v4711 = vadd.f32 %v4710, %v4680
      %v4712 = vadd.f32 %v4711, %v4681
      %v4713 = vadd.f32 %v4712, %v4682
      %v4714 = vadd.f32 %v4713, %v4683
      %v4715 = vadd.f32 %v4714, %v4684
      %v4716 = vadd.f32 %v4715, %v4685
      %v4717 = vadd.f32 %v4716, %v4686
      %v4718 = vadd.f32 %v4717, %v4687
      %v4719 = vadd.f32 %v4718, %v4688
      %v4720 = vadd.f32 %v4719, %v4689
      %v4721 = vadd.f32 %v4720, %v4690
      %v4722 = vadd.f32 %v4721, %v4691
      %v4723 = vadd.f32 %v4722, %v4692
      %v4724 = vadd.f32 %v4723, %v4693
      %v4725 = vadd.f32 %v4724, %v4694
      %v4726 = vadd.f32 %v4725, %v4695
      %v4727 = vadd.f32 %v4726, %v4696
      %v4728 = vadd.f32 %v4727, %v4697
      %v4729 = vadd.f32 %v4728, %v4698
      %v4730 = vadd.f32 %v4729, %v4699
      %v4731 = vadd.f32 %v4730, %v4700
      %v4732 = vrot.slane %v4731, 4
      %v4733 = vadd.f32 %v4731, %v4732
      %v4734 = vrot.slane %v4733, 2
      %v4735 = vadd.f32 %v4733, %v4734
      %v4736 = vrot.slane %v4735, 1
      %v4737 = vadd.f32 %v4735, %v4736
      %4738 = vst [vmem:[%s452] sm:$0x1] %v4737
      %s4739 = smul.u32 16, %s23
      %p4740 = scmp.lt.s32.totalorder %s22, 1
      %s4741 = scalar_select %p4740, %s22, 1
      %p4742 = scmp.lt.s32.totalorder %s4739, 15
      %s4743 = scalar_select %p4742, %s4739, 15
      %s4744 = smul.addr %s4743, 2
      %s4745 = smul.addr %s4741, 32
      %s4746 = sadd.s32 %s4744, %s4745
      %s4747 = smul.addr %s4746, 4
      %s4748 = scalar_lea.vmem %s4, %s4747
      %p4749 = scmp.lt.s32.totalorder %s22, 1
      %s4750 = scalar_select %p4749, %s22, 1
      %p4751 = scmp.lt.s32.totalorder %s23, 0
      %s4752 = scalar_select %p4751, %s23, 0
      %s4753 = sadd.s32 %s4752, %s4750
      %s4754 = scalar_lea.vmem %s5, %s4753
      %p4755 = scmp.lt.s32.totalorder %s22, 1
      %s4756 = scalar_select %p4755, %s22, 1
      %p4757 = scmp.lt.s32.totalorder %s23, 0
      %s4758 = scalar_select %p4757, %s23, 0
      %s4759 = sadd.s32 %s4758, %s4756
      %s4760 = scalar_lea.vmem %s6, %s4759
      // Predicated region
      $region53: #{double_conv.3} parent=35 // pred_check
        %p4761 = pneg %p171
      $region54: #{double_conv.3} parent=35 // pred_check_branch
        %4763 = sbr.rel (%p4761) target = $region56
      $region55: #{double_conv.3} parent=35 // pred_region
        %s4764 = smul.u32 16, %s23
      $region56: #{double_conv.3} parent=35 // pred_fallthru
        _
      // Predicated region
      $region57: #{double_conv.3} parent=35 // pred_check
        %p4765 = pneg %p199
      $region58: #{double_conv.3} parent=35 // pred_check_branch
        %4767 = sbr.rel (%p4765) target = $region60
      $region59: #{double_conv.3} parent=35 // pred_region
        _
      $region60: #{double_conv.3} parent=35 // pred_fallthru
        _
      // Predicated region
      $region61: #{double_conv.3} parent=35 // pred_check
        %p4768 = pneg %p227
      $region62: #{double_conv.3} parent=35 // pred_check_branch
        %4770 = sbr.rel (%p4768) target = $region64
      $region63: #{double_conv.3} parent=35 // pred_region
        _
      $region64: #{double_conv.3} parent=35 // pred_fallthru
        _
    $region36: #{double_conv.3} parent=5 // pred_fallthru
      _
    %p4771 = scmp.le.s32.totalorder 2, %s13
    // Predicated region
    $region65: #{double_conv.3} parent=5 // pred_check
      %p4772 = pneg %p4771
    $region66: #{double_conv.3} parent=5 // pred_check_branch
      %4774 = sbr.rel (%p4772) target = $region68
    $region67: #{double_conv.3} parent=5 // pred_region
      %s4775 = ssub.s32 %s13, 2
      // Predicated region
      $region69: #{double_conv.3} parent=67 // pred_check
        %p4776 = pneg %p177
      $region70: #{double_conv.3} parent=67 // pred_check_branch
        %4778 = sbr.rel (%p4776) target = $region72
      $region71: #{double_conv.3} parent=67 // pred_region
        %s4779 = smul.u32 16, %s25
        %p4780 = scmp.lt.s32.totalorder %s24, 1
        %s4781 = scalar_select %p4780, %s24, 1
        %p4782 = scmp.lt.s32.totalorder %s4779, 15
        %s4783 = scalar_select %p4782, %s4779, 15
        %s4784 = smul.addr %s4783, 2
        %s4785 = smul.addr %s4781, 32
        %s4786 = sadd.s32 %s4784, %s4785
        %s4787 = smul.addr %s4786, 4
        %s4788 = scalar_lea.vmem %s4, %s4787
      $region72: #{double_conv.3} parent=67 // pred_fallthru
        _
      // Predicated region
      $region73: #{double_conv.3} parent=67 // pred_check
        %p4789 = pneg %p205
      $region74: #{double_conv.3} parent=67 // pred_check_branch
        %4791 = sbr.rel (%p4789) target = $region76
      $region75: #{double_conv.3} parent=67 // pred_region
        %p4792 = scmp.lt.s32.totalorder %s24, 1
        %s4793 = scalar_select %p4792, %s24, 1
        %p4794 = scmp.lt.s32.totalorder %s25, 0
        %s4795 = scalar_select %p4794, %s25, 0
        %s4796 = sadd.s32 %s4795, %s4793
        %s4797 = scalar_lea.vmem %s5, %s4796
      $region76: #{double_conv.3} parent=67 // pred_fallthru
        _
      // Predicated region
      $region77: #{double_conv.3} parent=67 // pred_check
        %p4798 = pneg %p233
      $region78: #{double_conv.3} parent=67 // pred_check_branch
        %4800 = sbr.rel (%p4798) target = $region80
      $region79: #{double_conv.3} parent=67 // pred_region
        %p4801 = scmp.lt.s32.totalorder %s24, 1
        %s4802 = scalar_select %p4801, %s24, 1
        %p4803 = scmp.lt.s32.totalorder %s25, 0
        %s4804 = scalar_select %p4803, %s25, 0
        %s4805 = sadd.s32 %s4804, %s4802
        %s4806 = scalar_lea.vmem %s6, %s4805
      $region80: #{double_conv.3} parent=67 // pred_fallthru
        _
    $region68: #{double_conv.3} parent=5 // pred_fallthru
      _
  $region6: #{double_conv.3} parent=0 // loop_footer
    %s17 = sadd.s32 1, %s13
  $region7: #{double_conv.3} parent=0 // loop_footer_branch
    %12 = sbr.rel target = $region3
  $region8: #{double_conv.3} parent=0 // loop_exit
    _

// kernel: double_conv.4
$region0: #{double_conv.4}
  #allocation0 [shape = 'u32[]', space=smem, size = 0x4, offset = 0x4, fixed_abs, tag = 'smem constant byte address 0x4 - core index']
  #allocation1 [shape = 'u32[72,128]{1,0:T(1,128)}', space=vmem, size = 0x9000, scoped, tag = 'internal scratch']
  #allocation2 [shape = 'bf16[18,18,128]{2,1,0:T(8,128)(2,1)}', space=vmem, size = 0x1b000, scoped, tag = 'scratch operand']
  #allocation3 [shape = 'bf16[16,16,1152]{2,1,0:T(8,128)(2,1)}', space=vmem, size = 0x90000, scoped, tag = 'scratch operand']
  %s0 = inlined_call_operand.vmem [shape: bf16[2,16,16,128], index: 0, kind: input, shape index: {}, may-alias: {0,1,2}]
  %s1 = inlined_call_operand.vmem [shape: bf16[2,16,16,128], index: 1, kind: input, shape index: {}, may-alias: {0,1,2}]
  %s2 = inlined_call_operand.vmem [shape: bf16[2,16,16,128], index: 2, kind: input, shape index: {}, may-alias: {0,1,2}]
  %s3 = inlined_call_operand.vmem [shape: bf16[1152,128], index: 3, kind: input, shape index: {}]
  %s4 = inlined_call_operand.vmem [shape: f32[1,1,128], index: 4, kind: input, shape index: {}]
  %s5 = inlined_call_operand.vmem [shape: f32[1,1,128], index: 5, kind: input, shape index: {}]
  %s6 = inlined_call_operand.vmem [shape: bf16[2,16,16,128], index: 6, kind: output, shape index: {0}]
  %s7 = inlined_call_operand.vmem [shape: f32[2,1,128], index: 7, kind: output, shape index: {1}]
  %s8 = inlined_call_operand.vmem [shape: f32[2,1,128], index: 8, kind: output, shape index: {2}]
  %9 = xla_tuple %s6, %s7, %s8
  %s10 = sld [smem:[#allocation0]]
  $region89: #{double_conv.4} parent=0
    _
  %s12 = ssub.s32 1, %s10
  %s13 = scalar_select 0, %s12, %s10
  loop: start=0, step=1, limit=4
  $region2: #{double_conv.4} parent=0 // loop_pre_header
    _
  $region3: #{double_conv.4} parent=0 // loop_header
    %s15 = sphi 0, %s19
    %p16 = scmp.ge.s32.totalorder %s15, 4
    %s22 = sphi 0, %s34
    %s23 = sphi 0, %s30
    %s24 = sphi 0, %s22
    %s25 = sphi 0, %s23
    %s26 = sphi 0, %s24
    %s27 = sphi 0, %s25
    %s39 = sphi 0, %s41
    %s42 = sphi 0, %s39
    %s43 = sphi 0, %s42
    %s59 = sphi 0, %s43
    %s75 = sphi 0, %s77
    %s78 = sphi 0, %s75
    %s79 = sphi 0, %s78
    %s95 = sphi 0, %s79
    %s111 = sphi 0, %s113
    %s114 = sphi 0, %s111
    %s115 = sphi 0, %s114
    %s131 = sphi 0, %s115
    %s135 = sphi 0, %s135
    %s137 = sphi 0, %s135
    %s138 = sphi 0, %s137
    %s152 = sphi 0, %s138
    %s156 = sphi 0, %s156
    %s158 = sphi 0, %s156
    %s159 = sphi 0, %s158
    %s173 = sphi 0, %s159
    %s177 = sphi 0, %s177
    %s179 = sphi 0, %s177
    %s180 = sphi 0, %s179
    %s194 = sphi 0, %s180
    %s202 = sphi 0, %s204
    %s205 = sphi 0, %s202
    %s206 = sphi 0, %s205
    %s222 = sphi 0, %s206
    %s230 = sphi 0, %s232
    %s233 = sphi 0, %s230
    %s234 = sphi 0, %s233
    %s250 = sphi 0, %s234
    %s258 = sphi 0, %s260
    %s261 = sphi 0, %s258
    %s262 = sphi 0, %s261
    %s278 = sphi 0, %s262
  $region4: #{double_conv.4} parent=0 // loop_header_branch
    %18 = sbr.rel (%p16) target = $region8
  $region5: #{double_conv.4} parent=0 // loop_body
    %s20 = ssub.s32 %s15, 1
    %s21 = ssub.s32 %s15, 2
    %s28 = sadd.s32 1, %s23
    %p29 = scmp.ge.s32.totalorder %s28, 1
    %s30 = scalar_select %p29, 0, %s28
    %s31 = sadd.s32 1, %s22
    %s32 = scalar_select %p29, %s31, %s22
    %p33 = scmp.ge.s32.totalorder %s32, 2
    %s34 = scalar_select %p33, 0, %s32
    %s35 = ssub.s32 %s22, %s34
    %s36 = ssub.s32 %s23, %s30
    %s37 = sor.u32 %s35, %s36
    %p38 = scmp.eq.s32.totalorder %s37, 0
    %s40 = sadd.s32 %s39, 1
    %s41 = scalar_select %p38, %s39, %s40
    %p44 = pneg %p38
    %p45 = scmp.eq.s32.totalorder %s15, 1
    %p46 = por %p44, %p45
    %p47 = scmp.ne.s32.totalorder %s39, %s42
    %p48 = scmp.eq.s32.totalorder %s15, 0
    %p49 = por %p47, %p48
    %p50 = scmp.ne.s32.totalorder %s39, %s42
    %p51 = scmp.eq.s32.totalorder %s20, 1
    %p52 = por %p50, %p51
    %p53 = scmp.ne.s32.totalorder %s42, %s43
    %p54 = scmp.eq.s32.totalorder %s20, 0
    %p55 = por %p53, %p54
    %p56 = scmp.ne.s32.totalorder %s42, %s43
    %p57 = scmp.eq.s32.totalorder %s21, 1
    %p58 = por %p56, %p57
    %p60 = scmp.ne.s32.totalorder %s43, %s59
    %p61 = scmp.eq.s32.totalorder %s21, 0
    %p62 = por %p60, %p61
    %s63 = smul.u32 %s23, 16
    %s64 = ssub.s32 %s63, 1
    %p65 = scmp.gt.s32.totalorder %s64, 0
    %s66 = scalar_select %p65, %s64, 0
    %s67 = smul.u32 %s30, 16
    %s68 = ssub.s32 %s67, 1
    %p69 = scmp.gt.s32.totalorder %s68, 0
    %s70 = scalar_select %p69, %s68, 0
    %s71 = ssub.s32 %s22, %s34
    %s72 = ssub.s32 %s66, %s70
    %s73 = sor.u32 %s71, %s72
    %p74 = scmp.eq.s32.totalorder %s73, 0
    %s76 = sadd.s32 %s75, 1
    %s77 = scalar_select %p74, %s75, %s76
    %p80 = pneg %p74
    %p81 = scmp.eq.s32.totalorder %s15, 1
    %p82 = por %p80, %p81
    %p83 = scmp.ne.s32.totalorder %s75, %s78
    %p84 = scmp.eq.s32.totalorder %s15, 0
    %p85 = por %p83, %p84
    %p86 = scmp.ne.s32.totalorder %s75, %s78
    %p87 = scmp.eq.s32.totalorder %s20, 1
    %p88 = por %p86, %p87
    %p89 = scmp.ne.s32.totalorder %s78, %s79
    %p90 = scmp.eq.s32.totalorder %s20, 0
    %p91 = por %p89, %p90
    %p92 = scmp.ne.s32.totalorder %s78, %s79
    %p93 = scmp.eq.s32.totalorder %s21, 1
    %p94 = por %p92, %p93
    %p96 = scmp.ne.s32.totalorder %s79, %s95
    %p97 = scmp.eq.s32.totalorder %s21, 0
    %p98 = por %p96, %p97
    %s99 = sadd.s32 %s23, 1
    %s100 = smul.u32 %s99, 16
    %p101 = scmp.lt.s32.totalorder %s100, 15
    %s102 = scalar_select %p101, %s100, 15
    %s103 = sadd.s32 %s30, 1
    %s104 = smul.u32 %s103, 16
    %p105 = scmp.lt.s32.totalorder %s104, 15
    %s106 = scalar_select %p105, %s104, 15
    %s107 = ssub.s32 %s22, %s34
    %s108 = ssub.s32 %s102, %s106
    %s109 = sor.u32 %s107, %s108
    %p110 = scmp.eq.s32.totalorder %s109, 0
    %s112 = sadd.s32 %s111, 1
    %s113 = scalar_select %p110, %s111, %s112
    %p116 = pneg %p110
    %p117 = scmp.eq.s32.totalorder %s15, 1
    %p118 = por %p116, %p117
    %p119 = scmp.ne.s32.totalorder %s111, %s114
    %p120 = scmp.eq.s32.totalorder %s15, 0
    %p121 = por %p119, %p120
    %p122 = scmp.ne.s32.totalorder %s111, %s114
    %p123 = scmp.eq.s32.totalorder %s20, 1
    %p124 = por %p122, %p123
    %p125 = scmp.ne.s32.totalorder %s114, %s115
    %p126 = scmp.eq.s32.totalorder %s20, 0
    %p127 = por %p125, %p126
    %p128 = scmp.ne.s32.totalorder %s114, %s115
    %p129 = scmp.eq.s32.totalorder %s21, 1
    %p130 = por %p128, %p129
    %p132 = scmp.ne.s32.totalorder %s115, %s131
    %p133 = scmp.eq.s32.totalorder %s21, 0
    %p134 = por %p132, %p133
    %s136 = sadd.s32 %s135, 1
    %p139 = scmp.eq.s32.totalorder %s15, 1
    %p140 = scmp.ne.s32.totalorder %s135, %s137
    %p141 = scmp.eq.s32.totalorder %s15, 0
    %p142 = por %p140, %p141
    %p143 = scmp.ne.s32.totalorder %s135, %s137
    %p144 = scmp.eq.s32.totalorder %s20, 1
    %p145 = por %p143, %p144
    %p146 = scmp.ne.s32.totalorder %s137, %s138
    %p147 = scmp.eq.s32.totalorder %s20, 0
    %p148 = por %p146, %p147
    %p149 = scmp.ne.s32.totalorder %s137, %s138
    %p150 = scmp.eq.s32.totalorder %s21, 1
    %p151 = por %p149, %p150
    %p153 = scmp.ne.s32.totalorder %s138, %s152
    %p154 = scmp.eq.s32.totalorder %s21, 0
    %p155 = por %p153, %p154
    %s157 = sadd.s32 %s156, 1
    %p160 = scmp.eq.s32.totalorder %s15, 1
    %p161 = scmp.ne.s32.totalorder %s156, %s158
    %p162 = scmp.eq.s32.totalorder %s15, 0
    %p163 = por %p161, %p162
    %p164 = scmp.ne.s32.totalorder %s156, %s158
    %p165 = scmp.eq.s32.totalorder %s20, 1
    %p166 = por %p164, %p165
    %p167 = scmp.ne.s32.totalorder %s158, %s159
    %p168 = scmp.eq.s32.totalorder %s20, 0
    %p169 = por %p167, %p168
    %p170 = scmp.ne.s32.totalorder %s158, %s159
    %p171 = scmp.eq.s32.totalorder %s21, 1
    %p172 = por %p170, %p171
    %p174 = scmp.ne.s32.totalorder %s159, %s173
    %p175 = scmp.eq.s32.totalorder %s21, 0
    %p176 = por %p174, %p175
    %s178 = sadd.s32 %s177, 1
    %p181 = scmp.eq.s32.totalorder %s15, 1
    %p182 = scmp.ne.s32.totalorder %s177, %s179
    %p183 = scmp.eq.s32.totalorder %s15, 0
    %p184 = por %p182, %p183
    %p185 = scmp.ne.s32.totalorder %s177, %s179
    %p186 = scmp.eq.s32.totalorder %s20, 1
    %p187 = por %p185, %p186
    %p188 = scmp.ne.s32.totalorder %s179, %s180
    %p189 = scmp.eq.s32.totalorder %s20, 0
    %p190 = por %p188, %p189
    %p191 = scmp.ne.s32.totalorder %s179, %s180
    %p192 = scmp.eq.s32.totalorder %s21, 1
    %p193 = por %p191, %p192
    %p195 = scmp.ne.s32.totalorder %s180, %s194
    %p196 = scmp.eq.s32.totalorder %s21, 0
    %p197 = por %p195, %p196
    %s198 = ssub.s32 %s22, %s34
    %s199 = ssub.s32 %s23, %s30
    %s200 = sor.u32 %s198, %s199
    %p201 = scmp.eq.s32.totalorder %s200, 0
    %s203 = sadd.s32 %s202, 1
    %s204 = scalar_select %p201, %s202, %s203
    %p207 = pneg %p201
    %p208 = scmp.eq.s32.totalorder %s15, 1
    %p209 = por %p207, %p208
    %p210 = scmp.ne.s32.totalorder %s202, %s205
    %p211 = scmp.eq.s32.totalorder %s15, 0
    %p212 = por %p210, %p211
    %p213 = scmp.ne.s32.totalorder %s202, %s205
    %p214 = scmp.eq.s32.totalorder %s20, 1
    %p215 = por %p213, %p214
    %p216 = scmp.ne.s32.totalorder %s205, %s206
    %p217 = scmp.eq.s32.totalorder %s20, 0
    %p218 = por %p216, %p217
    %p219 = scmp.ne.s32.totalorder %s205, %s206
    %p220 = scmp.eq.s32.totalorder %s21, 1
    %p221 = por %p219, %p220
    %p223 = scmp.ne.s32.totalorder %s206, %s222
    %p224 = scmp.eq.s32.totalorder %s21, 0
    %p225 = por %p223, %p224
    %s226 = ssub.s32 %s22, %s34
    %s227 = ssub.s32 %s23, %s30
    %s228 = sor.u32 %s226, %s227
    %p229 = scmp.eq.s32.totalorder %s228, 0
    %s231 = sadd.s32 %s230, 1
    %s232 = scalar_select %p229, %s230, %s231
    %p235 = pneg %p229
    %p236 = scmp.eq.s32.totalorder %s15, 1
    %p237 = por %p235, %p236
    %p238 = scmp.ne.s32.totalorder %s230, %s233
    %p239 = scmp.eq.s32.totalorder %s15, 0
    %p240 = por %p238, %p239
    %p241 = scmp.ne.s32.totalorder %s230, %s233
    %p242 = scmp.eq.s32.totalorder %s20, 1
    %p243 = por %p241, %p242
    %p244 = scmp.ne.s32.totalorder %s233, %s234
    %p245 = scmp.eq.s32.totalorder %s20, 0
    %p246 = por %p244, %p245
    %p247 = scmp.ne.s32.totalorder %s233, %s234
    %p248 = scmp.eq.s32.totalorder %s21, 1
    %p249 = por %p247, %p248
    %p251 = scmp.ne.s32.totalorder %s234, %s250
    %p252 = scmp.eq.s32.totalorder %s21, 0
    %p253 = por %p251, %p252
    %s254 = ssub.s32 %s22, %s34
    %s255 = ssub.s32 %s23, %s30
    %s256 = sor.u32 %s254, %s255
    %p257 = scmp.eq.s32.totalorder %s256, 0
    %s259 = sadd.s32 %s258, 1
    %s260 = scalar_select %p257, %s258, %s259
    %p263 = pneg %p257
    %p264 = scmp.eq.s32.totalorder %s15, 1
    %p265 = por %p263, %p264
    %p266 = scmp.ne.s32.totalorder %s258, %s261
    %p267 = scmp.eq.s32.totalorder %s15, 0
    %p268 = por %p266, %p267
    %p269 = scmp.ne.s32.totalorder %s258, %s261
    %p270 = scmp.eq.s32.totalorder %s20, 1
    %p271 = por %p269, %p270
    %p272 = scmp.ne.s32.totalorder %s261, %s262
    %p273 = scmp.eq.s32.totalorder %s20, 0
    %p274 = por %p272, %p273
    %p275 = scmp.ne.s32.totalorder %s261, %s262
    %p276 = scmp.eq.s32.totalorder %s21, 1
    %p277 = por %p275, %p276
    %p279 = scmp.ne.s32.totalorder %s262, %s278
    %p280 = scmp.eq.s32.totalorder %s21, 0
    %p281 = por %p279, %p280
    %p282 = scmp.le.s32.totalorder 1, %s15
    %p283 = scmp.lt.s32.totalorder %s15, 3
    %p284 = pnand %p282, %p283
    %p285 = pneg %p284
    // Predicated region
    $region9: #{double_conv.4} parent=5 // pred_check
      _
    $region10: #{double_conv.4} parent=5 // pred_check_branch
      %287 = sbr.rel (%p284) target = $region12
    $region11: #{double_conv.4} parent=5 // pred_region
      %s288 = ssub.s32 %s15, 1
      // Predicated region
      $region13: #{double_conv.4} parent=11 // pred_check
        %p289 = pneg %p148
      $region14: #{double_conv.4} parent=11 // pred_check_branch
        %291 = sbr.rel (%p289) target = $region16
      $region15: #{double_conv.4} parent=11 // pred_region
        _
      $region16: #{double_conv.4} parent=11 // pred_fallthru
        _
      // Predicated region
      $region17: #{double_conv.4} parent=11 // pred_check
        %p292 = pneg %p169
      $region18: #{double_conv.4} parent=11 // pred_check_branch
        %294 = sbr.rel (%p292) target = $region20
      $region19: #{double_conv.4} parent=11 // pred_region
        _
      $region20: #{double_conv.4} parent=11 // pred_fallthru
        _
      // Predicated region
      $region21: #{double_conv.4} parent=11 // pred_check
        %p295 = pneg %p190
      $region22: #{double_conv.4} parent=11 // pred_check_branch
        %297 = sbr.rel (%p295) target = $region24
      $region23: #{double_conv.4} parent=11 // pred_region
        _
      $region24: #{double_conv.4} parent=11 // pred_fallthru
        _
    $region12: #{double_conv.4} parent=5 // pred_fallthru
      _
    %p298 = scmp.lt.s32.totalorder %s15, 2
    // Predicated region
    $region25: #{double_conv.4} parent=5 // pred_check
      %p299 = pneg %p298
    $region26: #{double_conv.4} parent=5 // pred_check_branch
      %301 = sbr.rel (%p299) target = $region28
    $region27: #{double_conv.4} parent=5 // pred_region
      // Predicated region
      $region29: #{double_conv.4} parent=27 // pred_check
        %p302 = pneg %p49
      $region30: #{double_conv.4} parent=27 // pred_check_branch
        %304 = sbr.rel (%p302) target = $region32
      $region31: #{double_conv.4} parent=27 // pred_region
        %s305 = smul.u32 16, %s23
        %p306 = scmp.lt.s32.totalorder %s22, 1
        %s307 = scalar_select %p306, %s22, 1
        %p308 = scmp.lt.s32.totalorder %s305, 15
        %s309 = scalar_select %p308, %s305, 15
        %s310 = smul.addr %s309, 2
        %s311 = smul.addr %s307, 32
        %s312 = sadd.s32 %s310, %s311
        %s313 = smul.addr %s312, 4
        %s314 = scalar_lea.vmem %s0, %s313
        %s315 = smul.u32 16, %s23
      $region32: #{double_conv.4} parent=27 // pred_fallthru
        _
      // Predicated region
      $region33: #{double_conv.4} parent=27 // pred_check
        %p316 = pneg %p85
      $region34: #{double_conv.4} parent=27 // pred_check_branch
        %318 = sbr.rel (%p316) target = $region36
      $region35: #{double_conv.4} parent=27 // pred_region
        %s319 = smul.u32 %s23, 16
        %s320 = ssub.s32 %s319, 1
        %p321 = scmp.gt.s32.totalorder %s320, 0
        %s322 = scalar_select %p321, %s320, 0
        %p323 = scmp.lt.s32.totalorder %s22, 1
        %s324 = scalar_select %p323, %s22, 1
        %p325 = scmp.lt.s32.totalorder %s322, 15
        %s326 = scalar_select %p325, %s322, 15
        %s327 = smul.addr %s326, 2
        %s328 = smul.addr %s324, 32
        %s329 = sadd.s32 %s327, %s328
        %s330 = smul.addr %s329, 4
        %s331 = scalar_lea.vmem %s1, %s330
        %s332 = smul.u32 %s23, 16
        %s333 = ssub.s32 %s332, 1
        %p334 = scmp.gt.s32.totalorder %s333, 0
        %s335 = scalar_select %p334, %s333, 0
      $region36: #{double_conv.4} parent=27 // pred_fallthru
        _
      // Predicated region
      $region37: #{double_conv.4} parent=27 // pred_check
        %p336 = pneg %p121
      $region38: #{double_conv.4} parent=27 // pred_check_branch
        %338 = sbr.rel (%p336) target = $region40
      $region39: #{double_conv.4} parent=27 // pred_region
        %s339 = sadd.s32 %s23, 1
        %s340 = smul.u32 %s339, 16
        %p341 = scmp.lt.s32.totalorder %s340, 15
        %s342 = scalar_select %p341, %s340, 15
        %p343 = scmp.lt.s32.totalorder %s22, 1
        %s344 = scalar_select %p343, %s22, 1
        %p345 = scmp.lt.s32.totalorder %s342, 15
        %s346 = scalar_select %p345, %s342, 15
        %s347 = smul.addr %s346, 2
        %s348 = smul.addr %s344, 32
        %s349 = sadd.s32 %s347, %s348
        %s350 = smul.addr %s349, 4
        %s351 = scalar_lea.vmem %s2, %s350
        %s352 = sadd.s32 %s23, 1
        %s353 = smul.u32 %s352, 16
        %p354 = scmp.lt.s32.totalorder %s353, 15
        %s355 = scalar_select %p354, %s353, 15
      $region40: #{double_conv.4} parent=27 // pred_fallthru
        _
    $region28: #{double_conv.4} parent=5 // pred_fallthru
      _
    %p356 = scmp.le.s32.totalorder 1, %s15
    %p357 = scmp.lt.s32.totalorder %s15, 3
    %p358 = pnand %p356, %p357
    %p359 = pneg %p358
    // Predicated region
    $region41: #{double_conv.4} parent=5 // pred_check
      _
    $region42: #{double_conv.4} parent=5 // pred_check_branch
      %361 = sbr.rel (%p358) target = $region44
    $region43: #{double_conv.4} parent=5 // pred_region
      %s362 = ssub.s32 %s15, 1
      %s363 = smul.u32 16, %s25
      %p364 = scmp.lt.s32.totalorder %s24, 1
      %s365 = scalar_select %p364, %s24, 1
      %p366 = scmp.lt.s32.totalorder %s363, 15
      %s367 = scalar_select %p366, %s363, 15
      %s368 = smul.addr %s367, 2
      %s369 = smul.addr %s365, 32
      %s370 = sadd.s32 %s368, %s369
      %s371 = smul.addr %s370, 4
      %s372 = scalar_lea.vmem %s0, %s371
      %p373 = pneg %p55
      %p374 = pneg %p52
      %s375 = smul.u32 %s25, 16
      %s376 = ssub.s32 %s375, 1
      %p377 = scmp.gt.s32.totalorder %s376, 0
      %s378 = scalar_select %p377, %s376, 0
      %p379 = scmp.lt.s32.totalorder %s24, 1
      %s380 = scalar_select %p379, %s24, 1
      %p381 = scmp.lt.s32.totalorder %s378, 15
      %s382 = scalar_select %p381, %s378, 15
      %s383 = smul.addr %s382, 2
      %s384 = smul.addr %s380, 32
      %s385 = sadd.s32 %s383, %s384
      %s386 = smul.addr %s385, 4
      %s387 = scalar_lea.vmem %s1, %s386
      %p388 = pneg %p91
      %p389 = pneg %p88
      %s390 = sadd.s32 %s25, 1
      %s391 = smul.u32 %s390, 16
      %p392 = scmp.lt.s32.totalorder %s391, 15
      %s393 = scalar_select %p392, %s391, 15
      %p394 = scmp.lt.s32.totalorder %s24, 1
      %s395 = scalar_select %p394, %s24, 1
      %p396 = scmp.lt.s32.totalorder %s393, 15
      %s397 = scalar_select %p396, %s393, 15
      %s398 = smul.addr %s397, 2
      %s399 = smul.addr %s395, 32
      %s400 = sadd.s32 %s398, %s399
      %s401 = smul.addr %s400, 4
      %s402 = scalar_lea.vmem %s2, %s401
      %p403 = pneg %p127
      %p404 = pneg %p124
      %p405 = pneg %p148
      %p406 = pneg %p145
      %p407 = pneg %p169
      %p408 = pneg %p166
      %p409 = pneg %p190
      %p410 = pneg %p187
      %p411 = pneg %p218
      %p412 = pneg %p215
      %s413 = smul.u32 16, %s25
      %p414 = scmp.lt.s32.totalorder %s24, 1
      %s415 = scalar_select %p414, %s24, 1
      %p416 = scmp.lt.s32.totalorder %s413, 15
      %s417 = scalar_select %p416, %s413, 15
      %s418 = smul.addr %s417, 2
      %s419 = smul.addr %s415, 32
      %s420 = sadd.s32 %s418, %s419
      %s421 = smul.addr %s420, 4
      %s422 = scalar_lea.vmem %s6, %s421
      %p423 = pneg %p246
      %p424 = pneg %p243
      %p425 = scmp.lt.s32.totalorder %s24, 1
      %s426 = scalar_select %p425, %s24, 1
      %p427 = scmp.lt.s32.totalorder %s25, 0
      %s428 = scalar_select %p427, %s25, 0
      %s429 = sadd.s32 %s428, %s426
      %s430 = scalar_lea.vmem %s7, %s429
      %p431 = pneg %p274
      %p432 = pneg %p271
      %p433 = scmp.lt.s32.totalorder %s24, 1
      %s434 = scalar_select %p433, %s24, 1
      %p435 = scmp.lt.s32.totalorder %s25, 0
      %s436 = scalar_select %p435, %s25, 0
      %s437 = sadd.s32 %s436, %s434
      %s438 = scalar_lea.vmem %s8, %s437
      %s439 = smul.u32 16, %s25
      %p440 = scmp.lt.s32.totalorder %s24, 1
      %s441 = scalar_select %p440, %s24, 1
      %p442 = scmp.lt.s32.totalorder %s439, 15
      %s443 = scalar_select %p442, %s439, 15
      %s444 = smul.addr %s443, 2
      %s445 = smul.addr %s441, 32
      %s446 = sadd.s32 %s444, %s445
      %s447 = smul.addr %s446, 4
      %s448 = scalar_lea.vmem %s0, %s447
      %s449 = smul.u32 16, %s25
      %s450 = smul.u32 %s25, 16
      %s451 = ssub.s32 %s450, 1
      %p452 = scmp.gt.s32.totalorder %s451, 0
      %s453 = scalar_select %p452, %s451, 0
      %p454 = scmp.lt.s32.totalorder %s24, 1
      %s455 = scalar_select %p454, %s24, 1
      %p456 = scmp.lt.s32.totalorder %s453, 15
      %s457 = scalar_select %p456, %s453, 15
      %s458 = smul.addr %s457, 2
      %s459 = smul.addr %s455, 32
      %s460 = sadd.s32 %s458, %s459
      %s461 = smul.addr %s460, 4
      %s462 = scalar_lea.vmem %s1, %s461
      %s463 = smul.u32 %s25, 16
      %s464 = ssub.s32 %s463, 1
      %p465 = scmp.gt.s32.totalorder %s464, 0
      %s466 = scalar_select %p465, %s464, 0
      %s467 = sadd.s32 %s25, 1
      %s468 = smul.u32 %s467, 16
      %p469 = scmp.lt.s32.totalorder %s468, 15
      %s470 = scalar_select %p469, %s468, 15
      %p471 = scmp.lt.s32.totalorder %s24, 1
      %s472 = scalar_select %p471, %s24, 1
      %p473 = scmp.lt.s32.totalorder %s470, 15
      %s474 = scalar_select %p473, %s470, 15
      %s475 = smul.addr %s474, 2
      %s476 = smul.addr %s472, 32
      %s477 = sadd.s32 %s475, %s476
      %s478 = smul.addr %s477, 4
      %s479 = scalar_lea.vmem %s2, %s478
      %s480 = sadd.s32 %s25, 1
      %s481 = smul.u32 %s480, 16
      %p482 = scmp.lt.s32.totalorder %s481, 15
      %s483 = scalar_select %p482, %s481, 15
      %s484 = smul.u32 16, %s25
      %p485 = scmp.lt.s32.totalorder %s24, 1
      %s486 = scalar_select %p485, %s24, 1
      %p487 = scmp.lt.s32.totalorder %s484, 15
      %s488 = scalar_select %p487, %s484, 15
      %s489 = smul.addr %s488, 2
      %s490 = smul.addr %s486, 32
      %s491 = sadd.s32 %s489, %s490
      %s492 = smul.addr %s491, 4
      %s493 = scalar_lea.vmem %s6, %s492
      %s494 = smul.u32 16, %s25
      %p495 = scmp.lt.s32.totalorder %s24, 1
      %s496 = scalar_select %p495, %s24, 1
      %p497 = scmp.lt.s32.totalorder %s25, 0
      %s498 = scalar_select %p497, %s25, 0
      %s499 = sadd.s32 %s498, %s496
      %s500 = scalar_lea.vmem %s7, %s499
      %p501 = scmp.lt.s32.totalorder %s24, 1
      %s502 = scalar_select %p501, %s24, 1
      %p503 = scmp.lt.s32.totalorder %s25, 0
      %s504 = scalar_select %p503, %s25, 0
      %s505 = sadd.s32 %s504, %s502
      %s506 = scalar_lea.vmem %s8, %s505
      %vm508 = vcmask 1040384
      %vm509 = vsmask.f32 256
      %vm510 = vmand %vm508, %vm509
      %v511 = vld [vmem:[#allocation2] sm:$0x1]
      %v512 = vsel %vm510, 0, %v511
      %513 = vst [vmem:[#allocation2] sm:$0x1] %v512
      %v514 = vld [vmem:[#allocation2 + $0xc] sm:$0x1]
      %v515 = vsel %vm510, 0, %v514
      %516 = vst [vmem:[#allocation2 + $0xc] sm:$0x1] %v515
      %v517 = vld [vmem:[#allocation2 + $0x18] sm:$0x1]
      %v518 = vsel %vm510, 0, %v517
      %519 = vst [vmem:[#allocation2 + $0x18] sm:$0x1] %v518
      %v520 = vld [vmem:[#allocation2 + $0x24] sm:$0x1]
      %v521 = vsel %vm510, 0, %v520
      %522 = vst [vmem:[#allocation2 + $0x24] sm:$0x1] %v521
      %v523 = vld [vmem:[#allocation2 + $0x30] sm:$0x1]
      %v524 = vsel %vm510, 0, %v523
      %525 = vst [vmem:[#allocation2 + $0x30] sm:$0x1] %v524
      %v526 = vld [vmem:[#allocation2 + $0x3c] sm:$0x1]
      %v527 = vsel %vm510, 0, %v526
      %528 = vst [vmem:[#allocation2 + $0x3c] sm:$0x1] %v527
      %v529 = vld [vmem:[#allocation2 + $0x48] sm:$0x1]
      %v530 = vsel %vm510, 0, %v529
      %531 = vst [vmem:[#allocation2 + $0x48] sm:$0x1] %v530
      %v532 = vld [vmem:[#allocation2 + $0x54] sm:$0x1]
      %v533 = vsel %vm510, 0, %v532
      %534 = vst [vmem:[#allocation2 + $0x54] sm:$0x1] %v533
      %v535 = vld [vmem:[#allocation2 + $0x60] sm:$0x1]
      %v536 = vsel %vm510, 0, %v535
      %537 = vst [vmem:[#allocation2 + $0x60] sm:$0x1] %v536
      %v538 = vld [vmem:[#allocation2 + $0x6c] sm:$0x1]
      %v539 = vsel %vm510, 0, %v538
      %540 = vst [vmem:[#allocation2 + $0x6c] sm:$0x1] %v539
      %v541 = vld [vmem:[#allocation2 + $0x78] sm:$0x1]
      %v542 = vsel %vm510, 0, %v541
      %543 = vst [vmem:[#allocation2 + $0x78] sm:$0x1] %v542
      %v544 = vld [vmem:[#allocation2 + $0x84] sm:$0x1]
      %v545 = vsel %vm510, 0, %v544
      %546 = vst [vmem:[#allocation2 + $0x84] sm:$0x1] %v545
      %v547 = vld [vmem:[#allocation2 + $0x90] sm:$0x1]
      %v548 = vsel %vm510, 0, %v547
      %549 = vst [vmem:[#allocation2 + $0x90] sm:$0x1] %v548
      %v550 = vld [vmem:[#allocation2 + $0x9c] sm:$0x1]
      %v551 = vsel %vm510, 0, %v550
      %552 = vst [vmem:[#allocation2 + $0x9c] sm:$0x1] %v551
      %v553 = vld [vmem:[#allocation2 + $0xa8] sm:$0x1]
      %v554 = vsel %vm510, 0, %v553
      %555 = vst [vmem:[#allocation2 + $0xa8] sm:$0x1] %v554
      %v556 = vld [vmem:[#allocation2 + $0xb4] sm:$0x1]
      %v557 = vsel %vm510, 0, %v556
      %558 = vst [vmem:[#allocation2 + $0xb4] sm:$0x1] %v557
      %v559 = vld [vmem:[#allocation2 + $0xc0] sm:$0x1]
      %v560 = vsel %vm510, 0, %v559
      %561 = vst [vmem:[#allocation2 + $0xc0] sm:$0x1] %v560
      %v562 = vld [vmem:[#allocation2 + $0xcc] sm:$0x1]
      %v563 = vsel %vm510, 0, %v562
      %564 = vst [vmem:[#allocation2 + $0xcc] sm:$0x1] %v563
      %vm565 = vsmask.f32 7938
      %vm566 = vmand %vm508, %vm565
      %v567 = vld [vmem:[#allocation2 + $0x8] sm:$0x1]
      %v568 = vsel %vm566, 0, %v567
      %569 = vst [vmem:[#allocation2 + $0x8] sm:$0x1] %v568
      %v570 = vld [vmem:[#allocation2 + $0x14] sm:$0x1]
      %v571 = vsel %vm566, 0, %v570
      %572 = vst [vmem:[#allocation2 + $0x14] sm:$0x1] %v571
      %v573 = vld [vmem:[#allocation2 + $0x20] sm:$0x1]
      %v574 = vsel %vm566, 0, %v573
      %575 = vst [vmem:[#allocation2 + $0x20] sm:$0x1] %v574
      %v576 = vld [vmem:[#allocation2 + $0x2c] sm:$0x1]
      %v577 = vsel %vm566, 0, %v576
      %578 = vst [vmem:[#allocation2 + $0x2c] sm:$0x1] %v577
      %v579 = vld [vmem:[#allocation2 + $0x38] sm:$0x1]
      %v580 = vsel %vm566, 0, %v579
      %581 = vst [vmem:[#allocation2 + $0x38] sm:$0x1] %v580
      %v582 = vld [vmem:[#allocation2 + $0x44] sm:$0x1]
      %v583 = vsel %vm566, 0, %v582
      %584 = vst [vmem:[#allocation2 + $0x44] sm:$0x1] %v583
      %v585 = vld [vmem:[#allocation2 + $0x50] sm:$0x1]
      %v586 = vsel %vm566, 0, %v585
      %587 = vst [vmem:[#allocation2 + $0x50] sm:$0x1] %v586
      %v588 = vld [vmem:[#allocation2 + $0x5c] sm:$0x1]
      %v589 = vsel %vm566, 0, %v588
      %590 = vst [vmem:[#allocation2 + $0x5c] sm:$0x1] %v589
      %v591 = vld [vmem:[#allocation2 + $0x68] sm:$0x1]
      %v592 = vsel %vm566, 0, %v591
      %593 = vst [vmem:[#allocation2 + $0x68] sm:$0x1] %v592
      %v594 = vld [vmem:[#allocation2 + $0x74] sm:$0x1]
      %v595 = vsel %vm566, 0, %v594
      %596 = vst [vmem:[#allocation2 + $0x74] sm:$0x1] %v595
      %v597 = vld [vmem:[#allocation2 + $0x80] sm:$0x1]
      %v598 = vsel %vm566, 0, %v597
      %599 = vst [vmem:[#allocation2 + $0x80] sm:$0x1] %v598
      %v600 = vld [vmem:[#allocation2 + $0x8c] sm:$0x1]
      %v601 = vsel %vm566, 0, %v600
      %602 = vst [vmem:[#allocation2 + $0x8c] sm:$0x1] %v601
      %v603 = vld [vmem:[#allocation2 + $0x98] sm:$0x1]
      %v604 = vsel %vm566, 0, %v603
      %605 = vst [vmem:[#allocation2 + $0x98] sm:$0x1] %v604
      %v606 = vld [vmem:[#allocation2 + $0xa4] sm:$0x1]
      %v607 = vsel %vm566, 0, %v606
      %608 = vst [vmem:[#allocation2 + $0xa4] sm:$0x1] %v607
      %v609 = vld [vmem:[#allocation2 + $0xb0] sm:$0x1]
      %v610 = vsel %vm566, 0, %v609
      %611 = vst [vmem:[#allocation2 + $0xb0] sm:$0x1] %v610
      %v612 = vld [vmem:[#allocation2 + $0xbc] sm:$0x1]
      %v613 = vsel %vm566, 0, %v612
      %614 = vst [vmem:[#allocation2 + $0xbc] sm:$0x1] %v613
      %v615 = vld [vmem:[#allocation2 + $0xc8] sm:$0x1]
      %v616 = vsel %vm566, 0, %v615
      %617 = vst [vmem:[#allocation2 + $0xc8] sm:$0x1] %v616
      %v618 = vld [vmem:[#allocation2 + $0xd4] sm:$0x1]
      %v619 = vsel %vm566, 0, %v618
      %620 = vst [vmem:[#allocation2 + $0xd4] sm:$0x1] %v619
      %v621 = vld [vmem:[%s448] sm:$0xf]
      %v622 = vld [vmem:[%s448 + $0x4] sm:$0xf]
      %v623 = vld [vmem:[%s448 + $0x8] sm:$0xf]
      %v624 = vld [vmem:[%s448 + $0xc] sm:$0xf]
      %v625 = vld [vmem:[%s448 + $0x10] sm:$0xf]
      %v626 = vld [vmem:[%s448 + $0x14] sm:$0xf]
      %v627 = vld [vmem:[%s448 + $0x18] sm:$0xf]
      %v628 = vld [vmem:[%s448 + $0x1c] sm:$0xf]
      %v629 = vld [vmem:[%s448 + $0x20] sm:$0xf]
      %v630 = vld [vmem:[%s448 + $0x24] sm:$0xf]
      %v631 = vld [vmem:[%s448 + $0x28] sm:$0xf]
      %v632 = vld [vmem:[%s448 + $0x2c] sm:$0xf]
      %v633 = vld [vmem:[%s448 + $0x30] sm:$0xf]
      %v634 = vld [vmem:[%s448 + $0x34] sm:$0xf]
      %v635 = vld [vmem:[%s448 + $0x38] sm:$0xf]
      %v636 = vld [vmem:[%s448 + $0x3c] sm:$0xf]
      %v637 = vld [vmem:[%s448 + $0x40] sm:$0xf]
      %v638 = vld [vmem:[%s448 + $0x44] sm:$0xf]
      %v639 = vld [vmem:[%s448 + $0x48] sm:$0xf]
      %v640 = vld [vmem:[%s448 + $0x4c] sm:$0xf]
      %v641 = vld [vmem:[%s448 + $0x50] sm:$0xf]
      %v642 = vld [vmem:[%s448 + $0x54] sm:$0xf]
      %v643 = vld [vmem:[%s448 + $0x58] sm:$0xf]
      %v644 = vld [vmem:[%s448 + $0x5c] sm:$0xf]
      %v645 = vld [vmem:[%s448 + $0x60] sm:$0xf]
      %v646 = vld [vmem:[%s448 + $0x64] sm:$0xf]
      %v647 = vld [vmem:[%s448 + $0x68] sm:$0xf]
      %v648 = vld [vmem:[%s448 + $0x6c] sm:$0xf]
      %v649 = vld [vmem:[%s448 + $0x70] sm:$0xf]
      %v650 = vld [vmem:[%s448 + $0x74] sm:$0xf]
      %v651 = vld [vmem:[%s448 + $0x78] sm:$0xf]
      %v652 = vld [vmem:[%s448 + $0x7c] sm:$0xf]
      %v653 = vunpack.c.l.bf16 %v621
      %v654 = vunpack.c.l.bf16 %v622
      %v655 = vunpack.c.l.bf16 %v623
      %v656 = vunpack.c.l.bf16 %v624
      %v657 = vunpack.c.l.bf16 %v625
      %v658 = vunpack.c.l.bf16 %v626
      %v659 = vunpack.c.l.bf16 %v627
      %v660 = vunpack.c.l.bf16 %v628
      %v661 = vunpack.c.l.bf16 %v629
      %v662 = vunpack.c.l.bf16 %v630
      %v663 = vunpack.c.l.bf16 %v631
      %v664 = vunpack.c.l.bf16 %v632
      %v665 = vunpack.c.l.bf16 %v633
      %v666 = vunpack.c.l.bf16 %v634
      %v667 = vunpack.c.l.bf16 %v635
      %v668 = vunpack.c.l.bf16 %v636
      %v669 = vunpack.c.l.bf16 %v637
      %v670 = vunpack.c.l.bf16 %v638
      %v671 = vunpack.c.l.bf16 %v639
      %v672 = vunpack.c.l.bf16 %v640
      %v673 = vunpack.c.l.bf16 %v641
      %v674 = vunpack.c.l.bf16 %v642
      %v675 = vunpack.c.l.bf16 %v643
      %v676 = vunpack.c.l.bf16 %v644
      %v677 = vunpack.c.l.bf16 %v645
      %v678 = vunpack.c.l.bf16 %v646
      %v679 = vunpack.c.l.bf16 %v647
      %v680 = vunpack.c.l.bf16 %v648
      %v681 = vunpack.c.l.bf16 %v649
      %v682 = vunpack.c.l.bf16 %v650
      %v683 = vunpack.c.l.bf16 %v651
      %v684 = vunpack.c.l.bf16 %v652
      %v685 = vld [vmem:[%s4] sm:$0x1]
      %v687 = vperm.slane %v685, 0
      %v689 = vmul.f32 %v653, %v687
      %v690 = vmul.f32 %v654, %v687
      %v691 = vmul.f32 %v655, %v687
      %v692 = vmul.f32 %v656, %v687
      %v693 = vmul.f32 %v657, %v687
      %v694 = vmul.f32 %v658, %v687
      %v695 = vmul.f32 %v659, %v687
      %v696 = vmul.f32 %v660, %v687
      %v697 = vmul.f32 %v661, %v687
      %v698 = vmul.f32 %v662, %v687
      %v699 = vmul.f32 %v663, %v687
      %v700 = vmul.f32 %v664, %v687
      %v701 = vmul.f32 %v665, %v687
      %v702 = vmul.f32 %v666, %v687
      %v703 = vmul.f32 %v667, %v687
      %v704 = vmul.f32 %v668, %v687
      %v705 = vmul.f32 %v669, %v687
      %v706 = vmul.f32 %v670, %v687
      %v707 = vmul.f32 %v671, %v687
      %v708 = vmul.f32 %v672, %v687
      %v709 = vmul.f32 %v673, %v687
      %v710 = vmul.f32 %v674, %v687
      %v711 = vmul.f32 %v675, %v687
      %v712 = vmul.f32 %v676, %v687
      %v713 = vmul.f32 %v677, %v687
      %v714 = vmul.f32 %v678, %v687
      %v715 = vmul.f32 %v679, %v687
      %v716 = vmul.f32 %v680, %v687
      %v717 = vmul.f32 %v681, %v687
      %v718 = vmul.f32 %v682, %v687
      %v719 = vmul.f32 %v683, %v687
      %v720 = vmul.f32 %v684, %v687
      %v721 = vld [vmem:[%s5] sm:$0x1]
      %v723 = vperm.slane %v721, 0
      %v725 = vadd.f32 %v689, %v723
      %v726 = vadd.f32 %v690, %v723
      %v727 = vadd.f32 %v691, %v723
      %v728 = vadd.f32 %v692, %v723
      %v729 = vadd.f32 %v693, %v723
      %v730 = vadd.f32 %v694, %v723
      %v731 = vadd.f32 %v695, %v723
      %v732 = vadd.f32 %v696, %v723
      %v733 = vadd.f32 %v697, %v723
      %v734 = vadd.f32 %v698, %v723
      %v735 = vadd.f32 %v699, %v723
      %v736 = vadd.f32 %v700, %v723
      %v737 = vadd.f32 %v701, %v723
      %v738 = vadd.f32 %v702, %v723
      %v739 = vadd.f32 %v703, %v723
      %v740 = vadd.f32 %v704, %v723
      %v741 = vadd.f32 %v705, %v723
      %v742 = vadd.f32 %v706, %v723
      %v743 = vadd.f32 %v707, %v723
      %v744 = vadd.f32 %v708, %v723
      %v745 = vadd.f32 %v709, %v723
      %v746 = vadd.f32 %v710, %v723
      %v747 = vadd.f32 %v711, %v723
      %v748 = vadd.f32 %v712, %v723
      %v749 = vadd.f32 %v713, %v723
      %v750 = vadd.f32 %v714, %v723
      %v751 = vadd.f32 %v715, %v723
      %v752 = vadd.f32 %v716, %v723
      %v753 = vadd.f32 %v717, %v723
      %v754 = vadd.f32 %v718, %v723
      %v755 = vadd.f32 %v719, %v723
      %v756 = vadd.f32 %v720, %v723
      %v757 = vmax.f32 %v725, 0.0
      %v758 = vmax.f32 %v726, 0.0
      %v759 = vmax.f32 %v727, 0.0
      %v760 = vmax.f32 %v728, 0.0
      %v761 = vmax.f32 %v729, 0.0
      %v762 = vmax.f32 %v730, 0.0
      %v763 = vmax.f32 %v731, 0.0
      %v764 = vmax.f32 %v732, 0.0
      %v765 = vmax.f32 %v733, 0.0
      %v766 = vmax.f32 %v734, 0.0
      %v767 = vmax.f32 %v735, 0.0
      %v768 = vmax.f32 %v736, 0.0
      %v769 = vmax.f32 %v737, 0.0
      %v770 = vmax.f32 %v738, 0.0
      %v771 = vmax.f32 %v739, 0.0
      %v772 = vmax.f32 %v740, 0.0
      %v773 = vmax.f32 %v741, 0.0
      %v774 = vmax.f32 %v742, 0.0
      %v775 = vmax.f32 %v743, 0.0
      %v776 = vmax.f32 %v744, 0.0
      %v777 = vmax.f32 %v745, 0.0
      %v778 = vmax.f32 %v746, 0.0
      %v779 = vmax.f32 %v747, 0.0
      %v780 = vmax.f32 %v748, 0.0
      %v781 = vmax.f32 %v749, 0.0
      %v782 = vmax.f32 %v750, 0.0
      %v783 = vmax.f32 %v751, 0.0
      %v784 = vmax.f32 %v752, 0.0
      %v785 = vmax.f32 %v753, 0.0
      %v786 = vmax.f32 %v754, 0.0
      %v787 = vmax.f32 %v755, 0.0
      %v788 = vmax.f32 %v756, 0.0
      %v789 = vpack.c.bf16 %v757, %v757
      %v790 = vpack.c.bf16 %v758, %v758
      %v791 = vpack.c.bf16 %v759, %v759
      %v792 = vpack.c.bf16 %v760, %v760
      %v793 = vpack.c.bf16 %v761, %v761
      %v794 = vpack.c.bf16 %v762, %v762
      %v795 = vpack.c.bf16 %v763, %v763
      %v796 = vpack.c.bf16 %v764, %v764
      %v797 = vpack.c.bf16 %v765, %v765
      %v798 = vpack.c.bf16 %v766, %v766
      %v799 = vpack.c.bf16 %v767, %v767
      %v800 = vpack.c.bf16 %v768, %v768
      %v801 = vpack.c.bf16 %v769, %v769
      %v802 = vpack.c.bf16 %v770, %v770
      %v803 = vpack.c.bf16 %v771, %v771
      %v804 = vpack.c.bf16 %v772, %v772
      %v805 = vpack.c.bf16 %v773, %v773
      %v806 = vpack.c.bf16 %v774, %v774
      %v807 = vpack.c.bf16 %v775, %v775
      %v808 = vpack.c.bf16 %v776, %v776
      %v809 = vpack.c.bf16 %v777, %v777
      %v810 = vpack.c.bf16 %v778, %v778
      %v811 = vpack.c.bf16 %v779, %v779
      %v812 = vpack.c.bf16 %v780, %v780
      %v813 = vpack.c.bf16 %v781, %v781
      %v814 = vpack.c.bf16 %v782, %v782
      %v815 = vpack.c.bf16 %v783, %v783
      %v816 = vpack.c.bf16 %v784, %v784
      %v817 = vpack.c.bf16 %v785, %v785
      %v818 = vpack.c.bf16 %v786, %v786
      %v819 = vpack.c.bf16 %v787, %v787
      %v820 = vpack.c.bf16 %v788, %v788
      %vm821 = vsmask.f32 4368
      %vm822 = vmor %vm509, %vm821
      %v824 = vshrl.u32 %v789, 16
      %v826 = vrot.slane %v824, 7
      %v827 = vshll.u32 %v789, 16
      %v829 = vor.u32 %v826, %v827
      %v830 = vrot.slane %v826, 4
      %v832 = vshrl.u32 %v790, 16
      %v834 = vrot.slane %v832, 7
      %v835 = vshll.u32 %v790, 16
      %v837 = vor.u32 %v834, %v835
      %v838 = vsel %vm822, %v830, %v837
      %v839 = vrot.slane %v834, 4
      %v841 = vshrl.u32 %v791, 16
      %v843 = vrot.slane %v841, 7
      %v844 = vshll.u32 %v791, 16
      %v846 = vor.u32 %v843, %v844
      %v847 = vrot.slane %v843, 4
      %v849 = vshrl.u32 %v792, 16
      %v851 = vrot.slane %v849, 7
      %v852 = vshll.u32 %v792, 16
      %v854 = vor.u32 %v851, %v852
      %v855 = vsel %vm822, %v847, %v854
      %v856 = vrot.slane %v851, 4
      %v858 = vshrl.u32 %v793, 16
      %v860 = vrot.slane %v858, 7
      %v861 = vshll.u32 %v793, 16
      %v863 = vor.u32 %v860, %v861
      %v864 = vrot.slane %v860, 4
      %v866 = vshrl.u32 %v794, 16
      %v868 = vrot.slane %v866, 7
      %v869 = vshll.u32 %v794, 16
      %v871 = vor.u32 %v868, %v869
      %v872 = vsel %vm822, %v864, %v871
      %v873 = vrot.slane %v868, 4
      %v875 = vshrl.u32 %v795, 16
      %v877 = vrot.slane %v875, 7
      %v878 = vshll.u32 %v795, 16
      %v880 = vor.u32 %v877, %v878
      %v881 = vrot.slane %v877, 4
      %v883 = vshrl.u32 %v796, 16
      %v885 = vrot.slane %v883, 7
      %v886 = vshll.u32 %v796, 16
      %v888 = vor.u32 %v885, %v886
      %v889 = vsel %vm822, %v881, %v888
      %v890 = vrot.slane %v885, 4
      %v892 = vshrl.u32 %v797, 16
      %v894 = vrot.slane %v892, 7
      %v895 = vshll.u32 %v797, 16
      %v897 = vor.u32 %v894, %v895
      %v898 = vrot.slane %v894, 4
      %v900 = vshrl.u32 %v798, 16
      %v902 = vrot.slane %v900, 7
      %v903 = vshll.u32 %v798, 16
      %v905 = vor.u32 %v902, %v903
      %v906 = vsel %vm822, %v898, %v905
      %v907 = vrot.slane %v902, 4
      %v909 = vshrl.u32 %v799, 16
      %v911 = vrot.slane %v909, 7
      %v912 = vshll.u32 %v799, 16
      %v914 = vor.u32 %v911, %v912
      %v915 = vrot.slane %v911, 4
      %v917 = vshrl.u32 %v800, 16
      %v919 = vrot.slane %v917, 7
      %v920 = vshll.u32 %v800, 16
      %v922 = vor.u32 %v919, %v920
      %v923 = vsel %vm822, %v915, %v922
      %v924 = vrot.slane %v919, 4
      %v926 = vshrl.u32 %v801, 16
      %v928 = vrot.slane %v926, 7
      %v929 = vshll.u32 %v801, 16
      %v931 = vor.u32 %v928, %v929
      %v932 = vrot.slane %v928, 4
      %v934 = vshrl.u32 %v802, 16
      %v936 = vrot.slane %v934, 7
      %v937 = vshll.u32 %v802, 16
      %v939 = vor.u32 %v936, %v937
      %v940 = vsel %vm822, %v932, %v939
      %v941 = vrot.slane %v936, 4
      %v943 = vshrl.u32 %v803, 16
      %v945 = vrot.slane %v943, 7
      %v946 = vshll.u32 %v803, 16
      %v948 = vor.u32 %v945, %v946
      %v949 = vrot.slane %v945, 4
      %v951 = vshrl.u32 %v804, 16
      %v953 = vrot.slane %v951, 7
      %v954 = vshll.u32 %v804, 16
      %v956 = vor.u32 %v953, %v954
      %v957 = vsel %vm822, %v949, %v956
      %v958 = vrot.slane %v953, 4
      %v960 = vshrl.u32 %v805, 16
      %v962 = vrot.slane %v960, 7
      %v963 = vshll.u32 %v805, 16
      %v965 = vor.u32 %v962, %v963
      %v966 = vrot.slane %v962, 4
      %v968 = vshrl.u32 %v806, 16
      %v970 = vrot.slane %v968, 7
      %v971 = vshll.u32 %v806, 16
      %v973 = vor.u32 %v970, %v971
      %v974 = vsel %vm822, %v966, %v973
      %v975 = vrot.slane %v970, 4
      %v977 = vshrl.u32 %v807, 16
      %v979 = vrot.slane %v977, 7
      %v980 = vshll.u32 %v807, 16
      %v982 = vor.u32 %v979, %v980
      %v983 = vrot.slane %v979, 4
      %v985 = vshrl.u32 %v808, 16
      %v987 = vrot.slane %v985, 7
      %v988 = vshll.u32 %v808, 16
      %v990 = vor.u32 %v987, %v988
      %v991 = vsel %vm822, %v983, %v990
      %v992 = vrot.slane %v987, 4
      %v994 = vshrl.u32 %v809, 16
      %v996 = vrot.slane %v994, 7
      %v997 = vshll.u32 %v809, 16
      %v999 = vor.u32 %v996, %v997
      %v1000 = vrot.slane %v996, 4
      %v1002 = vshrl.u32 %v810, 16
      %v1004 = vrot.slane %v1002, 7
      %v1005 = vshll.u32 %v810, 16
      %v1007 = vor.u32 %v1004, %v1005
      %v1008 = vsel %vm822, %v1000, %v1007
      %v1009 = vrot.slane %v1004, 4
      %v1011 = vshrl.u32 %v811, 16
      %v1013 = vrot.slane %v1011, 7
      %v1014 = vshll.u32 %v811, 16
      %v1016 = vor.u32 %v1013, %v1014
      %v1017 = vrot.slane %v1013, 4
      %v1019 = vshrl.u32 %v812, 16
      %v1021 = vrot.slane %v1019, 7
      %v1022 = vshll.u32 %v812, 16
      %v1024 = vor.u32 %v1021, %v1022
      %v1025 = vsel %vm822, %v1017, %v1024
      %v1026 = vrot.slane %v1021, 4
      %v1028 = vshrl.u32 %v813, 16
      %v1030 = vrot.slane %v1028, 7
      %v1031 = vshll.u32 %v813, 16
      %v1033 = vor.u32 %v1030, %v1031
      %v1034 = vrot.slane %v1030, 4
      %v1036 = vshrl.u32 %v814, 16
      %v1038 = vrot.slane %v1036, 7
      %v1039 = vshll.u32 %v814, 16
      %v1041 = vor.u32 %v1038, %v1039
      %v1042 = vsel %vm822, %v1034, %v1041
      %v1043 = vrot.slane %v1038, 4
      %v1045 = vshrl.u32 %v815, 16
      %v1047 = vrot.slane %v1045, 7
      %v1048 = vshll.u32 %v815, 16
      %v1050 = vor.u32 %v1047, %v1048
      %v1051 = vrot.slane %v1047, 4
      %v1053 = vshrl.u32 %v816, 16
      %v1055 = vrot.slane %v1053, 7
      %v1056 = vshll.u32 %v816, 16
      %v1058 = vor.u32 %v1055, %v1056
      %v1059 = vsel %vm822, %v1051, %v1058
      %v1060 = vrot.slane %v1055, 4
      %v1062 = vshrl.u32 %v817, 16
      %v1064 = vrot.slane %v1062, 7
      %v1065 = vshll.u32 %v817, 16
      %v1067 = vor.u32 %v1064, %v1065
      %v1068 = vrot.slane %v1064, 4
      %v1070 = vshrl.u32 %v818, 16
      %v1072 = vrot.slane %v1070, 7
      %v1073 = vshll.u32 %v818, 16
      %v1075 = vor.u32 %v1072, %v1073
      %v1076 = vsel %vm822, %v1068, %v1075
      %v1077 = vrot.slane %v1072, 4
      %v1079 = vshrl.u32 %v819, 16
      %v1081 = vrot.slane %v1079, 7
      %v1082 = vshll.u32 %v819, 16
      %v1084 = vor.u32 %v1081, %v1082
      %v1085 = vrot.slane %v1081, 4
      %v1087 = vshrl.u32 %v820, 16
      %v1089 = vrot.slane %v1087, 7
      %v1090 = vshll.u32 %v820, 16
      %v1092 = vor.u32 %v1089, %v1090
      %v1093 = vsel %vm822, %v1085, %v1092
      %v1094 = vrot.slane %v1089, 4
      %s1143 = scalar_lea.vmem [#allocation2], 12
      %vm1144 = vcmask 1043456
      %vm1145 = vmand %vm1144, %vm565
      %v1146 = vld [vmem:[%s1143] sm:$0xf]
      %v1147 = vsel %vm1145, %v829, %v1146
      %1148 = vst [vmem:[%s1143] sm:$0xf] %v1147
      %1149 = vst [vmem:[%s1143 + $0x4] sm:$0xf] %v838
      %v1150 = vld [vmem:[%s1143 + $0x8] sm:$0x1]
      %v1151 = vsel %vm510, %v839, %v1150
      %1152 = vst [vmem:[%s1143 + $0x8] sm:$0x1] %v1151
      %v1153 = vld [vmem:[%s1143 + $0xc] sm:$0xf]
      %v1154 = vsel %vm1145, %v846, %v1153
      %1155 = vst [vmem:[%s1143 + $0xc] sm:$0xf] %v1154
      %1156 = vst [vmem:[%s1143 + $0x10] sm:$0xf] %v855
      %v1157 = vld [vmem:[%s1143 + $0x14] sm:$0x1]
      %v1158 = vsel %vm510, %v856, %v1157
      %1159 = vst [vmem:[%s1143 + $0x14] sm:$0x1] %v1158
      %v1160 = vld [vmem:[%s1143 + $0x18] sm:$0xf]
      %v1161 = vsel %vm1145, %v863, %v1160
      %1162 = vst [vmem:[%s1143 + $0x18] sm:$0xf] %v1161
      %1163 = vst [vmem:[%s1143 + $0x1c] sm:$0xf] %v872
      %v1164 = vld [vmem:[%s1143 + $0x20] sm:$0x1]
      %v1165 = vsel %vm510, %v873, %v1164
      %1166 = vst [vmem:[%s1143 + $0x20] sm:$0x1] %v1165
      %v1167 = vld [vmem:[%s1143 + $0x24] sm:$0xf]
      %v1168 = vsel %vm1145, %v880, %v1167
      %1169 = vst [vmem:[%s1143 + $0x24] sm:$0xf] %v1168
      %1170 = vst [vmem:[%s1143 + $0x28] sm:$0xf] %v889
      %v1171 = vld [vmem:[%s1143 + $0x2c] sm:$0x1]
      %v1172 = vsel %vm510, %v890, %v1171
      %1173 = vst [vmem:[%s1143 + $0x2c] sm:$0x1] %v1172
      %v1174 = vld [vmem:[%s1143 + $0x30] sm:$0xf]
      %v1175 = vsel %vm1145, %v897, %v1174
      %1176 = vst [vmem:[%s1143 + $0x30] sm:$0xf] %v1175
      %1177 = vst [vmem:[%s1143 + $0x34] sm:$0xf] %v906
      %v1178 = vld [vmem:[%s1143 + $0x38] sm:$0x1]
      %v1179 = vsel %vm510, %v907, %v1178
      %1180 = vst [vmem:[%s1143 + $0x38] sm:$0x1] %v1179
      %v1181 = vld [vmem:[%s1143 + $0x3c] sm:$0xf]
      %v1182 = vsel %vm1145, %v914, %v1181
      %1183 = vst [vmem:[%s1143 + $0x3c] sm:$0xf] %v1182
      %1184 = vst [vmem:[%s1143 + $0x40] sm:$0xf] %v923
      %v1185 = vld [vmem:[%s1143 + $0x44] sm:$0x1]
      %v1186 = vsel %vm510, %v924, %v1185
      %1187 = vst [vmem:[%s1143 + $0x44] sm:$0x1] %v1186
      %v1188 = vld [vmem:[%s1143 + $0x48] sm:$0xf]
      %v1189 = vsel %vm1145, %v931, %v1188
      %1190 = vst [vmem:[%s1143 + $0x48] sm:$0xf] %v1189
      %1191 = vst [vmem:[%s1143 + $0x4c] sm:$0xf] %v940
      %v1192 = vld [vmem:[%s1143 + $0x50] sm:$0x1]
      %v1193 = vsel %vm510, %v941, %v1192
      %1194 = vst [vmem:[%s1143 + $0x50] sm:$0x1] %v1193
      %v1195 = vld [vmem:[%s1143 + $0x54] sm:$0xf]
      %v1196 = vsel %vm1145, %v948, %v1195
      %1197 = vst [vmem:[%s1143 + $0x54] sm:$0xf] %v1196
      %1198 = vst [vmem:[%s1143 + $0x58] sm:$0xf] %v957
      %v1199 = vld [vmem:[%s1143 + $0x5c] sm:$0x1]
      %v1200 = vsel %vm510, %v958, %v1199
      %1201 = vst [vmem:[%s1143 + $0x5c] sm:$0x1] %v1200
      %v1202 = vld [vmem:[%s1143 + $0x60] sm:$0xf]
      %v1203 = vsel %vm1145, %v965, %v1202
      %1204 = vst [vmem:[%s1143 + $0x60] sm:$0xf] %v1203
      %1205 = vst [vmem:[%s1143 + $0x64] sm:$0xf] %v974
      %v1206 = vld [vmem:[%s1143 + $0x68] sm:$0x1]
      %v1207 = vsel %vm510, %v975, %v1206
      %1208 = vst [vmem:[%s1143 + $0x68] sm:$0x1] %v1207
      %v1209 = vld [vmem:[%s1143 + $0x6c] sm:$0xf]
      %v1210 = vsel %vm1145, %v982, %v1209
      %1211 = vst [vmem:[%s1143 + $0x6c] sm:$0xf] %v1210
      %1212 = vst [vmem:[%s1143 + $0x70] sm:$0xf] %v991
      %v1213 = vld [vmem:[%s1143 + $0x74] sm:$0x1]
      %v1214 = vsel %vm510, %v992, %v1213
      %1215 = vst [vmem:[%s1143 + $0x74] sm:$0x1] %v1214
      %v1216 = vld [vmem:[%s1143 + $0x78] sm:$0xf]
      %v1217 = vsel %vm1145, %v999, %v1216
      %1218 = vst [vmem:[%s1143 + $0x78] sm:$0xf] %v1217
      %1219 = vst [vmem:[%s1143 + $0x7c] sm:$0xf] %v1008
      %v1220 = vld [vmem:[%s1143 + $0x80] sm:$0x1]
      %v1221 = vsel %vm510, %v1009, %v1220
      %1222 = vst [vmem:[%s1143 + $0x80] sm:$0x1] %v1221
      %v1223 = vld [vmem:[%s1143 + $0x84] sm:$0xf]
      %v1224 = vsel %vm1145, %v1016, %v1223
      %1225 = vst [vmem:[%s1143 + $0x84] sm:$0xf] %v1224
      %1226 = vst [vmem:[%s1143 + $0x88] sm:$0xf] %v1025
      %v1227 = vld [vmem:[%s1143 + $0x8c] sm:$0x1]
      %v1228 = vsel %vm510, %v1026, %v1227
      %1229 = vst [vmem:[%s1143 + $0x8c] sm:$0x1] %v1228
      %v1230 = vld [vmem:[%s1143 + $0x90] sm:$0xf]
      %v1231 = vsel %vm1145, %v1033, %v1230
      %1232 = vst [vmem:[%s1143 + $0x90] sm:$0xf] %v1231
      %1233 = vst [vmem:[%s1143 + $0x94] sm:$0xf] %v1042
      %v1234 = vld [vmem:[%s1143 + $0x98] sm:$0x1]
      %v1235 = vsel %vm510, %v1043, %v1234
      %1236 = vst [vmem:[%s1143 + $0x98] sm:$0x1] %v1235
      %v1237 = vld [vmem:[%s1143 + $0x9c] sm:$0xf]
      %v1238 = vsel %vm1145, %v1050, %v1237
      %1239 = vst [vmem:[%s1143 + $0x9c] sm:$0xf] %v1238
      %1240 = vst [vmem:[%s1143 + $0xa0] sm:$0xf] %v1059
      %v1241 = vld [vmem:[%s1143 + $0xa4] sm:$0x1]
      %v1242 = vsel %vm510, %v1060, %v1241
      %1243 = vst [vmem:[%s1143 + $0xa4] sm:$0x1] %v1242
      %v1244 = vld [vmem:[%s1143 + $0xa8] sm:$0xf]
      %v1245 = vsel %vm1145, %v1067, %v1244
      %1246 = vst [vmem:[%s1143 + $0xa8] sm:$0xf] %v1245
      %1247 = vst [vmem:[%s1143 + $0xac] sm:$0xf] %v1076
      %v1248 = vld [vmem:[%s1143 + $0xb0] sm:$0x1]
      %v1249 = vsel %vm510, %v1077, %v1248
      %1250 = vst [vmem:[%s1143 + $0xb0] sm:$0x1] %v1249
      %v1251 = vld [vmem:[%s1143 + $0xb4] sm:$0xf]
      %v1252 = vsel %vm1145, %v1084, %v1251
      %1253 = vst [vmem:[%s1143 + $0xb4] sm:$0xf] %v1252
      %1254 = vst [vmem:[%s1143 + $0xb8] sm:$0xf] %v1093
      %v1255 = vld [vmem:[%s1143 + $0xbc] sm:$0x1]
      %v1256 = vsel %vm510, %v1094, %v1255
      %1257 = vst [vmem:[%s1143 + $0xbc] sm:$0x1] %v1256
      %p1258 = scmp.eq.s32.totalorder %s25, 0
      // Predicated region
      $region45: #{double_conv.4} parent=43 // pred_check
        %p1259 = pneg %p1258
      $region46: #{double_conv.4} parent=43 // pred_check_branch
        %1261 = sbr.rel (%p1259) target = $region48
      $region47: #{double_conv.4} parent=43 // pred_region
        %v1262 = vld [vmem:[#allocation2] sm:$0xf]
        %v1263 = vsel %vm1145, 0, %v1262
        %1264 = vst [vmem:[#allocation2] sm:$0xf] %v1263
        %1265 = vst [vmem:[#allocation2 + $0x4] sm:$0xf] 0
        %v1266 = vld [vmem:[#allocation2 + $0x8] sm:$0x1]
        %v1267 = vsel %vm510, 0, %v1266
        %1268 = vst [vmem:[#allocation2 + $0x8] sm:$0x1] %v1267
      $region48: #{double_conv.4} parent=43 // pred_fallthru
        _
      %p1269 = scmp.gt.s32.totalorder %s25, 0
      // Predicated region
      $region49: #{double_conv.4} parent=43 // pred_check
        %p1270 = pneg %p1269
      $region50: #{double_conv.4} parent=43 // pred_check_branch
        %1272 = sbr.rel (%p1270) target = $region52
      $region51: #{double_conv.4} parent=43 // pred_region
        %v1273 = vld [vmem:[%s462] sm:$0xf]
        %v1274 = vld [vmem:[%s462 + $0x4] sm:$0xf]
        %v1275 = vunpack.c.l.bf16 %v1273
        %v1276 = vunpack.c.l.bf16 %v1274
        %v1277 = vld [vmem:[%s4] sm:$0x1]
        %v1279 = vperm.slane %v1277, 0
        %v1281 = vmul.f32 %v1275, %v1279
        %v1282 = vmul.f32 %v1276, %v1279
        %v1283 = vld [vmem:[%s5] sm:$0x1]
        %v1285 = vperm.slane %v1283, 0
        %v1287 = vadd.f32 %v1281, %v1285
        %v1288 = vadd.f32 %v1282, %v1285
        %v1289 = vmax.f32 %v1287, 0.0
        %v1290 = vmax.f32 %v1288, 0.0
        %v1291 = vpack.c.bf16 %v1289, %v1289
        %v1292 = vpack.c.bf16 %v1290, %v1290
        %v1294 = vshrl.u32 %v1291, 16
        %v1296 = vrot.slane %v1294, 7
        %v1297 = vshll.u32 %v1291, 16
        %v1299 = vor.u32 %v1296, %v1297
        %v1300 = vrot.slane %v1296, 4
        %v1302 = vshrl.u32 %v1292, 16
        %v1304 = vrot.slane %v1302, 7
        %v1305 = vshll.u32 %v1292, 16
        %v1307 = vor.u32 %v1304, %v1305
        %v1308 = vsel %vm822, %v1300, %v1307
        %v1309 = vrot.slane %v1304, 4
        %v1313 = vld [vmem:[#allocation2] sm:$0xf]
        %v1314 = vsel %vm1145, %v1299, %v1313
        %1315 = vst [vmem:[#allocation2] sm:$0xf] %v1314
        %1316 = vst [vmem:[#allocation2 + $0x4] sm:$0xf] %v1308
        %v1317 = vld [vmem:[#allocation2 + $0x8] sm:$0x1]
        %v1318 = vsel %vm510, %v1309, %v1317
        %1319 = vst [vmem:[#allocation2 + $0x8] sm:$0x1] %v1318
      $region52: #{double_conv.4} parent=43 // pred_fallthru
        _
      // Predicated region
      $region53: #{double_conv.4} parent=43 // pred_check
        %p1320 = pneg %p1258
      $region54: #{double_conv.4} parent=43 // pred_check_branch
        %1322 = sbr.rel (%p1320) target = $region56
      $region55: #{double_conv.4} parent=43 // pred_region
        %s1323 = scalar_lea.vmem [#allocation2], 204
        %v1324 = vld [vmem:[%s1323] sm:$0xf]
        %v1325 = vsel %vm1145, 0, %v1324
        %1326 = vst [vmem:[%s1323] sm:$0xf] %v1325
        %1327 = vst [vmem:[%s1323 + $0x4] sm:$0xf] 0
        %v1328 = vld [vmem:[%s1323 + $0x8] sm:$0x1]
        %v1329 = vsel %vm510, 0, %v1328
        %1330 = vst [vmem:[%s1323 + $0x8] sm:$0x1] %v1329
      $region56: #{double_conv.4} parent=43 // pred_fallthru
        _
      %p1331 = scmp.lt.s32.totalorder %s25, 0
      // Predicated region
      $region57: #{double_conv.4} parent=43 // pred_check
        %p1332 = pneg %p1331
      $region58: #{double_conv.4} parent=43 // pred_check_branch
        %1334 = sbr.rel (%p1332) target = $region60
      $region59: #{double_conv.4} parent=43 // pred_region
        %v1335 = vld [vmem:[%s479] sm:$0xf]
        %v1336 = vld [vmem:[%s479 + $0x4] sm:$0xf]
        %v1337 = vunpack.c.l.bf16 %v1335
        %v1338 = vunpack.c.l.bf16 %v1336
        %v1339 = vld [vmem:[%s4] sm:$0x1]
        %v1341 = vperm.slane %v1339, 0
        %v1343 = vmul.f32 %v1337, %v1341
        %v1344 = vmul.f32 %v1338, %v1341
        %v1345 = vld [vmem:[%s5] sm:$0x1]
        %v1347 = vperm.slane %v1345, 0
        %v1349 = vadd.f32 %v1343, %v1347
        %v1350 = vadd.f32 %v1344, %v1347
        %v1351 = vmax.f32 %v1349, 0.0
        %v1352 = vmax.f32 %v1350, 0.0
        %v1353 = vpack.c.bf16 %v1351, %v1351
        %v1354 = vpack.c.bf16 %v1352, %v1352
        %v1356 = vshrl.u32 %v1353, 16
        %v1358 = vrot.slane %v1356, 7
        %v1359 = vshll.u32 %v1353, 16
        %v1361 = vor.u32 %v1358, %v1359
        %v1362 = vrot.slane %v1358, 4
        %v1364 = vshrl.u32 %v1354, 16
        %v1366 = vrot.slane %v1364, 7
        %v1367 = vshll.u32 %v1354, 16
        %v1369 = vor.u32 %v1366, %v1367
        %v1370 = vsel %vm822, %v1362, %v1369
        %v1371 = vrot.slane %v1366, 4
        %s1375 = scalar_lea.vmem [#allocation2], 204
        %v1376 = vld [vmem:[%s1375] sm:$0xf]
        %v1377 = vsel %vm1145, %v1361, %v1376
        %1378 = vst [vmem:[%s1375] sm:$0xf] %v1377
        %1379 = vst [vmem:[%s1375 + $0x4] sm:$0xf] %v1370
        %v1380 = vld [vmem:[%s1375 + $0x8] sm:$0x1]
        %v1381 = vsel %vm510, %v1371, %v1380
        %1382 = vst [vmem:[%s1375 + $0x8] sm:$0x1] %v1381
      $region60: #{double_conv.4} parent=43 // pred_fallthru
        _
      %v1383 = vld [vmem:[#allocation2] sm:$0xf]
      %v1384 = vld [vmem:[#allocation2 + $0x4] sm:$0xf]
      %v1385 = vld [vmem:[#allocation2 + $0xc] sm:$0xf]
      %v1386 = vld [vmem:[#allocation2 + $0x10] sm:$0xf]
      %v1387 = vld [vmem:[#allocation2 + $0x18] sm:$0xf]
      %v1388 = vld [vmem:[#allocation2 + $0x1c] sm:$0xf]
      %v1389 = vld [vmem:[#allocation2 + $0x24] sm:$0xf]
      %v1390 = vld [vmem:[#allocation2 + $0x28] sm:$0xf]
      %v1391 = vld [vmem:[#allocation2 + $0x30] sm:$0xf]
      %v1392 = vld [vmem:[#allocation2 + $0x34] sm:$0xf]
      %v1393 = vld [vmem:[#allocation2 + $0x3c] sm:$0xf]
      %v1394 = vld [vmem:[#allocation2 + $0x40] sm:$0xf]
      %v1395 = vld [vmem:[#allocation2 + $0x48] sm:$0xf]
      %v1396 = vld [vmem:[#allocation2 + $0x4c] sm:$0xf]
      %v1397 = vld [vmem:[#allocation2 + $0x54] sm:$0xf]
      %v1398 = vld [vmem:[#allocation2 + $0x58] sm:$0xf]
      %v1399 = vld [vmem:[#allocation2 + $0x60] sm:$0xf]
      %v1400 = vld [vmem:[#allocation2 + $0x64] sm:$0xf]
      %v1401 = vld [vmem:[#allocation2 + $0x6c] sm:$0xf]
      %v1402 = vld [vmem:[#allocation2 + $0x70] sm:$0xf]
      %v1403 = vld [vmem:[#allocation2 + $0x78] sm:$0xf]
      %v1404 = vld [vmem:[#allocation2 + $0x7c] sm:$0xf]
      %v1405 = vld [vmem:[#allocation2 + $0x84] sm:$0xf]
      %v1406 = vld [vmem:[#allocation2 + $0x88] sm:$0xf]
      %v1407 = vld [vmem:[#allocation2 + $0x90] sm:$0xf]
      %v1408 = vld [vmem:[#allocation2 + $0x94] sm:$0xf]
      %v1409 = vld [vmem:[#allocation2 + $0x9c] sm:$0xf]
      %v1410 = vld [vmem:[#allocation2 + $0xa0] sm:$0xf]
      %v1411 = vld [vmem:[#allocation2 + $0xa8] sm:$0xf]
      %v1412 = vld [vmem:[#allocation2 + $0xac] sm:$0xf]
      %v1413 = vld [vmem:[#allocation2 + $0xb4] sm:$0xf]
      %v1414 = vld [vmem:[#allocation2 + $0xb8] sm:$0xf]
      %1415 = vst [vmem:[#allocation3] sm:$0xf] %v1383
      %1416 = vst [vmem:[#allocation3 + $0x24] sm:$0xf] %v1384
      %1417 = vst [vmem:[#allocation3 + $0x48] sm:$0xf] %v1385
      %1418 = vst [vmem:[#allocation3 + $0x6c] sm:$0xf] %v1386
      %1419 = vst [vmem:[#allocation3 + $0x90] sm:$0xf] %v1387
      %1420 = vst [vmem:[#allocation3 + $0xb4] sm:$0xf] %v1388
      %1421 = vst [vmem:[#allocation3 + $0xd8] sm:$0xf] %v1389
      %1422 = vst [vmem:[#allocation3 + $0xfc] sm:$0xf] %v1390
      %1423 = vst [vmem:[#allocation3 + $0x120] sm:$0xf] %v1391
      %1424 = vst [vmem:[#allocation3 + $0x144] sm:$0xf] %v1392
      %1425 = vst [vmem:[#allocation3 + $0x168] sm:$0xf] %v1393
      %1426 = vst [vmem:[#allocation3 + $0x18c] sm:$0xf] %v1394
      %1427 = vst [vmem:[#allocation3 + $0x1b0] sm:$0xf] %v1395
      %1428 = vst [vmem:[#allocation3 + $0x1d4] sm:$0xf] %v1396
      %1429 = vst [vmem:[#allocation3 + $0x1f8] sm:$0xf] %v1397
      %1430 = vst [vmem:[#allocation3 + $0x21c] sm:$0xf] %v1398
      %1431 = vst [vmem:[#allocation3 + $0x240] sm:$0xf] %v1399
      %1432 = vst [vmem:[#allocation3 + $0x264] sm:$0xf] %v1400
      %1433 = vst [vmem:[#allocation3 + $0x288] sm:$0xf] %v1401
      %1434 = vst [vmem:[#allocation3 + $0x2ac] sm:$0xf] %v1402
      %1435 = vst [vmem:[#allocation3 + $0x2d0] sm:$0xf] %v1403
      %1436 = vst [vmem:[#allocation3 + $0x2f4] sm:$0xf] %v1404
      %1437 = vst [vmem:[#allocation3 + $0x318] sm:$0xf] %v1405
      %1438 = vst [vmem:[#allocation3 + $0x33c] sm:$0xf] %v1406
      %1439 = vst [vmem:[#allocation3 + $0x360] sm:$0xf] %v1407
      %1440 = vst [vmem:[#allocation3 + $0x384] sm:$0xf] %v1408
      %1441 = vst [vmem:[#allocation3 + $0x3a8] sm:$0xf] %v1409
      %1442 = vst [vmem:[#allocation3 + $0x3cc] sm:$0xf] %v1410
      %1443 = vst [vmem:[#allocation3 + $0x3f0] sm:$0xf] %v1411
      %1444 = vst [vmem:[#allocation3 + $0x414] sm:$0xf] %v1412
      %1445 = vst [vmem:[#allocation3 + $0x438] sm:$0xf] %v1413
      %1446 = vst [vmem:[#allocation3 + $0x45c] sm:$0xf] %v1414
      %v1447 = vld [vmem:[#allocation2] sm:$0xf]
      %v1448 = vld [vmem:[#allocation2 + $0x4] sm:$0xf]
      %v1449 = vld [vmem:[#allocation2 + $0x8] sm:$0x1]
      %v1450 = vld [vmem:[#allocation2 + $0xc] sm:$0xf]
      %v1451 = vld [vmem:[#allocation2 + $0x10] sm:$0xf]
      %v1452 = vld [vmem:[#allocation2 + $0x14] sm:$0x1]
      %v1453 = vld [vmem:[#allocation2 + $0x18] sm:$0xf]
      %v1454 = vld [vmem:[#allocation2 + $0x1c] sm:$0xf]
      %v1455 = vld [vmem:[#allocation2 + $0x20] sm:$0x1]
      %v1456 = vld [vmem:[#allocation2 + $0x24] sm:$0xf]
      %v1457 = vld [vmem:[#allocation2 + $0x28] sm:$0xf]
      %v1458 = vld [vmem:[#allocation2 + $0x2c] sm:$0x1]
      %v1459 = vld [vmem:[#allocation2 + $0x30] sm:$0xf]
      %v1460 = vld [vmem:[#allocation2 + $0x34] sm:$0xf]
      %v1461 = vld [vmem:[#allocation2 + $0x38] sm:$0x1]
      %v1462 = vld [vmem:[#allocation2 + $0x3c] sm:$0xf]
      %v1463 = vld [vmem:[#allocation2 + $0x40] sm:$0xf]
      %v1464 = vld [vmem:[#allocation2 + $0x44] sm:$0x1]
      %v1465 = vld [vmem:[#allocation2 + $0x48] sm:$0xf]
      %v1466 = vld [vmem:[#allocation2 + $0x4c] sm:$0xf]
      %v1467 = vld [vmem:[#allocation2 + $0x50] sm:$0x1]
      %v1468 = vld [vmem:[#allocation2 + $0x54] sm:$0xf]
      %v1469 = vld [vmem:[#allocation2 + $0x58] sm:$0xf]
      %v1470 = vld [vmem:[#allocation2 + $0x5c] sm:$0x1]
      %v1471 = vld [vmem:[#allocation2 + $0x60] sm:$0xf]
      %v1472 = vld [vmem:[#allocation2 + $0x64] sm:$0xf]
      %v1473 = vld [vmem:[#allocation2 + $0x68] sm:$0x1]
      %v1474 = vld [vmem:[#allocation2 + $0x6c] sm:$0xf]
      %v1475 = vld [vmem:[#allocation2 + $0x70] sm:$0xf]
      %v1476 = vld [vmem:[#allocation2 + $0x74] sm:$0x1]
      %v1477 = vld [vmem:[#allocation2 + $0x78] sm:$0xf]
      %v1478 = vld [vmem:[#allocation2 + $0x7c] sm:$0xf]
      %v1479 = vld [vmem:[#allocation2 + $0x80] sm:$0x1]
      %v1480 = vld [vmem:[#allocation2 + $0x84] sm:$0xf]
      %v1481 = vld [vmem:[#allocation2 + $0x88] sm:$0xf]
      %v1482 = vld [vmem:[#allocation2 + $0x8c] sm:$0x1]
      %v1483 = vld [vmem:[#allocation2 + $0x90] sm:$0xf]
      %v1484 = vld [vmem:[#allocation2 + $0x94] sm:$0xf]
      %v1485 = vld [vmem:[#allocation2 + $0x98] sm:$0x1]
      %v1486 = vld [vmem:[#allocation2 + $0x9c] sm:$0xf]
      %v1487 = vld [vmem:[#allocation2 + $0xa0] sm:$0xf]
      %v1488 = vld [vmem:[#allocation2 + $0xa4] sm:$0x1]
      %v1489 = vld [vmem:[#allocation2 + $0xa8] sm:$0xf]
      %v1490 = vld [vmem:[#allocation2 + $0xac] sm:$0xf]
      %v1491 = vld [vmem:[#allocation2 + $0xb0] sm:$0x1]
      %v1492 = vld [vmem:[#allocation2 + $0xb4] sm:$0xf]
      %v1493 = vld [vmem:[#allocation2 + $0xb8] sm:$0xf]
      %v1494 = vld [vmem:[#allocation2 + $0xbc] sm:$0x1]
      %vm1495 = vsmask.f32 3328
      %vm1496 = vsmask.f32 7440
      %vm1497 = vmor %vm1495, %vm1496
      %v1499 = vshrl.u32 %v1447, 16
      %v1501 = vrot.slane %v1499, 4
      %v1502 = vshll.u32 %v1447, 16
      %v1504 = vrot.slane %v1502, 5
      %v1505 = vor.u32 %v1501, %v1504
      %v1506 = vrot.slane %v1505, 4
      %v1508 = vshll.u32 %v1448, 16
      %v1510 = vrot.slane %v1508, 5
      %v1511 = vsel %vm1497, %v1506, %v1510
      %v1512 = vshrl.u32 %v1448, 16
      %v1514 = vrot.slane %v1512, 4
      %v1515 = vor.u32 %v1514, %v1510
      %v1516 = vrot.slane %v1515, 4
      %v1518 = vshll.u32 %v1449, 16
      %v1520 = vrot.slane %v1518, 5
      %v1521 = vsel %vm1497, %v1516, %v1520
      %v1523 = vshrl.u32 %v1450, 16
      %v1525 = vrot.slane %v1523, 4
      %v1526 = vshll.u32 %v1450, 16
      %v1528 = vrot.slane %v1526, 5
      %v1529 = vor.u32 %v1525, %v1528
      %v1530 = vrot.slane %v1529, 4
      %v1532 = vshll.u32 %v1451, 16
      %v1534 = vrot.slane %v1532, 5
      %v1535 = vsel %vm1497, %v1530, %v1534
      %v1536 = vshrl.u32 %v1451, 16
      %v1538 = vrot.slane %v1536, 4
      %v1539 = vor.u32 %v1538, %v1534
      %v1540 = vrot.slane %v1539, 4
      %v1542 = vshll.u32 %v1452, 16
      %v1544 = vrot.slane %v1542, 5
      %v1545 = vsel %vm1497, %v1540, %v1544
      %v1547 = vshrl.u32 %v1453, 16
      %v1549 = vrot.slane %v1547, 4
      %v1550 = vshll.u32 %v1453, 16
      %v1552 = vrot.slane %v1550, 5
      %v1553 = vor.u32 %v1549, %v1552
      %v1554 = vrot.slane %v1553, 4
      %v1556 = vshll.u32 %v1454, 16
      %v1558 = vrot.slane %v1556, 5
      %v1559 = vsel %vm1497, %v1554, %v1558
      %v1560 = vshrl.u32 %v1454, 16
      %v1562 = vrot.slane %v1560, 4
      %v1563 = vor.u32 %v1562, %v1558
      %v1564 = vrot.slane %v1563, 4
      %v1566 = vshll.u32 %v1455, 16
      %v1568 = vrot.slane %v1566, 5
      %v1569 = vsel %vm1497, %v1564, %v1568
      %v1571 = vshrl.u32 %v1456, 16
      %v1573 = vrot.slane %v1571, 4
      %v1574 = vshll.u32 %v1456, 16
      %v1576 = vrot.slane %v1574, 5
      %v1577 = vor.u32 %v1573, %v1576
      %v1578 = vrot.slane %v1577, 4
      %v1580 = vshll.u32 %v1457, 16
      %v1582 = vrot.slane %v1580, 5
      %v1583 = vsel %vm1497, %v1578, %v1582
      %v1584 = vshrl.u32 %v1457, 16
      %v1586 = vrot.slane %v1584, 4
      %v1587 = vor.u32 %v1586, %v1582
      %v1588 = vrot.slane %v1587, 4
      %v1590 = vshll.u32 %v1458, 16
      %v1592 = vrot.slane %v1590, 5
      %v1593 = vsel %vm1497, %v1588, %v1592
      %v1595 = vshrl.u32 %v1459, 16
      %v1597 = vrot.slane %v1595, 4
      %v1598 = vshll.u32 %v1459, 16
      %v1600 = vrot.slane %v1598, 5
      %v1601 = vor.u32 %v1597, %v1600
      %v1602 = vrot.slane %v1601, 4
      %v1604 = vshll.u32 %v1460, 16
      %v1606 = vrot.slane %v1604, 5
      %v1607 = vsel %vm1497, %v1602, %v1606
      %v1608 = vshrl.u32 %v1460, 16
      %v1610 = vrot.slane %v1608, 4
      %v1611 = vor.u32 %v1610, %v1606
      %v1612 = vrot.slane %v1611, 4
      %v1614 = vshll.u32 %v1461, 16
      %v1616 = vrot.slane %v1614, 5
      %v1617 = vsel %vm1497, %v1612, %v1616
      %v1619 = vshrl.u32 %v1462, 16
      %v1621 = vrot.slane %v1619, 4
      %v1622 = vshll.u32 %v1462, 16
      %v1624 = vrot.slane %v1622, 5
      %v1625 = vor.u32 %v1621, %v1624
      %v1626 = vrot.slane %v1625, 4
      %v1628 = vshll.u32 %v1463, 16
      %v1630 = vrot.slane %v1628, 5
      %v1631 = vsel %vm1497, %v1626, %v1630
      %v1632 = vshrl.u32 %v1463, 16
      %v1634 = vrot.slane %v1632, 4
      %v1635 = vor.u32 %v1634, %v1630
      %v1636 = vrot.slane %v1635, 4
      %v1638 = vshll.u32 %v1464, 16
      %v1640 = vrot.slane %v1638, 5
      %v1641 = vsel %vm1497, %v1636, %v1640
      %v1643 = vshrl.u32 %v1465, 16
      %v1645 = vrot.slane %v1643, 4
      %v1646 = vshll.u32 %v1465, 16
      %v1648 = vrot.slane %v1646, 5
      %v1649 = vor.u32 %v1645, %v1648
      %v1650 = vrot.slane %v1649, 4
      %v1652 = vshll.u32 %v1466, 16
      %v1654 = vrot.slane %v1652, 5
      %v1655 = vsel %vm1497, %v1650, %v1654
      %v1656 = vshrl.u32 %v1466, 16
      %v1658 = vrot.slane %v1656, 4
      %v1659 = vor.u32 %v1658, %v1654
      %v1660 = vrot.slane %v1659, 4
      %v1662 = vshll.u32 %v1467, 16
      %v1664 = vrot.slane %v1662, 5
      %v1665 = vsel %vm1497, %v1660, %v1664
      %v1667 = vshrl.u32 %v1468, 16
      %v1669 = vrot.slane %v1667, 4
      %v1670 = vshll.u32 %v1468, 16
      %v1672 = vrot.slane %v1670, 5
      %v1673 = vor.u32 %v1669, %v1672
      %v1674 = vrot.slane %v1673, 4
      %v1676 = vshll.u32 %v1469, 16
      %v1678 = vrot.slane %v1676, 5
      %v1679 = vsel %vm1497, %v1674, %v1678
      %v1680 = vshrl.u32 %v1469, 16
      %v1682 = vrot.slane %v1680, 4
      %v1683 = vor.u32 %v1682, %v1678
      %v1684 = vrot.slane %v1683, 4
      %v1686 = vshll.u32 %v1470, 16
      %v1688 = vrot.slane %v1686, 5
      %v1689 = vsel %vm1497, %v1684, %v1688
      %v1691 = vshrl.u32 %v1471, 16
      %v1693 = vrot.slane %v1691, 4
      %v1694 = vshll.u32 %v1471, 16
      %v1696 = vrot.slane %v1694, 5
      %v1697 = vor.u32 %v1693, %v1696
      %v1698 = vrot.slane %v1697, 4
      %v1700 = vshll.u32 %v1472, 16
      %v1702 = vrot.slane %v1700, 5
      %v1703 = vsel %vm1497, %v1698, %v1702
      %v1704 = vshrl.u32 %v1472, 16
      %v1706 = vrot.slane %v1704, 4
      %v1707 = vor.u32 %v1706, %v1702
      %v1708 = vrot.slane %v1707, 4
      %v1710 = vshll.u32 %v1473, 16
      %v1712 = vrot.slane %v1710, 5
      %v1713 = vsel %vm1497, %v1708, %v1712
      %v1715 = vshrl.u32 %v1474, 16
      %v1717 = vrot.slane %v1715, 4
      %v1718 = vshll.u32 %v1474, 16
      %v1720 = vrot.slane %v1718, 5
      %v1721 = vor.u32 %v1717, %v1720
      %v1722 = vrot.slane %v1721, 4
      %v1724 = vshll.u32 %v1475, 16
      %v1726 = vrot.slane %v1724, 5
      %v1727 = vsel %vm1497, %v1722, %v1726
      %v1728 = vshrl.u32 %v1475, 16
      %v1730 = vrot.slane %v1728, 4
      %v1731 = vor.u32 %v1730, %v1726
      %v1732 = vrot.slane %v1731, 4
      %v1734 = vshll.u32 %v1476, 16
      %v1736 = vrot.slane %v1734, 5
      %v1737 = vsel %vm1497, %v1732, %v1736
      %v1739 = vshrl.u32 %v1477, 16
      %v1741 = vrot.slane %v1739, 4
      %v1742 = vshll.u32 %v1477, 16
      %v1744 = vrot.slane %v1742, 5
      %v1745 = vor.u32 %v1741, %v1744
      %v1746 = vrot.slane %v1745, 4
      %v1748 = vshll.u32 %v1478, 16
      %v1750 = vrot.slane %v1748, 5
      %v1751 = vsel %vm1497, %v1746, %v1750
      %v1752 = vshrl.u32 %v1478, 16
      %v1754 = vrot.slane %v1752, 4
      %v1755 = vor.u32 %v1754, %v1750
      %v1756 = vrot.slane %v1755, 4
      %v1758 = vshll.u32 %v1479, 16
      %v1760 = vrot.slane %v1758, 5
      %v1761 = vsel %vm1497, %v1756, %v1760
      %v1763 = vshrl.u32 %v1480, 16
      %v1765 = vrot.slane %v1763, 4
      %v1766 = vshll.u32 %v1480, 16
      %v1768 = vrot.slane %v1766, 5
      %v1769 = vor.u32 %v1765, %v1768
      %v1770 = vrot.slane %v1769, 4
      %v1772 = vshll.u32 %v1481, 16
      %v1774 = vrot.slane %v1772, 5
      %v1775 = vsel %vm1497, %v1770, %v1774
      %v1776 = vshrl.u32 %v1481, 16
      %v1778 = vrot.slane %v1776, 4
      %v1779 = vor.u32 %v1778, %v1774
      %v1780 = vrot.slane %v1779, 4
      %v1782 = vshll.u32 %v1482, 16
      %v1784 = vrot.slane %v1782, 5
      %v1785 = vsel %vm1497, %v1780, %v1784
      %v1787 = vshrl.u32 %v1483, 16
      %v1789 = vrot.slane %v1787, 4
      %v1790 = vshll.u32 %v1483, 16
      %v1792 = vrot.slane %v1790, 5
      %v1793 = vor.u32 %v1789, %v1792
      %v1794 = vrot.slane %v1793, 4
      %v1796 = vshll.u32 %v1484, 16
      %v1798 = vrot.slane %v1796, 5
      %v1799 = vsel %vm1497, %v1794, %v1798
      %v1800 = vshrl.u32 %v1484, 16
      %v1802 = vrot.slane %v1800, 4
      %v1803 = vor.u32 %v1802, %v1798
      %v1804 = vrot.slane %v1803, 4
      %v1806 = vshll.u32 %v1485, 16
      %v1808 = vrot.slane %v1806, 5
      %v1809 = vsel %vm1497, %v1804, %v1808
      %v1811 = vshrl.u32 %v1486, 16
      %v1813 = vrot.slane %v1811, 4
      %v1814 = vshll.u32 %v1486, 16
      %v1816 = vrot.slane %v1814, 5
      %v1817 = vor.u32 %v1813, %v1816
      %v1818 = vrot.slane %v1817, 4
      %v1820 = vshll.u32 %v1487, 16
      %v1822 = vrot.slane %v1820, 5
      %v1823 = vsel %vm1497, %v1818, %v1822
      %v1824 = vshrl.u32 %v1487, 16
      %v1826 = vrot.slane %v1824, 4
      %v1827 = vor.u32 %v1826, %v1822
      %v1828 = vrot.slane %v1827, 4
      %v1830 = vshll.u32 %v1488, 16
      %v1832 = vrot.slane %v1830, 5
      %v1833 = vsel %vm1497, %v1828, %v1832
      %v1835 = vshrl.u32 %v1489, 16
      %v1837 = vrot.slane %v1835, 4
      %v1838 = vshll.u32 %v1489, 16
      %v1840 = vrot.slane %v1838, 5
      %v1841 = vor.u32 %v1837, %v1840
      %v1842 = vrot.slane %v1841, 4
      %v1844 = vshll.u32 %v1490, 16
      %v1846 = vrot.slane %v1844, 5
      %v1847 = vsel %vm1497, %v1842, %v1846
      %v1848 = vshrl.u32 %v1490, 16
      %v1850 = vrot.slane %v1848, 4
      %v1851 = vor.u32 %v1850, %v1846
      %v1852 = vrot.slane %v1851, 4
      %v1854 = vshll.u32 %v1491, 16
      %v1856 = vrot.slane %v1854, 5
      %v1857 = vsel %vm1497, %v1852, %v1856
      %v1859 = vshrl.u32 %v1492, 16
      %v1861 = vrot.slane %v1859, 4
      %v1862 = vshll.u32 %v1492, 16
      %v1864 = vrot.slane %v1862, 5
      %v1865 = vor.u32 %v1861, %v1864
      %v1866 = vrot.slane %v1865, 4
      %v1868 = vshll.u32 %v1493, 16
      %v1870 = vrot.slane %v1868, 5
      %v1871 = vsel %vm1497, %v1866, %v1870
      %v1872 = vshrl.u32 %v1493, 16
      %v1874 = vrot.slane %v1872, 4
      %v1875 = vor.u32 %v1874, %v1870
      %v1876 = vrot.slane %v1875, 4
      %v1878 = vshll.u32 %v1494, 16
      %v1880 = vrot.slane %v1878, 5
      %v1881 = vsel %vm1497, %v1876, %v1880
      %1914 = vst [vmem:[#allocation3 + $0x4] sm:$0xf] %v1511
      %1915 = vst [vmem:[#allocation3 + $0x28] sm:$0xf] %v1521
      %1916 = vst [vmem:[#allocation3 + $0x4c] sm:$0xf] %v1535
      %1917 = vst [vmem:[#allocation3 + $0x70] sm:$0xf] %v1545
      %1918 = vst [vmem:[#allocation3 + $0x94] sm:$0xf] %v1559
      %1919 = vst [vmem:[#allocation3 + $0xb8] sm:$0xf] %v1569
      %1920 = vst [vmem:[#allocation3 + $0xdc] sm:$0xf] %v1583
      %1921 = vst [vmem:[#allocation3 + $0x100] sm:$0xf] %v1593
      %1922 = vst [vmem:[#allocation3 + $0x124] sm:$0xf] %v1607
      %1923 = vst [vmem:[#allocation3 + $0x148] sm:$0xf] %v1617
      %1924 = vst [vmem:[#allocation3 + $0x16c] sm:$0xf] %v1631
      %1925 = vst [vmem:[#allocation3 + $0x190] sm:$0xf] %v1641
      %1926 = vst [vmem:[#allocation3 + $0x1b4] sm:$0xf] %v1655
      %1927 = vst [vmem:[#allocation3 + $0x1d8] sm:$0xf] %v1665
      %1928 = vst [vmem:[#allocation3 + $0x1fc] sm:$0xf] %v1679
      %1929 = vst [vmem:[#allocation3 + $0x220] sm:$0xf] %v1689
      %1930 = vst [vmem:[#allocation3 + $0x244] sm:$0xf] %v1703
      %1931 = vst [vmem:[#allocation3 + $0x268] sm:$0xf] %v1713
      %1932 = vst [vmem:[#allocation3 + $0x28c] sm:$0xf] %v1727
      %1933 = vst [vmem:[#allocation3 + $0x2b0] sm:$0xf] %v1737
      %1934 = vst [vmem:[#allocation3 + $0x2d4] sm:$0xf] %v1751
      %1935 = vst [vmem:[#allocation3 + $0x2f8] sm:$0xf] %v1761
      %1936 = vst [vmem:[#allocation3 + $0x31c] sm:$0xf] %v1775
      %1937 = vst [vmem:[#allocation3 + $0x340] sm:$0xf] %v1785
      %1938 = vst [vmem:[#allocation3 + $0x364] sm:$0xf] %v1799
      %1939 = vst [vmem:[#allocation3 + $0x388] sm:$0xf] %v1809
      %1940 = vst [vmem:[#allocation3 + $0x3ac] sm:$0xf] %v1823
      %1941 = vst [vmem:[#allocation3 + $0x3d0] sm:$0xf] %v1833
      %1942 = vst [vmem:[#allocation3 + $0x3f4] sm:$0xf] %v1847
      %1943 = vst [vmem:[#allocation3 + $0x418] sm:$0xf] %v1857
      %1944 = vst [vmem:[#allocation3 + $0x43c] sm:$0xf] %v1871
      %1945 = vst [vmem:[#allocation3 + $0x460] sm:$0xf] %v1881
      %v1946 = vld [vmem:[#allocation2] sm:$0xe]
      %v1947 = vld [vmem:[#allocation2 + $0x4] sm:$0xf]
      %v1948 = vld [vmem:[#allocation2 + $0x8] sm:$0x1]
      %v1949 = vld [vmem:[#allocation2 + $0xc] sm:$0xe]
      %v1950 = vld [vmem:[#allocation2 + $0x10] sm:$0xf]
      %v1951 = vld [vmem:[#allocation2 + $0x14] sm:$0x1]
      %v1952 = vld [vmem:[#allocation2 + $0x18] sm:$0xe]
      %v1953 = vld [vmem:[#allocation2 + $0x1c] sm:$0xf]
      %v1954 = vld [vmem:[#allocation2 + $0x20] sm:$0x1]
      %v1955 = vld [vmem:[#allocation2 + $0x24] sm:$0xe]
      %v1956 = vld [vmem:[#allocation2 + $0x28] sm:$0xf]
      %v1957 = vld [vmem:[#allocation2 + $0x2c] sm:$0x1]
      %v1958 = vld [vmem:[#allocation2 + $0x30] sm:$0xe]
      %v1959 = vld [vmem:[#allocation2 + $0x34] sm:$0xf]
      %v1960 = vld [vmem:[#allocation2 + $0x38] sm:$0x1]
      %v1961 = vld [vmem:[#allocation2 + $0x3c] sm:$0xe]
      %v1962 = vld [vmem:[#allocation2 + $0x40] sm:$0xf]
      %v1963 = vld [vmem:[#allocation2 + $0x44] sm:$0x1]
      %v1964 = vld [vmem:[#allocation2 + $0x48] sm:$0xe]
      %v1965 = vld [vmem:[#allocation2 + $0x4c] sm:$0xf]
      %v1966 = vld [vmem:[#allocation2 + $0x50] sm:$0x1]
      %v1967 = vld [vmem:[#allocation2 + $0x54] sm:$0xe]
      %v1968 = vld [vmem:[#allocation2 + $0x58] sm:$0xf]
      %v1969 = vld [vmem:[#allocation2 + $0x5c] sm:$0x1]
      %v1970 = vld [vmem:[#allocation2 + $0x60] sm:$0xe]
      %v1971 = vld [vmem:[#allocation2 + $0x64] sm:$0xf]
      %v1972 = vld [vmem:[#allocation2 + $0x68] sm:$0x1]
      %v1973 = vld [vmem:[#allocation2 + $0x6c] sm:$0xe]
      %v1974 = vld [vmem:[#allocation2 + $0x70] sm:$0xf]
      %v1975 = vld [vmem:[#allocation2 + $0x74] sm:$0x1]
      %v1976 = vld [vmem:[#allocation2 + $0x78] sm:$0xe]
      %v1977 = vld [vmem:[#allocation2 + $0x7c] sm:$0xf]
      %v1978 = vld [vmem:[#allocation2 + $0x80] sm:$0x1]
      %v1979 = vld [vmem:[#allocation2 + $0x84] sm:$0xe]
      %v1980 = vld [vmem:[#allocation2 + $0x88] sm:$0xf]
      %v1981 = vld [vmem:[#allocation2 + $0x8c] sm:$0x1]
      %v1982 = vld [vmem:[#allocation2 + $0x90] sm:$0xe]
      %v1983 = vld [vmem:[#allocation2 + $0x94] sm:$0xf]
      %v1984 = vld [vmem:[#allocation2 + $0x98] sm:$0x1]
      %v1985 = vld [vmem:[#allocation2 + $0x9c] sm:$0xe]
      %v1986 = vld [vmem:[#allocation2 + $0xa0] sm:$0xf]
      %v1987 = vld [vmem:[#allocation2 + $0xa4] sm:$0x1]
      %v1988 = vld [vmem:[#allocation2 + $0xa8] sm:$0xe]
      %v1989 = vld [vmem:[#allocation2 + $0xac] sm:$0xf]
      %v1990 = vld [vmem:[#allocation2 + $0xb0] sm:$0x1]
      %v1991 = vld [vmem:[#allocation2 + $0xb4] sm:$0xe]
      %v1992 = vld [vmem:[#allocation2 + $0xb8] sm:$0xf]
      %v1993 = vld [vmem:[#allocation2 + $0xbc] sm:$0x1]
      %vm2042 = vcmask 1042432
      %vm2043 = vcmask 1046532
      %vm2044 = vmor %vm2042, %vm2043
      %v2045 = vrot.slane %v1946, 5
      %v2046 = vrot.slane %v2045, 4
      %v2047 = vrot.slane %v1947, 5
      %v2048 = vsel %vm2044, %v2046, %v2047
      %v2049 = vrot.slane %v2047, 4
      %v2050 = vrot.slane %v1948, 5
      %v2051 = vsel %vm2044, %v2049, %v2050
      %v2052 = vrot.slane %v1949, 5
      %v2053 = vrot.slane %v2052, 4
      %v2054 = vrot.slane %v1950, 5
      %v2055 = vsel %vm2044, %v2053, %v2054
      %v2056 = vrot.slane %v2054, 4
      %v2057 = vrot.slane %v1951, 5
      %v2058 = vsel %vm2044, %v2056, %v2057
      %v2059 = vrot.slane %v1952, 5
      %v2060 = vrot.slane %v2059, 4
      %v2061 = vrot.slane %v1953, 5
      %v2062 = vsel %vm2044, %v2060, %v2061
      %v2063 = vrot.slane %v2061, 4
      %v2064 = vrot.slane %v1954, 5
      %v2065 = vsel %vm2044, %v2063, %v2064
      %v2066 = vrot.slane %v1955, 5
      %v2067 = vrot.slane %v2066, 4
      %v2068 = vrot.slane %v1956, 5
      %v2069 = vsel %vm2044, %v2067, %v2068
      %v2070 = vrot.slane %v2068, 4
      %v2071 = vrot.slane %v1957, 5
      %v2072 = vsel %vm2044, %v2070, %v2071
      %v2073 = vrot.slane %v1958, 5
      %v2074 = vrot.slane %v2073, 4
      %v2075 = vrot.slane %v1959, 5
      %v2076 = vsel %vm2044, %v2074, %v2075
      %v2077 = vrot.slane %v2075, 4
      %v2078 = vrot.slane %v1960, 5
      %v2079 = vsel %vm2044, %v2077, %v2078
      %v2080 = vrot.slane %v1961, 5
      %v2081 = vrot.slane %v2080, 4
      %v2082 = vrot.slane %v1962, 5
      %v2083 = vsel %vm2044, %v2081, %v2082
      %v2084 = vrot.slane %v2082, 4
      %v2085 = vrot.slane %v1963, 5
      %v2086 = vsel %vm2044, %v2084, %v2085
      %v2087 = vrot.slane %v1964, 5
      %v2088 = vrot.slane %v2087, 4
      %v2089 = vrot.slane %v1965, 5
      %v2090 = vsel %vm2044, %v2088, %v2089
      %v2091 = vrot.slane %v2089, 4
      %v2092 = vrot.slane %v1966, 5
      %v2093 = vsel %vm2044, %v2091, %v2092
      %v2094 = vrot.slane %v1967, 5
      %v2095 = vrot.slane %v2094, 4
      %v2096 = vrot.slane %v1968, 5
      %v2097 = vsel %vm2044, %v2095, %v2096
      %v2098 = vrot.slane %v2096, 4
      %v2099 = vrot.slane %v1969, 5
      %v2100 = vsel %vm2044, %v2098, %v2099
      %v2101 = vrot.slane %v1970, 5
      %v2102 = vrot.slane %v2101, 4
      %v2103 = vrot.slane %v1971, 5
      %v2104 = vsel %vm2044, %v2102, %v2103
      %v2105 = vrot.slane %v2103, 4
      %v2106 = vrot.slane %v1972, 5
      %v2107 = vsel %vm2044, %v2105, %v2106
      %v2108 = vrot.slane %v1973, 5
      %v2109 = vrot.slane %v2108, 4
      %v2110 = vrot.slane %v1974, 5
      %v2111 = vsel %vm2044, %v2109, %v2110
      %v2112 = vrot.slane %v2110, 4
      %v2113 = vrot.slane %v1975, 5
      %v2114 = vsel %vm2044, %v2112, %v2113
      %v2115 = vrot.slane %v1976, 5
      %v2116 = vrot.slane %v2115, 4
      %v2117 = vrot.slane %v1977, 5
      %v2118 = vsel %vm2044, %v2116, %v2117
      %v2119 = vrot.slane %v2117, 4
      %v2120 = vrot.slane %v1978, 5
      %v2121 = vsel %vm2044, %v2119, %v2120
      %v2122 = vrot.slane %v1979, 5
      %v2123 = vrot.slane %v2122, 4
      %v2124 = vrot.slane %v1980, 5
      %v2125 = vsel %vm2044, %v2123, %v2124
      %v2126 = vrot.slane %v2124, 4
      %v2127 = vrot.slane %v1981, 5
      %v2128 = vsel %vm2044, %v2126, %v2127
      %v2129 = vrot.slane %v1982, 5
      %v2130 = vrot.slane %v2129, 4
      %v2131 = vrot.slane %v1983, 5
      %v2132 = vsel %vm2044, %v2130, %v2131
      %v2133 = vrot.slane %v2131, 4
      %v2134 = vrot.slane %v1984, 5
      %v2135 = vsel %vm2044, %v2133, %v2134
      %v2136 = vrot.slane %v1985, 5
      %v2137 = vrot.slane %v2136, 4
      %v2138 = vrot.slane %v1986, 5
      %v2139 = vsel %vm2044, %v2137, %v2138
      %v2140 = vrot.slane %v2138, 4
      %v2141 = vrot.slane %v1987, 5
      %v2142 = vsel %vm2044, %v2140, %v2141
      %v2143 = vrot.slane %v1988, 5
      %v2144 = vrot.slane %v2143, 4
      %v2145 = vrot.slane %v1989, 5
      %v2146 = vsel %vm2044, %v2144, %v2145
      %v2147 = vrot.slane %v2145, 4
      %v2148 = vrot.slane %v1990, 5
      %v2149 = vsel %vm2044, %v2147, %v2148
      %v2150 = vrot.slane %v1991, 5
      %v2151 = vrot.slane %v2150, 4
      %v2152 = vrot.slane %v1992, 5
      %v2153 = vsel %vm2044, %v2151, %v2152
      %v2154 = vrot.slane %v2152, 4
      %v2155 = vrot.slane %v1993, 5
      %v2156 = vsel %vm2044, %v2154, %v2155
      %2189 = vst [vmem:[#allocation3 + $0x8] sm:$0xf] %v2048
      %2190 = vst [vmem:[#allocation3 + $0x2c] sm:$0xf] %v2051
      %2191 = vst [vmem:[#allocation3 + $0x50] sm:$0xf] %v2055
      %2192 = vst [vmem:[#allocation3 + $0x74] sm:$0xf] %v2058
      %2193 = vst [vmem:[#allocation3 + $0x98] sm:$0xf] %v2062
      %2194 = vst [vmem:[#allocation3 + $0xbc] sm:$0xf] %v2065
      %2195 = vst [vmem:[#allocation3 + $0xe0] sm:$0xf] %v2069
      %2196 = vst [vmem:[#allocation3 + $0x104] sm:$0xf] %v2072
      %2197 = vst [vmem:[#allocation3 + $0x128] sm:$0xf] %v2076
      %2198 = vst [vmem:[#allocation3 + $0x14c] sm:$0xf] %v2079
      %2199 = vst [vmem:[#allocation3 + $0x170] sm:$0xf] %v2083
      %2200 = vst [vmem:[#allocation3 + $0x194] sm:$0xf] %v2086
      %2201 = vst [vmem:[#allocation3 + $0x1b8] sm:$0xf] %v2090
      %2202 = vst [vmem:[#allocation3 + $0x1dc] sm:$0xf] %v2093
      %2203 = vst [vmem:[#allocation3 + $0x200] sm:$0xf] %v2097
      %2204 = vst [vmem:[#allocation3 + $0x224] sm:$0xf] %v2100
      %2205 = vst [vmem:[#allocation3 + $0x248] sm:$0xf] %v2104
      %2206 = vst [vmem:[#allocation3 + $0x26c] sm:$0xf] %v2107
      %2207 = vst [vmem:[#allocation3 + $0x290] sm:$0xf] %v2111
      %2208 = vst [vmem:[#allocation3 + $0x2b4] sm:$0xf] %v2114
      %2209 = vst [vmem:[#allocation3 + $0x2d8] sm:$0xf] %v2118
      %2210 = vst [vmem:[#allocation3 + $0x2fc] sm:$0xf] %v2121
      %2211 = vst [vmem:[#allocation3 + $0x320] sm:$0xf] %v2125
      %2212 = vst [vmem:[#allocation3 + $0x344] sm:$0xf] %v2128
      %2213 = vst [vmem:[#allocation3 + $0x368] sm:$0xf] %v2132
      %2214 = vst [vmem:[#allocation3 + $0x38c] sm:$0xf] %v2135
      %2215 = vst [vmem:[#allocation3 + $0x3b0] sm:$0xf] %v2139
      %2216 = vst [vmem:[#allocation3 + $0x3d4] sm:$0xf] %v2142
      %2217 = vst [vmem:[#allocation3 + $0x3f8] sm:$0xf] %v2146
      %2218 = vst [vmem:[#allocation3 + $0x41c] sm:$0xf] %v2149
      %2219 = vst [vmem:[#allocation3 + $0x440] sm:$0xf] %v2153
      %2220 = vst [vmem:[#allocation3 + $0x464] sm:$0xf] %v2156
      %v2221 = vld [vmem:[%s1143] sm:$0xf]
      %v2222 = vld [vmem:[%s1143 + $0x4] sm:$0xf]
      %v2223 = vld [vmem:[%s1143 + $0xc] sm:$0xf]
      %v2224 = vld [vmem:[%s1143 + $0x10] sm:$0xf]
      %v2225 = vld [vmem:[%s1143 + $0x18] sm:$0xf]
      %v2226 = vld [vmem:[%s1143 + $0x1c] sm:$0xf]
      %v2227 = vld [vmem:[%s1143 + $0x24] sm:$0xf]
      %v2228 = vld [vmem:[%s1143 + $0x28] sm:$0xf]
      %v2229 = vld [vmem:[%s1143 + $0x30] sm:$0xf]
      %v2230 = vld [vmem:[%s1143 + $0x34] sm:$0xf]
      %v2231 = vld [vmem:[%s1143 + $0x3c] sm:$0xf]
      %v2232 = vld [vmem:[%s1143 + $0x40] sm:$0xf]
      %v2233 = vld [vmem:[%s1143 + $0x48] sm:$0xf]
      %v2234 = vld [vmem:[%s1143 + $0x4c] sm:$0xf]
      %v2235 = vld [vmem:[%s1143 + $0x54] sm:$0xf]
      %v2236 = vld [vmem:[%s1143 + $0x58] sm:$0xf]
      %v2237 = vld [vmem:[%s1143 + $0x60] sm:$0xf]
      %v2238 = vld [vmem:[%s1143 + $0x64] sm:$0xf]
      %v2239 = vld [vmem:[%s1143 + $0x6c] sm:$0xf]
      %v2240 = vld [vmem:[%s1143 + $0x70] sm:$0xf]
      %v2241 = vld [vmem:[%s1143 + $0x78] sm:$0xf]
      %v2242 = vld [vmem:[%s1143 + $0x7c] sm:$0xf]
      %v2243 = vld [vmem:[%s1143 + $0x84] sm:$0xf]
      %v2244 = vld [vmem:[%s1143 + $0x88] sm:$0xf]
      %v2245 = vld [vmem:[%s1143 + $0x90] sm:$0xf]
      %v2246 = vld [vmem:[%s1143 + $0x94] sm:$0xf]
      %v2247 = vld [vmem:[%s1143 + $0x9c] sm:$0xf]
      %v2248 = vld [vmem:[%s1143 + $0xa0] sm:$0xf]
      %v2249 = vld [vmem:[%s1143 + $0xa8] sm:$0xf]
      %v2250 = vld [vmem:[%s1143 + $0xac] sm:$0xf]
      %v2251 = vld [vmem:[%s1143 + $0xb4] sm:$0xf]
      %v2252 = vld [vmem:[%s1143 + $0xb8] sm:$0xf]
      %2253 = vst [vmem:[#allocation3 + $0xc] sm:$0xf] %v2221
      %2254 = vst [vmem:[#allocation3 + $0x30] sm:$0xf] %v2222
      %2255 = vst [vmem:[#allocation3 + $0x54] sm:$0xf] %v2223
      %2256 = vst [vmem:[#allocation3 + $0x78] sm:$0xf] %v2224
      %2257 = vst [vmem:[#allocation3 + $0x9c] sm:$0xf] %v2225
      %2258 = vst [vmem:[#allocation3 + $0xc0] sm:$0xf] %v2226
      %2259 = vst [vmem:[#allocation3 + $0xe4] sm:$0xf] %v2227
      %2260 = vst [vmem:[#allocation3 + $0x108] sm:$0xf] %v2228
      %2261 = vst [vmem:[#allocation3 + $0x12c] sm:$0xf] %v2229
      %2262 = vst [vmem:[#allocation3 + $0x150] sm:$0xf] %v2230
      %2263 = vst [vmem:[#allocation3 + $0x174] sm:$0xf] %v2231
      %2264 = vst [vmem:[#allocation3 + $0x198] sm:$0xf] %v2232
      %2265 = vst [vmem:[#allocation3 + $0x1bc] sm:$0xf] %v2233
      %2266 = vst [vmem:[#allocation3 + $0x1e0] sm:$0xf] %v2234
      %2267 = vst [vmem:[#allocation3 + $0x204] sm:$0xf] %v2235
      %2268 = vst [vmem:[#allocation3 + $0x228] sm:$0xf] %v2236
      %2269 = vst [vmem:[#allocation3 + $0x24c] sm:$0xf] %v2237
      %2270 = vst [vmem:[#allocation3 + $0x270] sm:$0xf] %v2238
      %2271 = vst [vmem:[#allocation3 + $0x294] sm:$0xf] %v2239
      %2272 = vst [vmem:[#allocation3 + $0x2b8] sm:$0xf] %v2240
      %2273 = vst [vmem:[#allocation3 + $0x2dc] sm:$0xf] %v2241
      %2274 = vst [vmem:[#allocation3 + $0x300] sm:$0xf] %v2242
      %2275 = vst [vmem:[#allocation3 + $0x324] sm:$0xf] %v2243
      %2276 = vst [vmem:[#allocation3 + $0x348] sm:$0xf] %v2244
      %2277 = vst [vmem:[#allocation3 + $0x36c] sm:$0xf] %v2245
      %2278 = vst [vmem:[#allocation3 + $0x390] sm:$0xf] %v2246
      %2279 = vst [vmem:[#allocation3 + $0x3b4] sm:$0xf] %v2247
      %2280 = vst [vmem:[#allocation3 + $0x3d8] sm:$0xf] %v2248
      %2281 = vst [vmem:[#allocation3 + $0x3fc] sm:$0xf] %v2249
      %2282 = vst [vmem:[#allocation3 + $0x420] sm:$0xf] %v2250
      %2283 = vst [vmem:[#allocation3 + $0x444] sm:$0xf] %v2251
      %2284 = vst [vmem:[#allocation3 + $0x468] sm:$0xf] %v2252
      %v2285 = vld [vmem:[%s1143] sm:$0xf]
      %v2286 = vld [vmem:[%s1143 + $0x4] sm:$0xf]
      %v2287 = vld [vmem:[%s1143 + $0x8] sm:$0x1]
      %v2288 = vld [vmem:[%s1143 + $0xc] sm:$0xf]
      %v2289 = vld [vmem:[%s1143 + $0x10] sm:$0xf]
      %v2290 = vld [vmem:[%s1143 + $0x14] sm:$0x1]
      %v2291 = vld [vmem:[%s1143 + $0x18] sm:$0xf]
      %v2292 = vld [vmem:[%s1143 + $0x1c] sm:$0xf]
      %v2293 = vld [vmem:[%s1143 + $0x20] sm:$0x1]
      %v2294 = vld [vmem:[%s1143 + $0x24] sm:$0xf]
      %v2295 = vld [vmem:[%s1143 + $0x28] sm:$0xf]
      %v2296 = vld [vmem:[%s1143 + $0x2c] sm:$0x1]
      %v2297 = vld [vmem:[%s1143 + $0x30] sm:$0xf]
      %v2298 = vld [vmem:[%s1143 + $0x34] sm:$0xf]
      %v2299 = vld [vmem:[%s1143 + $0x38] sm:$0x1]
      %v2300 = vld [vmem:[%s1143 + $0x3c] sm:$0xf]
      %v2301 = vld [vmem:[%s1143 + $0x40] sm:$0xf]
      %v2302 = vld [vmem:[%s1143 + $0x44] sm:$0x1]
      %v2303 = vld [vmem:[%s1143 + $0x48] sm:$0xf]
      %v2304 = vld [vmem:[%s1143 + $0x4c] sm:$0xf]
      %v2305 = vld [vmem:[%s1143 + $0x50] sm:$0x1]
      %v2306 = vld [vmem:[%s1143 + $0x54] sm:$0xf]
      %v2307 = vld [vmem:[%s1143 + $0x58] sm:$0xf]
      %v2308 = vld [vmem:[%s1143 + $0x5c] sm:$0x1]
      %v2309 = vld [vmem:[%s1143 + $0x60] sm:$0xf]
      %v2310 = vld [vmem:[%s1143 + $0x64] sm:$0xf]
      %v2311 = vld [vmem:[%s1143 + $0x68] sm:$0x1]
      %v2312 = vld [vmem:[%s1143 + $0x6c] sm:$0xf]
      %v2313 = vld [vmem:[%s1143 + $0x70] sm:$0xf]
      %v2314 = vld [vmem:[%s1143 + $0x74] sm:$0x1]
      %v2315 = vld [vmem:[%s1143 + $0x78] sm:$0xf]
      %v2316 = vld [vmem:[%s1143 + $0x7c] sm:$0xf]
      %v2317 = vld [vmem:[%s1143 + $0x80] sm:$0x1]
      %v2318 = vld [vmem:[%s1143 + $0x84] sm:$0xf]
      %v2319 = vld [vmem:[%s1143 + $0x88] sm:$0xf]
      %v2320 = vld [vmem:[%s1143 + $0x8c] sm:$0x1]
      %v2321 = vld [vmem:[%s1143 + $0x90] sm:$0xf]
      %v2322 = vld [vmem:[%s1143 + $0x94] sm:$0xf]
      %v2323 = vld [vmem:[%s1143 + $0x98] sm:$0x1]
      %v2324 = vld [vmem:[%s1143 + $0x9c] sm:$0xf]
      %v2325 = vld [vmem:[%s1143 + $0xa0] sm:$0xf]
      %v2326 = vld [vmem:[%s1143 + $0xa4] sm:$0x1]
      %v2327 = vld [vmem:[%s1143 + $0xa8] sm:$0xf]
      %v2328 = vld [vmem:[%s1143 + $0xac] sm:$0xf]
      %v2329 = vld [vmem:[%s1143 + $0xb0] sm:$0x1]
      %v2330 = vld [vmem:[%s1143 + $0xb4] sm:$0xf]
      %v2331 = vld [vmem:[%s1143 + $0xb8] sm:$0xf]
      %v2332 = vld [vmem:[%s1143 + $0xbc] sm:$0x1]
      %v2334 = vshrl.u32 %v2285, 16
      %v2336 = vrot.slane %v2334, 4
      %v2337 = vshll.u32 %v2285, 16
      %v2339 = vrot.slane %v2337, 5
      %v2340 = vor.u32 %v2336, %v2339
      %v2341 = vrot.slane %v2340, 4
      %v2343 = vshll.u32 %v2286, 16
      %v2345 = vrot.slane %v2343, 5
      %v2346 = vsel %vm1497, %v2341, %v2345
      %v2347 = vshrl.u32 %v2286, 16
      %v2349 = vrot.slane %v2347, 4
      %v2350 = vor.u32 %v2349, %v2345
      %v2351 = vrot.slane %v2350, 4
      %v2353 = vshll.u32 %v2287, 16
      %v2355 = vrot.slane %v2353, 5
      %v2356 = vsel %vm1497, %v2351, %v2355
      %v2358 = vshrl.u32 %v2288, 16
      %v2360 = vrot.slane %v2358, 4
      %v2361 = vshll.u32 %v2288, 16
      %v2363 = vrot.slane %v2361, 5
      %v2364 = vor.u32 %v2360, %v2363
      %v2365 = vrot.slane %v2364, 4
      %v2367 = vshll.u32 %v2289, 16
      %v2369 = vrot.slane %v2367, 5
      %v2370 = vsel %vm1497, %v2365, %v2369
      %v2371 = vshrl.u32 %v2289, 16
      %v2373 = vrot.slane %v2371, 4
      %v2374 = vor.u32 %v2373, %v2369
      %v2375 = vrot.slane %v2374, 4
      %v2377 = vshll.u32 %v2290, 16
      %v2379 = vrot.slane %v2377, 5
      %v2380 = vsel %vm1497, %v2375, %v2379
      %v2382 = vshrl.u32 %v2291, 16
      %v2384 = vrot.slane %v2382, 4
      %v2385 = vshll.u32 %v2291, 16
      %v2387 = vrot.slane %v2385, 5
      %v2388 = vor.u32 %v2384, %v2387
      %v2389 = vrot.slane %v2388, 4
      %v2391 = vshll.u32 %v2292, 16
      %v2393 = vrot.slane %v2391, 5
      %v2394 = vsel %vm1497, %v2389, %v2393
      %v2395 = vshrl.u32 %v2292, 16
      %v2397 = vrot.slane %v2395, 4
      %v2398 = vor.u32 %v2397, %v2393
      %v2399 = vrot.slane %v2398, 4
      %v2401 = vshll.u32 %v2293, 16
      %v2403 = vrot.slane %v2401, 5
      %v2404 = vsel %vm1497, %v2399, %v2403
      %v2406 = vshrl.u32 %v2294, 16
      %v2408 = vrot.slane %v2406, 4
      %v2409 = vshll.u32 %v2294, 16
      %v2411 = vrot.slane %v2409, 5
      %v2412 = vor.u32 %v2408, %v2411
      %v2413 = vrot.slane %v2412, 4
      %v2415 = vshll.u32 %v2295, 16
      %v2417 = vrot.slane %v2415, 5
      %v2418 = vsel %vm1497, %v2413, %v2417
      %v2419 = vshrl.u32 %v2295, 16
      %v2421 = vrot.slane %v2419, 4
      %v2422 = vor.u32 %v2421, %v2417
      %v2423 = vrot.slane %v2422, 4
      %v2425 = vshll.u32 %v2296, 16
      %v2427 = vrot.slane %v2425, 5
      %v2428 = vsel %vm1497, %v2423, %v2427
      %v2430 = vshrl.u32 %v2297, 16
      %v2432 = vrot.slane %v2430, 4
      %v2433 = vshll.u32 %v2297, 16
      %v2435 = vrot.slane %v2433, 5
      %v2436 = vor.u32 %v2432, %v2435
      %v2437 = vrot.slane %v2436, 4
      %v2439 = vshll.u32 %v2298, 16
      %v2441 = vrot.slane %v2439, 5
      %v2442 = vsel %vm1497, %v2437, %v2441
      %v2443 = vshrl.u32 %v2298, 16
      %v2445 = vrot.slane %v2443, 4
      %v2446 = vor.u32 %v2445, %v2441
      %v2447 = vrot.slane %v2446, 4
      %v2449 = vshll.u32 %v2299, 16
      %v2451 = vrot.slane %v2449, 5
      %v2452 = vsel %vm1497, %v2447, %v2451
      %v2454 = vshrl.u32 %v2300, 16
      %v2456 = vrot.slane %v2454, 4
      %v2457 = vshll.u32 %v2300, 16
      %v2459 = vrot.slane %v2457, 5
      %v2460 = vor.u32 %v2456, %v2459
      %v2461 = vrot.slane %v2460, 4
      %v2463 = vshll.u32 %v2301, 16
      %v2465 = vrot.slane %v2463, 5
      %v2466 = vsel %vm1497, %v2461, %v2465
      %v2467 = vshrl.u32 %v2301, 16
      %v2469 = vrot.slane %v2467, 4
      %v2470 = vor.u32 %v2469, %v2465
      %v2471 = vrot.slane %v2470, 4
      %v2473 = vshll.u32 %v2302, 16
      %v2475 = vrot.slane %v2473, 5
      %v2476 = vsel %vm1497, %v2471, %v2475
      %v2478 = vshrl.u32 %v2303, 16
      %v2480 = vrot.slane %v2478, 4
      %v2481 = vshll.u32 %v2303, 16
      %v2483 = vrot.slane %v2481, 5
      %v2484 = vor.u32 %v2480, %v2483
      %v2485 = vrot.slane %v2484, 4
      %v2487 = vshll.u32 %v2304, 16
      %v2489 = vrot.slane %v2487, 5
      %v2490 = vsel %vm1497, %v2485, %v2489
      %v2491 = vshrl.u32 %v2304, 16
      %v2493 = vrot.slane %v2491, 4
      %v2494 = vor.u32 %v2493, %v2489
      %v2495 = vrot.slane %v2494, 4
      %v2497 = vshll.u32 %v2305, 16
      %v2499 = vrot.slane %v2497, 5
      %v2500 = vsel %vm1497, %v2495, %v2499
      %v2502 = vshrl.u32 %v2306, 16
      %v2504 = vrot.slane %v2502, 4
      %v2505 = vshll.u32 %v2306, 16
      %v2507 = vrot.slane %v2505, 5
      %v2508 = vor.u32 %v2504, %v2507
      %v2509 = vrot.slane %v2508, 4
      %v2511 = vshll.u32 %v2307, 16
      %v2513 = vrot.slane %v2511, 5
      %v2514 = vsel %vm1497, %v2509, %v2513
      %v2515 = vshrl.u32 %v2307, 16
      %v2517 = vrot.slane %v2515, 4
      %v2518 = vor.u32 %v2517, %v2513
      %v2519 = vrot.slane %v2518, 4
      %v2521 = vshll.u32 %v2308, 16
      %v2523 = vrot.slane %v2521, 5
      %v2524 = vsel %vm1497, %v2519, %v2523
      %v2526 = vshrl.u32 %v2309, 16
      %v2528 = vrot.slane %v2526, 4
      %v2529 = vshll.u32 %v2309, 16
      %v2531 = vrot.slane %v2529, 5
      %v2532 = vor.u32 %v2528, %v2531
      %v2533 = vrot.slane %v2532, 4
      %v2535 = vshll.u32 %v2310, 16
      %v2537 = vrot.slane %v2535, 5
      %v2538 = vsel %vm1497, %v2533, %v2537
      %v2539 = vshrl.u32 %v2310, 16
      %v2541 = vrot.slane %v2539, 4
      %v2542 = vor.u32 %v2541, %v2537
      %v2543 = vrot.slane %v2542, 4
      %v2545 = vshll.u32 %v2311, 16
      %v2547 = vrot.slane %v2545, 5
      %v2548 = vsel %vm1497, %v2543, %v2547
      %v2550 = vshrl.u32 %v2312, 16
      %v2552 = vrot.slane %v2550, 4
      %v2553 = vshll.u32 %v2312, 16
      %v2555 = vrot.slane %v2553, 5
      %v2556 = vor.u32 %v2552, %v2555
      %v2557 = vrot.slane %v2556, 4
      %v2559 = vshll.u32 %v2313, 16
      %v2561 = vrot.slane %v2559, 5
      %v2562 = vsel %vm1497, %v2557, %v2561
      %v2563 = vshrl.u32 %v2313, 16
      %v2565 = vrot.slane %v2563, 4
      %v2566 = vor.u32 %v2565, %v2561
      %v2567 = vrot.slane %v2566, 4
      %v2569 = vshll.u32 %v2314, 16
      %v2571 = vrot.slane %v2569, 5
      %v2572 = vsel %vm1497, %v2567, %v2571
      %v2574 = vshrl.u32 %v2315, 16
      %v2576 = vrot.slane %v2574, 4
      %v2577 = vshll.u32 %v2315, 16
      %v2579 = vrot.slane %v2577, 5
      %v2580 = vor.u32 %v2576, %v2579
      %v2581 = vrot.slane %v2580, 4
      %v2583 = vshll.u32 %v2316, 16
      %v2585 = vrot.slane %v2583, 5
      %v2586 = vsel %vm1497, %v2581, %v2585
      %v2587 = vshrl.u32 %v2316, 16
      %v2589 = vrot.slane %v2587, 4
      %v2590 = vor.u32 %v2589, %v2585
      %v2591 = vrot.slane %v2590, 4
      %v2593 = vshll.u32 %v2317, 16
      %v2595 = vrot.slane %v2593, 5
      %v2596 = vsel %vm1497, %v2591, %v2595
      %v2598 = vshrl.u32 %v2318, 16
      %v2600 = vrot.slane %v2598, 4
      %v2601 = vshll.u32 %v2318, 16
      %v2603 = vrot.slane %v2601, 5
      %v2604 = vor.u32 %v2600, %v2603
      %v2605 = vrot.slane %v2604, 4
      %v2607 = vshll.u32 %v2319, 16
      %v2609 = vrot.slane %v2607, 5
      %v2610 = vsel %vm1497, %v2605, %v2609
      %v2611 = vshrl.u32 %v2319, 16
      %v2613 = vrot.slane %v2611, 4
      %v2614 = vor.u32 %v2613, %v2609
      %v2615 = vrot.slane %v2614, 4
      %v2617 = vshll.u32 %v2320, 16
      %v2619 = vrot.slane %v2617, 5
      %v2620 = vsel %vm1497, %v2615, %v2619
      %v2622 = vshrl.u32 %v2321, 16
      %v2624 = vrot.slane %v2622, 4
      %v2625 = vshll.u32 %v2321, 16
      %v2627 = vrot.slane %v2625, 5
      %v2628 = vor.u32 %v2624, %v2627
      %v2629 = vrot.slane %v2628, 4
      %v2631 = vshll.u32 %v2322, 16
      %v2633 = vrot.slane %v2631, 5
      %v2634 = vsel %vm1497, %v2629, %v2633
      %v2635 = vshrl.u32 %v2322, 16
      %v2637 = vrot.slane %v2635, 4
      %v2638 = vor.u32 %v2637, %v2633
      %v2639 = vrot.slane %v2638, 4
      %v2641 = vshll.u32 %v2323, 16
      %v2643 = vrot.slane %v2641, 5
      %v2644 = vsel %vm1497, %v2639, %v2643
      %v2646 = vshrl.u32 %v2324, 16
      %v2648 = vrot.slane %v2646, 4
      %v2649 = vshll.u32 %v2324, 16
      %v2651 = vrot.slane %v2649, 5
      %v2652 = vor.u32 %v2648, %v2651
      %v2653 = vrot.slane %v2652, 4
      %v2655 = vshll.u32 %v2325, 16
      %v2657 = vrot.slane %v2655, 5
      %v2658 = vsel %vm1497, %v2653, %v2657
      %v2659 = vshrl.u32 %v2325, 16
      %v2661 = vrot.slane %v2659, 4
      %v2662 = vor.u32 %v2661, %v2657
      %v2663 = vrot.slane %v2662, 4
      %v2665 = vshll.u32 %v2326, 16
      %v2667 = vrot.slane %v2665, 5
      %v2668 = vsel %vm1497, %v2663, %v2667
      %v2670 = vshrl.u32 %v2327, 16
      %v2672 = vrot.slane %v2670, 4
      %v2673 = vshll.u32 %v2327, 16
      %v2675 = vrot.slane %v2673, 5
      %v2676 = vor.u32 %v2672, %v2675
      %v2677 = vrot.slane %v2676, 4
      %v2679 = vshll.u32 %v2328, 16
      %v2681 = vrot.slane %v2679, 5
      %v2682 = vsel %vm1497, %v2677, %v2681
      %v2683 = vshrl.u32 %v2328, 16
      %v2685 = vrot.slane %v2683, 4
      %v2686 = vor.u32 %v2685, %v2681
      %v2687 = vrot.slane %v2686, 4
      %v2689 = vshll.u32 %v2329, 16
      %v2691 = vrot.slane %v2689, 5
      %v2692 = vsel %vm1497, %v2687, %v2691
      %v2694 = vshrl.u32 %v2330, 16
      %v2696 = vrot.slane %v2694, 4
      %v2697 = vshll.u32 %v2330, 16
      %v2699 = vrot.slane %v2697, 5
      %v2700 = vor.u32 %v2696, %v2699
      %v2701 = vrot.slane %v2700, 4
      %v2703 = vshll.u32 %v2331, 16
      %v2705 = vrot.slane %v2703, 5
      %v2706 = vsel %vm1497, %v2701, %v2705
      %v2707 = vshrl.u32 %v2331, 16
      %v2709 = vrot.slane %v2707, 4
      %v2710 = vor.u32 %v2709, %v2705
      %v2711 = vrot.slane %v2710, 4
      %v2713 = vshll.u32 %v2332, 16
      %v2715 = vrot.slane %v2713, 5
      %v2716 = vsel %vm1497, %v2711, %v2715
      %2749 = vst [vmem:[#allocation3 + $0x10] sm:$0xf] %v2346
      %2750 = vst [vmem:[#allocation3 + $0x34] sm:$0xf] %v2356
      %2751 = vst [vmem:[#allocation3 + $0x58] sm:$0xf] %v2370
      %2752 = vst [vmem:[#allocation3 + $0x7c] sm:$0xf] %v2380
      %2753 = vst [vmem:[#allocation3 + $0xa0] sm:$0xf] %v2394
      %2754 = vst [vmem:[#allocation3 + $0xc4] sm:$0xf] %v2404
      %2755 = vst [vmem:[#allocation3 + $0xe8] sm:$0xf] %v2418
      %2756 = vst [vmem:[#allocation3 + $0x10c] sm:$0xf] %v2428
      %2757 = vst [vmem:[#allocation3 + $0x130] sm:$0xf] %v2442
      %2758 = vst [vmem:[#allocation3 + $0x154] sm:$0xf] %v2452
      %2759 = vst [vmem:[#allocation3 + $0x178] sm:$0xf] %v2466
      %2760 = vst [vmem:[#allocation3 + $0x19c] sm:$0xf] %v2476
      %2761 = vst [vmem:[#allocation3 + $0x1c0] sm:$0xf] %v2490
      %2762 = vst [vmem:[#allocation3 + $0x1e4] sm:$0xf] %v2500
      %2763 = vst [vmem:[#allocation3 + $0x208] sm:$0xf] %v2514
      %2764 = vst [vmem:[#allocation3 + $0x22c] sm:$0xf] %v2524
      %2765 = vst [vmem:[#allocation3 + $0x250] sm:$0xf] %v2538
      %2766 = vst [vmem:[#allocation3 + $0x274] sm:$0xf] %v2548
      %2767 = vst [vmem:[#allocation3 + $0x298] sm:$0xf] %v2562
      %2768 = vst [vmem:[#allocation3 + $0x2bc] sm:$0xf] %v2572
      %2769 = vst [vmem:[#allocation3 + $0x2e0] sm:$0xf] %v2586
      %2770 = vst [vmem:[#allocation3 + $0x304] sm:$0xf] %v2596
      %2771 = vst [vmem:[#allocation3 + $0x328] sm:$0xf] %v2610
      %2772 = vst [vmem:[#allocation3 + $0x34c] sm:$0xf] %v2620
      %2773 = vst [vmem:[#allocation3 + $0x370] sm:$0xf] %v2634
      %2774 = vst [vmem:[#allocation3 + $0x394] sm:$0xf] %v2644
      %2775 = vst [vmem:[#allocation3 + $0x3b8] sm:$0xf] %v2658
      %2776 = vst [vmem:[#allocation3 + $0x3dc] sm:$0xf] %v2668
      %2777 = vst [vmem:[#allocation3 + $0x400] sm:$0xf] %v2682
      %2778 = vst [vmem:[#allocation3 + $0x424] sm:$0xf] %v2692
      %2779 = vst [vmem:[#allocation3 + $0x448] sm:$0xf] %v2706
      %2780 = vst [vmem:[#allocation3 + $0x46c] sm:$0xf] %v2716
      %v2781 = vld [vmem:[%s1143] sm:$0xe]
      %v2782 = vld [vmem:[%s1143 + $0x4] sm:$0xf]
      %v2783 = vld [vmem:[%s1143 + $0x8] sm:$0x1]
      %v2784 = vld [vmem:[%s1143 + $0xc] sm:$0xe]
      %v2785 = vld [vmem:[%s1143 + $0x10] sm:$0xf]
      %v2786 = vld [vmem:[%s1143 + $0x14] sm:$0x1]
      %v2787 = vld [vmem:[%s1143 + $0x18] sm:$0xe]
      %v2788 = vld [vmem:[%s1143 + $0x1c] sm:$0xf]
      %v2789 = vld [vmem:[%s1143 + $0x20] sm:$0x1]
      %v2790 = vld [vmem:[%s1143 + $0x24] sm:$0xe]
      %v2791 = vld [vmem:[%s1143 + $0x28] sm:$0xf]
      %v2792 = vld [vmem:[%s1143 + $0x2c] sm:$0x1]
      %v2793 = vld [vmem:[%s1143 + $0x30] sm:$0xe]
      %v2794 = vld [vmem:[%s1143 + $0x34] sm:$0xf]
      %v2795 = vld [vmem:[%s1143 + $0x38] sm:$0x1]
      %v2796 = vld [vmem:[%s1143 + $0x3c] sm:$0xe]
      %v2797 = vld [vmem:[%s1143 + $0x40] sm:$0xf]
      %v2798 = vld [vmem:[%s1143 + $0x44] sm:$0x1]
      %v2799 = vld [vmem:[%s1143 + $0x48] sm:$0xe]
      %v2800 = vld [vmem:[%s1143 + $0x4c] sm:$0xf]
      %v2801 = vld [vmem:[%s1143 + $0x50] sm:$0x1]
      %v2802 = vld [vmem:[%s1143 + $0x54] sm:$0xe]
      %v2803 = vld [vmem:[%s1143 + $0x58] sm:$0xf]
      %v2804 = vld [vmem:[%s1143 + $0x5c] sm:$0x1]
      %v2805 = vld [vmem:[%s1143 + $0x60] sm:$0xe]
      %v2806 = vld [vmem:[%s1143 + $0x64] sm:$0xf]
      %v2807 = vld [vmem:[%s1143 + $0x68] sm:$0x1]
      %v2808 = vld [vmem:[%s1143 + $0x6c] sm:$0xe]
      %v2809 = vld [vmem:[%s1143 + $0x70] sm:$0xf]
      %v2810 = vld [vmem:[%s1143 + $0x74] sm:$0x1]
      %v2811 = vld [vmem:[%s1143 + $0x78] sm:$0xe]
      %v2812 = vld [vmem:[%s1143 + $0x7c] sm:$0xf]
      %v2813 = vld [vmem:[%s1143 + $0x80] sm:$0x1]
      %v2814 = vld [vmem:[%s1143 + $0x84] sm:$0xe]
      %v2815 = vld [vmem:[%s1143 + $0x88] sm:$0xf]
      %v2816 = vld [vmem:[%s1143 + $0x8c] sm:$0x1]
      %v2817 = vld [vmem:[%s1143 + $0x90] sm:$0xe]
      %v2818 = vld [vmem:[%s1143 + $0x94] sm:$0xf]
      %v2819 = vld [vmem:[%s1143 + $0x98] sm:$0x1]
      %v2820 = vld [vmem:[%s1143 + $0x9c] sm:$0xe]
      %v2821 = vld [vmem:[%s1143 + $0xa0] sm:$0xf]
      %v2822 = vld [vmem:[%s1143 + $0xa4] sm:$0x1]
      %v2823 = vld [vmem:[%s1143 + $0xa8] sm:$0xe]
      %v2824 = vld [vmem:[%s1143 + $0xac] sm:$0xf]
      %v2825 = vld [vmem:[%s1143 + $0xb0] sm:$0x1]
      %v2826 = vld [vmem:[%s1143 + $0xb4] sm:$0xe]
      %v2827 = vld [vmem:[%s1143 + $0xb8] sm:$0xf]
      %v2828 = vld [vmem:[%s1143 + $0xbc] sm:$0x1]
      %v2877 = vrot.slane %v2781, 5
      %v2878 = vrot.slane %v2877, 4
      %v2879 = vrot.slane %v2782, 5
      %v2880 = vsel %vm2044, %v2878, %v2879
      %v2881 = vrot.slane %v2879, 4
      %v2882 = vrot.slane %v2783, 5
      %v2883 = vsel %vm2044, %v2881, %v2882
      %v2884 = vrot.slane %v2784, 5
      %v2885 = vrot.slane %v2884, 4
      %v2886 = vrot.slane %v2785, 5
      %v2887 = vsel %vm2044, %v2885, %v2886
      %v2888 = vrot.slane %v2886, 4
      %v2889 = vrot.slane %v2786, 5
      %v2890 = vsel %vm2044, %v2888, %v2889
      %v2891 = vrot.slane %v2787, 5
      %v2892 = vrot.slane %v2891, 4
      %v2893 = vrot.slane %v2788, 5
      %v2894 = vsel %vm2044, %v2892, %v2893
      %v2895 = vrot.slane %v2893, 4
      %v2896 = vrot.slane %v2789, 5
      %v2897 = vsel %vm2044, %v2895, %v2896
      %v2898 = vrot.slane %v2790, 5
      %v2899 = vrot.slane %v2898, 4
      %v2900 = vrot.slane %v2791, 5
      %v2901 = vsel %vm2044, %v2899, %v2900
      %v2902 = vrot.slane %v2900, 4
      %v2903 = vrot.slane %v2792, 5
      %v2904 = vsel %vm2044, %v2902, %v2903
      %v2905 = vrot.slane %v2793, 5
      %v2906 = vrot.slane %v2905, 4
      %v2907 = vrot.slane %v2794, 5
      %v2908 = vsel %vm2044, %v2906, %v2907
      %v2909 = vrot.slane %v2907, 4
      %v2910 = vrot.slane %v2795, 5
      %v2911 = vsel %vm2044, %v2909, %v2910
      %v2912 = vrot.slane %v2796, 5
      %v2913 = vrot.slane %v2912, 4
      %v2914 = vrot.slane %v2797, 5
      %v2915 = vsel %vm2044, %v2913, %v2914
      %v2916 = vrot.slane %v2914, 4
      %v2917 = vrot.slane %v2798, 5
      %v2918 = vsel %vm2044, %v2916, %v2917
      %v2919 = vrot.slane %v2799, 5
      %v2920 = vrot.slane %v2919, 4
      %v2921 = vrot.slane %v2800, 5
      %v2922 = vsel %vm2044, %v2920, %v2921
      %v2923 = vrot.slane %v2921, 4
      %v2924 = vrot.slane %v2801, 5
      %v2925 = vsel %vm2044, %v2923, %v2924
      %v2926 = vrot.slane %v2802, 5
      %v2927 = vrot.slane %v2926, 4
      %v2928 = vrot.slane %v2803, 5
      %v2929 = vsel %vm2044, %v2927, %v2928
      %v2930 = vrot.slane %v2928, 4
      %v2931 = vrot.slane %v2804, 5
      %v2932 = vsel %vm2044, %v2930, %v2931
      %v2933 = vrot.slane %v2805, 5
      %v2934 = vrot.slane %v2933, 4
      %v2935 = vrot.slane %v2806, 5
      %v2936 = vsel %vm2044, %v2934, %v2935
      %v2937 = vrot.slane %v2935, 4
      %v2938 = vrot.slane %v2807, 5
      %v2939 = vsel %vm2044, %v2937, %v2938
      %v2940 = vrot.slane %v2808, 5
      %v2941 = vrot.slane %v2940, 4
      %v2942 = vrot.slane %v2809, 5
      %v2943 = vsel %vm2044, %v2941, %v2942
      %v2944 = vrot.slane %v2942, 4
      %v2945 = vrot.slane %v2810, 5
      %v2946 = vsel %vm2044, %v2944, %v2945
      %v2947 = vrot.slane %v2811, 5
      %v2948 = vrot.slane %v2947, 4
      %v2949 = vrot.slane %v2812, 5
      %v2950 = vsel %vm2044, %v2948, %v2949
      %v2951 = vrot.slane %v2949, 4
      %v2952 = vrot.slane %v2813, 5
      %v2953 = vsel %vm2044, %v2951, %v2952
      %v2954 = vrot.slane %v2814, 5
      %v2955 = vrot.slane %v2954, 4
      %v2956 = vrot.slane %v2815, 5
      %v2957 = vsel %vm2044, %v2955, %v2956
      %v2958 = vrot.slane %v2956, 4
      %v2959 = vrot.slane %v2816, 5
      %v2960 = vsel %vm2044, %v2958, %v2959
      %v2961 = vrot.slane %v2817, 5
      %v2962 = vrot.slane %v2961, 4
      %v2963 = vrot.slane %v2818, 5
      %v2964 = vsel %vm2044, %v2962, %v2963
      %v2965 = vrot.slane %v2963, 4
      %v2966 = vrot.slane %v2819, 5
      %v2967 = vsel %vm2044, %v2965, %v2966
      %v2968 = vrot.slane %v2820, 5
      %v2969 = vrot.slane %v2968, 4
      %v2970 = vrot.slane %v2821, 5
      %v2971 = vsel %vm2044, %v2969, %v2970
      %v2972 = vrot.slane %v2970, 4
      %v2973 = vrot.slane %v2822, 5
      %v2974 = vsel %vm2044, %v2972, %v2973
      %v2975 = vrot.slane %v2823, 5
      %v2976 = vrot.slane %v2975, 4
      %v2977 = vrot.slane %v2824, 5
      %v2978 = vsel %vm2044, %v2976, %v2977
      %v2979 = vrot.slane %v2977, 4
      %v2980 = vrot.slane %v2825, 5
      %v2981 = vsel %vm2044, %v2979, %v2980
      %v2982 = vrot.slane %v2826, 5
      %v2983 = vrot.slane %v2982, 4
      %v2984 = vrot.slane %v2827, 5
      %v2985 = vsel %vm2044, %v2983, %v2984
      %v2986 = vrot.slane %v2984, 4
      %v2987 = vrot.slane %v2828, 5
      %v2988 = vsel %vm2044, %v2986, %v2987
      %3021 = vst [vmem:[#allocation3 + $0x14] sm:$0xf] %v2880
      %3022 = vst [vmem:[#allocation3 + $0x38] sm:$0xf] %v2883
      %3023 = vst [vmem:[#allocation3 + $0x5c] sm:$0xf] %v2887
      %3024 = vst [vmem:[#allocation3 + $0x80] sm:$0xf] %v2890
      %3025 = vst [vmem:[#allocation3 + $0xa4] sm:$0xf] %v2894
      %3026 = vst [vmem:[#allocation3 + $0xc8] sm:$0xf] %v2897
      %3027 = vst [vmem:[#allocation3 + $0xec] sm:$0xf] %v2901
      %3028 = vst [vmem:[#allocation3 + $0x110] sm:$0xf] %v2904
      %3029 = vst [vmem:[#allocation3 + $0x134] sm:$0xf] %v2908
      %3030 = vst [vmem:[#allocation3 + $0x158] sm:$0xf] %v2911
      %3031 = vst [vmem:[#allocation3 + $0x17c] sm:$0xf] %v2915
      %3032 = vst [vmem:[#allocation3 + $0x1a0] sm:$0xf] %v2918
      %3033 = vst [vmem:[#allocation3 + $0x1c4] sm:$0xf] %v2922
      %3034 = vst [vmem:[#allocation3 + $0x1e8] sm:$0xf] %v2925
      %3035 = vst [vmem:[#allocation3 + $0x20c] sm:$0xf] %v2929
      %3036 = vst [vmem:[#allocation3 + $0x230] sm:$0xf] %v2932
      %3037 = vst [vmem:[#allocation3 + $0x254] sm:$0xf] %v2936
      %3038 = vst [vmem:[#allocation3 + $0x278] sm:$0xf] %v2939
      %3039 = vst [vmem:[#allocation3 + $0x29c] sm:$0xf] %v2943
      %3040 = vst [vmem:[#allocation3 + $0x2c0] sm:$0xf] %v2946
      %3041 = vst [vmem:[#allocation3 + $0x2e4] sm:$0xf] %v2950
      %3042 = vst [vmem:[#allocation3 + $0x308] sm:$0xf] %v2953
      %3043 = vst [vmem:[#allocation3 + $0x32c] sm:$0xf] %v2957
      %3044 = vst [vmem:[#allocation3 + $0x350] sm:$0xf] %v2960
      %3045 = vst [vmem:[#allocation3 + $0x374] sm:$0xf] %v2964
      %3046 = vst [vmem:[#allocation3 + $0x398] sm:$0xf] %v2967
      %3047 = vst [vmem:[#allocation3 + $0x3bc] sm:$0xf] %v2971
      %3048 = vst [vmem:[#allocation3 + $0x3e0] sm:$0xf] %v2974
      %3049 = vst [vmem:[#allocation3 + $0x404] sm:$0xf] %v2978
      %3050 = vst [vmem:[#allocation3 + $0x428] sm:$0xf] %v2981
      %3051 = vst [vmem:[#allocation3 + $0x44c] sm:$0xf] %v2985
      %3052 = vst [vmem:[#allocation3 + $0x470] sm:$0xf] %v2988
      %s3053 = scalar_lea.vmem [#allocation2], 24
      %v3054 = vld [vmem:[%s3053] sm:$0xf]
      %v3055 = vld [vmem:[%s3053 + $0x4] sm:$0xf]
      %v3056 = vld [vmem:[%s3053 + $0xc] sm:$0xf]
      %v3057 = vld [vmem:[%s3053 + $0x10] sm:$0xf]
      %v3058 = vld [vmem:[%s3053 + $0x18] sm:$0xf]
      %v3059 = vld [vmem:[%s3053 + $0x1c] sm:$0xf]
      %v3060 = vld [vmem:[%s3053 + $0x24] sm:$0xf]
      %v3061 = vld [vmem:[%s3053 + $0x28] sm:$0xf]
      %v3062 = vld [vmem:[%s3053 + $0x30] sm:$0xf]
      %v3063 = vld [vmem:[%s3053 + $0x34] sm:$0xf]
      %v3064 = vld [vmem:[%s3053 + $0x3c] sm:$0xf]
      %v3065 = vld [vmem:[%s3053 + $0x40] sm:$0xf]
      %v3066 = vld [vmem:[%s3053 + $0x48] sm:$0xf]
      %v3067 = vld [vmem:[%s3053 + $0x4c] sm:$0xf]
      %v3068 = vld [vmem:[%s3053 + $0x54] sm:$0xf]
      %v3069 = vld [vmem:[%s3053 + $0x58] sm:$0xf]
      %v3070 = vld [vmem:[%s3053 + $0x60] sm:$0xf]
      %v3071 = vld [vmem:[%s3053 + $0x64] sm:$0xf]
      %v3072 = vld [vmem:[%s3053 + $0x6c] sm:$0xf]
      %v3073 = vld [vmem:[%s3053 + $0x70] sm:$0xf]
      %v3074 = vld [vmem:[%s3053 + $0x78] sm:$0xf]
      %v3075 = vld [vmem:[%s3053 + $0x7c] sm:$0xf]
      %v3076 = vld [vmem:[%s3053 + $0x84] sm:$0xf]
      %v3077 = vld [vmem:[%s3053 + $0x88] sm:$0xf]
      %v3078 = vld [vmem:[%s3053 + $0x90] sm:$0xf]
      %v3079 = vld [vmem:[%s3053 + $0x94] sm:$0xf]
      %v3080 = vld [vmem:[%s3053 + $0x9c] sm:$0xf]
      %v3081 = vld [vmem:[%s3053 + $0xa0] sm:$0xf]
      %v3082 = vld [vmem:[%s3053 + $0xa8] sm:$0xf]
      %v3083 = vld [vmem:[%s3053 + $0xac] sm:$0xf]
      %v3084 = vld [vmem:[%s3053 + $0xb4] sm:$0xf]
      %v3085 = vld [vmem:[%s3053 + $0xb8] sm:$0xf]
      %3086 = vst [vmem:[#allocation3 + $0x18] sm:$0xf] %v3054
      %3087 = vst [vmem:[#allocation3 + $0x3c] sm:$0xf] %v3055
      %3088 = vst [vmem:[#allocation3 + $0x60] sm:$0xf] %v3056
      %3089 = vst [vmem:[#allocation3 + $0x84] sm:$0xf] %v3057
      %3090 = vst [vmem:[#allocation3 + $0xa8] sm:$0xf] %v3058
      %3091 = vst [vmem:[#allocation3 + $0xcc] sm:$0xf] %v3059
      %3092 = vst [vmem:[#allocation3 + $0xf0] sm:$0xf] %v3060
      %3093 = vst [vmem:[#allocation3 + $0x114] sm:$0xf] %v3061
      %3094 = vst [vmem:[#allocation3 + $0x138] sm:$0xf] %v3062
      %3095 = vst [vmem:[#allocation3 + $0x15c] sm:$0xf] %v3063
      %3096 = vst [vmem:[#allocation3 + $0x180] sm:$0xf] %v3064
      %3097 = vst [vmem:[#allocation3 + $0x1a4] sm:$0xf] %v3065
      %3098 = vst [vmem:[#allocation3 + $0x1c8] sm:$0xf] %v3066
      %3099 = vst [vmem:[#allocation3 + $0x1ec] sm:$0xf] %v3067
      %3100 = vst [vmem:[#allocation3 + $0x210] sm:$0xf] %v3068
      %3101 = vst [vmem:[#allocation3 + $0x234] sm:$0xf] %v3069
      %3102 = vst [vmem:[#allocation3 + $0x258] sm:$0xf] %v3070
      %3103 = vst [vmem:[#allocation3 + $0x27c] sm:$0xf] %v3071
      %3104 = vst [vmem:[#allocation3 + $0x2a0] sm:$0xf] %v3072
      %3105 = vst [vmem:[#allocation3 + $0x2c4] sm:$0xf] %v3073
      %3106 = vst [vmem:[#allocation3 + $0x2e8] sm:$0xf] %v3074
      %3107 = vst [vmem:[#allocation3 + $0x30c] sm:$0xf] %v3075
      %3108 = vst [vmem:[#allocation3 + $0x330] sm:$0xf] %v3076
      %3109 = vst [vmem:[#allocation3 + $0x354] sm:$0xf] %v3077
      %3110 = vst [vmem:[#allocation3 + $0x378] sm:$0xf] %v3078
      %3111 = vst [vmem:[#allocation3 + $0x39c] sm:$0xf] %v3079
      %3112 = vst [vmem:[#allocation3 + $0x3c0] sm:$0xf] %v3080
      %3113 = vst [vmem:[#allocation3 + $0x3e4] sm:$0xf] %v3081
      %3114 = vst [vmem:[#allocation3 + $0x408] sm:$0xf] %v3082
      %3115 = vst [vmem:[#allocation3 + $0x42c] sm:$0xf] %v3083
      %3116 = vst [vmem:[#allocation3 + $0x450] sm:$0xf] %v3084
      %3117 = vst [vmem:[#allocation3 + $0x474] sm:$0xf] %v3085
      %v3118 = vld [vmem:[%s3053] sm:$0xf]
      %v3119 = vld [vmem:[%s3053 + $0x4] sm:$0xf]
      %v3120 = vld [vmem:[%s3053 + $0x8] sm:$0x1]
      %v3121 = vld [vmem:[%s3053 + $0xc] sm:$0xf]
      %v3122 = vld [vmem:[%s3053 + $0x10] sm:$0xf]
      %v3123 = vld [vmem:[%s3053 + $0x14] sm:$0x1]
      %v3124 = vld [vmem:[%s3053 + $0x18] sm:$0xf]
      %v3125 = vld [vmem:[%s3053 + $0x1c] sm:$0xf]
      %v3126 = vld [vmem:[%s3053 + $0x20] sm:$0x1]
      %v3127 = vld [vmem:[%s3053 + $0x24] sm:$0xf]
      %v3128 = vld [vmem:[%s3053 + $0x28] sm:$0xf]
      %v3129 = vld [vmem:[%s3053 + $0x2c] sm:$0x1]
      %v3130 = vld [vmem:[%s3053 + $0x30] sm:$0xf]
      %v3131 = vld [vmem:[%s3053 + $0x34] sm:$0xf]
      %v3132 = vld [vmem:[%s3053 + $0x38] sm:$0x1]
      %v3133 = vld [vmem:[%s3053 + $0x3c] sm:$0xf]
      %v3134 = vld [vmem:[%s3053 + $0x40] sm:$0xf]
      %v3135 = vld [vmem:[%s3053 + $0x44] sm:$0x1]
      %v3136 = vld [vmem:[%s3053 + $0x48] sm:$0xf]
      %v3137 = vld [vmem:[%s3053 + $0x4c] sm:$0xf]
      %v3138 = vld [vmem:[%s3053 + $0x50] sm:$0x1]
      %v3139 = vld [vmem:[%s3053 + $0x54] sm:$0xf]
      %v3140 = vld [vmem:[%s3053 + $0x58] sm:$0xf]
      %v3141 = vld [vmem:[%s3053 + $0x5c] sm:$0x1]
      %v3142 = vld [vmem:[%s3053 + $0x60] sm:$0xf]
      %v3143 = vld [vmem:[%s3053 + $0x64] sm:$0xf]
      %v3144 = vld [vmem:[%s3053 + $0x68] sm:$0x1]
      %v3145 = vld [vmem:[%s3053 + $0x6c] sm:$0xf]
      %v3146 = vld [vmem:[%s3053 + $0x70] sm:$0xf]
      %v3147 = vld [vmem:[%s3053 + $0x74] sm:$0x1]
      %v3148 = vld [vmem:[%s3053 + $0x78] sm:$0xf]
      %v3149 = vld [vmem:[%s3053 + $0x7c] sm:$0xf]
      %v3150 = vld [vmem:[%s3053 + $0x80] sm:$0x1]
      %v3151 = vld [vmem:[%s3053 + $0x84] sm:$0xf]
      %v3152 = vld [vmem:[%s3053 + $0x88] sm:$0xf]
      %v3153 = vld [vmem:[%s3053 + $0x8c] sm:$0x1]
      %v3154 = vld [vmem:[%s3053 + $0x90] sm:$0xf]
      %v3155 = vld [vmem:[%s3053 + $0x94] sm:$0xf]
      %v3156 = vld [vmem:[%s3053 + $0x98] sm:$0x1]
      %v3157 = vld [vmem:[%s3053 + $0x9c] sm:$0xf]
      %v3158 = vld [vmem:[%s3053 + $0xa0] sm:$0xf]
      %v3159 = vld [vmem:[%s3053 + $0xa4] sm:$0x1]
      %v3160 = vld [vmem:[%s3053 + $0xa8] sm:$0xf]
      %v3161 = vld [vmem:[%s3053 + $0xac] sm:$0xf]
      %v3162 = vld [vmem:[%s3053 + $0xb0] sm:$0x1]
      %v3163 = vld [vmem:[%s3053 + $0xb4] sm:$0xf]
      %v3164 = vld [vmem:[%s3053 + $0xb8] sm:$0xf]
      %v3165 = vld [vmem:[%s3053 + $0xbc] sm:$0x1]
      %v3167 = vshrl.u32 %v3118, 16
      %v3169 = vrot.slane %v3167, 4
      %v3170 = vshll.u32 %v3118, 16
      %v3172 = vrot.slane %v3170, 5
      %v3173 = vor.u32 %v3169, %v3172
      %v3174 = vrot.slane %v3173, 4
      %v3176 = vshll.u32 %v3119, 16
      %v3178 = vrot.slane %v3176, 5
      %v3179 = vsel %vm1497, %v3174, %v3178
      %v3180 = vshrl.u32 %v3119, 16
      %v3182 = vrot.slane %v3180, 4
      %v3183 = vor.u32 %v3182, %v3178
      %v3184 = vrot.slane %v3183, 4
      %v3186 = vshll.u32 %v3120, 16
      %v3188 = vrot.slane %v3186, 5
      %v3189 = vsel %vm1497, %v3184, %v3188
      %v3191 = vshrl.u32 %v3121, 16
      %v3193 = vrot.slane %v3191, 4
      %v3194 = vshll.u32 %v3121, 16
      %v3196 = vrot.slane %v3194, 5
      %v3197 = vor.u32 %v3193, %v3196
      %v3198 = vrot.slane %v3197, 4
      %v3200 = vshll.u32 %v3122, 16
      %v3202 = vrot.slane %v3200, 5
      %v3203 = vsel %vm1497, %v3198, %v3202
      %v3204 = vshrl.u32 %v3122, 16
      %v3206 = vrot.slane %v3204, 4
      %v3207 = vor.u32 %v3206, %v3202
      %v3208 = vrot.slane %v3207, 4
      %v3210 = vshll.u32 %v3123, 16
      %v3212 = vrot.slane %v3210, 5
      %v3213 = vsel %vm1497, %v3208, %v3212
      %v3215 = vshrl.u32 %v3124, 16
      %v3217 = vrot.slane %v3215, 4
      %v3218 = vshll.u32 %v3124, 16
      %v3220 = vrot.slane %v3218, 5
      %v3221 = vor.u32 %v3217, %v3220
      %v3222 = vrot.slane %v3221, 4
      %v3224 = vshll.u32 %v3125, 16
      %v3226 = vrot.slane %v3224, 5
      %v3227 = vsel %vm1497, %v3222, %v3226
      %v3228 = vshrl.u32 %v3125, 16
      %v3230 = vrot.slane %v3228, 4
      %v3231 = vor.u32 %v3230, %v3226
      %v3232 = vrot.slane %v3231, 4
      %v3234 = vshll.u32 %v3126, 16
      %v3236 = vrot.slane %v3234, 5
      %v3237 = vsel %vm1497, %v3232, %v3236
      %v3239 = vshrl.u32 %v3127, 16
      %v3241 = vrot.slane %v3239, 4
      %v3242 = vshll.u32 %v3127, 16
      %v3244 = vrot.slane %v3242, 5
      %v3245 = vor.u32 %v3241, %v3244
      %v3246 = vrot.slane %v3245, 4
      %v3248 = vshll.u32 %v3128, 16
      %v3250 = vrot.slane %v3248, 5
      %v3251 = vsel %vm1497, %v3246, %v3250
      %v3252 = vshrl.u32 %v3128, 16
      %v3254 = vrot.slane %v3252, 4
      %v3255 = vor.u32 %v3254, %v3250
      %v3256 = vrot.slane %v3255, 4
      %v3258 = vshll.u32 %v3129, 16
      %v3260 = vrot.slane %v3258, 5
      %v3261 = vsel %vm1497, %v3256, %v3260
      %v3263 = vshrl.u32 %v3130, 16
      %v3265 = vrot.slane %v3263, 4
      %v3266 = vshll.u32 %v3130, 16
      %v3268 = vrot.slane %v3266, 5
      %v3269 = vor.u32 %v3265, %v3268
      %v3270 = vrot.slane %v3269, 4
      %v3272 = vshll.u32 %v3131, 16
      %v3274 = vrot.slane %v3272, 5
      %v3275 = vsel %vm1497, %v3270, %v3274
      %v3276 = vshrl.u32 %v3131, 16
      %v3278 = vrot.slane %v3276, 4
      %v3279 = vor.u32 %v3278, %v3274
      %v3280 = vrot.slane %v3279, 4
      %v3282 = vshll.u32 %v3132, 16
      %v3284 = vrot.slane %v3282, 5
      %v3285 = vsel %vm1497, %v3280, %v3284
      %v3287 = vshrl.u32 %v3133, 16
      %v3289 = vrot.slane %v3287, 4
      %v3290 = vshll.u32 %v3133, 16
      %v3292 = vrot.slane %v3290, 5
      %v3293 = vor.u32 %v3289, %v3292
      %v3294 = vrot.slane %v3293, 4
      %v3296 = vshll.u32 %v3134, 16
      %v3298 = vrot.slane %v3296, 5
      %v3299 = vsel %vm1497, %v3294, %v3298
      %v3300 = vshrl.u32 %v3134, 16
      %v3302 = vrot.slane %v3300, 4
      %v3303 = vor.u32 %v3302, %v3298
      %v3304 = vrot.slane %v3303, 4
      %v3306 = vshll.u32 %v3135, 16
      %v3308 = vrot.slane %v3306, 5
      %v3309 = vsel %vm1497, %v3304, %v3308
      %v3311 = vshrl.u32 %v3136, 16
      %v3313 = vrot.slane %v3311, 4
      %v3314 = vshll.u32 %v3136, 16
      %v3316 = vrot.slane %v3314, 5
      %v3317 = vor.u32 %v3313, %v3316
      %v3318 = vrot.slane %v3317, 4
      %v3320 = vshll.u32 %v3137, 16
      %v3322 = vrot.slane %v3320, 5
      %v3323 = vsel %vm1497, %v3318, %v3322
      %v3324 = vshrl.u32 %v3137, 16
      %v3326 = vrot.slane %v3324, 4
      %v3327 = vor.u32 %v3326, %v3322
      %v3328 = vrot.slane %v3327, 4
      %v3330 = vshll.u32 %v3138, 16
      %v3332 = vrot.slane %v3330, 5
      %v3333 = vsel %vm1497, %v3328, %v3332
      %v3335 = vshrl.u32 %v3139, 16
      %v3337 = vrot.slane %v3335, 4
      %v3338 = vshll.u32 %v3139, 16
      %v3340 = vrot.slane %v3338, 5
      %v3341 = vor.u32 %v3337, %v3340
      %v3342 = vrot.slane %v3341, 4
      %v3344 = vshll.u32 %v3140, 16
      %v3346 = vrot.slane %v3344, 5
      %v3347 = vsel %vm1497, %v3342, %v3346
      %v3348 = vshrl.u32 %v3140, 16
      %v3350 = vrot.slane %v3348, 4
      %v3351 = vor.u32 %v3350, %v3346
      %v3352 = vrot.slane %v3351, 4
      %v3354 = vshll.u32 %v3141, 16
      %v3356 = vrot.slane %v3354, 5
      %v3357 = vsel %vm1497, %v3352, %v3356
      %v3359 = vshrl.u32 %v3142, 16
      %v3361 = vrot.slane %v3359, 4
      %v3362 = vshll.u32 %v3142, 16
      %v3364 = vrot.slane %v3362, 5
      %v3365 = vor.u32 %v3361, %v3364
      %v3366 = vrot.slane %v3365, 4
      %v3368 = vshll.u32 %v3143, 16
      %v3370 = vrot.slane %v3368, 5
      %v3371 = vsel %vm1497, %v3366, %v3370
      %v3372 = vshrl.u32 %v3143, 16
      %v3374 = vrot.slane %v3372, 4
      %v3375 = vor.u32 %v3374, %v3370
      %v3376 = vrot.slane %v3375, 4
      %v3378 = vshll.u32 %v3144, 16
      %v3380 = vrot.slane %v3378, 5
      %v3381 = vsel %vm1497, %v3376, %v3380
      %v3383 = vshrl.u32 %v3145, 16
      %v3385 = vrot.slane %v3383, 4
      %v3386 = vshll.u32 %v3145, 16
      %v3388 = vrot.slane %v3386, 5
      %v3389 = vor.u32 %v3385, %v3388
      %v3390 = vrot.slane %v3389, 4
      %v3392 = vshll.u32 %v3146, 16
      %v3394 = vrot.slane %v3392, 5
      %v3395 = vsel %vm1497, %v3390, %v3394
      %v3396 = vshrl.u32 %v3146, 16
      %v3398 = vrot.slane %v3396, 4
      %v3399 = vor.u32 %v3398, %v3394
      %v3400 = vrot.slane %v3399, 4
      %v3402 = vshll.u32 %v3147, 16
      %v3404 = vrot.slane %v3402, 5
      %v3405 = vsel %vm1497, %v3400, %v3404
      %v3407 = vshrl.u32 %v3148, 16
      %v3409 = vrot.slane %v3407, 4
      %v3410 = vshll.u32 %v3148, 16
      %v3412 = vrot.slane %v3410, 5
      %v3413 = vor.u32 %v3409, %v3412
      %v3414 = vrot.slane %v3413, 4
      %v3416 = vshll.u32 %v3149, 16
      %v3418 = vrot.slane %v3416, 5
      %v3419 = vsel %vm1497, %v3414, %v3418
      %v3420 = vshrl.u32 %v3149, 16
      %v3422 = vrot.slane %v3420, 4
      %v3423 = vor.u32 %v3422, %v3418
      %v3424 = vrot.slane %v3423, 4
      %v3426 = vshll.u32 %v3150, 16
      %v3428 = vrot.slane %v3426, 5
      %v3429 = vsel %vm1497, %v3424, %v3428
      %v3431 = vshrl.u32 %v3151, 16
      %v3433 = vrot.slane %v3431, 4
      %v3434 = vshll.u32 %v3151, 16
      %v3436 = vrot.slane %v3434, 5
      %v3437 = vor.u32 %v3433, %v3436
      %v3438 = vrot.slane %v3437, 4
      %v3440 = vshll.u32 %v3152, 16
      %v3442 = vrot.slane %v3440, 5
      %v3443 = vsel %vm1497, %v3438, %v3442
      %v3444 = vshrl.u32 %v3152, 16
      %v3446 = vrot.slane %v3444, 4
      %v3447 = vor.u32 %v3446, %v3442
      %v3448 = vrot.slane %v3447, 4
      %v3450 = vshll.u32 %v3153, 16
      %v3452 = vrot.slane %v3450, 5
      %v3453 = vsel %vm1497, %v3448, %v3452
      %v3455 = vshrl.u32 %v3154, 16
      %v3457 = vrot.slane %v3455, 4
      %v3458 = vshll.u32 %v3154, 16
      %v3460 = vrot.slane %v3458, 5
      %v3461 = vor.u32 %v3457, %v3460
      %v3462 = vrot.slane %v3461, 4
      %v3464 = vshll.u32 %v3155, 16
      %v3466 = vrot.slane %v3464, 5
      %v3467 = vsel %vm1497, %v3462, %v3466
      %v3468 = vshrl.u32 %v3155, 16
      %v3470 = vrot.slane %v3468, 4
      %v3471 = vor.u32 %v3470, %v3466
      %v3472 = vrot.slane %v3471, 4
      %v3474 = vshll.u32 %v3156, 16
      %v3476 = vrot.slane %v3474, 5
      %v3477 = vsel %vm1497, %v3472, %v3476
      %v3479 = vshrl.u32 %v3157, 16
      %v3481 = vrot.slane %v3479, 4
      %v3482 = vshll.u32 %v3157, 16
      %v3484 = vrot.slane %v3482, 5
      %v3485 = vor.u32 %v3481, %v3484
      %v3486 = vrot.slane %v3485, 4
      %v3488 = vshll.u32 %v3158, 16
      %v3490 = vrot.slane %v3488, 5
      %v3491 = vsel %vm1497, %v3486, %v3490
      %v3492 = vshrl.u32 %v3158, 16
      %v3494 = vrot.slane %v3492, 4
      %v3495 = vor.u32 %v3494, %v3490
      %v3496 = vrot.slane %v3495, 4
      %v3498 = vshll.u32 %v3159, 16
      %v3500 = vrot.slane %v3498, 5
      %v3501 = vsel %vm1497, %v3496, %v3500
      %v3503 = vshrl.u32 %v3160, 16
      %v3505 = vrot.slane %v3503, 4
      %v3506 = vshll.u32 %v3160, 16
      %v3508 = vrot.slane %v3506, 5
      %v3509 = vor.u32 %v3505, %v3508
      %v3510 = vrot.slane %v3509, 4
      %v3512 = vshll.u32 %v3161, 16
      %v3514 = vrot.slane %v3512, 5
      %v3515 = vsel %vm1497, %v3510, %v3514
      %v3516 = vshrl.u32 %v3161, 16
      %v3518 = vrot.slane %v3516, 4
      %v3519 = vor.u32 %v3518, %v3514
      %v3520 = vrot.slane %v3519, 4
      %v3522 = vshll.u32 %v3162, 16
      %v3524 = vrot.slane %v3522, 5
      %v3525 = vsel %vm1497, %v3520, %v3524
      %v3527 = vshrl.u32 %v3163, 16
      %v3529 = vrot.slane %v3527, 4
      %v3530 = vshll.u32 %v3163, 16
      %v3532 = vrot.slane %v3530, 5
      %v3533 = vor.u32 %v3529, %v3532
      %v3534 = vrot.slane %v3533, 4
      %v3536 = vshll.u32 %v3164, 16
      %v3538 = vrot.slane %v3536, 5
      %v3539 = vsel %vm1497, %v3534, %v3538
      %v3540 = vshrl.u32 %v3164, 16
      %v3542 = vrot.slane %v3540, 4
      %v3543 = vor.u32 %v3542, %v3538
      %v3544 = vrot.slane %v3543, 4
      %v3546 = vshll.u32 %v3165, 16
      %v3548 = vrot.slane %v3546, 5
      %v3549 = vsel %vm1497, %v3544, %v3548
      %3582 = vst [vmem:[#allocation3 + $0x1c] sm:$0xf] %v3179
      %3583 = vst [vmem:[#allocation3 + $0x40] sm:$0xf] %v3189
      %3584 = vst [vmem:[#allocation3 + $0x64] sm:$0xf] %v3203
      %3585 = vst [vmem:[#allocation3 + $0x88] sm:$0xf] %v3213
      %3586 = vst [vmem:[#allocation3 + $0xac] sm:$0xf] %v3227
      %3587 = vst [vmem:[#allocation3 + $0xd0] sm:$0xf] %v3237
      %3588 = vst [vmem:[#allocation3 + $0xf4] sm:$0xf] %v3251
      %3589 = vst [vmem:[#allocation3 + $0x118] sm:$0xf] %v3261
      %3590 = vst [vmem:[#allocation3 + $0x13c] sm:$0xf] %v3275
      %3591 = vst [vmem:[#allocation3 + $0x160] sm:$0xf] %v3285
      %3592 = vst [vmem:[#allocation3 + $0x184] sm:$0xf] %v3299
      %3593 = vst [vmem:[#allocation3 + $0x1a8] sm:$0xf] %v3309
      %3594 = vst [vmem:[#allocation3 + $0x1cc] sm:$0xf] %v3323
      %3595 = vst [vmem:[#allocation3 + $0x1f0] sm:$0xf] %v3333
      %3596 = vst [vmem:[#allocation3 + $0x214] sm:$0xf] %v3347
      %3597 = vst [vmem:[#allocation3 + $0x238] sm:$0xf] %v3357
      %3598 = vst [vmem:[#allocation3 + $0x25c] sm:$0xf] %v3371
      %3599 = vst [vmem:[#allocation3 + $0x280] sm:$0xf] %v3381
      %3600 = vst [vmem:[#allocation3 + $0x2a4] sm:$0xf] %v3395
      %3601 = vst [vmem:[#allocation3 + $0x2c8] sm:$0xf] %v3405
      %3602 = vst [vmem:[#allocation3 + $0x2ec] sm:$0xf] %v3419
      %3603 = vst [vmem:[#allocation3 + $0x310] sm:$0xf] %v3429
      %3604 = vst [vmem:[#allocation3 + $0x334] sm:$0xf] %v3443
      %3605 = vst [vmem:[#allocation3 + $0x358] sm:$0xf] %v3453
      %3606 = vst [vmem:[#allocation3 + $0x37c] sm:$0xf] %v3467
      %3607 = vst [vmem:[#allocation3 + $0x3a0] sm:$0xf] %v3477
      %3608 = vst [vmem:[#allocation3 + $0x3c4] sm:$0xf] %v3491
      %3609 = vst [vmem:[#allocation3 + $0x3e8] sm:$0xf] %v3501
      %3610 = vst [vmem:[#allocation3 + $0x40c] sm:$0xf] %v3515
      %3611 = vst [vmem:[#allocation3 + $0x430] sm:$0xf] %v3525
      %3612 = vst [vmem:[#allocation3 + $0x454] sm:$0xf] %v3539
      %3613 = vst [vmem:[#allocation3 + $0x478] sm:$0xf] %v3549
      %v3614 = vld [vmem:[%s3053] sm:$0xe]
      %v3615 = vld [vmem:[%s3053 + $0x4] sm:$0xf]
      %v3616 = vld [vmem:[%s3053 + $0x8] sm:$0x1]
      %v3617 = vld [vmem:[%s3053 + $0xc] sm:$0xe]
      %v3618 = vld [vmem:[%s3053 + $0x10] sm:$0xf]
      %v3619 = vld [vmem:[%s3053 + $0x14] sm:$0x1]
      %v3620 = vld [vmem:[%s3053 + $0x18] sm:$0xe]
      %v3621 = vld [vmem:[%s3053 + $0x1c] sm:$0xf]
      %v3622 = vld [vmem:[%s3053 + $0x20] sm:$0x1]
      %v3623 = vld [vmem:[%s3053 + $0x24] sm:$0xe]
      %v3624 = vld [vmem:[%s3053 + $0x28] sm:$0xf]
      %v3625 = vld [vmem:[%s3053 + $0x2c] sm:$0x1]
      %v3626 = vld [vmem:[%s3053 + $0x30] sm:$0xe]
      %v3627 = vld [vmem:[%s3053 + $0x34] sm:$0xf]
      %v3628 = vld [vmem:[%s3053 + $0x38] sm:$0x1]
      %v3629 = vld [vmem:[%s3053 + $0x3c] sm:$0xe]
      %v3630 = vld [vmem:[%s3053 + $0x40] sm:$0xf]
      %v3631 = vld [vmem:[%s3053 + $0x44] sm:$0x1]
      %v3632 = vld [vmem:[%s3053 + $0x48] sm:$0xe]
      %v3633 = vld [vmem:[%s3053 + $0x4c] sm:$0xf]
      %v3634 = vld [vmem:[%s3053 + $0x50] sm:$0x1]
      %v3635 = vld [vmem:[%s3053 + $0x54] sm:$0xe]
      %v3636 = vld [vmem:[%s3053 + $0x58] sm:$0xf]
      %v3637 = vld [vmem:[%s3053 + $0x5c] sm:$0x1]
      %v3638 = vld [vmem:[%s3053 + $0x60] sm:$0xe]
      %v3639 = vld [vmem:[%s3053 + $0x64] sm:$0xf]
      %v3640 = vld [vmem:[%s3053 + $0x68] sm:$0x1]
      %v3641 = vld [vmem:[%s3053 + $0x6c] sm:$0xe]
      %v3642 = vld [vmem:[%s3053 + $0x70] sm:$0xf]
      %v3643 = vld [vmem:[%s3053 + $0x74] sm:$0x1]
      %v3644 = vld [vmem:[%s3053 + $0x78] sm:$0xe]
      %v3645 = vld [vmem:[%s3053 + $0x7c] sm:$0xf]
      %v3646 = vld [vmem:[%s3053 + $0x80] sm:$0x1]
      %v3647 = vld [vmem:[%s3053 + $0x84] sm:$0xe]
      %v3648 = vld [vmem:[%s3053 + $0x88] sm:$0xf]
      %v3649 = vld [vmem:[%s3053 + $0x8c] sm:$0x1]
      %v3650 = vld [vmem:[%s3053 + $0x90] sm:$0xe]
      %v3651 = vld [vmem:[%s3053 + $0x94] sm:$0xf]
      %v3652 = vld [vmem:[%s3053 + $0x98] sm:$0x1]
      %v3653 = vld [vmem:[%s3053 + $0x9c] sm:$0xe]
      %v3654 = vld [vmem:[%s3053 + $0xa0] sm:$0xf]
      %v3655 = vld [vmem:[%s3053 + $0xa4] sm:$0x1]
      %v3656 = vld [vmem:[%s3053 + $0xa8] sm:$0xe]
      %v3657 = vld [vmem:[%s3053 + $0xac] sm:$0xf]
      %v3658 = vld [vmem:[%s3053 + $0xb0] sm:$0x1]
      %v3659 = vld [vmem:[%s3053 + $0xb4] sm:$0xe]
      %v3660 = vld [vmem:[%s3053 + $0xb8] sm:$0xf]
      %v3661 = vld [vmem:[%s3053 + $0xbc] sm:$0x1]
      %v3710 = vrot.slane %v3614, 5
      %v3711 = vrot.slane %v3710, 4
      %v3712 = vrot.slane %v3615, 5
      %v3713 = vsel %vm2044, %v3711, %v3712
      %v3714 = vrot.slane %v3712, 4
      %v3715 = vrot.slane %v3616, 5
      %v3716 = vsel %vm2044, %v3714, %v3715
      %v3717 = vrot.slane %v3617, 5
      %v3718 = vrot.slane %v3717, 4
      %v3719 = vrot.slane %v3618, 5
      %v3720 = vsel %vm2044, %v3718, %v3719
      %v3721 = vrot.slane %v3719, 4
      %v3722 = vrot.slane %v3619, 5
      %v3723 = vsel %vm2044, %v3721, %v3722
      %v3724 = vrot.slane %v3620, 5
      %v3725 = vrot.slane %v3724, 4
      %v3726 = vrot.slane %v3621, 5
      %v3727 = vsel %vm2044, %v3725, %v3726
      %v3728 = vrot.slane %v3726, 4
      %v3729 = vrot.slane %v3622, 5
      %v3730 = vsel %vm2044, %v3728, %v3729
      %v3731 = vrot.slane %v3623, 5
      %v3732 = vrot.slane %v3731, 4
      %v3733 = vrot.slane %v3624, 5
      %v3734 = vsel %vm2044, %v3732, %v3733
      %v3735 = vrot.slane %v3733, 4
      %v3736 = vrot.slane %v3625, 5
      %v3737 = vsel %vm2044, %v3735, %v3736
      %v3738 = vrot.slane %v3626, 5
      %v3739 = vrot.slane %v3738, 4
      %v3740 = vrot.slane %v3627, 5
      %v3741 = vsel %vm2044, %v3739, %v3740
      %v3742 = vrot.slane %v3740, 4
      %v3743 = vrot.slane %v3628, 5
      %v3744 = vsel %vm2044, %v3742, %v3743
      %v3745 = vrot.slane %v3629, 5
      %v3746 = vrot.slane %v3745, 4
      %v3747 = vrot.slane %v3630, 5
      %v3748 = vsel %vm2044, %v3746, %v3747
      %v3749 = vrot.slane %v3747, 4
      %v3750 = vrot.slane %v3631, 5
      %v3751 = vsel %vm2044, %v3749, %v3750
      %v3752 = vrot.slane %v3632, 5
      %v3753 = vrot.slane %v3752, 4
      %v3754 = vrot.slane %v3633, 5
      %v3755 = vsel %vm2044, %v3753, %v3754
      %v3756 = vrot.slane %v3754, 4
      %v3757 = vrot.slane %v3634, 5
      %v3758 = vsel %vm2044, %v3756, %v3757
      %v3759 = vrot.slane %v3635, 5
      %v3760 = vrot.slane %v3759, 4
      %v3761 = vrot.slane %v3636, 5
      %v3762 = vsel %vm2044, %v3760, %v3761
      %v3763 = vrot.slane %v3761, 4
      %v3764 = vrot.slane %v3637, 5
      %v3765 = vsel %vm2044, %v3763, %v3764
      %v3766 = vrot.slane %v3638, 5
      %v3767 = vrot.slane %v3766, 4
      %v3768 = vrot.slane %v3639, 5
      %v3769 = vsel %vm2044, %v3767, %v3768
      %v3770 = vrot.slane %v3768, 4
      %v3771 = vrot.slane %v3640, 5
      %v3772 = vsel %vm2044, %v3770, %v3771
      %v3773 = vrot.slane %v3641, 5
      %v3774 = vrot.slane %v3773, 4
      %v3775 = vrot.slane %v3642, 5
      %v3776 = vsel %vm2044, %v3774, %v3775
      %v3777 = vrot.slane %v3775, 4
      %v3778 = vrot.slane %v3643, 5
      %v3779 = vsel %vm2044, %v3777, %v3778
      %v3780 = vrot.slane %v3644, 5
      %v3781 = vrot.slane %v3780, 4
      %v3782 = vrot.slane %v3645, 5
      %v3783 = vsel %vm2044, %v3781, %v3782
      %v3784 = vrot.slane %v3782, 4
      %v3785 = vrot.slane %v3646, 5
      %v3786 = vsel %vm2044, %v3784, %v3785
      %v3787 = vrot.slane %v3647, 5
      %v3788 = vrot.slane %v3787, 4
      %v3789 = vrot.slane %v3648, 5
      %v3790 = vsel %vm2044, %v3788, %v3789
      %v3791 = vrot.slane %v3789, 4
      %v3792 = vrot.slane %v3649, 5
      %v3793 = vsel %vm2044, %v3791, %v3792
      %v3794 = vrot.slane %v3650, 5
      %v3795 = vrot.slane %v3794, 4
      %v3796 = vrot.slane %v3651, 5
      %v3797 = vsel %vm2044, %v3795, %v3796
      %v3798 = vrot.slane %v3796, 4
      %v3799 = vrot.slane %v3652, 5
      %v3800 = vsel %vm2044, %v3798, %v3799
      %v3801 = vrot.slane %v3653, 5
      %v3802 = vrot.slane %v3801, 4
      %v3803 = vrot.slane %v3654, 5
      %v3804 = vsel %vm2044, %v3802, %v3803
      %v3805 = vrot.slane %v3803, 4
      %v3806 = vrot.slane %v3655, 5
      %v3807 = vsel %vm2044, %v3805, %v3806
      %v3808 = vrot.slane %v3656, 5
      %v3809 = vrot.slane %v3808, 4
      %v3810 = vrot.slane %v3657, 5
      %v3811 = vsel %vm2044, %v3809, %v3810
      %v3812 = vrot.slane %v3810, 4
      %v3813 = vrot.slane %v3658, 5
      %v3814 = vsel %vm2044, %v3812, %v3813
      %v3815 = vrot.slane %v3659, 5
      %v3816 = vrot.slane %v3815, 4
      %v3817 = vrot.slane %v3660, 5
      %v3818 = vsel %vm2044, %v3816, %v3817
      %v3819 = vrot.slane %v3817, 4
      %v3820 = vrot.slane %v3661, 5
      %v3821 = vsel %vm2044, %v3819, %v3820
      %3854 = vst [vmem:[#allocation3 + $0x20] sm:$0xf] %v3713
      %3855 = vst [vmem:[#allocation3 + $0x44] sm:$0xf] %v3716
      %3856 = vst [vmem:[#allocation3 + $0x68] sm:$0xf] %v3720
      %3857 = vst [vmem:[#allocation3 + $0x8c] sm:$0xf] %v3723
      %3858 = vst [vmem:[#allocation3 + $0xb0] sm:$0xf] %v3727
      %3859 = vst [vmem:[#allocation3 + $0xd4] sm:$0xf] %v3730
      %3860 = vst [vmem:[#allocation3 + $0xf8] sm:$0xf] %v3734
      %3861 = vst [vmem:[#allocation3 + $0x11c] sm:$0xf] %v3737
      %3862 = vst [vmem:[#allocation3 + $0x140] sm:$0xf] %v3741
      %3863 = vst [vmem:[#allocation3 + $0x164] sm:$0xf] %v3744
      %3864 = vst [vmem:[#allocation3 + $0x188] sm:$0xf] %v3748
      %3865 = vst [vmem:[#allocation3 + $0x1ac] sm:$0xf] %v3751
      %3866 = vst [vmem:[#allocation3 + $0x1d0] sm:$0xf] %v3755
      %3867 = vst [vmem:[#allocation3 + $0x1f4] sm:$0xf] %v3758
      %3868 = vst [vmem:[#allocation3 + $0x218] sm:$0xf] %v3762
      %3869 = vst [vmem:[#allocation3 + $0x23c] sm:$0xf] %v3765
      %3870 = vst [vmem:[#allocation3 + $0x260] sm:$0xf] %v3769
      %3871 = vst [vmem:[#allocation3 + $0x284] sm:$0xf] %v3772
      %3872 = vst [vmem:[#allocation3 + $0x2a8] sm:$0xf] %v3776
      %3873 = vst [vmem:[#allocation3 + $0x2cc] sm:$0xf] %v3779
      %3874 = vst [vmem:[#allocation3 + $0x2f0] sm:$0xf] %v3783
      %3875 = vst [vmem:[#allocation3 + $0x314] sm:$0xf] %v3786
      %3876 = vst [vmem:[#allocation3 + $0x338] sm:$0xf] %v3790
      %3877 = vst [vmem:[#allocation3 + $0x35c] sm:$0xf] %v3793
      %3878 = vst [vmem:[#allocation3 + $0x380] sm:$0xf] %v3797
      %3879 = vst [vmem:[#allocation3 + $0x3a4] sm:$0xf] %v3800
      %3880 = vst [vmem:[#allocation3 + $0x3c8] sm:$0xf] %v3804
      %3881 = vst [vmem:[#allocation3 + $0x3ec] sm:$0xf] %v3807
      %3882 = vst [vmem:[#allocation3 + $0x410] sm:$0xf] %v3811
      %3883 = vst [vmem:[#allocation3 + $0x434] sm:$0xf] %v3814
      %3884 = vst [vmem:[#allocation3 + $0x458] sm:$0xf] %v3818
      %3885 = vst [vmem:[#allocation3 + $0x47c] sm:$0xf] %v3821
      %v3886 = vld [vmem:[#allocation3] sm:$0xff]
      %v3887 = vld [vmem:[#allocation3 + $0x8] sm:$0xff]
      %v3888 = vld [vmem:[#allocation3 + $0x10] sm:$0xff]
      %v3889 = vld [vmem:[#allocation3 + $0x18] sm:$0xff]
      %v3890 = vld [vmem:[#allocation3 + $0x20] sm:$0xf]
      %v3891 = vld [vmem:[#allocation3 + $0x24] sm:$0xff]
      %v3892 = vld [vmem:[#allocation3 + $0x2c] sm:$0xff]
      %v3893 = vld [vmem:[#allocation3 + $0x34] sm:$0xff]
      %v3894 = vld [vmem:[#allocation3 + $0x3c] sm:$0xff]
      %v3895 = vld [vmem:[#allocation3 + $0x44] sm:$0xf]
      %v3896 = vld [vmem:[#allocation3 + $0x48] sm:$0xff]
      %v3897 = vld [vmem:[#allocation3 + $0x50] sm:$0xff]
      %v3898 = vld [vmem:[#allocation3 + $0x58] sm:$0xff]
      %v3899 = vld [vmem:[#allocation3 + $0x60] sm:$0xff]
      %v3900 = vld [vmem:[#allocation3 + $0x68] sm:$0xf]
      %v3901 = vld [vmem:[#allocation3 + $0x6c] sm:$0xff]
      %v3902 = vld [vmem:[#allocation3 + $0x74] sm:$0xff]
      %v3903 = vld [vmem:[#allocation3 + $0x7c] sm:$0xff]
      %v3904 = vld [vmem:[#allocation3 + $0x84] sm:$0xff]
      %v3905 = vld [vmem:[#allocation3 + $0x8c] sm:$0xf]
      %v3906 = vld [vmem:[#allocation3 + $0x90] sm:$0xff]
      %v3907 = vld [vmem:[#allocation3 + $0x98] sm:$0xff]
      %v3908 = vld [vmem:[#allocation3 + $0xa0] sm:$0xff]
      %v3909 = vld [vmem:[#allocation3 + $0xa8] sm:$0xff]
      %v3910 = vld [vmem:[#allocation3 + $0xb0] sm:$0xf]
      %v3911 = vld [vmem:[#allocation3 + $0xb4] sm:$0xff]
      %v3912 = vld [vmem:[#allocation3 + $0xbc] sm:$0xff]
      %v3913 = vld [vmem:[#allocation3 + $0xc4] sm:$0xff]
      %v3914 = vld [vmem:[#allocation3 + $0xcc] sm:$0xff]
      %v3915 = vld [vmem:[#allocation3 + $0xd4] sm:$0xf]
      %v3916 = vld [vmem:[#allocation3 + $0xd8] sm:$0xff]
      %v3917 = vld [vmem:[#allocation3 + $0xe0] sm:$0xff]
      %v3918 = vld [vmem:[#allocation3 + $0xe8] sm:$0xff]
      %v3919 = vld [vmem:[#allocation3 + $0xf0] sm:$0xff]
      %v3920 = vld [vmem:[#allocation3 + $0xf8] sm:$0xf]
      %v3921 = vld [vmem:[#allocation3 + $0xfc] sm:$0xff]
      %v3922 = vld [vmem:[#allocation3 + $0x104] sm:$0xff]
      %v3923 = vld [vmem:[#allocation3 + $0x10c] sm:$0xff]
      %v3924 = vld [vmem:[#allocation3 + $0x114] sm:$0xff]
      %v3925 = vld [vmem:[#allocation3 + $0x11c] sm:$0xf]
      %v3926 = vld [vmem:[#allocation3 + $0x120] sm:$0xff]
      %v3927 = vld [vmem:[#allocation3 + $0x128] sm:$0xff]
      %v3928 = vld [vmem:[#allocation3 + $0x130] sm:$0xff]
      %v3929 = vld [vmem:[#allocation3 + $0x138] sm:$0xff]
      %v3930 = vld [vmem:[#allocation3 + $0x140] sm:$0xf]
      %v3931 = vld [vmem:[#allocation3 + $0x144] sm:$0xff]
      %v3932 = vld [vmem:[#allocation3 + $0x14c] sm:$0xff]
      %v3933 = vld [vmem:[#allocation3 + $0x154] sm:$0xff]
      %v3934 = vld [vmem:[#allocation3 + $0x15c] sm:$0xff]
      %v3935 = vld [vmem:[#allocation3 + $0x164] sm:$0xf]
      %v3936 = vld [vmem:[#allocation3 + $0x168] sm:$0xff]
      %v3937 = vld [vmem:[#allocation3 + $0x170] sm:$0xff]
      %v3938 = vld [vmem:[#allocation3 + $0x178] sm:$0xff]
      %v3939 = vld [vmem:[#allocation3 + $0x180] sm:$0xff]
      %v3940 = vld [vmem:[#allocation3 + $0x188] sm:$0xf]
      %v3941 = vld [vmem:[#allocation3 + $0x18c] sm:$0xff]
      %v3942 = vld [vmem:[#allocation3 + $0x194] sm:$0xff]
      %v3943 = vld [vmem:[#allocation3 + $0x19c] sm:$0xff]
      %v3944 = vld [vmem:[#allocation3 + $0x1a4] sm:$0xff]
      %v3945 = vld [vmem:[#allocation3 + $0x1ac] sm:$0xf]
      %v3946 = vld [vmem:[#allocation3 + $0x1b0] sm:$0xff]
      %v3947 = vld [vmem:[#allocation3 + $0x1b8] sm:$0xff]
      %v3948 = vld [vmem:[#allocation3 + $0x1c0] sm:$0xff]
      %v3949 = vld [vmem:[#allocation3 + $0x1c8] sm:$0xff]
      %v3950 = vld [vmem:[#allocation3 + $0x1d0] sm:$0xf]
      %v3951 = vld [vmem:[#allocation3 + $0x1d4] sm:$0xff]
      %v3952 = vld [vmem:[#allocation3 + $0x1dc] sm:$0xff]
      %v3953 = vld [vmem:[#allocation3 + $0x1e4] sm:$0xff]
      %v3954 = vld [vmem:[#allocation3 + $0x1ec] sm:$0xff]
      %v3955 = vld [vmem:[#allocation3 + $0x1f4] sm:$0xf]
      %v3956 = vld [vmem:[#allocation3 + $0x1f8] sm:$0xff]
      %v3957 = vld [vmem:[#allocation3 + $0x200] sm:$0xff]
      %v3958 = vld [vmem:[#allocation3 + $0x208] sm:$0xff]
      %v3959 = vld [vmem:[#allocation3 + $0x210] sm:$0xff]
      %v3960 = vld [vmem:[#allocation3 + $0x218] sm:$0xf]
      %v3961 = vld [vmem:[#allocation3 + $0x21c] sm:$0xff]
      %v3962 = vld [vmem:[#allocation3 + $0x224] sm:$0xff]
      %v3963 = vld [vmem:[#allocation3 + $0x22c] sm:$0xff]
      %v3964 = vld [vmem:[#allocation3 + $0x234] sm:$0xff]
      %v3965 = vld [vmem:[#allocation3 + $0x23c] sm:$0xf]
      %v3966 = vld [vmem:[#allocation3 + $0x240] sm:$0xff]
      %v3967 = vld [vmem:[#allocation3 + $0x248] sm:$0xff]
      %v3968 = vld [vmem:[#allocation3 + $0x250] sm:$0xff]
      %v3969 = vld [vmem:[#allocation3 + $0x258] sm:$0xff]
      %v3970 = vld [vmem:[#allocation3 + $0x260] sm:$0xf]
      %v3971 = vld [vmem:[#allocation3 + $0x264] sm:$0xff]
      %v3972 = vld [vmem:[#allocation3 + $0x26c] sm:$0xff]
      %v3973 = vld [vmem:[#allocation3 + $0x274] sm:$0xff]
      %v3974 = vld [vmem:[#allocation3 + $0x27c] sm:$0xff]
      %v3975 = vld [vmem:[#allocation3 + $0x284] sm:$0xf]
      %v3976 = vld [vmem:[#allocation3 + $0x288] sm:$0xff]
      %v3977 = vld [vmem:[#allocation3 + $0x290] sm:$0xff]
      %v3978 = vld [vmem:[#allocation3 + $0x298] sm:$0xff]
      %v3979 = vld [vmem:[#allocation3 + $0x2a0] sm:$0xff]
      %v3980 = vld [vmem:[#allocation3 + $0x2a8] sm:$0xf]
      %v3981 = vld [vmem:[#allocation3 + $0x2ac] sm:$0xff]
      %v3982 = vld [vmem:[#allocation3 + $0x2b4] sm:$0xff]
      %v3983 = vld [vmem:[#allocation3 + $0x2bc] sm:$0xff]
      %v3984 = vld [vmem:[#allocation3 + $0x2c4] sm:$0xff]
      %v3985 = vld [vmem:[#allocation3 + $0x2cc] sm:$0xf]
      %v3986 = vld [vmem:[#allocation3 + $0x2d0] sm:$0xff]
      %v3987 = vld [vmem:[#allocation3 + $0x2d8] sm:$0xff]
      %v3988 = vld [vmem:[#allocation3 + $0x2e0] sm:$0xff]
      %v3989 = vld [vmem:[#allocation3 + $0x2e8] sm:$0xff]
      %v3990 = vld [vmem:[#allocation3 + $0x2f0] sm:$0xf]
      %v3991 = vld [vmem:[#allocation3 + $0x2f4] sm:$0xff]
      %v3992 = vld [vmem:[#allocation3 + $0x2fc] sm:$0xff]
      %v3993 = vld [vmem:[#allocation3 + $0x304] sm:$0xff]
      %v3994 = vld [vmem:[#allocation3 + $0x30c] sm:$0xff]
      %v3995 = vld [vmem:[#allocation3 + $0x314] sm:$0xf]
      %v3996 = vld [vmem:[#allocation3 + $0x318] sm:$0xff]
      %v3997 = vld [vmem:[#allocation3 + $0x320] sm:$0xff]
      %v3998 = vld [vmem:[#allocation3 + $0x328] sm:$0xff]
      %v3999 = vld [vmem:[#allocation3 + $0x330] sm:$0xff]
      %v4000 = vld [vmem:[#allocation3 + $0x338] sm:$0xf]
      %v4001 = vld [vmem:[#allocation3 + $0x33c] sm:$0xff]
      %v4002 = vld [vmem:[#allocation3 + $0x344] sm:$0xff]
      %v4003 = vld [vmem:[#allocation3 + $0x34c] sm:$0xff]
      %v4004 = vld [vmem:[#allocation3 + $0x354] sm:$0xff]
      %v4005 = vld [vmem:[#allocation3 + $0x35c] sm:$0xf]
      %v4006 = vld [vmem:[#allocation3 + $0x360] sm:$0xff]
      %v4007 = vld [vmem:[#allocation3 + $0x368] sm:$0xff]
      %v4008 = vld [vmem:[#allocation3 + $0x370] sm:$0xff]
      %v4009 = vld [vmem:[#allocation3 + $0x378] sm:$0xff]
      %v4010 = vld [vmem:[#allocation3 + $0x380] sm:$0xf]
      %v4011 = vld [vmem:[#allocation3 + $0x384] sm:$0xff]
      %v4012 = vld [vmem:[#allocation3 + $0x38c] sm:$0xff]
      %v4013 = vld [vmem:[#allocation3 + $0x394] sm:$0xff]
      %v4014 = vld [vmem:[#allocation3 + $0x39c] sm:$0xff]
      %v4015 = vld [vmem:[#allocation3 + $0x3a4] sm:$0xf]
      %v4016 = vld [vmem:[#allocation3 + $0x3a8] sm:$0xff]
      %v4017 = vld [vmem:[#allocation3 + $0x3b0] sm:$0xff]
      %v4018 = vld [vmem:[#allocation3 + $0x3b8] sm:$0xff]
      %v4019 = vld [vmem:[#allocation3 + $0x3c0] sm:$0xff]
      %v4020 = vld [vmem:[#allocation3 + $0x3c8] sm:$0xf]
      %v4021 = vld [vmem:[#allocation3 + $0x3cc] sm:$0xff]
      %v4022 = vld [vmem:[#allocation3 + $0x3d4] sm:$0xff]
      %v4023 = vld [vmem:[#allocation3 + $0x3dc] sm:$0xff]
      %v4024 = vld [vmem:[#allocation3 + $0x3e4] sm:$0xff]
      %v4025 = vld [vmem:[#allocation3 + $0x3ec] sm:$0xf]
      %v4026 = vld [vmem:[#allocation3 + $0x3f0] sm:$0xff]
      %v4027 = vld [vmem:[#allocation3 + $0x3f8] sm:$0xff]
      %v4028 = vld [vmem:[#allocation3 + $0x400] sm:$0xff]
      %v4029 = vld [vmem:[#allocation3 + $0x408] sm:$0xff]
      %v4030 = vld [vmem:[#allocation3 + $0x410] sm:$0xf]
      %v4031 = vld [vmem:[#allocation3 + $0x414] sm:$0xff]
      %v4032 = vld [vmem:[#allocation3 + $0x41c] sm:$0xff]
      %v4033 = vld [vmem:[#allocation3 + $0x424] sm:$0xff]
      %v4034 = vld [vmem:[#allocation3 + $0x42c] sm:$0xff]
      %v4035 = vld [vmem:[#allocation3 + $0x434] sm:$0xf]
      %v4036 = vld [vmem:[#allocation3 + $0x438] sm:$0xff]
      %v4037 = vld [vmem:[#allocation3 + $0x440] sm:$0xff]
      %v4038 = vld [vmem:[#allocation3 + $0x448] sm:$0xff]
      %v4039 = vld [vmem:[#allocation3 + $0x450] sm:$0xff]
      %v4040 = vld [vmem:[#allocation3 + $0x458] sm:$0xf]
      %v4041 = vld [vmem:[#allocation3 + $0x45c] sm:$0xff]
      %v4042 = vld [vmem:[#allocation3 + $0x464] sm:$0xff]
      %v4043 = vld [vmem:[#allocation3 + $0x46c] sm:$0xff]
      %v4044 = vld [vmem:[#allocation3 + $0x474] sm:$0xff]
      %v4045 = vld [vmem:[#allocation3 + $0x47c] sm:$0xf]
      %v4046 = vld [vmem:[%s3] sm:$0xf]
      %v4047 = vld [vmem:[%s3 + $0x4] sm:$0xf]
      %v4048 = vld [vmem:[%s3 + $0x8] sm:$0xf]
      %v4049 = vld [vmem:[%s3 + $0xc] sm:$0xf]
      %v4050 = vld [vmem:[%s3 + $0x10] sm:$0xf]
      %v4051 = vld [vmem:[%s3 + $0x14] sm:$0xf]
      %v4052 = vld [vmem:[%s3 + $0x18] sm:$0xf]
      %v4053 = vld [vmem:[%s3 + $0x1c] sm:$0xf]
      %v4054 = vld [vmem:[%s3 + $0x20] sm:$0xf]
      %v4055 = vld [vmem:[%s3 + $0x24] sm:$0xf]
      %v4056 = vld [vmem:[%s3 + $0x28] sm:$0xf]
      %v4057 = vld [vmem:[%s3 + $0x2c] sm:$0xf]
      %v4058 = vld [vmem:[%s3 + $0x30] sm:$0xf]
      %v4059 = vld [vmem:[%s3 + $0x34] sm:$0xf]
      %v4060 = vld [vmem:[%s3 + $0x38] sm:$0xf]
      %v4061 = vld [vmem:[%s3 + $0x3c] sm:$0xf]
      %v4062 = vld [vmem:[%s3 + $0x40] sm:$0xf]
      %v4063 = vld [vmem:[%s3 + $0x44] sm:$0xf]
      %v4064 = vld [vmem:[%s3 + $0x48] sm:$0xf]
      %v4065 = vld [vmem:[%s3 + $0x4c] sm:$0xf]
      %v4066 = vld [vmem:[%s3 + $0x50] sm:$0xf]
      %v4067 = vld [vmem:[%s3 + $0x54] sm:$0xf]
      %v4068 = vld [vmem:[%s3 + $0x58] sm:$0xf]
      %v4069 = vld [vmem:[%s3 + $0x5c] sm:$0xf]
      %v4070 = vld [vmem:[%s3 + $0x60] sm:$0xf]
      %v4071 = vld [vmem:[%s3 + $0x64] sm:$0xf]
      %v4072 = vld [vmem:[%s3 + $0x68] sm:$0xf]
      %v4073 = vld [vmem:[%s3 + $0x6c] sm:$0xf]
      %v4074 = vld [vmem:[%s3 + $0x70] sm:$0xf]
      %v4075 = vld [vmem:[%s3 + $0x74] sm:$0xf]
      %v4076 = vld [vmem:[%s3 + $0x78] sm:$0xf]
      %v4077 = vld [vmem:[%s3 + $0x7c] sm:$0xf]
      %v4078 = vld [vmem:[%s3 + $0x80] sm:$0xf]
      %v4079 = vld [vmem:[%s3 + $0x84] sm:$0xf]
      %v4080 = vld [vmem:[%s3 + $0x88] sm:$0xf]
      %v4081 = vld [vmem:[%s3 + $0x8c] sm:$0xf]
      %v4082 = vld [vmem:[%s3 + $0x90] sm:$0xf]
      %v4083 = vld [vmem:[%s3 + $0x94] sm:$0xf]
      %v4084 = vld [vmem:[%s3 + $0x98] sm:$0xf]
      %v4085 = vld [vmem:[%s3 + $0x9c] sm:$0xf]
      %v4086 = vld [vmem:[%s3 + $0xa0] sm:$0xf]
      %v4087 = vld [vmem:[%s3 + $0xa4] sm:$0xf]
      %v4088 = vld [vmem:[%s3 + $0xa8] sm:$0xf]
      %v4089 = vld [vmem:[%s3 + $0xac] sm:$0xf]
      %v4090 = vld [vmem:[%s3 + $0xb0] sm:$0xf]
      %v4091 = vld [vmem:[%s3 + $0xb4] sm:$0xf]
      %v4092 = vld [vmem:[%s3 + $0xb8] sm:$0xf]
      %v4093 = vld [vmem:[%s3 + $0xbc] sm:$0xf]
      %v4094 = vld [vmem:[%s3 + $0xc0] sm:$0xf]
      %v4095 = vld [vmem:[%s3 + $0xc4] sm:$0xf]
      %v4096 = vld [vmem:[%s3 + $0xc8] sm:$0xf]
      %v4097 = vld [vmem:[%s3 + $0xcc] sm:$0xf]
      %v4098 = vld [vmem:[%s3 + $0xd0] sm:$0xf]
      %v4099 = vld [vmem:[%s3 + $0xd4] sm:$0xf]
      %v4100 = vld [vmem:[%s3 + $0xd8] sm:$0xf]
      %v4101 = vld [vmem:[%s3 + $0xdc] sm:$0xf]
      %v4102 = vld [vmem:[%s3 + $0xe0] sm:$0xf]
      %v4103 = vld [vmem:[%s3 + $0xe4] sm:$0xf]
      %v4104 = vld [vmem:[%s3 + $0xe8] sm:$0xf]
      %v4105 = vld [vmem:[%s3 + $0xec] sm:$0xf]
      %v4106 = vld [vmem:[%s3 + $0xf0] sm:$0xf]
      %v4107 = vld [vmem:[%s3 + $0xf4] sm:$0xf]
      %v4108 = vld [vmem:[%s3 + $0xf8] sm:$0xf]
      %v4109 = vld [vmem:[%s3 + $0xfc] sm:$0xf]
      %v4110 = vld [vmem:[%s3 + $0x100] sm:$0xf]
      %v4111 = vld [vmem:[%s3 + $0x104] sm:$0xf]
      %v4112 = vld [vmem:[%s3 + $0x108] sm:$0xf]
      %v4113 = vld [vmem:[%s3 + $0x10c] sm:$0xf]
      %v4114 = vld [vmem:[%s3 + $0x110] sm:$0xf]
      %v4115 = vld [vmem:[%s3 + $0x114] sm:$0xf]
      %v4116 = vld [vmem:[%s3 + $0x118] sm:$0xf]
      %v4117 = vld [vmem:[%s3 + $0x11c] sm:$0xf]
      %v4118 = vld [vmem:[%s3 + $0x120] sm:$0xf]
      %v4119 = vld [vmem:[%s3 + $0x124] sm:$0xf]
      %v4120 = vld [vmem:[%s3 + $0x128] sm:$0xf]
      %v4121 = vld [vmem:[%s3 + $0x12c] sm:$0xf]
      %v4122 = vld [vmem:[%s3 + $0x130] sm:$0xf]
      %v4123 = vld [vmem:[%s3 + $0x134] sm:$0xf]
      %v4124 = vld [vmem:[%s3 + $0x138] sm:$0xf]
      %v4125 = vld [vmem:[%s3 + $0x13c] sm:$0xf]
      %v4126 = vld [vmem:[%s3 + $0x140] sm:$0xf]
      %v4127 = vld [vmem:[%s3 + $0x144] sm:$0xf]
      %v4128 = vld [vmem:[%s3 + $0x148] sm:$0xf]
      %v4129 = vld [vmem:[%s3 + $0x14c] sm:$0xf]
      %v4130 = vld [vmem:[%s3 + $0x150] sm:$0xf]
      %v4131 = vld [vmem:[%s3 + $0x154] sm:$0xf]
      %v4132 = vld [vmem:[%s3 + $0x158] sm:$0xf]
      %v4133 = vld [vmem:[%s3 + $0x15c] sm:$0xf]
      %v4134 = vld [vmem:[%s3 + $0x160] sm:$0xf]
      %v4135 = vld [vmem:[%s3 + $0x164] sm:$0xf]
      %v4136 = vld [vmem:[%s3 + $0x168] sm:$0xf]
      %v4137 = vld [vmem:[%s3 + $0x16c] sm:$0xf]
      %v4138 = vld [vmem:[%s3 + $0x170] sm:$0xf]
      %v4139 = vld [vmem:[%s3 + $0x174] sm:$0xf]
      %v4140 = vld [vmem:[%s3 + $0x178] sm:$0xf]
      %v4141 = vld [vmem:[%s3 + $0x17c] sm:$0xf]
      %v4142 = vld [vmem:[%s3 + $0x180] sm:$0xf]
      %v4143 = vld [vmem:[%s3 + $0x184] sm:$0xf]
      %v4144 = vld [vmem:[%s3 + $0x188] sm:$0xf]
      %v4145 = vld [vmem:[%s3 + $0x18c] sm:$0xf]
      %v4146 = vld [vmem:[%s3 + $0x190] sm:$0xf]
      %v4147 = vld [vmem:[%s3 + $0x194] sm:$0xf]
      %v4148 = vld [vmem:[%s3 + $0x198] sm:$0xf]
      %v4149 = vld [vmem:[%s3 + $0x19c] sm:$0xf]
      %v4150 = vld [vmem:[%s3 + $0x1a0] sm:$0xf]
      %v4151 = vld [vmem:[%s3 + $0x1a4] sm:$0xf]
      %v4152 = vld [vmem:[%s3 + $0x1a8] sm:$0xf]
      %v4153 = vld [vmem:[%s3 + $0x1ac] sm:$0xf]
      %v4154 = vld [vmem:[%s3 + $0x1b0] sm:$0xf]
      %v4155 = vld [vmem:[%s3 + $0x1b4] sm:$0xf]
      %v4156 = vld [vmem:[%s3 + $0x1b8] sm:$0xf]
      %v4157 = vld [vmem:[%s3 + $0x1bc] sm:$0xf]
      %v4158 = vld [vmem:[%s3 + $0x1c0] sm:$0xf]
      %v4159 = vld [vmem:[%s3 + $0x1c4] sm:$0xf]
      %v4160 = vld [vmem:[%s3 + $0x1c8] sm:$0xf]
      %v4161 = vld [vmem:[%s3 + $0x1cc] sm:$0xf]
      %v4162 = vld [vmem:[%s3 + $0x1d0] sm:$0xf]
      %v4163 = vld [vmem:[%s3 + $0x1d4] sm:$0xf]
      %v4164 = vld [vmem:[%s3 + $0x1d8] sm:$0xf]
      %v4165 = vld [vmem:[%s3 + $0x1dc] sm:$0xf]
      %v4166 = vld [vmem:[%s3 + $0x1e0] sm:$0xf]
      %v4167 = vld [vmem:[%s3 + $0x1e4] sm:$0xf]
      %v4168 = vld [vmem:[%s3 + $0x1e8] sm:$0xf]
      %v4169 = vld [vmem:[%s3 + $0x1ec] sm:$0xf]
      %v4170 = vld [vmem:[%s3 + $0x1f0] sm:$0xf]
      %v4171 = vld [vmem:[%s3 + $0x1f4] sm:$0xf]
      %v4172 = vld [vmem:[%s3 + $0x1f8] sm:$0xf]
      %v4173 = vld [vmem:[%s3 + $0x1fc] sm:$0xf]
      %v4174 = vld [vmem:[%s3 + $0x200] sm:$0xf]
      %v4175 = vld [vmem:[%s3 + $0x204] sm:$0xf]
      %v4176 = vld [vmem:[%s3 + $0x208] sm:$0xf]
      %v4177 = vld [vmem:[%s3 + $0x20c] sm:$0xf]
      %v4178 = vld [vmem:[%s3 + $0x210] sm:$0xf]
      %v4179 = vld [vmem:[%s3 + $0x214] sm:$0xf]
      %v4180 = vld [vmem:[%s3 + $0x218] sm:$0xf]
      %v4181 = vld [vmem:[%s3 + $0x21c] sm:$0xf]
      %v4182 = vld [vmem:[%s3 + $0x220] sm:$0xf]
      %v4183 = vld [vmem:[%s3 + $0x224] sm:$0xf]
      %v4184 = vld [vmem:[%s3 + $0x228] sm:$0xf]
      %v4185 = vld [vmem:[%s3 + $0x22c] sm:$0xf]
      %v4186 = vld [vmem:[%s3 + $0x230] sm:$0xf]
      %v4187 = vld [vmem:[%s3 + $0x234] sm:$0xf]
      %v4188 = vld [vmem:[%s3 + $0x238] sm:$0xf]
      %v4189 = vld [vmem:[%s3 + $0x23c] sm:$0xf]
      %v4350 = vunpack.c.l.b16 %v3886
      %v4351 = vunpack.c.h.b16 %v3886
      %v4352 = vunpack.c.l.b16 %v3887
      %v4353 = vunpack.c.h.b16 %v3887
      %v4354 = vunpack.c.l.b16 %v3888
      %v4355 = vunpack.c.h.b16 %v3888
      %v4356 = vunpack.c.l.b16 %v3889
      %v4357 = vunpack.c.h.b16 %v3889
      %v4358 = vunpack.c.l.b16 %v3890
      %v4359 = vunpack.c.l.b16 %v3891
      %v4360 = vunpack.c.h.b16 %v3891
      %v4361 = vunpack.c.l.b16 %v3892
      %v4362 = vunpack.c.h.b16 %v3892
      %v4363 = vunpack.c.l.b16 %v3893
      %v4364 = vunpack.c.h.b16 %v3893
      %v4365 = vunpack.c.l.b16 %v3894
      %v4366 = vunpack.c.h.b16 %v3894
      %v4367 = vunpack.c.l.b16 %v3895
      %v4368 = vunpack.c.l.b16 %v3896
      %v4369 = vunpack.c.h.b16 %v3896
      %v4370 = vunpack.c.l.b16 %v3897
      %v4371 = vunpack.c.h.b16 %v3897
      %v4372 = vunpack.c.l.b16 %v3898
      %v4373 = vunpack.c.h.b16 %v3898
      %v4374 = vunpack.c.l.b16 %v3899
      %v4375 = vunpack.c.h.b16 %v3899
      %v4376 = vunpack.c.l.b16 %v3900
      %v4377 = vunpack.c.l.b16 %v3901
      %v4378 = vunpack.c.h.b16 %v3901
      %v4379 = vunpack.c.l.b16 %v3902
      %v4380 = vunpack.c.h.b16 %v3902
      %v4381 = vunpack.c.l.b16 %v3903
      %v4382 = vunpack.c.h.b16 %v3903
      %v4383 = vunpack.c.l.b16 %v3904
      %v4384 = vunpack.c.h.b16 %v3904
      %v4385 = vunpack.c.l.b16 %v3905
      %v4386 = vunpack.c.l.b16 %v3906
      %v4387 = vunpack.c.h.b16 %v3906
      %v4388 = vunpack.c.l.b16 %v3907
      %v4389 = vunpack.c.h.b16 %v3907
      %v4390 = vunpack.c.l.b16 %v3908
      %v4391 = vunpack.c.h.b16 %v3908
      %v4392 = vunpack.c.l.b16 %v3909
      %v4393 = vunpack.c.h.b16 %v3909
      %v4394 = vunpack.c.l.b16 %v3910
      %v4395 = vunpack.c.l.b16 %v3911
      %v4396 = vunpack.c.h.b16 %v3911
      %v4397 = vunpack.c.l.b16 %v3912
      %v4398 = vunpack.c.h.b16 %v3912
      %v4399 = vunpack.c.l.b16 %v3913
      %v4400 = vunpack.c.h.b16 %v3913
      %v4401 = vunpack.c.l.b16 %v3914
      %v4402 = vunpack.c.h.b16 %v3914
      %v4403 = vunpack.c.l.b16 %v3915
      %v4404 = vunpack.c.l.b16 %v3916
      %v4405 = vunpack.c.h.b16 %v3916
      %v4406 = vunpack.c.l.b16 %v3917
      %v4407 = vunpack.c.h.b16 %v3917
      %v4408 = vunpack.c.l.b16 %v3918
      %v4409 = vunpack.c.h.b16 %v3918
      %v4410 = vunpack.c.l.b16 %v3919
      %v4411 = vunpack.c.h.b16 %v3919
      %v4412 = vunpack.c.l.b16 %v3920
      %v4413 = vunpack.c.l.b16 %v3921
      %v4414 = vunpack.c.h.b16 %v3921
      %v4415 = vunpack.c.l.b16 %v3922
      %v4416 = vunpack.c.h.b16 %v3922
      %v4417 = vunpack.c.l.b16 %v3923
      %v4418 = vunpack.c.h.b16 %v3923
      %v4419 = vunpack.c.l.b16 %v3924
      %v4420 = vunpack.c.h.b16 %v3924
      %v4421 = vunpack.c.l.b16 %v3925
      %v4422 = vunpack.c.l.b16 %v3926
      %v4423 = vunpack.c.h.b16 %v3926
      %v4424 = vunpack.c.l.b16 %v3927
      %v4425 = vunpack.c.h.b16 %v3927
      %v4426 = vunpack.c.l.b16 %v3928
      %v4427 = vunpack.c.h.b16 %v3928
      %v4428 = vunpack.c.l.b16 %v3929
      %v4429 = vunpack.c.h.b16 %v3929
      %v4430 = vunpack.c.l.b16 %v3930
      %v4431 = vunpack.c.l.b16 %v3931
      %v4432 = vunpack.c.h.b16 %v3931
      %v4433 = vunpack.c.l.b16 %v3932
      %v4434 = vunpack.c.h.b16 %v3932
      %v4435 = vunpack.c.l.b16 %v3933
      %v4436 = vunpack.c.h.b16 %v3933
      %v4437 = vunpack.c.l.b16 %v3934
      %v4438 = vunpack.c.h.b16 %v3934
      %v4439 = vunpack.c.l.b16 %v3935
      %v4440 = vunpack.c.l.b16 %v3936
      %v4441 = vunpack.c.h.b16 %v3936
      %v4442 = vunpack.c.l.b16 %v3937
      %v4443 = vunpack.c.h.b16 %v3937
      %v4444 = vunpack.c.l.b16 %v3938
      %v4445 = vunpack.c.h.b16 %v3938
      %v4446 = vunpack.c.l.b16 %v3939
      %v4447 = vunpack.c.h.b16 %v3939
      %v4448 = vunpack.c.l.b16 %v3940
      %v4449 = vunpack.c.l.b16 %v3941
      %v4450 = vunpack.c.h.b16 %v3941
      %v4451 = vunpack.c.l.b16 %v3942
      %v4452 = vunpack.c.h.b16 %v3942
      %v4453 = vunpack.c.l.b16 %v3943
      %v4454 = vunpack.c.h.b16 %v3943
      %v4455 = vunpack.c.l.b16 %v3944
      %v4456 = vunpack.c.h.b16 %v3944
      %v4457 = vunpack.c.l.b16 %v3945
      %v4458 = vunpack.c.l.b16 %v3946
      %v4459 = vunpack.c.h.b16 %v3946
      %v4460 = vunpack.c.l.b16 %v3947
      %v4461 = vunpack.c.h.b16 %v3947
      %v4462 = vunpack.c.l.b16 %v3948
      %v4463 = vunpack.c.h.b16 %v3948
      %v4464 = vunpack.c.l.b16 %v3949
      %v4465 = vunpack.c.h.b16 %v3949
      %v4466 = vunpack.c.l.b16 %v3950
      %v4467 = vunpack.c.l.b16 %v3951
      %v4468 = vunpack.c.h.b16 %v3951
      %v4469 = vunpack.c.l.b16 %v3952
      %v4470 = vunpack.c.h.b16 %v3952
      %v4471 = vunpack.c.l.b16 %v3953
      %v4472 = vunpack.c.h.b16 %v3953
      %v4473 = vunpack.c.l.b16 %v3954
      %v4474 = vunpack.c.h.b16 %v3954
      %v4475 = vunpack.c.l.b16 %v3955
      %v4476 = vunpack.c.l.b16 %v3956
      %v4477 = vunpack.c.h.b16 %v3956
      %v4478 = vunpack.c.l.b16 %v3957
      %v4479 = vunpack.c.h.b16 %v3957
      %v4480 = vunpack.c.l.b16 %v3958
      %v4481 = vunpack.c.h.b16 %v3958
      %v4482 = vunpack.c.l.b16 %v3959
      %v4483 = vunpack.c.h.b16 %v3959
      %v4484 = vunpack.c.l.b16 %v3960
      %v4485 = vunpack.c.l.b16 %v3961
      %v4486 = vunpack.c.h.b16 %v3961
      %v4487 = vunpack.c.l.b16 %v3962
      %v4488 = vunpack.c.h.b16 %v3962
      %v4489 = vunpack.c.l.b16 %v3963
      %v4490 = vunpack.c.h.b16 %v3963
      %v4491 = vunpack.c.l.b16 %v3964
      %v4492 = vunpack.c.h.b16 %v3964
      %v4493 = vunpack.c.l.b16 %v3965
      %v4494 = vunpack.c.l.b16 %v3966
      %v4495 = vunpack.c.h.b16 %v3966
      %v4496 = vunpack.c.l.b16 %v3967
      %v4497 = vunpack.c.h.b16 %v3967
      %v4498 = vunpack.c.l.b16 %v3968
      %v4499 = vunpack.c.h.b16 %v3968
      %v4500 = vunpack.c.l.b16 %v3969
      %v4501 = vunpack.c.h.b16 %v3969
      %v4502 = vunpack.c.l.b16 %v3970
      %v4503 = vunpack.c.l.b16 %v3971
      %v4504 = vunpack.c.h.b16 %v3971
      %v4505 = vunpack.c.l.b16 %v3972
      %v4506 = vunpack.c.h.b16 %v3972
      %v4507 = vunpack.c.l.b16 %v3973
      %v4508 = vunpack.c.h.b16 %v3973
      %v4509 = vunpack.c.l.b16 %v3974
      %v4510 = vunpack.c.h.b16 %v3974
      %v4511 = vunpack.c.l.b16 %v3975
      %v4512 = vunpack.c.l.b16 %v3976
      %v4513 = vunpack.c.h.b16 %v3976
      %v4514 = vunpack.c.l.b16 %v3977
      %v4515 = vunpack.c.h.b16 %v3977
      %v4516 = vunpack.c.l.b16 %v3978
      %v4517 = vunpack.c.h.b16 %v3978
      %v4518 = vunpack.c.l.b16 %v3979
      %v4519 = vunpack.c.h.b16 %v3979
      %v4520 = vunpack.c.l.b16 %v3980
      %v4521 = vunpack.c.l.b16 %v3981
      %v4522 = vunpack.c.h.b16 %v3981
      %v4523 = vunpack.c.l.b16 %v3982
      %v4524 = vunpack.c.h.b16 %v3982
      %v4525 = vunpack.c.l.b16 %v3983
      %v4526 = vunpack.c.h.b16 %v3983
      %v4527 = vunpack.c.l.b16 %v3984
      %v4528 = vunpack.c.h.b16 %v3984
      %v4529 = vunpack.c.l.b16 %v3985
      %v4530 = vunpack.c.l.b16 %v3986
      %v4531 = vunpack.c.h.b16 %v3986
      %v4532 = vunpack.c.l.b16 %v3987
      %v4533 = vunpack.c.h.b16 %v3987
      %v4534 = vunpack.c.l.b16 %v3988
      %v4535 = vunpack.c.h.b16 %v3988
      %v4536 = vunpack.c.l.b16 %v3989
      %v4537 = vunpack.c.h.b16 %v3989
      %v4538 = vunpack.c.l.b16 %v3990
      %v4539 = vunpack.c.l.b16 %v3991
      %v4540 = vunpack.c.h.b16 %v3991
      %v4541 = vunpack.c.l.b16 %v3992
      %v4542 = vunpack.c.h.b16 %v3992
      %v4543 = vunpack.c.l.b16 %v3993
      %v4544 = vunpack.c.h.b16 %v3993
      %v4545 = vunpack.c.l.b16 %v3994
      %v4546 = vunpack.c.h.b16 %v3994
      %v4547 = vunpack.c.l.b16 %v3995
      %v4548 = vunpack.c.l.b16 %v3996
      %v4549 = vunpack.c.h.b16 %v3996
      %v4550 = vunpack.c.l.b16 %v3997
      %v4551 = vunpack.c.h.b16 %v3997
      %v4552 = vunpack.c.l.b16 %v3998
      %v4553 = vunpack.c.h.b16 %v3998
      %v4554 = vunpack.c.l.b16 %v3999
      %v4555 = vunpack.c.h.b16 %v3999
      %v4556 = vunpack.c.l.b16 %v4000
      %v4557 = vunpack.c.l.b16 %v4001
      %v4558 = vunpack.c.h.b16 %v4001
      %v4559 = vunpack.c.l.b16 %v4002
      %v4560 = vunpack.c.h.b16 %v4002
      %v4561 = vunpack.c.l.b16 %v4003
      %v4562 = vunpack.c.h.b16 %v4003
      %v4563 = vunpack.c.l.b16 %v4004
      %v4564 = vunpack.c.h.b16 %v4004
      %v4565 = vunpack.c.l.b16 %v4005
      %v4566 = vunpack.c.l.b16 %v4006
      %v4567 = vunpack.c.h.b16 %v4006
      %v4568 = vunpack.c.l.b16 %v4007
      %v4569 = vunpack.c.h.b16 %v4007
      %v4570 = vunpack.c.l.b16 %v4008
      %v4571 = vunpack.c.h.b16 %v4008
      %v4572 = vunpack.c.l.b16 %v4009
      %v4573 = vunpack.c.h.b16 %v4009
      %v4574 = vunpack.c.l.b16 %v4010
      %v4575 = vunpack.c.l.b16 %v4011
      %v4576 = vunpack.c.h.b16 %v4011
      %v4577 = vunpack.c.l.b16 %v4012
      %v4578 = vunpack.c.h.b16 %v4012
      %v4579 = vunpack.c.l.b16 %v4013
      %v4580 = vunpack.c.h.b16 %v4013
      %v4581 = vunpack.c.l.b16 %v4014
      %v4582 = vunpack.c.h.b16 %v4014
      %v4583 = vunpack.c.l.b16 %v4015
      %v4584 = vunpack.c.l.b16 %v4016
      %v4585 = vunpack.c.h.b16 %v4016
      %v4586 = vunpack.c.l.b16 %v4017
      %v4587 = vunpack.c.h.b16 %v4017
      %v4588 = vunpack.c.l.b16 %v4018
      %v4589 = vunpack.c.h.b16 %v4018
      %v4590 = vunpack.c.l.b16 %v4019
      %v4591 = vunpack.c.h.b16 %v4019
      %v4592 = vunpack.c.l.b16 %v4020
      %v4593 = vunpack.c.l.b16 %v4021
      %v4594 = vunpack.c.h.b16 %v4021
      %v4595 = vunpack.c.l.b16 %v4022
      %v4596 = vunpack.c.h.b16 %v4022
      %v4597 = vunpack.c.l.b16 %v4023
      %v4598 = vunpack.c.h.b16 %v4023
      %v4599 = vunpack.c.l.b16 %v4024
      %v4600 = vunpack.c.h.b16 %v4024
      %v4601 = vunpack.c.l.b16 %v4025
      %v4602 = vunpack.c.l.b16 %v4026
      %v4603 = vunpack.c.h.b16 %v4026
      %v4604 = vunpack.c.l.b16 %v4027
      %v4605 = vunpack.c.h.b16 %v4027
      %v4606 = vunpack.c.l.b16 %v4028
      %v4607 = vunpack.c.h.b16 %v4028
      %v4608 = vunpack.c.l.b16 %v4029
      %v4609 = vunpack.c.h.b16 %v4029
      %v4610 = vunpack.c.l.b16 %v4030
      %v4611 = vunpack.c.l.b16 %v4031
      %v4612 = vunpack.c.h.b16 %v4031
      %v4613 = vunpack.c.l.b16 %v4032
      %v4614 = vunpack.c.h.b16 %v4032
      %v4615 = vunpack.c.l.b16 %v4033
      %v4616 = vunpack.c.h.b16 %v4033
      %v4617 = vunpack.c.l.b16 %v4034
      %v4618 = vunpack.c.h.b16 %v4034
      %v4619 = vunpack.c.l.b16 %v4035
      %v4620 = vunpack.c.l.b16 %v4036
      %v4621 = vunpack.c.h.b16 %v4036
      %v4622 = vunpack.c.l.b16 %v4037
      %v4623 = vunpack.c.h.b16 %v4037
      %v4624 = vunpack.c.l.b16 %v4038
      %v4625 = vunpack.c.h.b16 %v4038
      %v4626 = vunpack.c.l.b16 %v4039
      %v4627 = vunpack.c.h.b16 %v4039
      %v4628 = vunpack.c.l.b16 %v4040
      %v4629 = vunpack.c.l.b16 %v4041
      %v4630 = vunpack.c.h.b16 %v4041
      %v4631 = vunpack.c.l.b16 %v4042
      %v4632 = vunpack.c.h.b16 %v4042
      %v4633 = vunpack.c.l.b16 %v4043
      %v4634 = vunpack.c.h.b16 %v4043
      %v4635 = vunpack.c.l.b16 %v4044
      %v4636 = vunpack.c.h.b16 %v4044
      %v4637 = vunpack.c.l.b16 %v4045
      %v4638 = vpack.c.b16 %v4359, %v4350
      %v4639 = vpack.c.b16 %v4360, %v4351
      %v4640 = vpack.c.b16 %v4361, %v4352
      %v4641 = vpack.c.b16 %v4362, %v4353
      %v4642 = vpack.c.b16 %v4363, %v4354
      %v4643 = vpack.c.b16 %v4364, %v4355
      %v4644 = vpack.c.b16 %v4365, %v4356
      %v4645 = vpack.c.b16 %v4366, %v4357
      %v4646 = vpack.c.b16 %v4367, %v4358
      %v4647 = vpack.c.b16 %v4377, %v4368
      %v4648 = vpack.c.b16 %v4378, %v4369
      %v4649 = vpack.c.b16 %v4379, %v4370
      %v4650 = vpack.c.b16 %v4380, %v4371
      %v4651 = vpack.c.b16 %v4381, %v4372
      %v4652 = vpack.c.b16 %v4382, %v4373
      %v4653 = vpack.c.b16 %v4383, %v4374
      %v4654 = vpack.c.b16 %v4384, %v4375
      %v4655 = vpack.c.b16 %v4385, %v4376
      %v4656 = vpack.c.b16 %v4395, %v4386
      %v4657 = vpack.c.b16 %v4396, %v4387
      %v4658 = vpack.c.b16 %v4397, %v4388
      %v4659 = vpack.c.b16 %v4398, %v4389
      %v4660 = vpack.c.b16 %v4399, %v4390
      %v4661 = vpack.c.b16 %v4400, %v4391
      %v4662 = vpack.c.b16 %v4401, %v4392
      %v4663 = vpack.c.b16 %v4402, %v4393
      %v4664 = vpack.c.b16 %v4403, %v4394
      %v4665 = vpack.c.b16 %v4413, %v4404
      %v4666 = vpack.c.b16 %v4414, %v4405
      %v4667 = vpack.c.b16 %v4415, %v4406
      %v4668 = vpack.c.b16 %v4416, %v4407
      %v4669 = vpack.c.b16 %v4417, %v4408
      %v4670 = vpack.c.b16 %v4418, %v4409
      %v4671 = vpack.c.b16 %v4419, %v4410
      %v4672 = vpack.c.b16 %v4420, %v4411
      %v4673 = vpack.c.b16 %v4421, %v4412
      %v4674 = vpack.c.b16 %v4431, %v4422
      %v4675 = vpack.c.b16 %v4432, %v4423
      %v4676 = vpack.c.b16 %v4433, %v4424
      %v4677 = vpack.c.b16 %v4434, %v4425
      %v4678 = vpack.c.b16 %v4435, %v4426
      %v4679 = vpack.c.b16 %v4436, %v4427
      %v4680 = vpack.c.b16 %v4437, %v4428
      %v4681 = vpack.c.b16 %v4438, %v4429
      %v4682 = vpack.c.b16 %v4439, %v4430
      %v4683 = vpack.c.b16 %v4449, %v4440
      %v4684 = vpack.c.b16 %v4450, %v4441
      %v4685 = vpack.c.b16 %v4451, %v4442
      %v4686 = vpack.c.b16 %v4452, %v4443
      %v4687 = vpack.c.b16 %v4453, %v4444
      %v4688 = vpack.c.b16 %v4454, %v4445
      %v4689 = vpack.c.b16 %v4455, %v4446
      %v4690 = vpack.c.b16 %v4456, %v4447
      %v4691 = vpack.c.b16 %v4457, %v4448
      %v4692 = vpack.c.b16 %v4467, %v4458
      %v4693 = vpack.c.b16 %v4468, %v4459
      %v4694 = vpack.c.b16 %v4469, %v4460
      %v4695 = vpack.c.b16 %v4470, %v4461
      %v4696 = vpack.c.b16 %v4471, %v4462
      %v4697 = vpack.c.b16 %v4472, %v4463
      %v4698 = vpack.c.b16 %v4473, %v4464
      %v4699 = vpack.c.b16 %v4474, %v4465
      %v4700 = vpack.c.b16 %v4475, %v4466
      %v4701 = vpack.c.b16 %v4485, %v4476
      %v4702 = vpack.c.b16 %v4486, %v4477
      %v4703 = vpack.c.b16 %v4487, %v4478
      %v4704 = vpack.c.b16 %v4488, %v4479
      %v4705 = vpack.c.b16 %v4489, %v4480
      %v4706 = vpack.c.b16 %v4490, %v4481
      %v4707 = vpack.c.b16 %v4491, %v4482
      %v4708 = vpack.c.b16 %v4492, %v4483
      %v4709 = vpack.c.b16 %v4493, %v4484
      %v4710 = vpack.c.b16 %v4503, %v4494
      %v4711 = vpack.c.b16 %v4504, %v4495
      %v4712 = vpack.c.b16 %v4505, %v4496
      %v4713 = vpack.c.b16 %v4506, %v4497
      %v4714 = vpack.c.b16 %v4507, %v4498
      %v4715 = vpack.c.b16 %v4508, %v4499
      %v4716 = vpack.c.b16 %v4509, %v4500
      %v4717 = vpack.c.b16 %v4510, %v4501
      %v4718 = vpack.c.b16 %v4511, %v4502
      %v4719 = vpack.c.b16 %v4521, %v4512
      %v4720 = vpack.c.b16 %v4522, %v4513
      %v4721 = vpack.c.b16 %v4523, %v4514
      %v4722 = vpack.c.b16 %v4524, %v4515
      %v4723 = vpack.c.b16 %v4525, %v4516
      %v4724 = vpack.c.b16 %v4526, %v4517
      %v4725 = vpack.c.b16 %v4527, %v4518
      %v4726 = vpack.c.b16 %v4528, %v4519
      %v4727 = vpack.c.b16 %v4529, %v4520
      %v4728 = vpack.c.b16 %v4539, %v4530
      %v4729 = vpack.c.b16 %v4540, %v4531
      %v4730 = vpack.c.b16 %v4541, %v4532
      %v4731 = vpack.c.b16 %v4542, %v4533
      %v4732 = vpack.c.b16 %v4543, %v4534
      %v4733 = vpack.c.b16 %v4544, %v4535
      %v4734 = vpack.c.b16 %v4545, %v4536
      %v4735 = vpack.c.b16 %v4546, %v4537
      %v4736 = vpack.c.b16 %v4547, %v4538
      %v4737 = vpack.c.b16 %v4557, %v4548
      %v4738 = vpack.c.b16 %v4558, %v4549
      %v4739 = vpack.c.b16 %v4559, %v4550
      %v4740 = vpack.c.b16 %v4560, %v4551
      %v4741 = vpack.c.b16 %v4561, %v4552
      %v4742 = vpack.c.b16 %v4562, %v4553
      %v4743 = vpack.c.b16 %v4563, %v4554
      %v4744 = vpack.c.b16 %v4564, %v4555
      %v4745 = vpack.c.b16 %v4565, %v4556
      %v4746 = vpack.c.b16 %v4575, %v4566
      %v4747 = vpack.c.b16 %v4576, %v4567
      %v4748 = vpack.c.b16 %v4577, %v4568
      %v4749 = vpack.c.b16 %v4578, %v4569
      %v4750 = vpack.c.b16 %v4579, %v4570
      %v4751 = vpack.c.b16 %v4580, %v4571
      %v4752 = vpack.c.b16 %v4581, %v4572
      %v4753 = vpack.c.b16 %v4582, %v4573
      %v4754 = vpack.c.b16 %v4583, %v4574
      %v4755 = vpack.c.b16 %v4593, %v4584
      %v4756 = vpack.c.b16 %v4594, %v4585
      %v4757 = vpack.c.b16 %v4595, %v4586
      %v4758 = vpack.c.b16 %v4596, %v4587
      %v4759 = vpack.c.b16 %v4597, %v4588
      %v4760 = vpack.c.b16 %v4598, %v4589
      %v4761 = vpack.c.b16 %v4599, %v4590
      %v4762 = vpack.c.b16 %v4600, %v4591
      %v4763 = vpack.c.b16 %v4601, %v4592
      %v4764 = vpack.c.b16 %v4611, %v4602
      %v4765 = vpack.c.b16 %v4612, %v4603
      %v4766 = vpack.c.b16 %v4613, %v4604
      %v4767 = vpack.c.b16 %v4614, %v4605
      %v4768 = vpack.c.b16 %v4615, %v4606
      %v4769 = vpack.c.b16 %v4616, %v4607
      %v4770 = vpack.c.b16 %v4617, %v4608
      %v4771 = vpack.c.b16 %v4618, %v4609
      %v4772 = vpack.c.b16 %v4619, %v4610
      %v4773 = vpack.c.b16 %v4629, %v4620
      %v4774 = vpack.c.b16 %v4630, %v4621
      %v4775 = vpack.c.b16 %v4631, %v4622
      %v4776 = vpack.c.b16 %v4632, %v4623
      %v4777 = vpack.c.b16 %v4633, %v4624
      %v4778 = vpack.c.b16 %v4634, %v4625
      %v4779 = vpack.c.b16 %v4635, %v4626
      %v4780 = vpack.c.b16 %v4636, %v4627
      %v4781 = vpack.c.b16 %v4637, %v4628
      %v5070 = vunpack.c.l.b16 %v4046
      %v5071 = vunpack.c.l.b16 %v4047
      %v5072 = vunpack.c.l.b16 %v4048
      %v5073 = vunpack.c.l.b16 %v4049
      %v5074 = vunpack.c.l.b16 %v4050
      %v5075 = vunpack.c.l.b16 %v4051
      %v5076 = vunpack.c.l.b16 %v4052
      %v5077 = vunpack.c.l.b16 %v4053
      %v5078 = vunpack.c.l.b16 %v4054
      %v5079 = vunpack.c.l.b16 %v4055
      %v5080 = vunpack.c.l.b16 %v4056
      %v5081 = vunpack.c.l.b16 %v4057
      %v5082 = vunpack.c.l.b16 %v4058
      %v5083 = vunpack.c.l.b16 %v4059
      %v5084 = vunpack.c.l.b16 %v4060
      %v5085 = vunpack.c.l.b16 %v4061
      %v5086 = vunpack.c.l.b16 %v4062
      %v5087 = vunpack.c.l.b16 %v4063
      %v5088 = vunpack.c.l.b16 %v4064
      %v5089 = vunpack.c.l.b16 %v4065
      %v5090 = vunpack.c.l.b16 %v4066
      %v5091 = vunpack.c.l.b16 %v4067
      %v5092 = vunpack.c.l.b16 %v4068
      %v5093 = vunpack.c.l.b16 %v4069
      %v5094 = vunpack.c.l.b16 %v4070
      %v5095 = vunpack.c.l.b16 %v4071
      %v5096 = vunpack.c.l.b16 %v4072
      %v5097 = vunpack.c.l.b16 %v4073
      %v5098 = vunpack.c.l.b16 %v4074
      %v5099 = vunpack.c.l.b16 %v4075
      %v5100 = vunpack.c.l.b16 %v4076
      %v5101 = vunpack.c.l.b16 %v4077
      %v5102 = vunpack.c.l.b16 %v4078
      %v5103 = vunpack.c.l.b16 %v4079
      %v5104 = vunpack.c.l.b16 %v4080
      %v5105 = vunpack.c.l.b16 %v4081
      %v5106 = vunpack.c.l.b16 %v4082
      %v5107 = vunpack.c.l.b16 %v4083
      %v5108 = vunpack.c.l.b16 %v4084
      %v5109 = vunpack.c.l.b16 %v4085
      %v5110 = vunpack.c.l.b16 %v4086
      %v5111 = vunpack.c.l.b16 %v4087
      %v5112 = vunpack.c.l.b16 %v4088
      %v5113 = vunpack.c.l.b16 %v4089
      %v5114 = vunpack.c.l.b16 %v4090
      %v5115 = vunpack.c.l.b16 %v4091
      %v5116 = vunpack.c.l.b16 %v4092
      %v5117 = vunpack.c.l.b16 %v4093
      %v5118 = vunpack.c.l.b16 %v4094
      %v5119 = vunpack.c.l.b16 %v4095
      %v5120 = vunpack.c.l.b16 %v4096
      %v5121 = vunpack.c.l.b16 %v4097
      %v5122 = vunpack.c.l.b16 %v4098
      %v5123 = vunpack.c.l.b16 %v4099
      %v5124 = vunpack.c.l.b16 %v4100
      %v5125 = vunpack.c.l.b16 %v4101
      %v5126 = vunpack.c.l.b16 %v4102
      %v5127 = vunpack.c.l.b16 %v4103
      %v5128 = vunpack.c.l.b16 %v4104
      %v5129 = vunpack.c.l.b16 %v4105
      %v5130 = vunpack.c.l.b16 %v4106
      %v5131 = vunpack.c.l.b16 %v4107
      %v5132 = vunpack.c.l.b16 %v4108
      %v5133 = vunpack.c.l.b16 %v4109
      %v5134 = vunpack.c.l.b16 %v4110
      %v5135 = vunpack.c.l.b16 %v4111
      %v5136 = vunpack.c.l.b16 %v4112
      %v5137 = vunpack.c.l.b16 %v4113
      %v5138 = vunpack.c.l.b16 %v4114
      %v5139 = vunpack.c.l.b16 %v4115
      %v5140 = vunpack.c.l.b16 %v4116
      %v5141 = vunpack.c.l.b16 %v4117
      %v5142 = vunpack.c.l.b16 %v4118
      %v5143 = vunpack.c.l.b16 %v4119
      %v5144 = vunpack.c.l.b16 %v4120
      %v5145 = vunpack.c.l.b16 %v4121
      %v5146 = vunpack.c.l.b16 %v4122
      %v5147 = vunpack.c.l.b16 %v4123
      %v5148 = vunpack.c.l.b16 %v4124
      %v5149 = vunpack.c.l.b16 %v4125
      %v5150 = vunpack.c.l.b16 %v4126
      %v5151 = vunpack.c.l.b16 %v4127
      %v5152 = vunpack.c.l.b16 %v4128
      %v5153 = vunpack.c.l.b16 %v4129
      %v5154 = vunpack.c.l.b16 %v4130
      %v5155 = vunpack.c.l.b16 %v4131
      %v5156 = vunpack.c.l.b16 %v4132
      %v5157 = vunpack.c.l.b16 %v4133
      %v5158 = vunpack.c.l.b16 %v4134
      %v5159 = vunpack.c.l.b16 %v4135
      %v5160 = vunpack.c.l.b16 %v4136
      %v5161 = vunpack.c.l.b16 %v4137
      %v5162 = vunpack.c.l.b16 %v4138
      %v5163 = vunpack.c.l.b16 %v4139
      %v5164 = vunpack.c.l.b16 %v4140
      %v5165 = vunpack.c.l.b16 %v4141
      %v5166 = vunpack.c.l.b16 %v4142
      %v5167 = vunpack.c.l.b16 %v4143
      %v5168 = vunpack.c.l.b16 %v4144
      %v5169 = vunpack.c.l.b16 %v4145
      %v5170 = vunpack.c.l.b16 %v4146
      %v5171 = vunpack.c.l.b16 %v4147
      %v5172 = vunpack.c.l.b16 %v4148
      %v5173 = vunpack.c.l.b16 %v4149
      %v5174 = vunpack.c.l.b16 %v4150
      %v5175 = vunpack.c.l.b16 %v4151
      %v5176 = vunpack.c.l.b16 %v4152
      %v5177 = vunpack.c.l.b16 %v4153
      %v5178 = vunpack.c.l.b16 %v4154
      %v5179 = vunpack.c.l.b16 %v4155
      %v5180 = vunpack.c.l.b16 %v4156
      %v5181 = vunpack.c.l.b16 %v4157
      %v5182 = vunpack.c.l.b16 %v4158
      %v5183 = vunpack.c.l.b16 %v4159
      %v5184 = vunpack.c.l.b16 %v4160
      %v5185 = vunpack.c.l.b16 %v4161
      %v5186 = vunpack.c.l.b16 %v4162
      %v5187 = vunpack.c.l.b16 %v4163
      %v5188 = vunpack.c.l.b16 %v4164
      %v5189 = vunpack.c.l.b16 %v4165
      %v5190 = vunpack.c.l.b16 %v4166
      %v5191 = vunpack.c.l.b16 %v4167
      %v5192 = vunpack.c.l.b16 %v4168
      %v5193 = vunpack.c.l.b16 %v4169
      %v5194 = vunpack.c.l.b16 %v4170
      %v5195 = vunpack.c.l.b16 %v4171
      %v5196 = vunpack.c.l.b16 %v4172
      %v5197 = vunpack.c.l.b16 %v4173
      %v5198 = vunpack.c.l.b16 %v4174
      %v5199 = vunpack.c.l.b16 %v4175
      %v5200 = vunpack.c.l.b16 %v4176
      %v5201 = vunpack.c.l.b16 %v4177
      %v5202 = vunpack.c.l.b16 %v4178
      %v5203 = vunpack.c.l.b16 %v4179
      %v5204 = vunpack.c.l.b16 %v4180
      %v5205 = vunpack.c.l.b16 %v4181
      %v5206 = vunpack.c.l.b16 %v4182
      %v5207 = vunpack.c.l.b16 %v4183
      %v5208 = vunpack.c.l.b16 %v4184
      %v5209 = vunpack.c.l.b16 %v4185
      %v5210 = vunpack.c.l.b16 %v4186
      %v5211 = vunpack.c.l.b16 %v4187
      %v5212 = vunpack.c.l.b16 %v4188
      %v5213 = vunpack.c.l.b16 %v4189
      %v5214 = vpack.c.b16 %v5071, %v5070
      %v5215 = vpack.c.b16 %v5073, %v5072
      %v5216 = vpack.c.b16 %v5075, %v5074
      %v5217 = vpack.c.b16 %v5077, %v5076
      %v5218 = vpack.c.b16 %v5079, %v5078
      %v5219 = vpack.c.b16 %v5081, %v5080
      %v5220 = vpack.c.b16 %v5083, %v5082
      %v5221 = vpack.c.b16 %v5085, %v5084
      %v5222 = vpack.c.b16 %v5087, %v5086
      %v5223 = vpack.c.b16 %v5089, %v5088
      %v5224 = vpack.c.b16 %v5091, %v5090
      %v5225 = vpack.c.b16 %v5093, %v5092
      %v5226 = vpack.c.b16 %v5095, %v5094
      %v5227 = vpack.c.b16 %v5097, %v5096
      %v5228 = vpack.c.b16 %v5099, %v5098
      %v5229 = vpack.c.b16 %v5101, %v5100
      %v5230 = vpack.c.b16 %v5103, %v5102
      %v5231 = vpack.c.b16 %v5105, %v5104
      %v5232 = vpack.c.b16 %v5107, %v5106
      %v5233 = vpack.c.b16 %v5109, %v5108
      %v5234 = vpack.c.b16 %v5111, %v5110
      %v5235 = vpack.c.b16 %v5113, %v5112
      %v5236 = vpack.c.b16 %v5115, %v5114
      %v5237 = vpack.c.b16 %v5117, %v5116
      %v5238 = vpack.c.b16 %v5119, %v5118
      %v5239 = vpack.c.b16 %v5121, %v5120
      %v5240 = vpack.c.b16 %v5123, %v5122
      %v5241 = vpack.c.b16 %v5125, %v5124
      %v5242 = vpack.c.b16 %v5127, %v5126
      %v5243 = vpack.c.b16 %v5129, %v5128
      %v5244 = vpack.c.b16 %v5131, %v5130
      %v5245 = vpack.c.b16 %v5133, %v5132
      %v5246 = vpack.c.b16 %v5135, %v5134
      %v5247 = vpack.c.b16 %v5137, %v5136
      %v5248 = vpack.c.b16 %v5139, %v5138
      %v5249 = vpack.c.b16 %v5141, %v5140
      %v5250 = vpack.c.b16 %v5143, %v5142
      %v5251 = vpack.c.b16 %v5145, %v5144
      %v5252 = vpack.c.b16 %v5147, %v5146
      %v5253 = vpack.c.b16 %v5149, %v5148
      %v5254 = vpack.c.b16 %v5151, %v5150
      %v5255 = vpack.c.b16 %v5153, %v5152
      %v5256 = vpack.c.b16 %v5155, %v5154
      %v5257 = vpack.c.b16 %v5157, %v5156
      %v5258 = vpack.c.b16 %v5159, %v5158
      %v5259 = vpack.c.b16 %v5161, %v5160
      %v5260 = vpack.c.b16 %v5163, %v5162
      %v5261 = vpack.c.b16 %v5165, %v5164
      %v5262 = vpack.c.b16 %v5167, %v5166
      %v5263 = vpack.c.b16 %v5169, %v5168
      %v5264 = vpack.c.b16 %v5171, %v5170
      %v5265 = vpack.c.b16 %v5173, %v5172
      %v5266 = vpack.c.b16 %v5175, %v5174
      %v5267 = vpack.c.b16 %v5177, %v5176
      %v5268 = vpack.c.b16 %v5179, %v5178
      %v5269 = vpack.c.b16 %v5181, %v5180
      %v5270 = vpack.c.b16 %v5183, %v5182
      %v5271 = vpack.c.b16 %v5185, %v5184
      %v5272 = vpack.c.b16 %v5187, %v5186
      %v5273 = vpack.c.b16 %v5189, %v5188
      %v5274 = vpack.c.b16 %v5191, %v5190
      %v5275 = vpack.c.b16 %v5193, %v5192
      %v5276 = vpack.c.b16 %v5195, %v5194
      %v5277 = vpack.c.b16 %v5197, %v5196
      %v5278 = vpack.c.b16 %v5199, %v5198
      %v5279 = vpack.c.b16 %v5201, %v5200
      %v5280 = vpack.c.b16 %v5203, %v5202
      %v5281 = vpack.c.b16 %v5205, %v5204
      %v5282 = vpack.c.b16 %v5207, %v5206
      %v5283 = vpack.c.b16 %v5209, %v5208
      %v5284 = vpack.c.b16 %v5211, %v5210
      %v5285 = vpack.c.b16 %v5213, %v5212
      %5358 = vmatpush.bf16.msra.mxu0 %v5221
      %5359 = vmatpush.bf16.msra.mxu0 %v5220
      %5360 = vmatpush.bf16.msra.mxu0 %v5219
      %5361 = vmatpush.bf16.msra.mxu0 %v5218
      %5362 = vmatpush.bf16.msra.mxu0 %v5217
      %5363 = vmatpush.bf16.msra.mxu0 %v5216
      %5364 = vmatpush.bf16.msra.mxu0 %v5215
      %5365 = vmatpush.bf16.msra.mxu0 %v5214
      %5366 = vmatmul.bf16.gmra.mxu0 %v4638
      %v5367 = vpop.f32.mrf.mxu0
      %v5368 = vadd.f32 0.0, %v5367
      %v5369 = vpop.f32.mrf.mxu0
      %v5370 = vadd.f32 0.0, %v5369
      %5371 = vmatmul.bf16.gmra.mxu0 %v4647
      %v5372 = vpop.f32.mrf.mxu0
      %v5373 = vadd.f32 0.0, %v5372
      %v5374 = vpop.f32.mrf.mxu0
      %v5375 = vadd.f32 0.0, %v5374
      %5376 = vmatmul.bf16.gmra.mxu0 %v4656
      %v5377 = vpop.f32.mrf.mxu0
      %v5378 = vadd.f32 0.0, %v5377
      %v5379 = vpop.f32.mrf.mxu0
      %v5380 = vadd.f32 0.0, %v5379
      %5381 = vmatmul.bf16.gmra.mxu0 %v4665
      %v5382 = vpop.f32.mrf.mxu0
      %v5383 = vadd.f32 0.0, %v5382
      %v5384 = vpop.f32.mrf.mxu0
      %v5385 = vadd.f32 0.0, %v5384
      %5386 = vmatmul.bf16.gmra.mxu0 %v4674
      %v5387 = vpop.f32.mrf.mxu0
      %v5388 = vadd.f32 0.0, %v5387
      %v5389 = vpop.f32.mrf.mxu0
      %v5390 = vadd.f32 0.0, %v5389
      %5391 = vmatmul.bf16.gmra.mxu0 %v4683
      %v5392 = vpop.f32.mrf.mxu0
      %v5393 = vadd.f32 0.0, %v5392
      %v5394 = vpop.f32.mrf.mxu0
      %v5395 = vadd.f32 0.0, %v5394
      %5396 = vmatmul.bf16.gmra.mxu0 %v4692
      %v5397 = vpop.f32.mrf.mxu0
      %v5398 = vadd.f32 0.0, %v5397
      %v5399 = vpop.f32.mrf.mxu0
      %v5400 = vadd.f32 0.0, %v5399
      %5401 = vmatmul.bf16.gmra.mxu0 %v4701
      %v5402 = vpop.f32.mrf.mxu0
      %v5403 = vadd.f32 0.0, %v5402
      %v5404 = vpop.f32.mrf.mxu0
      %v5405 = vadd.f32 0.0, %v5404
      %5406 = vmatmul.bf16.gmra.mxu0 %v4710
      %v5407 = vpop.f32.mrf.mxu0
      %v5408 = vadd.f32 0.0, %v5407
      %v5409 = vpop.f32.mrf.mxu0
      %v5410 = vadd.f32 0.0, %v5409
      %5411 = vmatmul.bf16.gmra.mxu0 %v4719
      %v5412 = vpop.f32.mrf.mxu0
      %v5413 = vadd.f32 0.0, %v5412
      %v5414 = vpop.f32.mrf.mxu0
      %v5415 = vadd.f32 0.0, %v5414
      %5416 = vmatmul.bf16.gmra.mxu0 %v4728
      %v5417 = vpop.f32.mrf.mxu0
      %v5418 = vadd.f32 0.0, %v5417
      %v5419 = vpop.f32.mrf.mxu0
      %v5420 = vadd.f32 0.0, %v5419
      %5421 = vmatmul.bf16.gmra.mxu0 %v4737
      %v5422 = vpop.f32.mrf.mxu0
      %v5423 = vadd.f32 0.0, %v5422
      %v5424 = vpop.f32.mrf.mxu0
      %v5425 = vadd.f32 0.0, %v5424
      %5426 = vmatmul.bf16.gmra.mxu0 %v4746
      %v5427 = vpop.f32.mrf.mxu0
      %v5428 = vadd.f32 0.0, %v5427
      %v5429 = vpop.f32.mrf.mxu0
      %v5430 = vadd.f32 0.0, %v5429
      %5431 = vmatmul.bf16.gmra.mxu0 %v4755
      %v5432 = vpop.f32.mrf.mxu0
      %v5433 = vadd.f32 0.0, %v5432
      %v5434 = vpop.f32.mrf.mxu0
      %v5435 = vadd.f32 0.0, %v5434
      %5436 = vmatmul.bf16.gmra.mxu0 %v4764
      %v5437 = vpop.f32.mrf.mxu0
      %v5438 = vadd.f32 0.0, %v5437
      %v5439 = vpop.f32.mrf.mxu0
      %v5440 = vadd.f32 0.0, %v5439
      %5441 = vmatmul.bf16.gmra.mxu0 %v4773
      %v5442 = vpop.f32.mrf.mxu0
      %v5443 = vadd.f32 0.0, %v5442
      %v5444 = vpop.f32.mrf.mxu0
      %v5445 = vadd.f32 0.0, %v5444
      %5446 = vdwg.mxu0
      %5447 = vmatpush.bf16.msra.mxu0 %v5229
      %5448 = vmatpush.bf16.msra.mxu0 %v5228
      %5449 = vmatpush.bf16.msra.mxu0 %v5227
      %5450 = vmatpush.bf16.msra.mxu0 %v5226
      %5451 = vmatpush.bf16.msra.mxu0 %v5225
      %5452 = vmatpush.bf16.msra.mxu0 %v5224
      %5453 = vmatpush.bf16.msra.mxu0 %v5223
      %5454 = vmatpush.bf16.msra.mxu0 %v5222
      %5455 = vmatmul.bf16.gmra.mxu0 %v4639
      %v5456 = vpop.f32.mrf.mxu0
      %v5457 = vadd.f32 %v5368, %v5456
      %v5458 = vpop.f32.mrf.mxu0
      %v5459 = vadd.f32 %v5370, %v5458
      %5460 = vmatmul.bf16.gmra.mxu0 %v4648
      %v5461 = vpop.f32.mrf.mxu0
      %v5462 = vadd.f32 %v5373, %v5461
      %v5463 = vpop.f32.mrf.mxu0
      %v5464 = vadd.f32 %v5375, %v5463
      %5465 = vmatmul.bf16.gmra.mxu0 %v4657
      %v5466 = vpop.f32.mrf.mxu0
      %v5467 = vadd.f32 %v5378, %v5466
      %v5468 = vpop.f32.mrf.mxu0
      %v5469 = vadd.f32 %v5380, %v5468
      %5470 = vmatmul.bf16.gmra.mxu0 %v4666
      %v5471 = vpop.f32.mrf.mxu0
      %v5472 = vadd.f32 %v5383, %v5471
      %v5473 = vpop.f32.mrf.mxu0
      %v5474 = vadd.f32 %v5385, %v5473
      %5475 = vmatmul.bf16.gmra.mxu0 %v4675
      %v5476 = vpop.f32.mrf.mxu0
      %v5477 = vadd.f32 %v5388, %v5476
      %v5478 = vpop.f32.mrf.mxu0
      %v5479 = vadd.f32 %v5390, %v5478
      %5480 = vmatmul.bf16.gmra.mxu0 %v4684
      %v5481 = vpop.f32.mrf.mxu0
      %v5482 = vadd.f32 %v5393, %v5481
      %v5483 = vpop.f32.mrf.mxu0
      %v5484 = vadd.f32 %v5395, %v5483
      %5485 = vmatmul.bf16.gmra.mxu0 %v4693
      %v5486 = vpop.f32.mrf.mxu0
      %v5487 = vadd.f32 %v5398, %v5486
      %v5488 = vpop.f32.mrf.mxu0
      %v5489 = vadd.f32 %v5400, %v5488
      %5490 = vmatmul.bf16.gmra.mxu0 %v4702
      %v5491 = vpop.f32.mrf.mxu0
      %v5492 = vadd.f32 %v5403, %v5491
      %v5493 = vpop.f32.mrf.mxu0
      %v5494 = vadd.f32 %v5405, %v5493
      %5495 = vmatmul.bf16.gmra.mxu0 %v4711
      %v5496 = vpop.f32.mrf.mxu0
      %v5497 = vadd.f32 %v5408, %v5496
      %v5498 = vpop.f32.mrf.mxu0
      %v5499 = vadd.f32 %v5410, %v5498
      %5500 = vmatmul.bf16.gmra.mxu0 %v4720
      %v5501 = vpop.f32.mrf.mxu0
      %v5502 = vadd.f32 %v5413, %v5501
      %v5503 = vpop.f32.mrf.mxu0
      %v5504 = vadd.f32 %v5415, %v5503
      %5505 = vmatmul.bf16.gmra.mxu0 %v4729
      %v5506 = vpop.f32.mrf.mxu0
      %v5507 = vadd.f32 %v5418, %v5506
      %v5508 = vpop.f32.mrf.mxu0
      %v5509 = vadd.f32 %v5420, %v5508
      %5510 = vmatmul.bf16.gmra.mxu0 %v4738
      %v5511 = vpop.f32.mrf.mxu0
      %v5512 = vadd.f32 %v5423, %v5511
      %v5513 = vpop.f32.mrf.mxu0
      %v5514 = vadd.f32 %v5425, %v5513
      %5515 = vmatmul.bf16.gmra.mxu0 %v4747
      %v5516 = vpop.f32.mrf.mxu0
      %v5517 = vadd.f32 %v5428, %v5516
      %v5518 = vpop.f32.mrf.mxu0
      %v5519 = vadd.f32 %v5430, %v5518
      %5520 = vmatmul.bf16.gmra.mxu0 %v4756
      %v5521 = vpop.f32.mrf.mxu0
      %v5522 = vadd.f32 %v5433, %v5521
      %v5523 = vpop.f32.mrf.mxu0
      %v5524 = vadd.f32 %v5435, %v5523
      %5525 = vmatmul.bf16.gmra.mxu0 %v4765
      %v5526 = vpop.f32.mrf.mxu0
      %v5527 = vadd.f32 %v5438, %v5526
      %v5528 = vpop.f32.mrf.mxu0
      %v5529 = vadd.f32 %v5440, %v5528
      %5530 = vmatmul.bf16.gmra.mxu0 %v4774
      %v5531 = vpop.f32.mrf.mxu0
      %v5532 = vadd.f32 %v5443, %v5531
      %v5533 = vpop.f32.mrf.mxu0
      %v5534 = vadd.f32 %v5445, %v5533
      %5535 = vdwg.mxu0
      %5536 = vmatpush.bf16.msra.mxu0 %v5237
      %5537 = vmatpush.bf16.msra.mxu0 %v5236
      %5538 = vmatpush.bf16.msra.mxu0 %v5235
      %5539 = vmatpush.bf16.msra.mxu0 %v5234
      %5540 = vmatpush.bf16.msra.mxu0 %v5233
      %5541 = vmatpush.bf16.msra.mxu0 %v5232
      %5542 = vmatpush.bf16.msra.mxu0 %v5231
      %5543 = vmatpush.bf16.msra.mxu0 %v5230
      %5544 = vmatmul.bf16.gmra.mxu0 %v4640
      %v5545 = vpop.f32.mrf.mxu0
      %v5546 = vadd.f32 %v5457, %v5545
      %v5547 = vpop.f32.mrf.mxu0
      %v5548 = vadd.f32 %v5459, %v5547
      %5549 = vmatmul.bf16.gmra.mxu0 %v4649
      %v5550 = vpop.f32.mrf.mxu0
      %v5551 = vadd.f32 %v5462, %v5550
      %v5552 = vpop.f32.mrf.mxu0
      %v5553 = vadd.f32 %v5464, %v5552
      %5554 = vmatmul.bf16.gmra.mxu0 %v4658
      %v5555 = vpop.f32.mrf.mxu0
      %v5556 = vadd.f32 %v5467, %v5555
      %v5557 = vpop.f32.mrf.mxu0
      %v5558 = vadd.f32 %v5469, %v5557
      %5559 = vmatmul.bf16.gmra.mxu0 %v4667
      %v5560 = vpop.f32.mrf.mxu0
      %v5561 = vadd.f32 %v5472, %v5560
      %v5562 = vpop.f32.mrf.mxu0
      %v5563 = vadd.f32 %v5474, %v5562
      %5564 = vmatmul.bf16.gmra.mxu0 %v4676
      %v5565 = vpop.f32.mrf.mxu0
      %v5566 = vadd.f32 %v5477, %v5565
      %v5567 = vpop.f32.mrf.mxu0
      %v5568 = vadd.f32 %v5479, %v5567
      %5569 = vmatmul.bf16.gmra.mxu0 %v4685
      %v5570 = vpop.f32.mrf.mxu0
      %v5571 = vadd.f32 %v5482, %v5570
      %v5572 = vpop.f32.mrf.mxu0
      %v5573 = vadd.f32 %v5484, %v5572
      %5574 = vmatmul.bf16.gmra.mxu0 %v4694
      %v5575 = vpop.f32.mrf.mxu0
      %v5576 = vadd.f32 %v5487, %v5575
      %v5577 = vpop.f32.mrf.mxu0
      %v5578 = vadd.f32 %v5489, %v5577
      %5579 = vmatmul.bf16.gmra.mxu0 %v4703
      %v5580 = vpop.f32.mrf.mxu0
      %v5581 = vadd.f32 %v5492, %v5580
      %v5582 = vpop.f32.mrf.mxu0
      %v5583 = vadd.f32 %v5494, %v5582
      %5584 = vmatmul.bf16.gmra.mxu0 %v4712
      %v5585 = vpop.f32.mrf.mxu0
      %v5586 = vadd.f32 %v5497, %v5585
      %v5587 = vpop.f32.mrf.mxu0
      %v5588 = vadd.f32 %v5499, %v5587
      %5589 = vmatmul.bf16.gmra.mxu0 %v4721
      %v5590 = vpop.f32.mrf.mxu0
      %v5591 = vadd.f32 %v5502, %v5590
      %v5592 = vpop.f32.mrf.mxu0
      %v5593 = vadd.f32 %v5504, %v5592
      %5594 = vmatmul.bf16.gmra.mxu0 %v4730
      %v5595 = vpop.f32.mrf.mxu0
      %v5596 = vadd.f32 %v5507, %v5595
      %v5597 = vpop.f32.mrf.mxu0
      %v5598 = vadd.f32 %v5509, %v5597
      %5599 = vmatmul.bf16.gmra.mxu0 %v4739
      %v5600 = vpop.f32.mrf.mxu0
      %v5601 = vadd.f32 %v5512, %v5600
      %v5602 = vpop.f32.mrf.mxu0
      %v5603 = vadd.f32 %v5514, %v5602
      %5604 = vmatmul.bf16.gmra.mxu0 %v4748
      %v5605 = vpop.f32.mrf.mxu0
      %v5606 = vadd.f32 %v5517, %v5605
      %v5607 = vpop.f32.mrf.mxu0
      %v5608 = vadd.f32 %v5519, %v5607
      %5609 = vmatmul.bf16.gmra.mxu0 %v4757
      %v5610 = vpop.f32.mrf.mxu0
      %v5611 = vadd.f32 %v5522, %v5610
      %v5612 = vpop.f32.mrf.mxu0
      %v5613 = vadd.f32 %v5524, %v5612
      %5614 = vmatmul.bf16.gmra.mxu0 %v4766
      %v5615 = vpop.f32.mrf.mxu0
      %v5616 = vadd.f32 %v5527, %v5615
      %v5617 = vpop.f32.mrf.mxu0
      %v5618 = vadd.f32 %v5529, %v5617
      %5619 = vmatmul.bf16.gmra.mxu0 %v4775
      %v5620 = vpop.f32.mrf.mxu0
      %v5621 = vadd.f32 %v5532, %v5620
      %v5622 = vpop.f32.mrf.mxu0
      %v5623 = vadd.f32 %v5534, %v5622
      %5624 = vdwg.mxu0
      %5625 = vmatpush.bf16.msra.mxu0 %v5245
      %5626 = vmatpush.bf16.msra.mxu0 %v5244
      %5627 = vmatpush.bf16.msra.mxu0 %v5243
      %5628 = vmatpush.bf16.msra.mxu0 %v5242
      %5629 = vmatpush.bf16.msra.mxu0 %v5241
      %5630 = vmatpush.bf16.msra.mxu0 %v5240
      %5631 = vmatpush.bf16.msra.mxu0 %v5239
      %5632 = vmatpush.bf16.msra.mxu0 %v5238
      %5633 = vmatmul.bf16.gmra.mxu0 %v4641
      %v5634 = vpop.f32.mrf.mxu0
      %v5635 = vadd.f32 %v5546, %v5634
      %v5636 = vpop.f32.mrf.mxu0
      %v5637 = vadd.f32 %v5548, %v5636
      %5638 = vmatmul.bf16.gmra.mxu0 %v4650
      %v5639 = vpop.f32.mrf.mxu0
      %v5640 = vadd.f32 %v5551, %v5639
      %v5641 = vpop.f32.mrf.mxu0
      %v5642 = vadd.f32 %v5553, %v5641
      %5643 = vmatmul.bf16.gmra.mxu0 %v4659
      %v5644 = vpop.f32.mrf.mxu0
      %v5645 = vadd.f32 %v5556, %v5644
      %v5646 = vpop.f32.mrf.mxu0
      %v5647 = vadd.f32 %v5558, %v5646
      %5648 = vmatmul.bf16.gmra.mxu0 %v4668
      %v5649 = vpop.f32.mrf.mxu0
      %v5650 = vadd.f32 %v5561, %v5649
      %v5651 = vpop.f32.mrf.mxu0
      %v5652 = vadd.f32 %v5563, %v5651
      %5653 = vmatmul.bf16.gmra.mxu0 %v4677
      %v5654 = vpop.f32.mrf.mxu0
      %v5655 = vadd.f32 %v5566, %v5654
      %v5656 = vpop.f32.mrf.mxu0
      %v5657 = vadd.f32 %v5568, %v5656
      %5658 = vmatmul.bf16.gmra.mxu0 %v4686
      %v5659 = vpop.f32.mrf.mxu0
      %v5660 = vadd.f32 %v5571, %v5659
      %v5661 = vpop.f32.mrf.mxu0
      %v5662 = vadd.f32 %v5573, %v5661
      %5663 = vmatmul.bf16.gmra.mxu0 %v4695
      %v5664 = vpop.f32.mrf.mxu0
      %v5665 = vadd.f32 %v5576, %v5664
      %v5666 = vpop.f32.mrf.mxu0
      %v5667 = vadd.f32 %v5578, %v5666
      %5668 = vmatmul.bf16.gmra.mxu0 %v4704
      %v5669 = vpop.f32.mrf.mxu0
      %v5670 = vadd.f32 %v5581, %v5669
      %v5671 = vpop.f32.mrf.mxu0
      %v5672 = vadd.f32 %v5583, %v5671
      %5673 = vmatmul.bf16.gmra.mxu0 %v4713
      %v5674 = vpop.f32.mrf.mxu0
      %v5675 = vadd.f32 %v5586, %v5674
      %v5676 = vpop.f32.mrf.mxu0
      %v5677 = vadd.f32 %v5588, %v5676
      %5678 = vmatmul.bf16.gmra.mxu0 %v4722
      %v5679 = vpop.f32.mrf.mxu0
      %v5680 = vadd.f32 %v5591, %v5679
      %v5681 = vpop.f32.mrf.mxu0
      %v5682 = vadd.f32 %v5593, %v5681
      %5683 = vmatmul.bf16.gmra.mxu0 %v4731
      %v5684 = vpop.f32.mrf.mxu0
      %v5685 = vadd.f32 %v5596, %v5684
      %v5686 = vpop.f32.mrf.mxu0
      %v5687 = vadd.f32 %v5598, %v5686
      %5688 = vmatmul.bf16.gmra.mxu0 %v4740
      %v5689 = vpop.f32.mrf.mxu0
      %v5690 = vadd.f32 %v5601, %v5689
      %v5691 = vpop.f32.mrf.mxu0
      %v5692 = vadd.f32 %v5603, %v5691
      %5693 = vmatmul.bf16.gmra.mxu0 %v4749
      %v5694 = vpop.f32.mrf.mxu0
      %v5695 = vadd.f32 %v5606, %v5694
      %v5696 = vpop.f32.mrf.mxu0
      %v5697 = vadd.f32 %v5608, %v5696
      %5698 = vmatmul.bf16.gmra.mxu0 %v4758
      %v5699 = vpop.f32.mrf.mxu0
      %v5700 = vadd.f32 %v5611, %v5699
      %v5701 = vpop.f32.mrf.mxu0
      %v5702 = vadd.f32 %v5613, %v5701
      %5703 = vmatmul.bf16.gmra.mxu0 %v4767
      %v5704 = vpop.f32.mrf.mxu0
      %v5705 = vadd.f32 %v5616, %v5704
      %v5706 = vpop.f32.mrf.mxu0
      %v5707 = vadd.f32 %v5618, %v5706
      %5708 = vmatmul.bf16.gmra.mxu0 %v4776
      %v5709 = vpop.f32.mrf.mxu0
      %v5710 = vadd.f32 %v5621, %v5709
      %v5711 = vpop.f32.mrf.mxu0
      %v5712 = vadd.f32 %v5623, %v5711
      %5713 = vdwg.mxu0
      %5714 = vmatpush.bf16.msra.mxu0 %v5253
      %5715 = vmatpush.bf16.msra.mxu0 %v5252
      %5716 = vmatpush.bf16.msra.mxu0 %v5251
      %5717 = vmatpush.bf16.msra.mxu0 %v5250
      %5718 = vmatpush.bf16.msra.mxu0 %v5249
      %5719 = vmatpush.bf16.msra.mxu0 %v5248
      %5720 = vmatpush.bf16.msra.mxu0 %v5247
      %5721 = vmatpush.bf16.msra.mxu0 %v5246
      %5722 = vmatmul.bf16.gmra.mxu0 %v4642
      %v5723 = vpop.f32.mrf.mxu0
      %v5724 = vadd.f32 %v5635, %v5723
      %v5725 = vpop.f32.mrf.mxu0
      %v5726 = vadd.f32 %v5637, %v5725
      %5727 = vmatmul.bf16.gmra.mxu0 %v4651
      %v5728 = vpop.f32.mrf.mxu0
      %v5729 = vadd.f32 %v5640, %v5728
      %v5730 = vpop.f32.mrf.mxu0
      %v5731 = vadd.f32 %v5642, %v5730
      %5732 = vmatmul.bf16.gmra.mxu0 %v4660
      %v5733 = vpop.f32.mrf.mxu0
      %v5734 = vadd.f32 %v5645, %v5733
      %v5735 = vpop.f32.mrf.mxu0
      %v5736 = vadd.f32 %v5647, %v5735
      %5737 = vmatmul.bf16.gmra.mxu0 %v4669
      %v5738 = vpop.f32.mrf.mxu0
      %v5739 = vadd.f32 %v5650, %v5738
      %v5740 = vpop.f32.mrf.mxu0
      %v5741 = vadd.f32 %v5652, %v5740
      %5742 = vmatmul.bf16.gmra.mxu0 %v4678
      %v5743 = vpop.f32.mrf.mxu0
      %v5744 = vadd.f32 %v5655, %v5743
      %v5745 = vpop.f32.mrf.mxu0
      %v5746 = vadd.f32 %v5657, %v5745
      %5747 = vmatmul.bf16.gmra.mxu0 %v4687
      %v5748 = vpop.f32.mrf.mxu0
      %v5749 = vadd.f32 %v5660, %v5748
      %v5750 = vpop.f32.mrf.mxu0
      %v5751 = vadd.f32 %v5662, %v5750
      %5752 = vmatmul.bf16.gmra.mxu0 %v4696
      %v5753 = vpop.f32.mrf.mxu0
      %v5754 = vadd.f32 %v5665, %v5753
      %v5755 = vpop.f32.mrf.mxu0
      %v5756 = vadd.f32 %v5667, %v5755
      %5757 = vmatmul.bf16.gmra.mxu0 %v4705
      %v5758 = vpop.f32.mrf.mxu0
      %v5759 = vadd.f32 %v5670, %v5758
      %v5760 = vpop.f32.mrf.mxu0
      %v5761 = vadd.f32 %v5672, %v5760
      %5762 = vmatmul.bf16.gmra.mxu0 %v4714
      %v5763 = vpop.f32.mrf.mxu0
      %v5764 = vadd.f32 %v5675, %v5763
      %v5765 = vpop.f32.mrf.mxu0
      %v5766 = vadd.f32 %v5677, %v5765
      %5767 = vmatmul.bf16.gmra.mxu0 %v4723
      %v5768 = vpop.f32.mrf.mxu0
      %v5769 = vadd.f32 %v5680, %v5768
      %v5770 = vpop.f32.mrf.mxu0
      %v5771 = vadd.f32 %v5682, %v5770
      %5772 = vmatmul.bf16.gmra.mxu0 %v4732
      %v5773 = vpop.f32.mrf.mxu0
      %v5774 = vadd.f32 %v5685, %v5773
      %v5775 = vpop.f32.mrf.mxu0
      %v5776 = vadd.f32 %v5687, %v5775
      %5777 = vmatmul.bf16.gmra.mxu0 %v4741
      %v5778 = vpop.f32.mrf.mxu0
      %v5779 = vadd.f32 %v5690, %v5778
      %v5780 = vpop.f32.mrf.mxu0
      %v5781 = vadd.f32 %v5692, %v5780
      %5782 = vmatmul.bf16.gmra.mxu0 %v4750
      %v5783 = vpop.f32.mrf.mxu0
      %v5784 = vadd.f32 %v5695, %v5783
      %v5785 = vpop.f32.mrf.mxu0
      %v5786 = vadd.f32 %v5697, %v5785
      %5787 = vmatmul.bf16.gmra.mxu0 %v4759
      %v5788 = vpop.f32.mrf.mxu0
      %v5789 = vadd.f32 %v5700, %v5788
      %v5790 = vpop.f32.mrf.mxu0
      %v5791 = vadd.f32 %v5702, %v5790
      %5792 = vmatmul.bf16.gmra.mxu0 %v4768
      %v5793 = vpop.f32.mrf.mxu0
      %v5794 = vadd.f32 %v5705, %v5793
      %v5795 = vpop.f32.mrf.mxu0
      %v5796 = vadd.f32 %v5707, %v5795
      %5797 = vmatmul.bf16.gmra.mxu0 %v4777
      %v5798 = vpop.f32.mrf.mxu0
      %v5799 = vadd.f32 %v5710, %v5798
      %v5800 = vpop.f32.mrf.mxu0
      %v5801 = vadd.f32 %v5712, %v5800
      %5802 = vdwg.mxu0
      %5803 = vmatpush.bf16.msra.mxu0 %v5261
      %5804 = vmatpush.bf16.msra.mxu0 %v5260
      %5805 = vmatpush.bf16.msra.mxu0 %v5259
      %5806 = vmatpush.bf16.msra.mxu0 %v5258
      %5807 = vmatpush.bf16.msra.mxu0 %v5257
      %5808 = vmatpush.bf16.msra.mxu0 %v5256
      %5809 = vmatpush.bf16.msra.mxu0 %v5255
      %5810 = vmatpush.bf16.msra.mxu0 %v5254
      %5811 = vmatmul.bf16.gmra.mxu0 %v4643
      %v5812 = vpop.f32.mrf.mxu0
      %v5813 = vadd.f32 %v5724, %v5812
      %v5814 = vpop.f32.mrf.mxu0
      %v5815 = vadd.f32 %v5726, %v5814
      %5816 = vmatmul.bf16.gmra.mxu0 %v4652
      %v5817 = vpop.f32.mrf.mxu0
      %v5818 = vadd.f32 %v5729, %v5817
      %v5819 = vpop.f32.mrf.mxu0
      %v5820 = vadd.f32 %v5731, %v5819
      %5821 = vmatmul.bf16.gmra.mxu0 %v4661
      %v5822 = vpop.f32.mrf.mxu0
      %v5823 = vadd.f32 %v5734, %v5822
      %v5824 = vpop.f32.mrf.mxu0
      %v5825 = vadd.f32 %v5736, %v5824
      %5826 = vmatmul.bf16.gmra.mxu0 %v4670
      %v5827 = vpop.f32.mrf.mxu0
      %v5828 = vadd.f32 %v5739, %v5827
      %v5829 = vpop.f32.mrf.mxu0
      %v5830 = vadd.f32 %v5741, %v5829
      %5831 = vmatmul.bf16.gmra.mxu0 %v4679
      %v5832 = vpop.f32.mrf.mxu0
      %v5833 = vadd.f32 %v5744, %v5832
      %v5834 = vpop.f32.mrf.mxu0
      %v5835 = vadd.f32 %v5746, %v5834
      %5836 = vmatmul.bf16.gmra.mxu0 %v4688
      %v5837 = vpop.f32.mrf.mxu0
      %v5838 = vadd.f32 %v5749, %v5837
      %v5839 = vpop.f32.mrf.mxu0
      %v5840 = vadd.f32 %v5751, %v5839
      %5841 = vmatmul.bf16.gmra.mxu0 %v4697
      %v5842 = vpop.f32.mrf.mxu0
      %v5843 = vadd.f32 %v5754, %v5842
      %v5844 = vpop.f32.mrf.mxu0
      %v5845 = vadd.f32 %v5756, %v5844
      %5846 = vmatmul.bf16.gmra.mxu0 %v4706
      %v5847 = vpop.f32.mrf.mxu0
      %v5848 = vadd.f32 %v5759, %v5847
      %v5849 = vpop.f32.mrf.mxu0
      %v5850 = vadd.f32 %v5761, %v5849
      %5851 = vmatmul.bf16.gmra.mxu0 %v4715
      %v5852 = vpop.f32.mrf.mxu0
      %v5853 = vadd.f32 %v5764, %v5852
      %v5854 = vpop.f32.mrf.mxu0
      %v5855 = vadd.f32 %v5766, %v5854
      %5856 = vmatmul.bf16.gmra.mxu0 %v4724
      %v5857 = vpop.f32.mrf.mxu0
      %v5858 = vadd.f32 %v5769, %v5857
      %v5859 = vpop.f32.mrf.mxu0
      %v5860 = vadd.f32 %v5771, %v5859
      %5861 = vmatmul.bf16.gmra.mxu0 %v4733
      %v5862 = vpop.f32.mrf.mxu0
      %v5863 = vadd.f32 %v5774, %v5862
      %v5864 = vpop.f32.mrf.mxu0
      %v5865 = vadd.f32 %v5776, %v5864
      %5866 = vmatmul.bf16.gmra.mxu0 %v4742
      %v5867 = vpop.f32.mrf.mxu0
      %v5868 = vadd.f32 %v5779, %v5867
      %v5869 = vpop.f32.mrf.mxu0
      %v5870 = vadd.f32 %v5781, %v5869
      %5871 = vmatmul.bf16.gmra.mxu0 %v4751
      %v5872 = vpop.f32.mrf.mxu0
      %v5873 = vadd.f32 %v5784, %v5872
      %v5874 = vpop.f32.mrf.mxu0
      %v5875 = vadd.f32 %v5786, %v5874
      %5876 = vmatmul.bf16.gmra.mxu0 %v4760
      %v5877 = vpop.f32.mrf.mxu0
      %v5878 = vadd.f32 %v5789, %v5877
      %v5879 = vpop.f32.mrf.mxu0
      %v5880 = vadd.f32 %v5791, %v5879
      %5881 = vmatmul.bf16.gmra.mxu0 %v4769
      %v5882 = vpop.f32.mrf.mxu0
      %v5883 = vadd.f32 %v5794, %v5882
      %v5884 = vpop.f32.mrf.mxu0
      %v5885 = vadd.f32 %v5796, %v5884
      %5886 = vmatmul.bf16.gmra.mxu0 %v4778
      %v5887 = vpop.f32.mrf.mxu0
      %v5888 = vadd.f32 %v5799, %v5887
      %v5889 = vpop.f32.mrf.mxu0
      %v5890 = vadd.f32 %v5801, %v5889
      %5891 = vdwg.mxu0
      %5892 = vmatpush.bf16.msra.mxu0 %v5269
      %5893 = vmatpush.bf16.msra.mxu0 %v5268
      %5894 = vmatpush.bf16.msra.mxu0 %v5267
      %5895 = vmatpush.bf16.msra.mxu0 %v5266
      %5896 = vmatpush.bf16.msra.mxu0 %v5265
      %5897 = vmatpush.bf16.msra.mxu0 %v5264
      %5898 = vmatpush.bf16.msra.mxu0 %v5263
      %5899 = vmatpush.bf16.msra.mxu0 %v5262
      %5900 = vmatmul.bf16.gmra.mxu0 %v4644
      %v5901 = vpop.f32.mrf.mxu0
      %v5902 = vadd.f32 %v5813, %v5901
      %v5903 = vpop.f32.mrf.mxu0
      %v5904 = vadd.f32 %v5815, %v5903
      %5905 = vmatmul.bf16.gmra.mxu0 %v4653
      %v5906 = vpop.f32.mrf.mxu0
      %v5907 = vadd.f32 %v5818, %v5906
      %v5908 = vpop.f32.mrf.mxu0
      %v5909 = vadd.f32 %v5820, %v5908
      %5910 = vmatmul.bf16.gmra.mxu0 %v4662
      %v5911 = vpop.f32.mrf.mxu0
      %v5912 = vadd.f32 %v5823, %v5911
      %v5913 = vpop.f32.mrf.mxu0
      %v5914 = vadd.f32 %v5825, %v5913
      %5915 = vmatmul.bf16.gmra.mxu0 %v4671
      %v5916 = vpop.f32.mrf.mxu0
      %v5917 = vadd.f32 %v5828, %v5916
      %v5918 = vpop.f32.mrf.mxu0
      %v5919 = vadd.f32 %v5830, %v5918
      %5920 = vmatmul.bf16.gmra.mxu0 %v4680
      %v5921 = vpop.f32.mrf.mxu0
      %v5922 = vadd.f32 %v5833, %v5921
      %v5923 = vpop.f32.mrf.mxu0
      %v5924 = vadd.f32 %v5835, %v5923
      %5925 = vmatmul.bf16.gmra.mxu0 %v4689
      %v5926 = vpop.f32.mrf.mxu0
      %v5927 = vadd.f32 %v5838, %v5926
      %v5928 = vpop.f32.mrf.mxu0
      %v5929 = vadd.f32 %v5840, %v5928
      %5930 = vmatmul.bf16.gmra.mxu0 %v4698
      %v5931 = vpop.f32.mrf.mxu0
      %v5932 = vadd.f32 %v5843, %v5931
      %v5933 = vpop.f32.mrf.mxu0
      %v5934 = vadd.f32 %v5845, %v5933
      %5935 = vmatmul.bf16.gmra.mxu0 %v4707
      %v5936 = vpop.f32.mrf.mxu0
      %v5937 = vadd.f32 %v5848, %v5936
      %v5938 = vpop.f32.mrf.mxu0
      %v5939 = vadd.f32 %v5850, %v5938
      %5940 = vmatmul.bf16.gmra.mxu0 %v4716
      %v5941 = vpop.f32.mrf.mxu0
      %v5942 = vadd.f32 %v5853, %v5941
      %v5943 = vpop.f32.mrf.mxu0
      %v5944 = vadd.f32 %v5855, %v5943
      %5945 = vmatmul.bf16.gmra.mxu0 %v4725
      %v5946 = vpop.f32.mrf.mxu0
      %v5947 = vadd.f32 %v5858, %v5946
      %v5948 = vpop.f32.mrf.mxu0
      %v5949 = vadd.f32 %v5860, %v5948
      %5950 = vmatmul.bf16.gmra.mxu0 %v4734
      %v5951 = vpop.f32.mrf.mxu0
      %v5952 = vadd.f32 %v5863, %v5951
      %v5953 = vpop.f32.mrf.mxu0
      %v5954 = vadd.f32 %v5865, %v5953
      %5955 = vmatmul.bf16.gmra.mxu0 %v4743
      %v5956 = vpop.f32.mrf.mxu0
      %v5957 = vadd.f32 %v5868, %v5956
      %v5958 = vpop.f32.mrf.mxu0
      %v5959 = vadd.f32 %v5870, %v5958
      %5960 = vmatmul.bf16.gmra.mxu0 %v4752
      %v5961 = vpop.f32.mrf.mxu0
      %v5962 = vadd.f32 %v5873, %v5961
      %v5963 = vpop.f32.mrf.mxu0
      %v5964 = vadd.f32 %v5875, %v5963
      %5965 = vmatmul.bf16.gmra.mxu0 %v4761
      %v5966 = vpop.f32.mrf.mxu0
      %v5967 = vadd.f32 %v5878, %v5966
      %v5968 = vpop.f32.mrf.mxu0
      %v5969 = vadd.f32 %v5880, %v5968
      %5970 = vmatmul.bf16.gmra.mxu0 %v4770
      %v5971 = vpop.f32.mrf.mxu0
      %v5972 = vadd.f32 %v5883, %v5971
      %v5973 = vpop.f32.mrf.mxu0
      %v5974 = vadd.f32 %v5885, %v5973
      %5975 = vmatmul.bf16.gmra.mxu0 %v4779
      %v5976 = vpop.f32.mrf.mxu0
      %v5977 = vadd.f32 %v5888, %v5976
      %v5978 = vpop.f32.mrf.mxu0
      %v5979 = vadd.f32 %v5890, %v5978
      %5980 = vdwg.mxu0
      %5981 = vmatpush.bf16.msra.mxu0 %v5277
      %5982 = vmatpush.bf16.msra.mxu0 %v5276
      %5983 = vmatpush.bf16.msra.mxu0 %v5275
      %5984 = vmatpush.bf16.msra.mxu0 %v5274
      %5985 = vmatpush.bf16.msra.mxu0 %v5273
      %5986 = vmatpush.bf16.msra.mxu0 %v5272
      %5987 = vmatpush.bf16.msra.mxu0 %v5271
      %5988 = vmatpush.bf16.msra.mxu0 %v5270
      %5989 = vmatmul.bf16.gmra.mxu0 %v4645
      %v5990 = vpop.f32.mrf.mxu0
      %v5991 = vadd.f32 %v5902, %v5990
      %v5992 = vpop.f32.mrf.mxu0
      %v5993 = vadd.f32 %v5904, %v5992
      %5994 = vmatmul.bf16.gmra.mxu0 %v4654
      %v5995 = vpop.f32.mrf.mxu0
      %v5996 = vadd.f32 %v5907, %v5995
      %v5997 = vpop.f32.mrf.mxu0
      %v5998 = vadd.f32 %v5909, %v5997
      %5999 = vmatmul.bf16.gmra.mxu0 %v4663
      %v6000 = vpop.f32.mrf.mxu0
      %v6001 = vadd.f32 %v5912, %v6000
      %v6002 = vpop.f32.mrf.mxu0
      %v6003 = vadd.f32 %v5914, %v6002
      %6004 = vmatmul.bf16.gmra.mxu0 %v4672
      %v6005 = vpop.f32.mrf.mxu0
      %v6006 = vadd.f32 %v5917, %v6005
      %v6007 = vpop.f32.mrf.mxu0
      %v6008 = vadd.f32 %v5919, %v6007
      %6009 = vmatmul.bf16.gmra.mxu0 %v4681
      %v6010 = vpop.f32.mrf.mxu0
      %v6011 = vadd.f32 %v5922, %v6010
      %v6012 = vpop.f32.mrf.mxu0
      %v6013 = vadd.f32 %v5924, %v6012
      %6014 = vmatmul.bf16.gmra.mxu0 %v4690
      %v6015 = vpop.f32.mrf.mxu0
      %v6016 = vadd.f32 %v5927, %v6015
      %v6017 = vpop.f32.mrf.mxu0
      %v6018 = vadd.f32 %v5929, %v6017
      %6019 = vmatmul.bf16.gmra.mxu0 %v4699
      %v6020 = vpop.f32.mrf.mxu0
      %v6021 = vadd.f32 %v5932, %v6020
      %v6022 = vpop.f32.mrf.mxu0
      %v6023 = vadd.f32 %v5934, %v6022
      %6024 = vmatmul.bf16.gmra.mxu0 %v4708
      %v6025 = vpop.f32.mrf.mxu0
      %v6026 = vadd.f32 %v5937, %v6025
      %v6027 = vpop.f32.mrf.mxu0
      %v6028 = vadd.f32 %v5939, %v6027
      %6029 = vmatmul.bf16.gmra.mxu0 %v4717
      %v6030 = vpop.f32.mrf.mxu0
      %v6031 = vadd.f32 %v5942, %v6030
      %v6032 = vpop.f32.mrf.mxu0
      %v6033 = vadd.f32 %v5944, %v6032
      %6034 = vmatmul.bf16.gmra.mxu0 %v4726
      %v6035 = vpop.f32.mrf.mxu0
      %v6036 = vadd.f32 %v5947, %v6035
      %v6037 = vpop.f32.mrf.mxu0
      %v6038 = vadd.f32 %v5949, %v6037
      %6039 = vmatmul.bf16.gmra.mxu0 %v4735
      %v6040 = vpop.f32.mrf.mxu0
      %v6041 = vadd.f32 %v5952, %v6040
      %v6042 = vpop.f32.mrf.mxu0
      %v6043 = vadd.f32 %v5954, %v6042
      %6044 = vmatmul.bf16.gmra.mxu0 %v4744
      %v6045 = vpop.f32.mrf.mxu0
      %v6046 = vadd.f32 %v5957, %v6045
      %v6047 = vpop.f32.mrf.mxu0
      %v6048 = vadd.f32 %v5959, %v6047
      %6049 = vmatmul.bf16.gmra.mxu0 %v4753
      %v6050 = vpop.f32.mrf.mxu0
      %v6051 = vadd.f32 %v5962, %v6050
      %v6052 = vpop.f32.mrf.mxu0
      %v6053 = vadd.f32 %v5964, %v6052
      %6054 = vmatmul.bf16.gmra.mxu0 %v4762
      %v6055 = vpop.f32.mrf.mxu0
      %v6056 = vadd.f32 %v5967, %v6055
      %v6057 = vpop.f32.mrf.mxu0
      %v6058 = vadd.f32 %v5969, %v6057
      %6059 = vmatmul.bf16.gmra.mxu0 %v4771
      %v6060 = vpop.f32.mrf.mxu0
      %v6061 = vadd.f32 %v5972, %v6060
      %v6062 = vpop.f32.mrf.mxu0
      %v6063 = vadd.f32 %v5974, %v6062
      %6064 = vmatmul.bf16.gmra.mxu0 %v4780
      %v6065 = vpop.f32.mrf.mxu0
      %v6066 = vadd.f32 %v5977, %v6065
      %v6067 = vpop.f32.mrf.mxu0
      %v6068 = vadd.f32 %v5979, %v6067
      %6069 = vdwg.mxu0
      %6070 = vmatpush.bf16.msra.mxu0 %v5285
      %6071 = vmatpush.bf16.msra.mxu0 %v5284
      %6072 = vmatpush.bf16.msra.mxu0 %v5283
      %6073 = vmatpush.bf16.msra.mxu0 %v5282
      %6074 = vmatpush.bf16.msra.mxu0 %v5281
      %6075 = vmatpush.bf16.msra.mxu0 %v5280
      %6076 = vmatpush.bf16.msra.mxu0 %v5279
      %6077 = vmatpush.bf16.msra.mxu0 %v5278
      %6078 = vmatmul.bf16.gmra.mxu0 %v4646
      %v6079 = vpop.f32.mrf.mxu0
      %v6080 = vadd.f32 %v5991, %v6079
      %v6081 = vpop.f32.mrf.mxu0
      %v6082 = vadd.f32 %v5993, %v6081
      %6083 = vmatmul.bf16.gmra.mxu0 %v4655
      %v6084 = vpop.f32.mrf.mxu0
      %v6085 = vadd.f32 %v5996, %v6084
      %v6086 = vpop.f32.mrf.mxu0
      %v6087 = vadd.f32 %v5998, %v6086
      %6088 = vmatmul.bf16.gmra.mxu0 %v4664
      %v6089 = vpop.f32.mrf.mxu0
      %v6090 = vadd.f32 %v6001, %v6089
      %v6091 = vpop.f32.mrf.mxu0
      %v6092 = vadd.f32 %v6003, %v6091
      %6093 = vmatmul.bf16.gmra.mxu0 %v4673
      %v6094 = vpop.f32.mrf.mxu0
      %v6095 = vadd.f32 %v6006, %v6094
      %v6096 = vpop.f32.mrf.mxu0
      %v6097 = vadd.f32 %v6008, %v6096
      %6098 = vmatmul.bf16.gmra.mxu0 %v4682
      %v6099 = vpop.f32.mrf.mxu0
      %v6100 = vadd.f32 %v6011, %v6099
      %v6101 = vpop.f32.mrf.mxu0
      %v6102 = vadd.f32 %v6013, %v6101
      %6103 = vmatmul.bf16.gmra.mxu0 %v4691
      %v6104 = vpop.f32.mrf.mxu0
      %v6105 = vadd.f32 %v6016, %v6104
      %v6106 = vpop.f32.mrf.mxu0
      %v6107 = vadd.f32 %v6018, %v6106
      %6108 = vmatmul.bf16.gmra.mxu0 %v4700
      %v6109 = vpop.f32.mrf.mxu0
      %v6110 = vadd.f32 %v6021, %v6109
      %v6111 = vpop.f32.mrf.mxu0
      %v6112 = vadd.f32 %v6023, %v6111
      %6113 = vmatmul.bf16.gmra.mxu0 %v4709
      %v6114 = vpop.f32.mrf.mxu0
      %v6115 = vadd.f32 %v6026, %v6114
      %v6116 = vpop.f32.mrf.mxu0
      %v6117 = vadd.f32 %v6028, %v6116
      %6118 = vmatmul.bf16.gmra.mxu0 %v4718
      %v6119 = vpop.f32.mrf.mxu0
      %v6120 = vadd.f32 %v6031, %v6119
      %v6121 = vpop.f32.mrf.mxu0
      %v6122 = vadd.f32 %v6033, %v6121
      %6123 = vmatmul.bf16.gmra.mxu0 %v4727
      %v6124 = vpop.f32.mrf.mxu0
      %v6125 = vadd.f32 %v6036, %v6124
      %v6126 = vpop.f32.mrf.mxu0
      %v6127 = vadd.f32 %v6038, %v6126
      %6128 = vmatmul.bf16.gmra.mxu0 %v4736
      %v6129 = vpop.f32.mrf.mxu0
      %v6130 = vadd.f32 %v6041, %v6129
      %v6131 = vpop.f32.mrf.mxu0
      %v6132 = vadd.f32 %v6043, %v6131
      %6133 = vmatmul.bf16.gmra.mxu0 %v4745
      %v6134 = vpop.f32.mrf.mxu0
      %v6135 = vadd.f32 %v6046, %v6134
      %v6136 = vpop.f32.mrf.mxu0
      %v6137 = vadd.f32 %v6048, %v6136
      %6138 = vmatmul.bf16.gmra.mxu0 %v4754
      %v6139 = vpop.f32.mrf.mxu0
      %v6140 = vadd.f32 %v6051, %v6139
      %v6141 = vpop.f32.mrf.mxu0
      %v6142 = vadd.f32 %v6053, %v6141
      %6143 = vmatmul.bf16.gmra.mxu0 %v4763
      %v6144 = vpop.f32.mrf.mxu0
      %v6145 = vadd.f32 %v6056, %v6144
      %v6146 = vpop.f32.mrf.mxu0
      %v6147 = vadd.f32 %v6058, %v6146
      %6148 = vmatmul.bf16.gmra.mxu0 %v4772
      %v6149 = vpop.f32.mrf.mxu0
      %v6150 = vadd.f32 %v6061, %v6149
      %v6151 = vpop.f32.mrf.mxu0
      %v6152 = vadd.f32 %v6063, %v6151
      %6153 = vmatmul.bf16.gmra.mxu0 %v4781
      %v6154 = vpop.f32.mrf.mxu0
      %v6155 = vadd.f32 %v6066, %v6154
      %v6156 = vpop.f32.mrf.mxu0
      %v6157 = vadd.f32 %v6068, %v6156
      %6158 = vdwg.mxu0
      %v6159 = vpack.c.bf16 %v6080, %v6080
      %v6160 = vpack.c.bf16 %v6082, %v6082
      %v6161 = vpack.c.bf16 %v6085, %v6085
      %v6162 = vpack.c.bf16 %v6087, %v6087
      %v6163 = vpack.c.bf16 %v6090, %v6090
      %v6164 = vpack.c.bf16 %v6092, %v6092
      %v6165 = vpack.c.bf16 %v6095, %v6095
      %v6166 = vpack.c.bf16 %v6097, %v6097
      %v6167 = vpack.c.bf16 %v6100, %v6100
      %v6168 = vpack.c.bf16 %v6102, %v6102
      %v6169 = vpack.c.bf16 %v6105, %v6105
      %v6170 = vpack.c.bf16 %v6107, %v6107
      %v6171 = vpack.c.bf16 %v6110, %v6110
      %v6172 = vpack.c.bf16 %v6112, %v6112
      %v6173 = vpack.c.bf16 %v6115, %v6115
      %v6174 = vpack.c.bf16 %v6117, %v6117
      %v6175 = vpack.c.bf16 %v6120, %v6120
      %v6176 = vpack.c.bf16 %v6122, %v6122
      %v6177 = vpack.c.bf16 %v6125, %v6125
      %v6178 = vpack.c.bf16 %v6127, %v6127
      %v6179 = vpack.c.bf16 %v6130, %v6130
      %v6180 = vpack.c.bf16 %v6132, %v6132
      %v6181 = vpack.c.bf16 %v6135, %v6135
      %v6182 = vpack.c.bf16 %v6137, %v6137
      %v6183 = vpack.c.bf16 %v6140, %v6140
      %v6184 = vpack.c.bf16 %v6142, %v6142
      %v6185 = vpack.c.bf16 %v6145, %v6145
      %v6186 = vpack.c.bf16 %v6147, %v6147
      %v6187 = vpack.c.bf16 %v6150, %v6150
      %v6188 = vpack.c.bf16 %v6152, %v6152
      %v6189 = vpack.c.bf16 %v6155, %v6155
      %v6190 = vpack.c.bf16 %v6157, %v6157
      %6191 = vst [vmem:[%s493] sm:$0xf] %v6159
      %6192 = vst [vmem:[%s493 + $0x4] sm:$0xf] %v6160
      %6193 = vst [vmem:[%s493 + $0x8] sm:$0xf] %v6161
      %6194 = vst [vmem:[%s493 + $0xc] sm:$0xf] %v6162
      %6195 = vst [vmem:[%s493 + $0x10] sm:$0xf] %v6163
      %6196 = vst [vmem:[%s493 + $0x14] sm:$0xf] %v6164
      %6197 = vst [vmem:[%s493 + $0x18] sm:$0xf] %v6165
      %6198 = vst [vmem:[%s493 + $0x1c] sm:$0xf] %v6166
      %6199 = vst [vmem:[%s493 + $0x20] sm:$0xf] %v6167
      %6200 = vst [vmem:[%s493 + $0x24] sm:$0xf] %v6168
      %6201 = vst [vmem:[%s493 + $0x28] sm:$0xf] %v6169
      %6202 = vst [vmem:[%s493 + $0x2c] sm:$0xf] %v6170
      %6203 = vst [vmem:[%s493 + $0x30] sm:$0xf] %v6171
      %6204 = vst [vmem:[%s493 + $0x34] sm:$0xf] %v6172
      %6205 = vst [vmem:[%s493 + $0x38] sm:$0xf] %v6173
      %6206 = vst [vmem:[%s493 + $0x3c] sm:$0xf] %v6174
      %6207 = vst [vmem:[%s493 + $0x40] sm:$0xf] %v6175
      %6208 = vst [vmem:[%s493 + $0x44] sm:$0xf] %v6176
      %6209 = vst [vmem:[%s493 + $0x48] sm:$0xf] %v6177
      %6210 = vst [vmem:[%s493 + $0x4c] sm:$0xf] %v6178
      %6211 = vst [vmem:[%s493 + $0x50] sm:$0xf] %v6179
      %6212 = vst [vmem:[%s493 + $0x54] sm:$0xf] %v6180
      %6213 = vst [vmem:[%s493 + $0x58] sm:$0xf] %v6181
      %6214 = vst [vmem:[%s493 + $0x5c] sm:$0xf] %v6182
      %6215 = vst [vmem:[%s493 + $0x60] sm:$0xf] %v6183
      %6216 = vst [vmem:[%s493 + $0x64] sm:$0xf] %v6184
      %6217 = vst [vmem:[%s493 + $0x68] sm:$0xf] %v6185
      %6218 = vst [vmem:[%s493 + $0x6c] sm:$0xf] %v6186
      %6219 = vst [vmem:[%s493 + $0x70] sm:$0xf] %v6187
      %6220 = vst [vmem:[%s493 + $0x74] sm:$0xf] %v6188
      %6221 = vst [vmem:[%s493 + $0x78] sm:$0xf] %v6189
      %6222 = vst [vmem:[%s493 + $0x7c] sm:$0xf] %v6190
      %v6223 = vadd.f32 %v6080, %v6082
      %v6224 = vadd.f32 %v6223, %v6085
      %v6225 = vadd.f32 %v6224, %v6087
      %v6226 = vadd.f32 %v6225, %v6090
      %v6227 = vadd.f32 %v6226, %v6092
      %v6228 = vadd.f32 %v6227, %v6095
      %v6229 = vadd.f32 %v6228, %v6097
      %v6230 = vadd.f32 %v6229, %v6100
      %v6231 = vadd.f32 %v6230, %v6102
      %v6232 = vadd.f32 %v6231, %v6105
      %v6233 = vadd.f32 %v6232, %v6107
      %v6234 = vadd.f32 %v6233, %v6110
      %v6235 = vadd.f32 %v6234, %v6112
      %v6236 = vadd.f32 %v6235, %v6115
      %v6237 = vadd.f32 %v6236, %v6117
      %v6238 = vadd.f32 %v6237, %v6120
      %v6239 = vadd.f32 %v6238, %v6122
      %v6240 = vadd.f32 %v6239, %v6125
      %v6241 = vadd.f32 %v6240, %v6127
      %v6242 = vadd.f32 %v6241, %v6130
      %v6243 = vadd.f32 %v6242, %v6132
      %v6244 = vadd.f32 %v6243, %v6135
      %v6245 = vadd.f32 %v6244, %v6137
      %v6246 = vadd.f32 %v6245, %v6140
      %v6247 = vadd.f32 %v6246, %v6142
      %v6248 = vadd.f32 %v6247, %v6145
      %v6249 = vadd.f32 %v6248, %v6147
      %v6250 = vadd.f32 %v6249, %v6150
      %v6251 = vadd.f32 %v6250, %v6152
      %v6252 = vadd.f32 %v6251, %v6155
      %v6253 = vadd.f32 %v6252, %v6157
      %v6254 = vrot.slane %v6253, 4
      %v6255 = vadd.f32 %v6253, %v6254
      %v6256 = vrot.slane %v6255, 2
      %v6257 = vadd.f32 %v6255, %v6256
      %v6258 = vrot.slane %v6257, 1
      %v6259 = vadd.f32 %v6257, %v6258
      %6260 = vst [vmem:[%s500] sm:$0x1] %v6259
      %v6261 = vmul.f32 %v6080, %v6080
      %v6262 = vmul.f32 %v6082, %v6082
      %v6263 = vmul.f32 %v6085, %v6085
      %v6264 = vmul.f32 %v6087, %v6087
      %v6265 = vmul.f32 %v6090, %v6090
      %v6266 = vmul.f32 %v6092, %v6092
      %v6267 = vmul.f32 %v6095, %v6095
      %v6268 = vmul.f32 %v6097, %v6097
      %v6269 = vmul.f32 %v6100, %v6100
      %v6270 = vmul.f32 %v6102, %v6102
      %v6271 = vmul.f32 %v6105, %v6105
      %v6272 = vmul.f32 %v6107, %v6107
      %v6273 = vmul.f32 %v6110, %v6110
      %v6274 = vmul.f32 %v6112, %v6112
      %v6275 = vmul.f32 %v6115, %v6115
      %v6276 = vmul.f32 %v6117, %v6117
      %v6277 = vmul.f32 %v6120, %v6120
      %v6278 = vmul.f32 %v6122, %v6122
      %v6279 = vmul.f32 %v6125, %v6125
      %v6280 = vmul.f32 %v6127, %v6127
      %v6281 = vmul.f32 %v6130, %v6130
      %v6282 = vmul.f32 %v6132, %v6132
      %v6283 = vmul.f32 %v6135, %v6135
      %v6284 = vmul.f32 %v6137, %v6137
      %v6285 = vmul.f32 %v6140, %v6140
      %v6286 = vmul.f32 %v6142, %v6142
      %v6287 = vmul.f32 %v6145, %v6145
      %v6288 = vmul.f32 %v6147, %v6147
      %v6289 = vmul.f32 %v6150, %v6150
      %v6290 = vmul.f32 %v6152, %v6152
      %v6291 = vmul.f32 %v6155, %v6155
      %v6292 = vmul.f32 %v6157, %v6157
      %v6293 = vadd.f32 %v6261, %v6262
      %v6294 = vadd.f32 %v6293, %v6263
      %v6295 = vadd.f32 %v6294, %v6264
      %v6296 = vadd.f32 %v6295, %v6265
      %v6297 = vadd.f32 %v6296, %v6266
      %v6298 = vadd.f32 %v6297, %v6267
      %v6299 = vadd.f32 %v6298, %v6268
      %v6300 = vadd.f32 %v6299, %v6269
      %v6301 = vadd.f32 %v6300, %v6270
      %v6302 = vadd.f32 %v6301, %v6271
      %v6303 = vadd.f32 %v6302, %v6272
      %v6304 = vadd.f32 %v6303, %v6273
      %v6305 = vadd.f32 %v6304, %v6274
      %v6306 = vadd.f32 %v6305, %v6275
      %v6307 = vadd.f32 %v6306, %v6276
      %v6308 = vadd.f32 %v6307, %v6277
      %v6309 = vadd.f32 %v6308, %v6278
      %v6310 = vadd.f32 %v6309, %v6279
      %v6311 = vadd.f32 %v6310, %v6280
      %v6312 = vadd.f32 %v6311, %v6281
      %v6313 = vadd.f32 %v6312, %v6282
      %v6314 = vadd.f32 %v6313, %v6283
      %v6315 = vadd.f32 %v6314, %v6284
      %v6316 = vadd.f32 %v6315, %v6285
      %v6317 = vadd.f32 %v6316, %v6286
      %v6318 = vadd.f32 %v6317, %v6287
      %v6319 = vadd.f32 %v6318, %v6288
      %v6320 = vadd.f32 %v6319, %v6289
      %v6321 = vadd.f32 %v6320, %v6290
      %v6322 = vadd.f32 %v6321, %v6291
      %v6323 = vadd.f32 %v6322, %v6292
      %v6324 = vrot.slane %v6323, 4
      %v6325 = vadd.f32 %v6323, %v6324
      %v6326 = vrot.slane %v6325, 2
      %v6327 = vadd.f32 %v6325, %v6326
      %v6328 = vrot.slane %v6327, 1
      %v6329 = vadd.f32 %v6327, %v6328
      %6330 = vst [vmem:[%s506] sm:$0x1] %v6329
      %s6331 = smul.u32 16, %s25
      %p6332 = scmp.lt.s32.totalorder %s24, 1
      %s6333 = scalar_select %p6332, %s24, 1
      %p6334 = scmp.lt.s32.totalorder %s6331, 15
      %s6335 = scalar_select %p6334, %s6331, 15
      %s6336 = smul.addr %s6335, 2
      %s6337 = smul.addr %s6333, 32
      %s6338 = sadd.s32 %s6336, %s6337
      %s6339 = smul.addr %s6338, 4
      %s6340 = scalar_lea.vmem %s6, %s6339
      %p6341 = scmp.lt.s32.totalorder %s24, 1
      %s6342 = scalar_select %p6341, %s24, 1
      %p6343 = scmp.lt.s32.totalorder %s25, 0
      %s6344 = scalar_select %p6343, %s25, 0
      %s6345 = sadd.s32 %s6344, %s6342
      %s6346 = scalar_lea.vmem %s7, %s6345
      %p6347 = scmp.lt.s32.totalorder %s24, 1
      %s6348 = scalar_select %p6347, %s24, 1
      %p6349 = scmp.lt.s32.totalorder %s25, 0
      %s6350 = scalar_select %p6349, %s25, 0
      %s6351 = sadd.s32 %s6350, %s6348
      %s6352 = scalar_lea.vmem %s8, %s6351
      // Predicated region
      $region61: #{double_conv.4} parent=43 // pred_check
        %p6353 = pneg %p215
      $region62: #{double_conv.4} parent=43 // pred_check_branch
        %6355 = sbr.rel (%p6353) target = $region64
      $region63: #{double_conv.4} parent=43 // pred_region
        %s6356 = smul.u32 16, %s25
      $region64: #{double_conv.4} parent=43 // pred_fallthru
        _
      // Predicated region
      $region65: #{double_conv.4} parent=43 // pred_check
        %p6357 = pneg %p243
      $region66: #{double_conv.4} parent=43 // pred_check_branch
        %6359 = sbr.rel (%p6357) target = $region68
      $region67: #{double_conv.4} parent=43 // pred_region
        _
      $region68: #{double_conv.4} parent=43 // pred_fallthru
        _
      // Predicated region
      $region69: #{double_conv.4} parent=43 // pred_check
        %p6360 = pneg %p271
      $region70: #{double_conv.4} parent=43 // pred_check_branch
        %6362 = sbr.rel (%p6360) target = $region72
      $region71: #{double_conv.4} parent=43 // pred_region
        _
      $region72: #{double_conv.4} parent=43 // pred_fallthru
        _
    $region44: #{double_conv.4} parent=5 // pred_fallthru
      _
    %p6363 = scmp.le.s32.totalorder 2, %s15
    // Predicated region
    $region73: #{double_conv.4} parent=5 // pred_check
      %p6364 = pneg %p6363
    $region74: #{double_conv.4} parent=5 // pred_check_branch
      %6366 = sbr.rel (%p6364) target = $region76
    $region75: #{double_conv.4} parent=5 // pred_region
      %s6367 = ssub.s32 %s15, 2
      // Predicated region
      $region77: #{double_conv.4} parent=75 // pred_check
        %p6368 = pneg %p221
      $region78: #{double_conv.4} parent=75 // pred_check_branch
        %6370 = sbr.rel (%p6368) target = $region80
      $region79: #{double_conv.4} parent=75 // pred_region
        %s6371 = smul.u32 16, %s27
        %p6372 = scmp.lt.s32.totalorder %s26, 1
        %s6373 = scalar_select %p6372, %s26, 1
        %p6374 = scmp.lt.s32.totalorder %s6371, 15
        %s6375 = scalar_select %p6374, %s6371, 15
        %s6376 = smul.addr %s6375, 2
        %s6377 = smul.addr %s6373, 32
        %s6378 = sadd.s32 %s6376, %s6377
        %s6379 = smul.addr %s6378, 4
        %s6380 = scalar_lea.vmem %s6, %s6379
      $region80: #{double_conv.4} parent=75 // pred_fallthru
        _
      // Predicated region
      $region81: #{double_conv.4} parent=75 // pred_check
        %p6381 = pneg %p249
      $region82: #{double_conv.4} parent=75 // pred_check_branch
        %6383 = sbr.rel (%p6381) target = $region84
      $region83: #{double_conv.4} parent=75 // pred_region
        %p6384 = scmp.lt.s32.totalorder %s26, 1
        %s6385 = scalar_select %p6384, %s26, 1
        %p6386 = scmp.lt.s32.totalorder %s27, 0
        %s6387 = scalar_select %p6386, %s27, 0
        %s6388 = sadd.s32 %s6387, %s6385
        %s6389 = scalar_lea.vmem %s7, %s6388
      $region84: #{double_conv.4} parent=75 // pred_fallthru
        _
      // Predicated region
      $region85: #{double_conv.4} parent=75 // pred_check
        %p6390 = pneg %p277
      $region86: #{double_conv.4} parent=75 // pred_check_branch
        %6392 = sbr.rel (%p6390) target = $region88
      $region87: #{double_conv.4} parent=75 // pred_region
        %p6393 = scmp.lt.s32.totalorder %s26, 1
        %s6394 = scalar_select %p6393, %s26, 1
        %p6395 = scmp.lt.s32.totalorder %s27, 0
        %s6396 = scalar_select %p6395, %s27, 0
        %s6397 = sadd.s32 %s6396, %s6394
        %s6398 = scalar_lea.vmem %s8, %s6397
      $region88: #{double_conv.4} parent=75 // pred_fallthru
        _
    $region76: #{double_conv.4} parent=5 // pred_fallthru
      _
  $region6: #{double_conv.4} parent=0 // loop_footer
    %s19 = sadd.s32 1, %s15
  $region7: #{double_conv.4} parent=0 // loop_footer_branch
    %14 = sbr.rel target = $region3
  $region8: #{double_conv.4} parent=0 // loop_exit
    _

</llo_original>
